<compile_context>
chip_gen: v7x
topology: tpu7x:2x2x1
jax: 0.10.0
libtpu: 0.0.40
codegen_flags: <defaults>
</compile_context>

<pallas_src>
import functools

import jax
import jax.numpy as jnp
from jax.experimental import pallas as pl
from jax.experimental.pallas import tpu as pltpu

EPS = 1e-15      # LiteMLA eps
BN_EPS = 1e-5    # nn.BatchNorm2d default eps
DW_K = 5         # scales=(5,)


# ----------------------------------------------------------------------------------
# Pallas kernels
# ----------------------------------------------------------------------------------
def _qkv_kernel(x_ref, w_ref, o_ref):
    # x_ref: (1, Cin, N) channel-major tokens (free reshape of NCHW — the transpose is
    # folded into this matmul), w_ref: (Cin, C3), o_ref: (1, N, C3).
    o_ref[0] = jax.lax.dot_general(
        x_ref[0], w_ref[...], (((0,), (0,)), ((), ())),
        preferred_element_type=jnp.float32)


def _dw_attn_proj_kernel(qkv_ref, xp_ref, wdw_ref, wg_ref, mask_ref,
                         wp1_ref, wp2_ref, bias_ref, o_ref):
    # qkv_ref: (1, N, C3) part-major [Q | K | V] tokens (stream 1).
    # xp_ref:  (1, Hp, Wp, C3) zero-padded NHWC qkv image (for the 5x5 depthwise conv).
    # wdw_ref: (K, K, C3) depthwise weights; wg_ref: (C3, C3) block-diag grouped 1x1.
    # mask_ref: (td, td) block-diagonal head mask (dim x dim blocks of ones).
    # wp1_ref / wp2_ref: (Cout, td) proj weight halves with BN scale folded in.
    # bias_ref: (Cout, 1) fused BN bias.  o_ref: (1, Cout, N) channel-major output.
    K = wdw_ref.shape[0]
    Hp, Wp, C3 = xp_ref.shape[1], xp_ref.shape[2], xp_ref.shape[3]
    H, W = Hp - K + 1, Wp - K + 1
    N = H * W
    td = C3 // 3

    # ---- 5x5 depthwise conv (VPU) with the width shift hoisted: 5 unaligned slices
    # instead of 25; the inner row shift only indexes the leading dim (cheap).
    x = xp_ref[0]
    acc = jnp.zeros((H, W, C3), jnp.float32)
    for dj in range(K):
        xj = x[:, dj:dj + W, :]                       # (Hp, W, C3)
        for di in range(K):
            acc = acc + xj[di:di + H] * wdw_ref[di, dj]

    # ---- grouped 1x1 conv as a dense block-diagonal matmul on the resident acc;
    # (H, W, C3) -> (N, C3) collapses leading dims only (W % 8 == 0).
    agg = jnp.dot(acc.reshape(N, C3), wg_ref[...], preferred_element_type=jnp.float32)

    # ---- ReLU linear attention, all heads at once, + fused proj (per stream) ----
    mask = mask_ref[...]

    def stream(xt, wp_t):
        q = jnp.maximum(xt[:, 0:td], 0.0)             # kernel_func = relu
        k = jnp.maximum(xt[:, td:2 * td], 0.0)
        v = xt[:, 2 * td:3 * td]
        # All heads at once: per-head k^T v blocks live on the diagonal of the full
        # (td, td) product; the block-diagonal mask removes cross-head terms.
        kv = jax.lax.dot_general(k, v, (((0,), (0,)), ((), ())),
                                 preferred_element_type=jnp.float32)       # (td, td)
        ksum = jnp.sum(k, axis=0, keepdims=True)                            # (1, td)
        num = jnp.dot(q, kv * mask, preferred_element_type=jnp.float32)     # (N, td)
        den = jnp.dot(q * ksum, mask, preferred_element_type=jnp.float32)   # (N, td)
        attn = num / (den + EPS)
        # (Cout, td) x (N, td)^T -> (Cout, N): proj with the transpose fused into the
        # matmul so the output store is lane-dense (N in lanes).
        return jax.lax.dot_general(wp_t, attn, (((1,), (1,)), ((), ())),
                                   preferred_element_type=jnp.float32)

    y = stream(qkv_ref[0], wp1_ref[...]) + stream(agg, wp2_ref[...])
    o_ref[0] = y + bias_ref[...]


# ----------------------------------------------------------------------------------
# Pallas wrappers
# ----------------------------------------------------------------------------------
def qkv_pointwise(x_ncn, w):
    B, Cin, N = x_ncn.shape
    C3 = w.shape[1]
    return pl.pallas_call(
        _qkv_kernel,
        out_shape=jax.ShapeDtypeStruct((B, N, C3), jnp.float32),
        grid=(B,),
        in_specs=[
            pl.BlockSpec((1, Cin, N), lambda b: (b, 0, 0)),
            pl.BlockSpec((Cin, C3), lambda b: (0, 0)),
        ],
        out_specs=pl.BlockSpec((1, N, C3), lambda b: (b, 0, 0)),
        compiler_params=pltpu.CompilerParams(dimension_semantics=("parallel",)),
    )(x_ncn, w)


def dw_attention_proj(qkv_tok, qkv_pad, w_dw, w_group, mask, wp1_t, wp2_t, bias_col):
    """Fused 5x5 depthwise conv + grouped 1x1 conv + ReLU linear attention (both
    streams, all heads) + proj 1x1 conv + eval-mode BN affine — one pallas_call."""
    B, N, C3 = qkv_tok.shape
    _, Hp, Wp, _ = qkv_pad.shape
    K = w_dw.shape[0]
    td = C3 // 3
    Cout = wp1_t.shape[0]
    return pl.pallas_call(
        _dw_attn_proj_kernel,
        out_shape=jax.ShapeDtypeStruct((B, Cout, N), jnp.float32),
        grid=(B,),
        in_specs=[
            pl.BlockSpec((1, N, C3), lambda b: (b, 0, 0)),
            pl.BlockSpec((1, Hp, Wp, C3), lambda b: (b, 0, 0, 0)),
            pl.BlockSpec((K, K, C3), lambda b: (0, 0, 0)),
            pl.BlockSpec((C3, C3), lambda b: (0, 0)),
            pl.BlockSpec((td, td), lambda b: (0, 0)),
            pl.BlockSpec((Cout, td), lambda b: (0, 0)),
            pl.BlockSpec((Cout, td), lambda b: (0, 0)),
            pl.BlockSpec((Cout, 1), lambda b: (0, 0)),
        ],
        out_specs=pl.BlockSpec((1, Cout, N), lambda b: (b, 0, 0)),
        compiler_params=pltpu.CompilerParams(dimension_semantics=("parallel",)),
    )(qkv_tok, qkv_pad, w_dw, w_group, mask, wp1_t, wp2_t, bias_col)


# ----------------------------------------------------------------------------------
# LiteMLA forward (glue around the kernels)
# ----------------------------------------------------------------------------------
def lite_mla_forward(x_nchw, params, dim=8):
    B, Cin, H, W = x_nchw.shape
    N = H * W
    C3 = params["w_qkv"].shape[1]
    total_dim = C3 // 3
    heads = total_dim // dim
    Cout = params["w_proj"].shape[1]
    K = params["w_dw"].shape[0]
    p = (K - 1) // 2

    # Channel permutation: PyTorch's interleaved per-head [q|k|v] order
    # (old = h*3*dim + part*dim + d) -> part-major [Q | K | V] (new = part*td + h*dim + d).
    perm = jnp.array([h * 3 * dim + pt * dim + d
                      for pt in range(3) for h in range(heads) for d in range(dim)],
                     dtype=jnp.int32)
    w_qkv_p = params["w_qkv"][:, perm]
    w_dw_p = params["w_dw"][:, :, perm]
    w_group_p = params["w_group"][perm][:, perm]   # stays block-diagonal per 8-ch group

    # proj weight with BN scale folded in; split into per-stream halves, pre-transposed.
    scale = params["bn_gamma"] / jnp.sqrt(params["bn_var"] + BN_EPS)
    bias = params["bn_beta"] - params["bn_mean"] * scale
    w_proj_s = params["w_proj"] * scale[None, :]
    wp1_t = w_proj_s[:total_dim].T                 # (Cout, td) — heads from qkv stream
    wp2_t = w_proj_s[total_dim:].T                 # (Cout, td) — heads from aggreg stream
    bias_col = bias[:, None]                       # (Cout, 1)

    # Block-diagonal head mask (dim x dim blocks of ones).
    hid = jnp.arange(total_dim) // dim
    mask = (hid[:, None] == hid[None, :]).astype(jnp.float32)

    # qkv 1x1 conv: transpose folded into the matmul (input is a free reshape of NCHW).
    x_ncn = x_nchw.reshape(B, Cin, N)
    qkv = qkv_pointwise(x_ncn, w_qkv_p)                               # (B, N, C3)

    # Zero-padded NHWC view of qkv for the 'same' 5x5 depthwise conv (free reshape + pad).
    qkv_pad = jnp.pad(qkv.reshape(B, H, W, C3), ((0, 0), (p, p), (p, p), (0, 0)))

    # Fused depthwise + grouped conv + attention (both streams) + proj + BN.
    y = dw_attention_proj(qkv, qkv_pad, w_dw_p, w_group_p, mask,
                          wp1_t, wp2_t, bias_col)                     # (B, Cout, N)
    return y.reshape(B, Cout, H, W)                                   # NCHW, no transpose


# ----------------------------------------------------------------------------------
# Deterministic parameter init (synthetic; shapes follow LiteMLA.__init__)
# ----------------------------------------------------------------------------------
def init_params(key, in_channels=32, out_channels=32, dim=8, scales=(5,)):
    heads = in_channels // dim
    total_dim = heads * dim
    C3 = 3 * total_dim
    ngroups = 3 * heads
    ks = jax.random.split(key, 8)
    w_qkv = 0.1 * jax.random.normal(ks[0], (in_channels, C3), jnp.float32)
    w_dw = 0.1 * jax.random.normal(ks[1], (DW_K, DW_K, C3), jnp.float32)
    g_blocks = 0.2 * jax.random.normal(ks[2], (ngroups, dim, dim), jnp.float32)
    w_group = jax.scipy.linalg.block_diag(*[g_blocks[g] for g in range(ngroups)])
    w_proj = 0.1 * jax.random.normal(
        ks[3], (total_dim * (1 + len(scales)), out_channels), jnp.float32)
    bn_gamma = 1.0 + 0.1 * jax.random.normal(ks[4], (out_channels,), jnp.float32)
    bn_beta = 0.1 * jax.random.normal(ks[5], (out_channels,), jnp.float32)
    bn_mean = 0.1 * jax.random.normal(ks[6], (out_channels,), jnp.float32)
    bn_var = 0.5 + jnp.abs(jax.random.normal(ks[7], (out_channels,), jnp.float32))
    return dict(w_qkv=w_qkv, w_dw=w_dw, w_group=w_group, w_proj=w_proj,
                bn_gamma=bn_gamma, bn_beta=bn_beta, bn_mean=bn_mean, bn_var=bn_var)


# ----------------------------------------------------------------------------------
# Pure-JAX reference mirroring the PyTorch forward (for validation)
# ----------------------------------------------------------------------------------
def reference_forward(x_nchw, params, dim=8):
    hp = jax.lax.Precision.HIGHEST
    B, Cin, H, W = x_nchw.shape
    qkv = jnp.einsum("bchw,cd->bdhw", x_nchw, params["w_qkv"], precision=hp)
    w_dw = jnp.transpose(params["w_dw"], (2, 0, 1))[:, None]     # (C, 1, K, K)
    dw = jax.lax.conv_general_dilated(
        qkv, w_dw, (1, 1), ((2, 2), (2, 2)),
        feature_group_count=qkv.shape[1],
        dimension_numbers=("NCHW", "OIHW", "NCHW"), precision=hp)
    agg = jnp.einsum("bchw,cd->bdhw", dw, params["w_group"], precision=hp)
    cat = jnp.concatenate([qkv, agg], axis=1)
    t = cat.reshape(B, -1, 3 * dim, H * W).transpose(0, 1, 3, 2)
    q = jax.nn.relu(t[..., :dim])
    k = jax.nn.relu(t[..., dim:2 * dim])
    v = t[..., 2 * dim:]
    vpad = jnp.concatenate([v, jnp.ones(v.shape[:-1] + (1,), v.dtype)], axis=-1)
    kv = jnp.einsum("bhnd,bhne->bhde", k, vpad, precision=hp)
    out = jnp.einsum("bhnd,bhde->bhne", q, kv, precision=hp)
    out = out[..., :-1] / (out[..., -1:] + EPS)
    out = out.transpose(0, 1, 3, 2).reshape(B, -1, H, W)
    y = jnp.einsum("bchw,cd->bdhw", out, params["w_proj"], precision=hp)
    scale = params["bn_gamma"] / jnp.sqrt(params["bn_var"] + BN_EPS)
    bias = params["bn_beta"] - params["bn_mean"] * scale
    return y * scale[None, :, None, None] + bias[None, :, None, None]


if __name__ == "__main__":
    key = jax.random.PRNGKey(0)
    kx, kp = jax.random.split(key)
    # in_channels=32, dim=8 -> heads=4, total_dim=32, 3*total_dim=96, 8 attention heads
    x = jax.random.normal(kx, (2, 32, 16, 16), jnp.float32)
    params = init_params(kp, in_channels=32, out_channels=32, dim=8)

    fwd = jax.jit(functools.partial(lite_mla_forward, dim=8))
    y = fwd(x, params)
    y = jax.block_until_ready(y)

    ref = reference_forward(x, params, dim=8)
    ref = jax.block_until_ready(ref)

    assert y.shape == (2, 32, 16, 16), y.shape
    max_err = float(jnp.max(jnp.abs(y - ref)))
    tol = 2e-2 * (1.0 + float(jnp.max(jnp.abs(ref))))
    assert max_err < tol, f"max_err={max_err} tol={tol}"
    print("KERNEL_OK")
</pallas_src>

<mosaic_0001>
module attributes {stable_mosaic.version = 11 : i64} {
  func.func @_qkv_kernel(%arg0: i32, %arg1: memref<1x32x256xf32, #tpu.memory_space<vmem>>, %arg2: memref<32x96xf32, #tpu.memory_space<vmem>>, %arg3: memref<1x256x96xf32, #tpu.memory_space<vmem>>) attributes {dimension_semantics = [#tpu.dimension_semantics<parallel>], iteration_bounds = array<i64: 2>, scalar_prefetch = 0 : i64, scratch_operands = 0 : i64, tpu.core_type = #tpu.core_type<tc>, window_params = [{transform_indices = @transform_0, window_bounds = array<i64: 1, 32, 256>}, {pipeline_mode = #tpu.pipeline_mode<synchronous>, transform_indices = @transform_1, window_bounds = array<i64: 32, 96>}, {transform_indices = @transform_2, window_bounds = array<i64: 1, 256, 96>}]} {
    %c0 = arith.constant 0 : index
    %c0_0 = arith.constant 0 : index
    %c0_1 = arith.constant 0 : index
    %0 = vector.load %arg1[%c0, %c0_0, %c0_1] : memref<1x32x256xf32, #tpu.memory_space<vmem>>, vector<1x32x256xf32>
    %1 = vector.shape_cast %0 : vector<1x32x256xf32> to vector<32x256xf32>
    %c0_2 = arith.constant 0 : index
    %c0_3 = arith.constant 0 : index
    %2 = vector.load %arg2[%c0_2, %c0_3] : memref<32x96xf32, #tpu.memory_space<vmem>>, vector<32x96xf32>
    %cst = arith.constant dense<0.000000e+00> : vector<256x96xf32>
    %3 = tpu.matmul %1, %2, %cst {dimension_numbers = #tpu.dot_dimension_numbers<[0], [0], [1], [1], [0, 1, 1, 1], [], []>} : vector<32x256xf32>, vector<32x96xf32>, vector<256x96xf32> -> vector<256x96xf32>
    %c0_4 = arith.constant 0 : index
    %c0_5 = arith.constant 0 : index
    %c0_6 = arith.constant 0 : index
    %4 = vector.load %arg3[%c0_4, %c0_5, %c0_6] : memref<1x256x96xf32, #tpu.memory_space<vmem>>, vector<1x256x96xf32>
    %5 = vector.shape_cast %4 : vector<1x256x96xf32> to vector<256x96xf32>
    %6 = vector.shape_cast %3 : vector<256x96xf32> to vector<1x256x96xf32>
    tpu.vector_store %arg3[%c0_4, %c0_5, %c0_6], %6 {strides = array<i32>} : memref<1x256x96xf32, #tpu.memory_space<vmem>>, vector<1x256x96xf32>,
    return
  }
  func.func @transform_0(%arg0: i32) -> (i32, i32, i32) {
    %c0_i32 = arith.constant 0 : i32
    %c0_i32_0 = arith.constant 0 : i32
    %c0_i32_1 = arith.constant 0 : i32
    return %arg0, %c0_i32, %c0_i32_0 : i32, i32, i32
  }
  func.func @transform_1(%arg0: i32) -> (i32, i32) {
    %c0_i32 = arith.constant 0 : i32
    %c0_i32_0 = arith.constant 0 : i32
    %c0_i32_1 = arith.constant 0 : i32
    return %c0_i32, %c0_i32_0 : i32, i32
  }
  func.func @transform_2(%arg0: i32) -> (i32, i32, i32) {
    %c0_i32 = arith.constant 0 : i32
    %c0_i32_0 = arith.constant 0 : i32
    %c0_i32_1 = arith.constant 0 : i32
    return %arg0, %c0_i32, %c0_i32_0 : i32, i32, i32
  }
}

module attributes {stable_mosaic.version = 11 : i64} {
  func.func @_dw_attn_proj_kernel(%arg0: i32, %arg1: memref<1x256x96xf32, #tpu.memory_space<vmem>>, %arg2: memref<1x20x20x96xf32, #tpu.memory_space<vmem>>, %arg3: memref<5x5x96xf32, #tpu.memory_space<vmem>>, %arg4: memref<96x96xf32, #tpu.memory_space<vmem>>, %arg5: memref<32x32xf32, #tpu.memory_space<vmem>>, %arg6: memref<32x32xf32, #tpu.memory_space<vmem>>, %arg7: memref<32x32xf32, #tpu.memory_space<vmem>>, %arg8: memref<32x1xf32, #tpu.memory_space<vmem>>, %arg9: memref<1x32x256xf32, #tpu.memory_space<vmem>>) attributes {dimension_semantics = [#tpu.dimension_semantics<parallel>], iteration_bounds = array<i64: 2>, scalar_prefetch = 0 : i64, scratch_operands = 0 : i64, tpu.core_type = #tpu.core_type<tc>, window_params = [{transform_indices = @transform_0, window_bounds = array<i64: 1, 256, 96>}, {transform_indices = @transform_1, window_bounds = array<i64: 1, 20, 20, 96>}, {pipeline_mode = #tpu.pipeline_mode<synchronous>, transform_indices = @transform_2, window_bounds = array<i64: 5, 5, 96>}, {pipeline_mode = #tpu.pipeline_mode<synchronous>, transform_indices = @transform_3, window_bounds = array<i64: 96, 96>}, {pipeline_mode = #tpu.pipeline_mode<synchronous>, transform_indices = @transform_4, window_bounds = array<i64: 32, 32>}, {pipeline_mode = #tpu.pipeline_mode<synchronous>, transform_indices = @transform_5, window_bounds = array<i64: 32, 32>}, {pipeline_mode = #tpu.pipeline_mode<synchronous>, transform_indices = @transform_6, window_bounds = array<i64: 32, 32>}, {pipeline_mode = #tpu.pipeline_mode<synchronous>, transform_indices = @transform_7, window_bounds = array<i64: 32, 1>}, {transform_indices = @transform_8, window_bounds = array<i64: 1, 32, 256>}]} {
    %c0 = arith.constant 0 : index
    %c0_0 = arith.constant 0 : index
    %c0_1 = arith.constant 0 : index
    %c0_2 = arith.constant 0 : index
    %0 = vector.load %arg2[%c0, %c0_0, %c0_1, %c0_2] : memref<1x20x20x96xf32, #tpu.memory_space<vmem>>, vector<1x20x20x96xf32>
    %1 = vector.shape_cast %0 : vector<1x20x20x96xf32> to vector<20x20x96xf32>
    %cst = arith.constant 0.000000e+00 : f32
    %2 = vector.broadcast %cst : f32 to vector<16x16x96xf32>
    %3 = vector.extract_strided_slice %1 {offsets = [0, 0, 0], sizes = [20, 16, 96], strides = [1, 1, 1]} : vector<20x20x96xf32> to vector<20x16x96xf32>
    %4 = vector.extract_strided_slice %3 {offsets = [0, 0, 0], sizes = [16, 16, 96], strides = [1, 1, 1]} : vector<20x16x96xf32> to vector<16x16x96xf32>
    %c0_3 = arith.constant 0 : index
    %c0_4 = arith.constant 0 : index
    %c0_5 = arith.constant 0 : index
    %5 = vector.load %arg3[%c0_3, %c0_4, %c0_5] : memref<5x5x96xf32, #tpu.memory_space<vmem>>, vector<1x1x96xf32>
    %6 = vector.shape_cast %5 : vector<1x1x96xf32> to vector<96xf32>
    %7 = vector.shape_cast %6 : vector<96xf32> to vector<1x1x96xf32>
    %8 = vector.broadcast %7 : vector<1x1x96xf32> to vector<16x16x96xf32>
    %9 = arith.mulf %4, %8 : vector<16x16x96xf32>
    %10 = arith.addf %2, %9 : vector<16x16x96xf32>
    %11 = vector.extract_strided_slice %3 {offsets = [1, 0, 0], sizes = [16, 16, 96], strides = [1, 1, 1]} : vector<20x16x96xf32> to vector<16x16x96xf32>
    %c1 = arith.constant 1 : index
    %c0_6 = arith.constant 0 : index
    %c0_7 = arith.constant 0 : index
    %12 = vector.load %arg3[%c1, %c0_6, %c0_7] : memref<5x5x96xf32, #tpu.memory_space<vmem>>, vector<1x1x96xf32>
    %13 = vector.shape_cast %12 : vector<1x1x96xf32> to vector<96xf32>
    %14 = vector.shape_cast %13 : vector<96xf32> to vector<1x1x96xf32>
    %15 = vector.broadcast %14 : vector<1x1x96xf32> to vector<16x16x96xf32>
    %16 = arith.mulf %11, %15 : vector<16x16x96xf32>
    %17 = arith.addf %10, %16 : vector<16x16x96xf32>
    %18 = vector.extract_strided_slice %3 {offsets = [2, 0, 0], sizes = [16, 16, 96], strides = [1, 1, 1]} : vector<20x16x96xf32> to vector<16x16x96xf32>
    %c2 = arith.constant 2 : index
    %c0_8 = arith.constant 0 : index
    %c0_9 = arith.constant 0 : index
    %19 = vector.load %arg3[%c2, %c0_8, %c0_9] : memref<5x5x96xf32, #tpu.memory_space<vmem>>, vector<1x1x96xf32>
    %20 = vector.shape_cast %19 : vector<1x1x96xf32> to vector<96xf32>
    %21 = vector.shape_cast %20 : vector<96xf32> to vector<1x1x96xf32>
    %22 = vector.broadcast %21 : vector<1x1x96xf32> to vector<16x16x96xf32>
    %23 = arith.mulf %18, %22 : vector<16x16x96xf32>
    %24 = arith.addf %17, %23 : vector<16x16x96xf32>
    %25 = vector.extract_strided_slice %3 {offsets = [3, 0, 0], sizes = [16, 16, 96], strides = [1, 1, 1]} : vector<20x16x96xf32> to vector<16x16x96xf32>
    %c3 = arith.constant 3 : index
    %c0_10 = arith.constant 0 : index
    %c0_11 = arith.constant 0 : index
    %26 = vector.load %arg3[%c3, %c0_10, %c0_11] : memref<5x5x96xf32, #tpu.memory_space<vmem>>, vector<1x1x96xf32>
    %27 = vector.shape_cast %26 : vector<1x1x96xf32> to vector<96xf32>
    %28 = vector.shape_cast %27 : vector<96xf32> to vector<1x1x96xf32>
    %29 = vector.broadcast %28 : vector<1x1x96xf32> to vector<16x16x96xf32>
    %30 = arith.mulf %25, %29 : vector<16x16x96xf32>
    %31 = arith.addf %24, %30 : vector<16x16x96xf32>
    %32 = vector.extract_strided_slice %3 {offsets = [4, 0, 0], sizes = [16, 16, 96], strides = [1, 1, 1]} : vector<20x16x96xf32> to vector<16x16x96xf32>
    %c4 = arith.constant 4 : index
    %c0_12 = arith.constant 0 : index
    %c0_13 = arith.constant 0 : index
    %33 = vector.load %arg3[%c4, %c0_12, %c0_13] : memref<5x5x96xf32, #tpu.memory_space<vmem>>, vector<1x1x96xf32>
    %34 = vector.shape_cast %33 : vector<1x1x96xf32> to vector<96xf32>
    %35 = vector.shape_cast %34 : vector<96xf32> to vector<1x1x96xf32>
    %36 = vector.broadcast %35 : vector<1x1x96xf32> to vector<16x16x96xf32>
    %37 = arith.mulf %32, %36 : vector<16x16x96xf32>
    %38 = arith.addf %31, %37 : vector<16x16x96xf32>
    %39 = vector.extract_strided_slice %1 {offsets = [0, 1, 0], sizes = [20, 16, 96], strides = [1, 1, 1]} : vector<20x20x96xf32> to vector<20x16x96xf32>
    %40 = vector.extract_strided_slice %39 {offsets = [0, 0, 0], sizes = [16, 16, 96], strides = [1, 1, 1]} : vector<20x16x96xf32> to vector<16x16x96xf32>
    %c0_14 = arith.constant 0 : index
    %c1_15 = arith.constant 1 : index
    %c0_16 = arith.constant 0 : index
    %41 = vector.load %arg3[%c0_14, %c1_15, %c0_16] : memref<5x5x96xf32, #tpu.memory_space<vmem>>, vector<1x1x96xf32>
    %42 = vector.shape_cast %41 : vector<1x1x96xf32> to vector<96xf32>
    %43 = vector.shape_cast %42 : vector<96xf32> to vector<1x1x96xf32>
    %44 = vector.broadcast %43 : vector<1x1x96xf32> to vector<16x16x96xf32>
    %45 = arith.mulf %40, %44 : vector<16x16x96xf32>
    %46 = arith.addf %38, %45 : vector<16x16x96xf32>
    %47 = vector.extract_strided_slice %39 {offsets = [1, 0, 0], sizes = [16, 16, 96], strides = [1, 1, 1]} : vector<20x16x96xf32> to vector<16x16x96xf32>
    %c1_17 = arith.constant 1 : index
    %c1_18 = arith.constant 1 : index
    %c0_19 = arith.constant 0 : index
    %48 = vector.load %arg3[%c1_17, %c1_18, %c0_19] : memref<5x5x96xf32, #tpu.memory_space<vmem>>, vector<1x1x96xf32>
    %49 = vector.shape_cast %48 : vector<1x1x96xf32> to vector<96xf32>
    %50 = vector.shape_cast %49 : vector<96xf32> to vector<1x1x96xf32>
    %51 = vector.broadcast %50 : vector<1x1x96xf32> to vector<16x16x96xf32>
    %52 = arith.mulf %47, %51 : vector<16x16x96xf32>
    %53 = arith.addf %46, %52 : vector<16x16x96xf32>
    %54 = vector.extract_strided_slice %39 {offsets = [2, 0, 0], sizes = [16, 16, 96], strides = [1, 1, 1]} : vector<20x16x96xf32> to vector<16x16x96xf32>
    %c2_20 = arith.constant 2 : index
    %c1_21 = arith.constant 1 : index
    %c0_22 = arith.constant 0 : index
    %55 = vector.load %arg3[%c2_20, %c1_21, %c0_22] : memref<5x5x96xf32, #tpu.memory_space<vmem>>, vector<1x1x96xf32>
    %56 = vector.shape_cast %55 : vector<1x1x96xf32> to vector<96xf32>
    %57 = vector.shape_cast %56 : vector<96xf32> to vector<1x1x96xf32>
    %58 = vector.broadcast %57 : vector<1x1x96xf32> to vector<16x16x96xf32>
    %59 = arith.mulf %54, %58 : vector<16x16x96xf32>
    %60 = arith.addf %53, %59 : vector<16x16x96xf32>
    %61 = vector.extract_strided_slice %39 {offsets = [3, 0, 0], sizes = [16, 16, 96], strides = [1, 1, 1]} : vector<20x16x96xf32> to vector<16x16x96xf32>
    %c3_23 = arith.constant 3 : index
    %c1_24 = arith.constant 1 : index
    %c0_25 = arith.constant 0 : index
    %62 = vector.load %arg3[%c3_23, %c1_24, %c0_25] : memref<5x5x96xf32, #tpu.memory_space<vmem>>, vector<1x1x96xf32>
    %63 = vector.shape_cast %62 : vector<1x1x96xf32> to vector<96xf32>
    %64 = vector.shape_cast %63 : vector<96xf32> to vector<1x1x96xf32>
    %65 = vector.broadcast %64 : vector<1x1x96xf32> to vector<16x16x96xf32>
    %66 = arith.mulf %61, %65 : vector<16x16x96xf32>
    %67 = arith.addf %60, %66 : vector<16x16x96xf32>
    %68 = vector.extract_strided_slice %39 {offsets = [4, 0, 0], sizes = [16, 16, 96], strides = [1, 1, 1]} : vector<20x16x96xf32> to vector<16x16x96xf32>
    %c4_26 = arith.constant 4 : index
    %c1_27 = arith.constant 1 : index
    %c0_28 = arith.constant 0 : index
    %69 = vector.load %arg3[%c4_26, %c1_27, %c0_28] : memref<5x5x96xf32, #tpu.memory_space<vmem>>, vector<1x1x96xf32>
    %70 = vector.shape_cast %69 : vector<1x1x96xf32> to vector<96xf32>
    %71 = vector.shape_cast %70 : vector<96xf32> to vector<1x1x96xf32>
    %72 = vector.broadcast %71 : vector<1x1x96xf32> to vector<16x16x96xf32>
    %73 = arith.mulf %68, %72 : vector<16x16x96xf32>
    %74 = arith.addf %67, %73 : vector<16x16x96xf32>
    %75 = vector.extract_strided_slice %1 {offsets = [0, 2, 0], sizes = [20, 16, 96], strides = [1, 1, 1]} : vector<20x20x96xf32> to vector<20x16x96xf32>
    %76 = vector.extract_strided_slice %75 {offsets = [0, 0, 0], sizes = [16, 16, 96], strides = [1, 1, 1]} : vector<20x16x96xf32> to vector<16x16x96xf32>
    %c0_29 = arith.constant 0 : index
    %c2_30 = arith.constant 2 : index
    %c0_31 = arith.constant 0 : index
    %77 = vector.load %arg3[%c0_29, %c2_30, %c0_31] : memref<5x5x96xf32, #tpu.memory_space<vmem>>, vector<1x1x96xf32>
    %78 = vector.shape_cast %77 : vector<1x1x96xf32> to vector<96xf32>
    %79 = vector.shape_cast %78 : vector<96xf32> to vector<1x1x96xf32>
    %80 = vector.broadcast %79 : vector<1x1x96xf32> to vector<16x16x96xf32>
    %81 = arith.mulf %76, %80 : vector<16x16x96xf32>
    %82 = arith.addf %74, %81 : vector<16x16x96xf32>
    %83 = vector.extract_strided_slice %75 {offsets = [1, 0, 0], sizes = [16, 16, 96], strides = [1, 1, 1]} : vector<20x16x96xf32> to vector<16x16x96xf32>
    %c1_32 = arith.constant 1 : index
    %c2_33 = arith.constant 2 : index
    %c0_34 = arith.constant 0 : index
    %84 = vector.load %arg3[%c1_32, %c2_33, %c0_34] : memref<5x5x96xf32, #tpu.memory_space<vmem>>, vector<1x1x96xf32>
    %85 = vector.shape_cast %84 : vector<1x1x96xf32> to vector<96xf32>
    %86 = vector.shape_cast %85 : vector<96xf32> to vector<1x1x96xf32>
    %87 = vector.broadcast %86 : vector<1x1x96xf32> to vector<16x16x96xf32>
    %88 = arith.mulf %83, %87 : vector<16x16x96xf32>
    %89 = arith.addf %82, %88 : vector<16x16x96xf32>
    %90 = vector.extract_strided_slice %75 {offsets = [2, 0, 0], sizes = [16, 16, 96], strides = [1, 1, 1]} : vector<20x16x96xf32> to vector<16x16x96xf32>
    %c2_35 = arith.constant 2 : index
    %c2_36 = arith.constant 2 : index
    %c0_37 = arith.constant 0 : index
    %91 = vector.load %arg3[%c2_35, %c2_36, %c0_37] : memref<5x5x96xf32, #tpu.memory_space<vmem>>, vector<1x1x96xf32>
    %92 = vector.shape_cast %91 : vector<1x1x96xf32> to vector<96xf32>
    %93 = vector.shape_cast %92 : vector<96xf32> to vector<1x1x96xf32>
    %94 = vector.broadcast %93 : vector<1x1x96xf32> to vector<16x16x96xf32>
    %95 = arith.mulf %90, %94 : vector<16x16x96xf32>
    %96 = arith.addf %89, %95 : vector<16x16x96xf32>
    %97 = vector.extract_strided_slice %75 {offsets = [3, 0, 0], sizes = [16, 16, 96], strides = [1, 1, 1]} : vector<20x16x96xf32> to vector<16x16x96xf32>
    %c3_38 = arith.constant 3 : index
    %c2_39 = arith.constant 2 : index
    %c0_40 = arith.constant 0 : index
    %98 = vector.load %arg3[%c3_38, %c2_39, %c0_40] : memref<5x5x96xf32, #tpu.memory_space<vmem>>, vector<1x1x96xf32>
    %99 = vector.shape_cast %98 : vector<1x1x96xf32> to vector<96xf32>
    %100 = vector.shape_cast %99 : vector<96xf32> to vector<1x1x96xf32>
    %101 = vector.broadcast %100 : vector<1x1x96xf32> to vector<16x16x96xf32>
    %102 = arith.mulf %97, %101 : vector<16x16x96xf32>
    %103 = arith.addf %96, %102 : vector<16x16x96xf32>
    %104 = vector.extract_strided_slice %75 {offsets = [4, 0, 0], sizes = [16, 16, 96], strides = [1, 1, 1]} : vector<20x16x96xf32> to vector<16x16x96xf32>
    %c4_41 = arith.constant 4 : index
    %c2_42 = arith.constant 2 : index
    %c0_43 = arith.constant 0 : index
    %105 = vector.load %arg3[%c4_41, %c2_42, %c0_43] : memref<5x5x96xf32, #tpu.memory_space<vmem>>, vector<1x1x96xf32>
    %106 = vector.shape_cast %105 : vector<1x1x96xf32> to vector<96xf32>
    %107 = vector.shape_cast %106 : vector<96xf32> to vector<1x1x96xf32>
    %108 = vector.broadcast %107 : vector<1x1x96xf32> to vector<16x16x96xf32>
    %109 = arith.mulf %104, %108 : vector<16x16x96xf32>
    %110 = arith.addf %103, %109 : vector<16x16x96xf32>
    %111 = vector.extract_strided_slice %1 {offsets = [0, 3, 0], sizes = [20, 16, 96], strides = [1, 1, 1]} : vector<20x20x96xf32> to vector<20x16x96xf32>
    %112 = vector.extract_strided_slice %111 {offsets = [0, 0, 0], sizes = [16, 16, 96], strides = [1, 1, 1]} : vector<20x16x96xf32> to vector<16x16x96xf32>
    %c0_44 = arith.constant 0 : index
    %c3_45 = arith.constant 3 : index
    %c0_46 = arith.constant 0 : index
    %113 = vector.load %arg3[%c0_44, %c3_45, %c0_46] : memref<5x5x96xf32, #tpu.memory_space<vmem>>, vector<1x1x96xf32>
    %114 = vector.shape_cast %113 : vector<1x1x96xf32> to vector<96xf32>
    %115 = vector.shape_cast %114 : vector<96xf32> to vector<1x1x96xf32>
    %116 = vector.broadcast %115 : vector<1x1x96xf32> to vector<16x16x96xf32>
    %117 = arith.mulf %112, %116 : vector<16x16x96xf32>
    %118 = arith.addf %110, %117 : vector<16x16x96xf32>
    %119 = vector.extract_strided_slice %111 {offsets = [1, 0, 0], sizes = [16, 16, 96], strides = [1, 1, 1]} : vector<20x16x96xf32> to vector<16x16x96xf32>
    %c1_47 = arith.constant 1 : index
    %c3_48 = arith.constant 3 : index
    %c0_49 = arith.constant 0 : index
    %120 = vector.load %arg3[%c1_47, %c3_48, %c0_49] : memref<5x5x96xf32, #tpu.memory_space<vmem>>, vector<1x1x96xf32>
    %121 = vector.shape_cast %120 : vector<1x1x96xf32> to vector<96xf32>
    %122 = vector.shape_cast %121 : vector<96xf32> to vector<1x1x96xf32>
    %123 = vector.broadcast %122 : vector<1x1x96xf32> to vector<16x16x96xf32>
    %124 = arith.mulf %119, %123 : vector<16x16x96xf32>
    %125 = arith.addf %118, %124 : vector<16x16x96xf32>
    %126 = vector.extract_strided_slice %111 {offsets = [2, 0, 0], sizes = [16, 16, 96], strides = [1, 1, 1]} : vector<20x16x96xf32> to vector<16x16x96xf32>
    %c2_50 = arith.constant 2 : index
    %c3_51 = arith.constant 3 : index
    %c0_52 = arith.constant 0 : index
    %127 = vector.load %arg3[%c2_50, %c3_51, %c0_52] : memref<5x5x96xf32, #tpu.memory_space<vmem>>, vector<1x1x96xf32>
    %128 = vector.shape_cast %127 : vector<1x1x96xf32> to vector<96xf32>
    %129 = vector.shape_cast %128 : vector<96xf32> to vector<1x1x96xf32>
    %130 = vector.broadcast %129 : vector<1x1x96xf32> to vector<16x16x96xf32>
    %131 = arith.mulf %126, %130 : vector<16x16x96xf32>
    %132 = arith.addf %125, %131 : vector<16x16x96xf32>
    %133 = vector.extract_strided_slice %111 {offsets = [3, 0, 0], sizes = [16, 16, 96], strides = [1, 1, 1]} : vector<20x16x96xf32> to vector<16x16x96xf32>
    %c3_53 = arith.constant 3 : index
    %c3_54 = arith.constant 3 : index
    %c0_55 = arith.constant 0 : index
    %134 = vector.load %arg3[%c3_53, %c3_54, %c0_55] : memref<5x5x96xf32, #tpu.memory_space<vmem>>, vector<1x1x96xf32>
    %135 = vector.shape_cast %134 : vector<1x1x96xf32> to vector<96xf32>
    %136 = vector.shape_cast %135 : vector<96xf32> to vector<1x1x96xf32>
    %137 = vector.broadcast %136 : vector<1x1x96xf32> to vector<16x16x96xf32>
    %138 = arith.mulf %133, %137 : vector<16x16x96xf32>
    %139 = arith.addf %132, %138 : vector<16x16x96xf32>
    %140 = vector.extract_strided_slice %111 {offsets = [4, 0, 0], sizes = [16, 16, 96], strides = [1, 1, 1]} : vector<20x16x96xf32> to vector<16x16x96xf32>
    %c4_56 = arith.constant 4 : index
    %c3_57 = arith.constant 3 : index
    %c0_58 = arith.constant 0 : index
    %141 = vector.load %arg3[%c4_56, %c3_57, %c0_58] : memref<5x5x96xf32, #tpu.memory_space<vmem>>, vector<1x1x96xf32>
    %142 = vector.shape_cast %141 : vector<1x1x96xf32> to vector<96xf32>
    %143 = vector.shape_cast %142 : vector<96xf32> to vector<1x1x96xf32>
    %144 = vector.broadcast %143 : vector<1x1x96xf32> to vector<16x16x96xf32>
    %145 = arith.mulf %140, %144 : vector<16x16x96xf32>
    %146 = arith.addf %139, %145 : vector<16x16x96xf32>
    %147 = vector.extract_strided_slice %1 {offsets = [0, 4, 0], sizes = [20, 16, 96], strides = [1, 1, 1]} : vector<20x20x96xf32> to vector<20x16x96xf32>
    %148 = vector.extract_strided_slice %147 {offsets = [0, 0, 0], sizes = [16, 16, 96], strides = [1, 1, 1]} : vector<20x16x96xf32> to vector<16x16x96xf32>
    %c0_59 = arith.constant 0 : index
    %c4_60 = arith.constant 4 : index
    %c0_61 = arith.constant 0 : index
    %149 = vector.load %arg3[%c0_59, %c4_60, %c0_61] : memref<5x5x96xf32, #tpu.memory_space<vmem>>, vector<1x1x96xf32>
    %150 = vector.shape_cast %149 : vector<1x1x96xf32> to vector<96xf32>
    %151 = vector.shape_cast %150 : vector<96xf32> to vector<1x1x96xf32>
    %152 = vector.broadcast %151 : vector<1x1x96xf32> to vector<16x16x96xf32>
    %153 = arith.mulf %148, %152 : vector<16x16x96xf32>
    %154 = arith.addf %146, %153 : vector<16x16x96xf32>
    %155 = vector.extract_strided_slice %147 {offsets = [1, 0, 0], sizes = [16, 16, 96], strides = [1, 1, 1]} : vector<20x16x96xf32> to vector<16x16x96xf32>
    %c1_62 = arith.constant 1 : index
    %c4_63 = arith.constant 4 : index
    %c0_64 = arith.constant 0 : index
    %156 = vector.load %arg3[%c1_62, %c4_63, %c0_64] : memref<5x5x96xf32, #tpu.memory_space<vmem>>, vector<1x1x96xf32>
    %157 = vector.shape_cast %156 : vector<1x1x96xf32> to vector<96xf32>
    %158 = vector.shape_cast %157 : vector<96xf32> to vector<1x1x96xf32>
    %159 = vector.broadcast %158 : vector<1x1x96xf32> to vector<16x16x96xf32>
    %160 = arith.mulf %155, %159 : vector<16x16x96xf32>
    %161 = arith.addf %154, %160 : vector<16x16x96xf32>
    %162 = vector.extract_strided_slice %147 {offsets = [2, 0, 0], sizes = [16, 16, 96], strides = [1, 1, 1]} : vector<20x16x96xf32> to vector<16x16x96xf32>
    %c2_65 = arith.constant 2 : index
    %c4_66 = arith.constant 4 : index
    %c0_67 = arith.constant 0 : index
    %163 = vector.load %arg3[%c2_65, %c4_66, %c0_67] : memref<5x5x96xf32, #tpu.memory_space<vmem>>, vector<1x1x96xf32>
    %164 = vector.shape_cast %163 : vector<1x1x96xf32> to vector<96xf32>
    %165 = vector.shape_cast %164 : vector<96xf32> to vector<1x1x96xf32>
    %166 = vector.broadcast %165 : vector<1x1x96xf32> to vector<16x16x96xf32>
    %167 = arith.mulf %162, %166 : vector<16x16x96xf32>
    %168 = arith.addf %161, %167 : vector<16x16x96xf32>
    %169 = vector.extract_strided_slice %147 {offsets = [3, 0, 0], sizes = [16, 16, 96], strides = [1, 1, 1]} : vector<20x16x96xf32> to vector<16x16x96xf32>
    %c3_68 = arith.constant 3 : index
    %c4_69 = arith.constant 4 : index
    %c0_70 = arith.constant 0 : index
    %170 = vector.load %arg3[%c3_68, %c4_69, %c0_70] : memref<5x5x96xf32, #tpu.memory_space<vmem>>, vector<1x1x96xf32>
    %171 = vector.shape_cast %170 : vector<1x1x96xf32> to vector<96xf32>
    %172 = vector.shape_cast %171 : vector<96xf32> to vector<1x1x96xf32>
    %173 = vector.broadcast %172 : vector<1x1x96xf32> to vector<16x16x96xf32>
    %174 = arith.mulf %169, %173 : vector<16x16x96xf32>
    %175 = arith.addf %168, %174 : vector<16x16x96xf32>
    %176 = vector.extract_strided_slice %147 {offsets = [4, 0, 0], sizes = [16, 16, 96], strides = [1, 1, 1]} : vector<20x16x96xf32> to vector<16x16x96xf32>
    %c4_71 = arith.constant 4 : index
    %c4_72 = arith.constant 4 : index
    %c0_73 = arith.constant 0 : index
    %177 = vector.load %arg3[%c4_71, %c4_72, %c0_73] : memref<5x5x96xf32, #tpu.memory_space<vmem>>, vector<1x1x96xf32>
    %178 = vector.shape_cast %177 : vector<1x1x96xf32> to vector<96xf32>
    %179 = vector.shape_cast %178 : vector<96xf32> to vector<1x1x96xf32>
    %180 = vector.broadcast %179 : vector<1x1x96xf32> to vector<16x16x96xf32>
    %181 = arith.mulf %176, %180 : vector<16x16x96xf32>
    %182 = arith.addf %175, %181 : vector<16x16x96xf32>
    %183 = vector.shape_cast %182 : vector<16x16x96xf32> to vector<256x96xf32>
    %c0_74 = arith.constant 0 : index
    %c0_75 = arith.constant 0 : index
    %184 = vector.load %arg4[%c0_74, %c0_75] : memref<96x96xf32, #tpu.memory_space<vmem>>, vector<96x96xf32>
    %cst_76 = arith.constant dense<0.000000e+00> : vector<256x96xf32>
    %185 = tpu.matmul %183, %184, %cst_76 {dimension_numbers = #tpu.dot_dimension_numbers<[1], [0], [0], [1], [0, 0, 1, 1], [], []>} : vector<256x96xf32>, vector<96x96xf32>, vector<256x96xf32> -> vector<256x96xf32>
    %c0_77 = arith.constant 0 : index
    %c0_78 = arith.constant 0 : index
    %186 = vector.load %arg5[%c0_77, %c0_78] : memref<32x32xf32, #tpu.memory_space<vmem>>, vector<32x32xf32>
    %c0_79 = arith.constant 0 : index
    %c0_80 = arith.constant 0 : index
    %c0_81 = arith.constant 0 : index
    %187 = vector.load %arg1[%c0_79, %c0_80, %c0_81] : memref<1x256x96xf32, #tpu.memory_space<vmem>>, vector<1x256x96xf32>
    %188 = vector.shape_cast %187 : vector<1x256x96xf32> to vector<256x96xf32>
    %c0_82 = arith.constant 0 : index
    %c0_83 = arith.constant 0 : index
    %189 = vector.load %arg6[%c0_82, %c0_83] : memref<32x32xf32, #tpu.memory_space<vmem>>, vector<32x32xf32>
    %190 = vector.extract_strided_slice %188 {offsets = [0, 0], sizes = [256, 32], strides = [1, 1]} : vector<256x96xf32> to vector<256x32xf32>
    %cst_84 = arith.constant 0.000000e+00 : f32
    %191 = vector.broadcast %cst_84 : f32 to vector<256x32xf32>
    %192 = arith.maximumf %190, %191 : vector<256x32xf32>
    %193 = vector.extract_strided_slice %188 {offsets = [0, 32], sizes = [256, 32], strides = [1, 1]} : vector<256x96xf32> to vector<256x32xf32>
    %cst_85 = arith.constant 0.000000e+00 : f32
    %194 = vector.broadcast %cst_85 : f32 to vector<256x32xf32>
    %195 = arith.maximumf %193, %194 : vector<256x32xf32>
    %196 = vector.extract_strided_slice %188 {offsets = [0, 64], sizes = [256, 32], strides = [1, 1]} : vector<256x96xf32> to vector<256x32xf32>
    %cst_86 = arith.constant dense<0.000000e+00> : vector<32x32xf32>
    %197 = tpu.matmul %195, %196, %cst_86 {dimension_numbers = #tpu.dot_dimension_numbers<[0], [0], [1], [1], [0, 1, 1, 1], [], []>} : vector<256x32xf32>, vector<256x32xf32>, vector<32x32xf32> -> vector<32x32xf32>
    %cst_87 = arith.constant dense<0.000000e+00> : vector<32xf32>
    %198 = vector.multi_reduction <add>, %195, %cst_87 [0] : vector<256x32xf32> to vector<32xf32>
    %199 = vector.shape_cast %198 : vector<32xf32> to vector<1x32xf32>
    %200 = arith.mulf %197, %186 : vector<32x32xf32>
    %cst_88 = arith.constant dense<0.000000e+00> : vector<256x32xf32>
    %201 = tpu.matmul %192, %200, %cst_88 {dimension_numbers = #tpu.dot_dimension_numbers<[1], [0], [0], [1], [0, 0, 1, 1], [], []>} : vector<256x32xf32>, vector<32x32xf32>, vector<256x32xf32> -> vector<256x32xf32>
    %202 = vector.broadcast %199 : vector<1x32xf32> to vector<256x32xf32>
    %203 = arith.mulf %192, %202 : vector<256x32xf32>
    %cst_89 = arith.constant dense<0.000000e+00> : vector<256x32xf32>
    %204 = tpu.matmul %203, %186, %cst_89 {dimension_numbers = #tpu.dot_dimension_numbers<[1], [0], [0], [1], [0, 0, 1, 1], [], []>} : vector<256x32xf32>, vector<32x32xf32>, vector<256x32xf32> -> vector<256x32xf32>
    %cst_90 = arith.constant 1.000000e-15 : f32
    %205 = vector.broadcast %cst_90 : f32 to vector<256x32xf32>
    %206 = arith.addf %204, %205 : vector<256x32xf32>
    %207 = arith.divf %201, %206 : vector<256x32xf32>
    %cst_91 = arith.constant dense<0.000000e+00> : vector<32x256xf32>
    %208 = tpu.matmul %189, %207, %cst_91 {dimension_numbers = #tpu.dot_dimension_numbers<[1], [1], [0], [0], [0, 0, 1, 0], [], []>} : vector<32x32xf32>, vector<256x32xf32>, vector<32x256xf32> -> vector<32x256xf32>
    %c0_92 = arith.constant 0 : index
    %c0_93 = arith.constant 0 : index
    %209 = vector.load %arg7[%c0_92, %c0_93] : memref<32x32xf32, #tpu.memory_space<vmem>>, vector<32x32xf32>
    %210 = vector.extract_strided_slice %185 {offsets = [0, 0], sizes = [256, 32], strides = [1, 1]} : vector<256x96xf32> to vector<256x32xf32>
    %cst_94 = arith.constant 0.000000e+00 : f32
    %211 = vector.broadcast %cst_94 : f32 to vector<256x32xf32>
    %212 = arith.maximumf %210, %211 : vector<256x32xf32>
    %213 = vector.extract_strided_slice %185 {offsets = [0, 32], sizes = [256, 32], strides = [1, 1]} : vector<256x96xf32> to vector<256x32xf32>
    %cst_95 = arith.constant 0.000000e+00 : f32
    %214 = vector.broadcast %cst_95 : f32 to vector<256x32xf32>
    %215 = arith.maximumf %213, %214 : vector<256x32xf32>
    %216 = vector.extract_strided_slice %185 {offsets = [0, 64], sizes = [256, 32], strides = [1, 1]} : vector<256x96xf32> to vector<256x32xf32>
    %cst_96 = arith.constant dense<0.000000e+00> : vector<32x32xf32>
    %217 = tpu.matmul %215, %216, %cst_96 {dimension_numbers = #tpu.dot_dimension_numbers<[0], [0], [1], [1], [0, 1, 1, 1], [], []>} : vector<256x32xf32>, vector<256x32xf32>, vector<32x32xf32> -> vector<32x32xf32>
    %cst_97 = arith.constant dense<0.000000e+00> : vector<32xf32>
    %218 = vector.multi_reduction <add>, %215, %cst_97 [0] : vector<256x32xf32> to vector<32xf32>
    %219 = vector.shape_cast %218 : vector<32xf32> to vector<1x32xf32>
    %220 = arith.mulf %217, %186 : vector<32x32xf32>
    %cst_98 = arith.constant dense<0.000000e+00> : vector<256x32xf32>
    %221 = tpu.matmul %212, %220, %cst_98 {dimension_numbers = #tpu.dot_dimension_numbers<[1], [0], [0], [1], [0, 0, 1, 1], [], []>} : vector<256x32xf32>, vector<32x32xf32>, vector<256x32xf32> -> vector<256x32xf32>
    %222 = vector.broadcast %219 : vector<1x32xf32> to vector<256x32xf32>
    %223 = arith.mulf %212, %222 : vector<256x32xf32>
    %cst_99 = arith.constant dense<0.000000e+00> : vector<256x32xf32>
    %224 = tpu.matmul %223, %186, %cst_99 {dimension_numbers = #tpu.dot_dimension_numbers<[1], [0], [0], [1], [0, 0, 1, 1], [], []>} : vector<256x32xf32>, vector<32x32xf32>, vector<256x32xf32> -> vector<256x32xf32>
    %cst_100 = arith.constant 1.000000e-15 : f32
    %225 = vector.broadcast %cst_100 : f32 to vector<256x32xf32>
    %226 = arith.addf %224, %225 : vector<256x32xf32>
    %227 = arith.divf %221, %226 : vector<256x32xf32>
    %cst_101 = arith.constant dense<0.000000e+00> : vector<32x256xf32>
    %228 = tpu.matmul %209, %227, %cst_101 {dimension_numbers = #tpu.dot_dimension_numbers<[1], [1], [0], [0], [0, 0, 1, 0], [], []>} : vector<32x32xf32>, vector<256x32xf32>, vector<32x256xf32> -> vector<32x256xf32>
    %229 = arith.addf %208, %228 : vector<32x256xf32>
    %c0_102 = arith.constant 0 : index
    %c0_103 = arith.constant 0 : index
    %230 = vector.load %arg8[%c0_102, %c0_103] : memref<32x1xf32, #tpu.memory_space<vmem>>, vector<32x1xf32>
    %231 = vector.broadcast %230 : vector<32x1xf32> to vector<32x256xf32>
    %232 = arith.addf %229, %231 : vector<32x256xf32>
    %c0_104 = arith.constant 0 : index
    %c0_105 = arith.constant 0 : index
    %c0_106 = arith.constant 0 : index
    %233 = vector.load %arg9[%c0_104, %c0_105, %c0_106] : memref<1x32x256xf32, #tpu.memory_space<vmem>>, vector<1x32x256xf32>
    %234 = vector.shape_cast %233 : vector<1x32x256xf32> to vector<32x256xf32>
    %235 = vector.shape_cast %232 : vector<32x256xf32> to vector<1x32x256xf32>
    tpu.vector_store %arg9[%c0_104, %c0_105, %c0_106], %235 {strides = array<i32>} : memref<1x32x256xf32, #tpu.memory_space<vmem>>, vector<1x32x256xf32>,
    return
  }
  func.func @transform_0(%arg0: i32) -> (i32, i32, i32) {
    %c0_i32 = arith.constant 0 : i32
    %c0_i32_0 = arith.constant 0 : i32
    %c0_i32_1 = arith.constant 0 : i32
    return %arg0, %c0_i32, %c0_i32_0 : i32, i32, i32
  }
  func.func @transform_1(%arg0: i32) -> (i32, i32, i32, i32) {
    %c0_i32 = arith.constant 0 : i32
    %c0_i32_0 = arith.constant 0 : i32
    %c0_i32_1 = arith.constant 0 : i32
    %c0_i32_2 = arith.constant 0 : i32
    return %arg0, %c0_i32, %c0_i32_0, %c0_i32_1 : i32, i32, i32, i32
  }
  func.func @transform_2(%arg0: i32) -> (i32, i32, i32) {
    %c0_i32 = arith.constant 0 : i32
    %c0_i32_0 = arith.constant 0 : i32
    %c0_i32_1 = arith.constant 0 : i32
    %c0_i32_2 = arith.constant 0 : i32
    return %c0_i32, %c0_i32_0, %c0_i32_1 : i32, i32, i32
  }
  func.func @transform_3(%arg0: i32) -> (i32, i32) {
    %c0_i32 = arith.constant 0 : i32
    %c0_i32_0 = arith.constant 0 : i32
    %c0_i32_1 = arith.constant 0 : i32
    return %c0_i32, %c0_i32_0 : i32, i32
  }
  func.func @transform_4(%arg0: i32) -> (i32, i32) {
    %c0_i32 = arith.constant 0 : i32
    %c0_i32_0 = arith.constant 0 : i32
    %c0_i32_1 = arith.constant 0 : i32
    return %c0_i32, %c0_i32_0 : i32, i32
  }
  func.func @transform_5(%arg0: i32) -> (i32, i32) {
    %c0_i32 = arith.constant 0 : i32
    %c0_i32_0 = arith.constant 0 : i32
    %c0_i32_1 = arith.constant 0 : i32
    return %c0_i32, %c0_i32_0 : i32, i32
  }
  func.func @transform_6(%arg0: i32) -> (i32, i32) {
    %c0_i32 = arith.constant 0 : i32
    %c0_i32_0 = arith.constant 0 : i32
    %c0_i32_1 = arith.constant 0 : i32
    return %c0_i32, %c0_i32_0 : i32, i32
  }
  func.func @transform_7(%arg0: i32) -> (i32, i32) {
    %c0_i32 = arith.constant 0 : i32
    %c0_i32_0 = arith.constant 0 : i32
    %c0_i32_1 = arith.constant 0 : i32
    return %c0_i32, %c0_i32_0 : i32, i32
  }
  func.func @transform_8(%arg0: i32) -> (i32, i32, i32) {
    %c0_i32 = arith.constant 0 : i32
    %c0_i32_0 = arith.constant 0 : i32
    %c0_i32_1 = arith.constant 0 : i32
    return %arg0, %c0_i32, %c0_i32_0 : i32, i32, i32
  }
}

</mosaic_0001>

<llo_original>
// kernel: lite_mla_forward.2
$region0: #{lite_mla_forward.2}
  #allocation0 [shape = 'u32[]', space=smem, size = 0x4, offset = 0x4, fixed_abs, tag = 'smem constant byte address 0x4 - core index']
  #allocation1 [shape = 'u32[144,128]{1,0:T(1,128)}', space=vmem, size = 0x12000, scoped, tag = 'internal scratch']
  %s0 = inlined_call_operand.vmem [shape: f32[2,32,256], index: 0, kind: input, shape index: {}]
  %s1 = inlined_call_operand.vmem [shape: f32[32,96], index: 1, kind: input, shape index: {}]
  %s2 = inlined_call_operand.vmem [shape: f32[2,256,96], index: 2, kind: output, shape index: {}]
  %s3 = sld [smem:[#allocation0]]
  $region41: #{lite_mla_forward.2} parent=0
    _
  %s5 = ssub.s32 1, %s3
  %s6 = scalar_select 0, %s5, %s3
  loop: start=0, step=1, limit=4
  $region2: #{lite_mla_forward.2} parent=0 // loop_pre_header
    _
  $region3: #{lite_mla_forward.2} parent=0 // loop_header
    %s8 = sphi 0, %s12
    %p9 = scmp.ge.s32.totalorder %s8, 4
    %s18 = sphi 0, %s20
    %s21 = sphi 0, %s18
    %s22 = sphi 0, %s21
    %s38 = sphi 0, %s22
    %s42 = sphi 0, %s42
    %s44 = sphi 0, %s42
    %s45 = sphi 0, %s44
    %s59 = sphi 0, %s45
    %s65 = sphi 0, %s67
    %s68 = sphi 0, %s65
    %s69 = sphi 0, %s68
    %s85 = sphi 0, %s69
  $region4: #{lite_mla_forward.2} parent=0 // loop_header_branch
    %11 = sbr.rel (%p9) target = $region8
  $region5: #{lite_mla_forward.2} parent=0 // loop_body
    %s13 = ssub.s32 %s8, 1
    %s14 = ssub.s32 %s8, 2
    %s15 = sadd.s32 %s8, 1
    %s16 = ssub.s32 %s8, %s15
    %p17 = scmp.eq.s32.totalorder %s16, 0
    %s19 = sadd.s32 %s18, 1
    %s20 = scalar_select %p17, %s18, %s19
    %p23 = pneg %p17
    %p24 = scmp.eq.s32.totalorder %s8, 1
    %p25 = por %p23, %p24
    %p26 = scmp.ne.s32.totalorder %s18, %s21
    %p27 = scmp.eq.s32.totalorder %s8, 0
    %p28 = por %p26, %p27
    %p29 = scmp.ne.s32.totalorder %s18, %s21
    %p30 = scmp.eq.s32.totalorder %s13, 1
    %p31 = por %p29, %p30
    %p32 = scmp.ne.s32.totalorder %s21, %s22
    %p33 = scmp.eq.s32.totalorder %s13, 0
    %p34 = por %p32, %p33
    %p35 = scmp.ne.s32.totalorder %s21, %s22
    %p36 = scmp.eq.s32.totalorder %s14, 1
    %p37 = por %p35, %p36
    %p39 = scmp.ne.s32.totalorder %s22, %s38
    %p40 = scmp.eq.s32.totalorder %s14, 0
    %p41 = por %p39, %p40
    %s43 = sadd.s32 %s42, 1
    %p46 = scmp.eq.s32.totalorder %s8, 1
    %p47 = scmp.ne.s32.totalorder %s42, %s44
    %p48 = scmp.eq.s32.totalorder %s8, 0
    %p49 = por %p47, %p48
    %p50 = scmp.ne.s32.totalorder %s42, %s44
    %p51 = scmp.eq.s32.totalorder %s13, 1
    %p52 = por %p50, %p51
    %p53 = scmp.ne.s32.totalorder %s44, %s45
    %p54 = scmp.eq.s32.totalorder %s13, 0
    %p55 = por %p53, %p54
    %p56 = scmp.ne.s32.totalorder %s44, %s45
    %p57 = scmp.eq.s32.totalorder %s14, 1
    %p58 = por %p56, %p57
    %p60 = scmp.ne.s32.totalorder %s45, %s59
    %p61 = scmp.eq.s32.totalorder %s14, 0
    %p62 = por %p60, %p61
    %s63 = ssub.s32 %s8, %s15
    %p64 = scmp.eq.s32.totalorder %s63, 0
    %s66 = sadd.s32 %s65, 1
    %s67 = scalar_select %p64, %s65, %s66
    %p70 = pneg %p64
    %p71 = scmp.eq.s32.totalorder %s8, 1
    %p72 = por %p70, %p71
    %p73 = scmp.ne.s32.totalorder %s65, %s68
    %p74 = scmp.eq.s32.totalorder %s8, 0
    %p75 = por %p73, %p74
    %p76 = scmp.ne.s32.totalorder %s65, %s68
    %p77 = scmp.eq.s32.totalorder %s13, 1
    %p78 = por %p76, %p77
    %p79 = scmp.ne.s32.totalorder %s68, %s69
    %p80 = scmp.eq.s32.totalorder %s13, 0
    %p81 = por %p79, %p80
    %p82 = scmp.ne.s32.totalorder %s68, %s69
    %p83 = scmp.eq.s32.totalorder %s14, 1
    %p84 = por %p82, %p83
    %p86 = scmp.ne.s32.totalorder %s69, %s85
    %p87 = scmp.eq.s32.totalorder %s14, 0
    %p88 = por %p86, %p87
    %p89 = scmp.le.s32.totalorder 1, %s8
    %p90 = scmp.lt.s32.totalorder %s8, 3
    %p91 = pnand %p89, %p90
    %p92 = pneg %p91
    // Predicated region
    $region9: #{lite_mla_forward.2} parent=5 // pred_check
      _
    $region10: #{lite_mla_forward.2} parent=5 // pred_check_branch
      %94 = sbr.rel (%p91) target = $region12
    $region11: #{lite_mla_forward.2} parent=5 // pred_region
      %s95 = ssub.s32 %s8, 1
      // Predicated region
      $region13: #{lite_mla_forward.2} parent=11 // pred_check
        %p96 = pneg %p55
      $region14: #{lite_mla_forward.2} parent=11 // pred_check_branch
        %98 = sbr.rel (%p96) target = $region16
      $region15: #{lite_mla_forward.2} parent=11 // pred_region
        _
      $region16: #{lite_mla_forward.2} parent=11 // pred_fallthru
        _
    $region12: #{lite_mla_forward.2} parent=5 // pred_fallthru
      _
    %p99 = scmp.lt.s32.totalorder %s8, 2
    // Predicated region
    $region17: #{lite_mla_forward.2} parent=5 // pred_check
      %p100 = pneg %p99
    $region18: #{lite_mla_forward.2} parent=5 // pred_check_branch
      %102 = sbr.rel (%p100) target = $region20
    $region19: #{lite_mla_forward.2} parent=5 // pred_region
      // Predicated region
      $region21: #{lite_mla_forward.2} parent=19 // pred_check
        %p103 = pneg %p28
      $region22: #{lite_mla_forward.2} parent=19 // pred_check_branch
        %105 = sbr.rel (%p103) target = $region24
      $region23: #{lite_mla_forward.2} parent=19 // pred_region
        %p106 = scmp.lt.s32.totalorder %s8, 1
        %s107 = scalar_select %p106, %s8, 1
        %s108 = smul.addr %s107, 8
        %s109 = smul.addr %s108, 8
        %s110 = scalar_lea.vmem %s0, %s109
      $region24: #{lite_mla_forward.2} parent=19 // pred_fallthru
        _
    $region20: #{lite_mla_forward.2} parent=5 // pred_fallthru
      _
    %p111 = scmp.le.s32.totalorder 1, %s8
    %p112 = scmp.lt.s32.totalorder %s8, 3
    %p113 = pnand %p111, %p112
    %p114 = pneg %p113
    // Predicated region
    $region25: #{lite_mla_forward.2} parent=5 // pred_check
      _
    $region26: #{lite_mla_forward.2} parent=5 // pred_check_branch
      %116 = sbr.rel (%p113) target = $region28
    $region27: #{lite_mla_forward.2} parent=5 // pred_region
      %s117 = ssub.s32 %s8, 1
      %p118 = scmp.lt.s32.totalorder %s13, 1
      %s119 = scalar_select %p118, %s13, 1
      %s120 = smul.addr %s119, 8
      %s121 = smul.addr %s120, 8
      %s122 = scalar_lea.vmem %s0, %s121
      %p123 = pneg %p34
      %p124 = pneg %p31
      %p125 = pneg %p55
      %p126 = pneg %p52
      %p127 = pneg %p81
      %p128 = pneg %p78
      %p129 = scmp.lt.s32.totalorder %s13, 1
      %s130 = scalar_select %p129, %s13, 1
      %s131 = smul.addr %s130, 32
      %s132 = smul.addr %s131, 8
      %s133 = scalar_lea.vmem %s2, %s132
      %p134 = scmp.lt.s32.totalorder %s13, 1
      %s135 = scalar_select %p134, %s13, 1
      %s136 = smul.addr %s135, 8
      %s137 = smul.addr %s136, 8
      %s138 = scalar_lea.vmem %s0, %s137
      %p139 = scmp.lt.s32.totalorder %s13, 1
      %s140 = scalar_select %p139, %s13, 1
      %s141 = smul.addr %s140, 32
      %s142 = smul.addr %s141, 8
      %s143 = scalar_lea.vmem %s2, %s142
      %v144 = vld [vmem:[%s138] sm:$0xff]
      %v145 = vld [vmem:[%s138 + $0x8] sm:$0xff]
      %v146 = vld [vmem:[%s138 + $0x10] sm:$0xff]
      %v147 = vld [vmem:[%s138 + $0x18] sm:$0xff]
      %v148 = vld [vmem:[%s138 + $0x20] sm:$0xff]
      %v149 = vld [vmem:[%s138 + $0x28] sm:$0xff]
      %v150 = vld [vmem:[%s138 + $0x30] sm:$0xff]
      %v151 = vld [vmem:[%s138 + $0x38] sm:$0xff]
      %v152 = vld [vmem:[%s1] sm:$0xff]
      %v153 = vld [vmem:[%s1 + $0x8] sm:$0xff]
      %v154 = vld [vmem:[%s1 + $0x10] sm:$0xff]
      %v155 = vld [vmem:[%s1 + $0x18] sm:$0xff]
      %156 = vxpose.xlu0.b32.start [1/16] %v144, 128
      %157 = vxpose.xlu0.b32.cont [2/16] %v146, 128
      %158 = vxpose.xlu0.b32.cont [3/16] %v148, 128
      %159 = vxpose.xlu0.b32.cont [4/16] %v150, 128
      %160 = vxpose.xlu0.b32.cont [5/16] 0.0, 128
      %161 = vxpose.xlu0.b32.cont [6/16] 0.0, 128
      %162 = vxpose.xlu0.b32.cont [7/16] 0.0, 128
      %163 = vxpose.xlu0.b32.cont [8/16] 0.0, 128
      %164 = vxpose.xlu0.b32.cont [9/16] 0.0, 128
      %165 = vxpose.xlu0.b32.cont [10/16] 0.0, 128
      %166 = vxpose.xlu0.b32.cont [11/16] 0.0, 128
      %167 = vxpose.xlu0.b32.cont [12/16] 0.0, 128
      %168 = vxpose.xlu0.b32.cont [13/16] 0.0, 128
      %169 = vxpose.xlu0.b32.cont [14/16] 0.0, 128
      %170 = vxpose.xlu0.b32.cont [15/16] 0.0, 128
      %171 = vxpose.xlu0.b32.end [16/16] 0.0, 128
      %v172 = vpop.trf.xlu0
      %v173 = vpop.trf.xlu0
      %v174 = vpop.trf.xlu0
      %v175 = vpop.trf.xlu0
      %v176 = vpop.trf.xlu0
      %v177 = vpop.trf.xlu0
      %v178 = vpop.trf.xlu0
      %v179 = vpop.trf.xlu0
      %v180 = vpop.trf.xlu0
      %v181 = vpop.trf.xlu0
      %v182 = vpop.trf.xlu0
      %v183 = vpop.trf.xlu0
      %v184 = vpop.trf.xlu0
      %v185 = vpop.trf.xlu0
      %v186 = vpop.trf.xlu0
      %v187 = vpop.trf.xlu0
      %188 = vxpose.xlu0.b32.start [1/16] %v145, 128
      %189 = vxpose.xlu0.b32.cont [2/16] %v147, 128
      %190 = vxpose.xlu0.b32.cont [3/16] %v149, 128
      %191 = vxpose.xlu0.b32.cont [4/16] %v151, 128
      %192 = vxpose.xlu0.b32.cont [5/16] 0.0, 128
      %193 = vxpose.xlu0.b32.cont [6/16] 0.0, 128
      %194 = vxpose.xlu0.b32.cont [7/16] 0.0, 128
      %195 = vxpose.xlu0.b32.cont [8/16] 0.0, 128
      %196 = vxpose.xlu0.b32.cont [9/16] 0.0, 128
      %197 = vxpose.xlu0.b32.cont [10/16] 0.0, 128
      %198 = vxpose.xlu0.b32.cont [11/16] 0.0, 128
      %199 = vxpose.xlu0.b32.cont [12/16] 0.0, 128
      %200 = vxpose.xlu0.b32.cont [13/16] 0.0, 128
      %201 = vxpose.xlu0.b32.cont [14/16] 0.0, 128
      %202 = vxpose.xlu0.b32.cont [15/16] 0.0, 128
      %203 = vxpose.xlu0.b32.end [16/16] 0.0, 128
      %v204 = vpop.trf.xlu0
      %v205 = vpop.trf.xlu0
      %v206 = vpop.trf.xlu0
      %v207 = vpop.trf.xlu0
      %v208 = vpop.trf.xlu0
      %v209 = vpop.trf.xlu0
      %v210 = vpop.trf.xlu0
      %v211 = vpop.trf.xlu0
      %v212 = vpop.trf.xlu0
      %v213 = vpop.trf.xlu0
      %v214 = vpop.trf.xlu0
      %v215 = vpop.trf.xlu0
      %v216 = vpop.trf.xlu0
      %v217 = vpop.trf.xlu0
      %v218 = vpop.trf.xlu0
      %v219 = vpop.trf.xlu0
      %vm220 = vcmask 261120
      %v222 = vsel %vm220, %v172, 0
      %v225 = vsel %vm220, %v173, 0
      %v228 = vsel %vm220, %v174, 0
      %v231 = vsel %vm220, %v175, 0
      %v234 = vsel %vm220, %v176, 0
      %v237 = vsel %vm220, %v177, 0
      %v240 = vsel %vm220, %v178, 0
      %v243 = vsel %vm220, %v179, 0
      %v246 = vsel %vm220, %v180, 0
      %v249 = vsel %vm220, %v181, 0
      %v252 = vsel %vm220, %v182, 0
      %v255 = vsel %vm220, %v183, 0
      %v258 = vsel %vm220, %v184, 0
      %v261 = vsel %vm220, %v185, 0
      %v264 = vsel %vm220, %v186, 0
      %v267 = vsel %vm220, %v187, 0
      %v270 = vsel %vm220, %v204, 0
      %v273 = vsel %vm220, %v205, 0
      %v276 = vsel %vm220, %v206, 0
      %v279 = vsel %vm220, %v207, 0
      %v282 = vsel %vm220, %v208, 0
      %v285 = vsel %vm220, %v209, 0
      %v288 = vsel %vm220, %v210, 0
      %v291 = vsel %vm220, %v211, 0
      %v294 = vsel %vm220, %v212, 0
      %v297 = vsel %vm220, %v213, 0
      %v300 = vsel %vm220, %v214, 0
      %v303 = vsel %vm220, %v215, 0
      %v306 = vsel %vm220, %v216, 0
      %v309 = vsel %vm220, %v217, 0
      %v312 = vsel %vm220, %v218, 0
      %v315 = vsel %vm220, %v219, 0
      %317 = vmatprep.subr.mxu0 0.0
      %318 = vmatpush1.msra.mxu0 %v152
      %319 = vmatprep.subr.mxu0 0.0
      %320 = vmatpush1.msra.mxu0 %v153
      %321 = vmatprep.subr.mxu0 0.0
      %322 = vmatpush1.msra.mxu0 %v154
      %323 = vmatprep.subr.mxu0 0.0
      %324 = vmatpush1.msra.mxu0 %v155
      %325 = vmatprep.subr.mxu0 0.0
      %326 = vmatpush1.msra.mxu0 0.0
      %327 = vmatprep.subr.mxu0 0.0
      %328 = vmatpush1.msra.mxu0 0.0
      %329 = vmatprep.subr.mxu0 0.0
      %330 = vmatpush1.msra.mxu0 0.0
      %331 = vmatprep.subr.mxu0 0.0
      %332 = vmatpush1.msra.mxu0 0.0
      %333 = vmatprep.subr.mxu0 0.0
      %334 = vmatpush1.msra.mxu0 0.0
      %335 = vmatprep.subr.mxu0 0.0
      %336 = vmatpush1.msra.mxu0 0.0
      %337 = vmatprep.subr.mxu0 0.0
      %338 = vmatpush1.msra.mxu0 0.0
      %339 = vmatprep.subr.mxu0 0.0
      %340 = vmatpush1.msra.mxu0 0.0
      %341 = vmatprep.subr.mxu0 0.0
      %342 = vmatpush1.msra.mxu0 0.0
      %343 = vmatprep.subr.mxu0 0.0
      %344 = vmatpush1.msra.mxu0 0.0
      %345 = vmatprep.subr.mxu0 0.0
      %346 = vmatpush1.msra.mxu0 0.0
      %347 = vmatprep.subr.mxu0 0.0
      %348 = vmatpush1.msra.mxu0 0.0
      %349 = vmatprep.subr.mxu0 0.0
      %350 = vmatpush1.msra.mxu0 0.0
      %351 = vmatprep.subr.mxu0 0.0
      %352 = vmatpush1.msra.mxu0 0.0
      %353 = vmatprep.subr.mxu0 0.0
      %354 = vmatpush1.msra.mxu0 0.0
      %355 = vmatprep.subr.mxu0 0.0
      %356 = vmatpush1.msra.mxu0 0.0
      %357 = vmatprep.subr.mxu0 0.0
      %358 = vmatpush1.msra.mxu0 0.0
      %359 = vmatprep.subr.mxu0 0.0
      %360 = vmatpush1.msra.mxu0 0.0
      %361 = vmatprep.subr.mxu0 0.0
      %362 = vmatpush1.msra.mxu0 0.0
      %363 = vmatprep.subr.mxu0 0.0
      %364 = vmatpush1.msra.mxu0 0.0
      %365 = vmatprep.subr.mxu0 0.0
      %366 = vmatpush1.msra.mxu0 0.0
      %367 = vmatprep.subr.mxu0 0.0
      %368 = vmatpush1.msra.mxu0 0.0
      %369 = vmatprep.subr.mxu0 0.0
      %370 = vmatpush1.msra.mxu0 0.0
      %371 = vmatprep.subr.mxu0 0.0
      %372 = vmatpush1.msra.mxu0 0.0
      %373 = vmatprep.subr.mxu0 0.0
      %374 = vmatpush1.msra.mxu0 0.0
      %375 = vmatprep.subr.mxu0 0.0
      %376 = vmatpush1.msra.mxu0 0.0
      %377 = vmatprep.subr.mxu0 0.0
      %378 = vmatpush1.msra.mxu0 0.0
      %379 = vmatprep.subr.mxu0 0.0
      %380 = vmatpush1.msra.mxu0 0.0
      %381 = vmatprep.mubr.f32.mxu0 0.0
      %382 = vmatmul.mubr.f32.gmra.mrb[0].mxu0 %v222
      %v383 = vpop.f32.mrb[0].mxu0
      %v384 = vadd.f32 0.0, %v383
      %v385 = vpop.f32.mrb[0].mxu0
      %386 = vmatprep.mubr.f32.mxu0 0.0
      %387 = vmatmul.mubr.f32.gmra.mrb[0].mxu0 %v225
      %v388 = vpop.f32.mrb[0].mxu0
      %v389 = vadd.f32 0.0, %v388
      %v390 = vpop.f32.mrb[0].mxu0
      %391 = vmatprep.mubr.f32.mxu0 0.0
      %392 = vmatmul.mubr.f32.gmra.mrb[0].mxu0 %v228
      %v393 = vpop.f32.mrb[0].mxu0
      %v394 = vadd.f32 0.0, %v393
      %v395 = vpop.f32.mrb[0].mxu0
      %396 = vmatprep.mubr.f32.mxu0 0.0
      %397 = vmatmul.mubr.f32.gmra.mrb[0].mxu0 %v231
      %v398 = vpop.f32.mrb[0].mxu0
      %v399 = vadd.f32 0.0, %v398
      %v400 = vpop.f32.mrb[0].mxu0
      %401 = vmatprep.mubr.f32.mxu0 0.0
      %402 = vmatmul.mubr.f32.gmra.mrb[0].mxu0 %v234
      %v403 = vpop.f32.mrb[0].mxu0
      %v404 = vadd.f32 0.0, %v403
      %v405 = vpop.f32.mrb[0].mxu0
      %406 = vmatprep.mubr.f32.mxu0 0.0
      %407 = vmatmul.mubr.f32.gmra.mrb[0].mxu0 %v237
      %v408 = vpop.f32.mrb[0].mxu0
      %v409 = vadd.f32 0.0, %v408
      %v410 = vpop.f32.mrb[0].mxu0
      %411 = vmatprep.mubr.f32.mxu0 0.0
      %412 = vmatmul.mubr.f32.gmra.mrb[0].mxu0 %v240
      %v413 = vpop.f32.mrb[0].mxu0
      %v414 = vadd.f32 0.0, %v413
      %v415 = vpop.f32.mrb[0].mxu0
      %416 = vmatprep.mubr.f32.mxu0 0.0
      %417 = vmatmul.mubr.f32.gmra.mrb[0].mxu0 %v243
      %v418 = vpop.f32.mrb[0].mxu0
      %v419 = vadd.f32 0.0, %v418
      %v420 = vpop.f32.mrb[0].mxu0
      %421 = vmatprep.mubr.f32.mxu0 0.0
      %422 = vmatmul.mubr.f32.gmra.mrb[0].mxu0 %v246
      %v423 = vpop.f32.mrb[0].mxu0
      %v424 = vadd.f32 0.0, %v423
      %v425 = vpop.f32.mrb[0].mxu0
      %426 = vmatprep.mubr.f32.mxu0 0.0
      %427 = vmatmul.mubr.f32.gmra.mrb[0].mxu0 %v249
      %v428 = vpop.f32.mrb[0].mxu0
      %v429 = vadd.f32 0.0, %v428
      %v430 = vpop.f32.mrb[0].mxu0
      %431 = vmatprep.mubr.f32.mxu0 0.0
      %432 = vmatmul.mubr.f32.gmra.mrb[0].mxu0 %v252
      %v433 = vpop.f32.mrb[0].mxu0
      %v434 = vadd.f32 0.0, %v433
      %v435 = vpop.f32.mrb[0].mxu0
      %436 = vmatprep.mubr.f32.mxu0 0.0
      %437 = vmatmul.mubr.f32.gmra.mrb[0].mxu0 %v255
      %v438 = vpop.f32.mrb[0].mxu0
      %v439 = vadd.f32 0.0, %v438
      %v440 = vpop.f32.mrb[0].mxu0
      %441 = vmatprep.mubr.f32.mxu0 0.0
      %442 = vmatmul.mubr.f32.gmra.mrb[0].mxu0 %v258
      %v443 = vpop.f32.mrb[0].mxu0
      %v444 = vadd.f32 0.0, %v443
      %v445 = vpop.f32.mrb[0].mxu0
      %446 = vmatprep.mubr.f32.mxu0 0.0
      %447 = vmatmul.mubr.f32.gmra.mrb[0].mxu0 %v261
      %v448 = vpop.f32.mrb[0].mxu0
      %v449 = vadd.f32 0.0, %v448
      %v450 = vpop.f32.mrb[0].mxu0
      %451 = vmatprep.mubr.f32.mxu0 0.0
      %452 = vmatmul.mubr.f32.gmra.mrb[0].mxu0 %v264
      %v453 = vpop.f32.mrb[0].mxu0
      %v454 = vadd.f32 0.0, %v453
      %v455 = vpop.f32.mrb[0].mxu0
      %456 = vmatprep.mubr.f32.mxu0 0.0
      %457 = vmatmul.mubr.f32.gmra.mrb[0].mxu0 %v267
      %v458 = vpop.f32.mrb[0].mxu0
      %v459 = vadd.f32 0.0, %v458
      %v460 = vpop.f32.mrb[0].mxu0
      %461 = vmatprep.mubr.f32.mxu0 0.0
      %462 = vmatmul.mubr.f32.gmra.mrb[0].mxu0 %v270
      %v463 = vpop.f32.mrb[0].mxu0
      %v464 = vadd.f32 0.0, %v463
      %v465 = vpop.f32.mrb[0].mxu0
      %466 = vmatprep.mubr.f32.mxu0 0.0
      %467 = vmatmul.mubr.f32.gmra.mrb[0].mxu0 %v273
      %v468 = vpop.f32.mrb[0].mxu0
      %v469 = vadd.f32 0.0, %v468
      %v470 = vpop.f32.mrb[0].mxu0
      %471 = vmatprep.mubr.f32.mxu0 0.0
      %472 = vmatmul.mubr.f32.gmra.mrb[0].mxu0 %v276
      %v473 = vpop.f32.mrb[0].mxu0
      %v474 = vadd.f32 0.0, %v473
      %v475 = vpop.f32.mrb[0].mxu0
      %476 = vmatprep.mubr.f32.mxu0 0.0
      %477 = vmatmul.mubr.f32.gmra.mrb[0].mxu0 %v279
      %v478 = vpop.f32.mrb[0].mxu0
      %v479 = vadd.f32 0.0, %v478
      %v480 = vpop.f32.mrb[0].mxu0
      %481 = vmatprep.mubr.f32.mxu0 0.0
      %482 = vmatmul.mubr.f32.gmra.mrb[0].mxu0 %v282
      %v483 = vpop.f32.mrb[0].mxu0
      %v484 = vadd.f32 0.0, %v483
      %v485 = vpop.f32.mrb[0].mxu0
      %486 = vmatprep.mubr.f32.mxu0 0.0
      %487 = vmatmul.mubr.f32.gmra.mrb[0].mxu0 %v285
      %v488 = vpop.f32.mrb[0].mxu0
      %v489 = vadd.f32 0.0, %v488
      %v490 = vpop.f32.mrb[0].mxu0
      %491 = vmatprep.mubr.f32.mxu0 0.0
      %492 = vmatmul.mubr.f32.gmra.mrb[0].mxu0 %v288
      %v493 = vpop.f32.mrb[0].mxu0
      %v494 = vadd.f32 0.0, %v493
      %v495 = vpop.f32.mrb[0].mxu0
      %496 = vmatprep.mubr.f32.mxu0 0.0
      %497 = vmatmul.mubr.f32.gmra.mrb[0].mxu0 %v291
      %v498 = vpop.f32.mrb[0].mxu0
      %v499 = vadd.f32 0.0, %v498
      %v500 = vpop.f32.mrb[0].mxu0
      %501 = vmatprep.mubr.f32.mxu0 0.0
      %502 = vmatmul.mubr.f32.gmra.mrb[0].mxu0 %v294
      %v503 = vpop.f32.mrb[0].mxu0
      %v504 = vadd.f32 0.0, %v503
      %v505 = vpop.f32.mrb[0].mxu0
      %506 = vmatprep.mubr.f32.mxu0 0.0
      %507 = vmatmul.mubr.f32.gmra.mrb[0].mxu0 %v297
      %v508 = vpop.f32.mrb[0].mxu0
      %v509 = vadd.f32 0.0, %v508
      %v510 = vpop.f32.mrb[0].mxu0
      %511 = vmatprep.mubr.f32.mxu0 0.0
      %512 = vmatmul.mubr.f32.gmra.mrb[0].mxu0 %v300
      %v513 = vpop.f32.mrb[0].mxu0
      %v514 = vadd.f32 0.0, %v513
      %v515 = vpop.f32.mrb[0].mxu0
      %516 = vmatprep.mubr.f32.mxu0 0.0
      %517 = vmatmul.mubr.f32.gmra.mrb[0].mxu0 %v303
      %v518 = vpop.f32.mrb[0].mxu0
      %v519 = vadd.f32 0.0, %v518
      %v520 = vpop.f32.mrb[0].mxu0
      %521 = vmatprep.mubr.f32.mxu0 0.0
      %522 = vmatmul.mubr.f32.gmra.mrb[0].mxu0 %v306
      %v523 = vpop.f32.mrb[0].mxu0
      %v524 = vadd.f32 0.0, %v523
      %v525 = vpop.f32.mrb[0].mxu0
      %526 = vmatprep.mubr.f32.mxu0 0.0
      %527 = vmatmul.mubr.f32.gmra.mrb[0].mxu0 %v309
      %v528 = vpop.f32.mrb[0].mxu0
      %v529 = vadd.f32 0.0, %v528
      %v530 = vpop.f32.mrb[0].mxu0
      %531 = vmatprep.mubr.f32.mxu0 0.0
      %532 = vmatmul.mubr.f32.gmra.mrb[0].mxu0 %v312
      %v533 = vpop.f32.mrb[0].mxu0
      %v534 = vadd.f32 0.0, %v533
      %v535 = vpop.f32.mrb[0].mxu0
      %536 = vmatprep.mubr.f32.mxu0 0.0
      %537 = vmatmul.mubr.f32.gmra.mrb[0].mxu0 %v315
      %v538 = vpop.f32.mrb[0].mxu0
      %v539 = vadd.f32 0.0, %v538
      %v540 = vpop.f32.mrb[0].mxu0
      %541 = vdwg.mxu0
      %vm542 = vcmask 785408
      %543 = vst.msk [vmem:[%s143] sm:$0xff] %vm542, %v384
      %544 = vst.msk [vmem:[%s143 + $0x8] sm:$0xff] %vm542, %v389
      %545 = vst.msk [vmem:[%s143 + $0x10] sm:$0xff] %vm542, %v394
      %546 = vst.msk [vmem:[%s143 + $0x18] sm:$0xff] %vm542, %v399
      %547 = vst.msk [vmem:[%s143 + $0x20] sm:$0xff] %vm542, %v404
      %548 = vst.msk [vmem:[%s143 + $0x28] sm:$0xff] %vm542, %v409
      %549 = vst.msk [vmem:[%s143 + $0x30] sm:$0xff] %vm542, %v414
      %550 = vst.msk [vmem:[%s143 + $0x38] sm:$0xff] %vm542, %v419
      %551 = vst.msk [vmem:[%s143 + $0x40] sm:$0xff] %vm542, %v424
      %552 = vst.msk [vmem:[%s143 + $0x48] sm:$0xff] %vm542, %v429
      %553 = vst.msk [vmem:[%s143 + $0x50] sm:$0xff] %vm542, %v434
      %554 = vst.msk [vmem:[%s143 + $0x58] sm:$0xff] %vm542, %v439
      %555 = vst.msk [vmem:[%s143 + $0x60] sm:$0xff] %vm542, %v444
      %556 = vst.msk [vmem:[%s143 + $0x68] sm:$0xff] %vm542, %v449
      %557 = vst.msk [vmem:[%s143 + $0x70] sm:$0xff] %vm542, %v454
      %558 = vst.msk [vmem:[%s143 + $0x78] sm:$0xff] %vm542, %v459
      %559 = vst.msk [vmem:[%s143 + $0x80] sm:$0xff] %vm542, %v464
      %560 = vst.msk [vmem:[%s143 + $0x88] sm:$0xff] %vm542, %v469
      %561 = vst.msk [vmem:[%s143 + $0x90] sm:$0xff] %vm542, %v474
      %562 = vst.msk [vmem:[%s143 + $0x98] sm:$0xff] %vm542, %v479
      %563 = vst.msk [vmem:[%s143 + $0xa0] sm:$0xff] %vm542, %v484
      %564 = vst.msk [vmem:[%s143 + $0xa8] sm:$0xff] %vm542, %v489
      %565 = vst.msk [vmem:[%s143 + $0xb0] sm:$0xff] %vm542, %v494
      %566 = vst.msk [vmem:[%s143 + $0xb8] sm:$0xff] %vm542, %v499
      %567 = vst.msk [vmem:[%s143 + $0xc0] sm:$0xff] %vm542, %v504
      %568 = vst.msk [vmem:[%s143 + $0xc8] sm:$0xff] %vm542, %v509
      %569 = vst.msk [vmem:[%s143 + $0xd0] sm:$0xff] %vm542, %v514
      %570 = vst.msk [vmem:[%s143 + $0xd8] sm:$0xff] %vm542, %v519
      %571 = vst.msk [vmem:[%s143 + $0xe0] sm:$0xff] %vm542, %v524
      %572 = vst.msk [vmem:[%s143 + $0xe8] sm:$0xff] %vm542, %v529
      %573 = vst.msk [vmem:[%s143 + $0xf0] sm:$0xff] %vm542, %v534
      %574 = vst.msk [vmem:[%s143 + $0xf8] sm:$0xff] %vm542, %v539
      %p575 = scmp.lt.s32.totalorder %s13, 1
      %s576 = scalar_select %p575, %s13, 1
      %s577 = smul.addr %s576, 32
      %s578 = smul.addr %s577, 8
      %s579 = scalar_lea.vmem %s2, %s578
      // Predicated region
      $region29: #{lite_mla_forward.2} parent=27 // pred_check
        %p580 = pneg %p78
      $region30: #{lite_mla_forward.2} parent=27 // pred_check_branch
        %582 = sbr.rel (%p580) target = $region32
      $region31: #{lite_mla_forward.2} parent=27 // pred_region
        _
      $region32: #{lite_mla_forward.2} parent=27 // pred_fallthru
        _
    $region28: #{lite_mla_forward.2} parent=5 // pred_fallthru
      _
    %p583 = scmp.le.s32.totalorder 2, %s8
    // Predicated region
    $region33: #{lite_mla_forward.2} parent=5 // pred_check
      %p584 = pneg %p583
    $region34: #{lite_mla_forward.2} parent=5 // pred_check_branch
      %586 = sbr.rel (%p584) target = $region36
    $region35: #{lite_mla_forward.2} parent=5 // pred_region
      %s587 = ssub.s32 %s8, 2
      // Predicated region
      $region37: #{lite_mla_forward.2} parent=35 // pred_check
        %p588 = pneg %p84
      $region38: #{lite_mla_forward.2} parent=35 // pred_check_branch
        %590 = sbr.rel (%p588) target = $region40
      $region39: #{lite_mla_forward.2} parent=35 // pred_region
        %p591 = scmp.lt.s32.totalorder %s14, 1
        %s592 = scalar_select %p591, %s14, 1
        %s593 = smul.addr %s592, 32
        %s594 = smul.addr %s593, 8
        %s595 = scalar_lea.vmem %s2, %s594
      $region40: #{lite_mla_forward.2} parent=35 // pred_fallthru
        _
    $region36: #{lite_mla_forward.2} parent=5 // pred_fallthru
      _
  $region6: #{lite_mla_forward.2} parent=0 // loop_footer
    %s12 = sadd.s32 1, %s8
  $region7: #{lite_mla_forward.2} parent=0 // loop_footer_branch
    %7 = sbr.rel target = $region3
  $region8: #{lite_mla_forward.2} parent=0 // loop_exit
    _

// kernel: lite_mla_forward.3
$region0: #{lite_mla_forward.3}
  #allocation0 [shape = 'u32[]', space=smem, size = 0x4, offset = 0x4, fixed_abs, tag = 'smem constant byte address 0x4 - core index']
  #allocation1 [shape = 'u32[144,128]{1,0:T(1,128)}', space=vmem, size = 0x12000, scoped, tag = 'internal scratch']
  %s0 = inlined_call_operand.vmem [shape: f32[2,256,96], index: 0, kind: input, shape index: {}]
  %s1 = inlined_call_operand.vmem [shape: f32[2,20,20,96], index: 1, kind: input, shape index: {}]
  %s2 = inlined_call_operand.vmem [shape: f32[5,5,96], index: 2, kind: input, shape index: {}]
  %s3 = inlined_call_operand.vmem [shape: f32[96,96], index: 3, kind: input, shape index: {}]
  %s4 = inlined_call_operand.vmem [shape: f32[32,32], index: 4, kind: input, shape index: {}]
  %s5 = inlined_call_operand.vmem [shape: f32[32,32], index: 5, kind: input, shape index: {}]
  %s6 = inlined_call_operand.vmem [shape: f32[32,32], index: 6, kind: input, shape index: {}]
  %s7 = inlined_call_operand.vmem [shape: f32[32,1], index: 7, kind: input, shape index: {}]
  %s8 = inlined_call_operand.vmem [shape: f32[2,32,256], index: 8, kind: output, shape index: {}]
  %s9 = sld [smem:[#allocation0]]
  $region65: #{lite_mla_forward.3} parent=0
    _
  %s11 = ssub.s32 1, %s9
  %s12 = scalar_select 0, %s11, %s9
  loop: start=0, step=1, limit=4
  $region2: #{lite_mla_forward.3} parent=0 // loop_pre_header
    _
  $region3: #{lite_mla_forward.3} parent=0 // loop_header
    %s14 = sphi 0, %s18
    %p15 = scmp.ge.s32.totalorder %s14, 4
    %s24 = sphi 0, %s26
    %s27 = sphi 0, %s24
    %s28 = sphi 0, %s27
    %s44 = sphi 0, %s28
    %s50 = sphi 0, %s52
    %s53 = sphi 0, %s50
    %s54 = sphi 0, %s53
    %s70 = sphi 0, %s54
    %s74 = sphi 0, %s74
    %s76 = sphi 0, %s74
    %s77 = sphi 0, %s76
    %s91 = sphi 0, %s77
    %s95 = sphi 0, %s95
    %s97 = sphi 0, %s95
    %s98 = sphi 0, %s97
    %s112 = sphi 0, %s98
    %s116 = sphi 0, %s116
    %s118 = sphi 0, %s116
    %s119 = sphi 0, %s118
    %s133 = sphi 0, %s119
    %s137 = sphi 0, %s137
    %s139 = sphi 0, %s137
    %s140 = sphi 0, %s139
    %s154 = sphi 0, %s140
    %s158 = sphi 0, %s158
    %s160 = sphi 0, %s158
    %s161 = sphi 0, %s160
    %s175 = sphi 0, %s161
    %s179 = sphi 0, %s179
    %s181 = sphi 0, %s179
    %s182 = sphi 0, %s181
    %s196 = sphi 0, %s182
    %s202 = sphi 0, %s204
    %s205 = sphi 0, %s202
    %s206 = sphi 0, %s205
    %s222 = sphi 0, %s206
  $region4: #{lite_mla_forward.3} parent=0 // loop_header_branch
    %17 = sbr.rel (%p15) target = $region8
  $region5: #{lite_mla_forward.3} parent=0 // loop_body
    %s19 = ssub.s32 %s14, 1
    %s20 = ssub.s32 %s14, 2
    %s21 = sadd.s32 %s14, 1
    %s22 = ssub.s32 %s14, %s21
    %p23 = scmp.eq.s32.totalorder %s22, 0
    %s25 = sadd.s32 %s24, 1
    %s26 = scalar_select %p23, %s24, %s25
    %p29 = pneg %p23
    %p30 = scmp.eq.s32.totalorder %s14, 1
    %p31 = por %p29, %p30
    %p32 = scmp.ne.s32.totalorder %s24, %s27
    %p33 = scmp.eq.s32.totalorder %s14, 0
    %p34 = por %p32, %p33
    %p35 = scmp.ne.s32.totalorder %s24, %s27
    %p36 = scmp.eq.s32.totalorder %s19, 1
    %p37 = por %p35, %p36
    %p38 = scmp.ne.s32.totalorder %s27, %s28
    %p39 = scmp.eq.s32.totalorder %s19, 0
    %p40 = por %p38, %p39
    %p41 = scmp.ne.s32.totalorder %s27, %s28
    %p42 = scmp.eq.s32.totalorder %s20, 1
    %p43 = por %p41, %p42
    %p45 = scmp.ne.s32.totalorder %s28, %s44
    %p46 = scmp.eq.s32.totalorder %s20, 0
    %p47 = por %p45, %p46
    %s48 = ssub.s32 %s14, %s21
    %p49 = scmp.eq.s32.totalorder %s48, 0
    %s51 = sadd.s32 %s50, 1
    %s52 = scalar_select %p49, %s50, %s51
    %p55 = pneg %p49
    %p56 = scmp.eq.s32.totalorder %s14, 1
    %p57 = por %p55, %p56
    %p58 = scmp.ne.s32.totalorder %s50, %s53
    %p59 = scmp.eq.s32.totalorder %s14, 0
    %p60 = por %p58, %p59
    %p61 = scmp.ne.s32.totalorder %s50, %s53
    %p62 = scmp.eq.s32.totalorder %s19, 1
    %p63 = por %p61, %p62
    %p64 = scmp.ne.s32.totalorder %s53, %s54
    %p65 = scmp.eq.s32.totalorder %s19, 0
    %p66 = por %p64, %p65
    %p67 = scmp.ne.s32.totalorder %s53, %s54
    %p68 = scmp.eq.s32.totalorder %s20, 1
    %p69 = por %p67, %p68
    %p71 = scmp.ne.s32.totalorder %s54, %s70
    %p72 = scmp.eq.s32.totalorder %s20, 0
    %p73 = por %p71, %p72
    %s75 = sadd.s32 %s74, 1
    %p78 = scmp.eq.s32.totalorder %s14, 1
    %p79 = scmp.ne.s32.totalorder %s74, %s76
    %p80 = scmp.eq.s32.totalorder %s14, 0
    %p81 = por %p79, %p80
    %p82 = scmp.ne.s32.totalorder %s74, %s76
    %p83 = scmp.eq.s32.totalorder %s19, 1
    %p84 = por %p82, %p83
    %p85 = scmp.ne.s32.totalorder %s76, %s77
    %p86 = scmp.eq.s32.totalorder %s19, 0
    %p87 = por %p85, %p86
    %p88 = scmp.ne.s32.totalorder %s76, %s77
    %p89 = scmp.eq.s32.totalorder %s20, 1
    %p90 = por %p88, %p89
    %p92 = scmp.ne.s32.totalorder %s77, %s91
    %p93 = scmp.eq.s32.totalorder %s20, 0
    %p94 = por %p92, %p93
    %s96 = sadd.s32 %s95, 1
    %p99 = scmp.eq.s32.totalorder %s14, 1
    %p100 = scmp.ne.s32.totalorder %s95, %s97
    %p101 = scmp.eq.s32.totalorder %s14, 0
    %p102 = por %p100, %p101
    %p103 = scmp.ne.s32.totalorder %s95, %s97
    %p104 = scmp.eq.s32.totalorder %s19, 1
    %p105 = por %p103, %p104
    %p106 = scmp.ne.s32.totalorder %s97, %s98
    %p107 = scmp.eq.s32.totalorder %s19, 0
    %p108 = por %p106, %p107
    %p109 = scmp.ne.s32.totalorder %s97, %s98
    %p110 = scmp.eq.s32.totalorder %s20, 1
    %p111 = por %p109, %p110
    %p113 = scmp.ne.s32.totalorder %s98, %s112
    %p114 = scmp.eq.s32.totalorder %s20, 0
    %p115 = por %p113, %p114
    %s117 = sadd.s32 %s116, 1
    %p120 = scmp.eq.s32.totalorder %s14, 1
    %p121 = scmp.ne.s32.totalorder %s116, %s118
    %p122 = scmp.eq.s32.totalorder %s14, 0
    %p123 = por %p121, %p122
    %p124 = scmp.ne.s32.totalorder %s116, %s118
    %p125 = scmp.eq.s32.totalorder %s19, 1
    %p126 = por %p124, %p125
    %p127 = scmp.ne.s32.totalorder %s118, %s119
    %p128 = scmp.eq.s32.totalorder %s19, 0
    %p129 = por %p127, %p128
    %p130 = scmp.ne.s32.totalorder %s118, %s119
    %p131 = scmp.eq.s32.totalorder %s20, 1
    %p132 = por %p130, %p131
    %p134 = scmp.ne.s32.totalorder %s119, %s133
    %p135 = scmp.eq.s32.totalorder %s20, 0
    %p136 = por %p134, %p135
    %s138 = sadd.s32 %s137, 1
    %p141 = scmp.eq.s32.totalorder %s14, 1
    %p142 = scmp.ne.s32.totalorder %s137, %s139
    %p143 = scmp.eq.s32.totalorder %s14, 0
    %p144 = por %p142, %p143
    %p145 = scmp.ne.s32.totalorder %s137, %s139
    %p146 = scmp.eq.s32.totalorder %s19, 1
    %p147 = por %p145, %p146
    %p148 = scmp.ne.s32.totalorder %s139, %s140
    %p149 = scmp.eq.s32.totalorder %s19, 0
    %p150 = por %p148, %p149
    %p151 = scmp.ne.s32.totalorder %s139, %s140
    %p152 = scmp.eq.s32.totalorder %s20, 1
    %p153 = por %p151, %p152
    %p155 = scmp.ne.s32.totalorder %s140, %s154
    %p156 = scmp.eq.s32.totalorder %s20, 0
    %p157 = por %p155, %p156
    %s159 = sadd.s32 %s158, 1
    %p162 = scmp.eq.s32.totalorder %s14, 1
    %p163 = scmp.ne.s32.totalorder %s158, %s160
    %p164 = scmp.eq.s32.totalorder %s14, 0
    %p165 = por %p163, %p164
    %p166 = scmp.ne.s32.totalorder %s158, %s160
    %p167 = scmp.eq.s32.totalorder %s19, 1
    %p168 = por %p166, %p167
    %p169 = scmp.ne.s32.totalorder %s160, %s161
    %p170 = scmp.eq.s32.totalorder %s19, 0
    %p171 = por %p169, %p170
    %p172 = scmp.ne.s32.totalorder %s160, %s161
    %p173 = scmp.eq.s32.totalorder %s20, 1
    %p174 = por %p172, %p173
    %p176 = scmp.ne.s32.totalorder %s161, %s175
    %p177 = scmp.eq.s32.totalorder %s20, 0
    %p178 = por %p176, %p177
    %s180 = sadd.s32 %s179, 1
    %p183 = scmp.eq.s32.totalorder %s14, 1
    %p184 = scmp.ne.s32.totalorder %s179, %s181
    %p185 = scmp.eq.s32.totalorder %s14, 0
    %p186 = por %p184, %p185
    %p187 = scmp.ne.s32.totalorder %s179, %s181
    %p188 = scmp.eq.s32.totalorder %s19, 1
    %p189 = por %p187, %p188
    %p190 = scmp.ne.s32.totalorder %s181, %s182
    %p191 = scmp.eq.s32.totalorder %s19, 0
    %p192 = por %p190, %p191
    %p193 = scmp.ne.s32.totalorder %s181, %s182
    %p194 = scmp.eq.s32.totalorder %s20, 1
    %p195 = por %p193, %p194
    %p197 = scmp.ne.s32.totalorder %s182, %s196
    %p198 = scmp.eq.s32.totalorder %s20, 0
    %p199 = por %p197, %p198
    %s200 = ssub.s32 %s14, %s21
    %p201 = scmp.eq.s32.totalorder %s200, 0
    %s203 = sadd.s32 %s202, 1
    %s204 = scalar_select %p201, %s202, %s203
    %p207 = pneg %p201
    %p208 = scmp.eq.s32.totalorder %s14, 1
    %p209 = por %p207, %p208
    %p210 = scmp.ne.s32.totalorder %s202, %s205
    %p211 = scmp.eq.s32.totalorder %s14, 0
    %p212 = por %p210, %p211
    %p213 = scmp.ne.s32.totalorder %s202, %s205
    %p214 = scmp.eq.s32.totalorder %s19, 1
    %p215 = por %p213, %p214
    %p216 = scmp.ne.s32.totalorder %s205, %s206
    %p217 = scmp.eq.s32.totalorder %s19, 0
    %p218 = por %p216, %p217
    %p219 = scmp.ne.s32.totalorder %s205, %s206
    %p220 = scmp.eq.s32.totalorder %s20, 1
    %p221 = por %p219, %p220
    %p223 = scmp.ne.s32.totalorder %s206, %s222
    %p224 = scmp.eq.s32.totalorder %s20, 0
    %p225 = por %p223, %p224
    %p226 = scmp.le.s32.totalorder 1, %s14
    %p227 = scmp.lt.s32.totalorder %s14, 3
    %p228 = pnand %p226, %p227
    %p229 = pneg %p228
    // Predicated region
    $region9: #{lite_mla_forward.3} parent=5 // pred_check
      _
    $region10: #{lite_mla_forward.3} parent=5 // pred_check_branch
      %231 = sbr.rel (%p228) target = $region12
    $region11: #{lite_mla_forward.3} parent=5 // pred_region
      %s232 = ssub.s32 %s14, 1
      // Predicated region
      $region13: #{lite_mla_forward.3} parent=11 // pred_check
        %p233 = pneg %p87
      $region14: #{lite_mla_forward.3} parent=11 // pred_check_branch
        %235 = sbr.rel (%p233) target = $region16
      $region15: #{lite_mla_forward.3} parent=11 // pred_region
        _
      $region16: #{lite_mla_forward.3} parent=11 // pred_fallthru
        _
      // Predicated region
      $region17: #{lite_mla_forward.3} parent=11 // pred_check
        %p236 = pneg %p108
      $region18: #{lite_mla_forward.3} parent=11 // pred_check_branch
        %238 = sbr.rel (%p236) target = $region20
      $region19: #{lite_mla_forward.3} parent=11 // pred_region
        _
      $region20: #{lite_mla_forward.3} parent=11 // pred_fallthru
        _
      // Predicated region
      $region21: #{lite_mla_forward.3} parent=11 // pred_check
        %p239 = pneg %p129
      $region22: #{lite_mla_forward.3} parent=11 // pred_check_branch
        %241 = sbr.rel (%p239) target = $region24
      $region23: #{lite_mla_forward.3} parent=11 // pred_region
        _
      $region24: #{lite_mla_forward.3} parent=11 // pred_fallthru
        _
      // Predicated region
      $region25: #{lite_mla_forward.3} parent=11 // pred_check
        %p242 = pneg %p150
      $region26: #{lite_mla_forward.3} parent=11 // pred_check_branch
        %244 = sbr.rel (%p242) target = $region28
      $region27: #{lite_mla_forward.3} parent=11 // pred_region
        _
      $region28: #{lite_mla_forward.3} parent=11 // pred_fallthru
        _
      // Predicated region
      $region29: #{lite_mla_forward.3} parent=11 // pred_check
        %p245 = pneg %p171
      $region30: #{lite_mla_forward.3} parent=11 // pred_check_branch
        %247 = sbr.rel (%p245) target = $region32
      $region31: #{lite_mla_forward.3} parent=11 // pred_region
        _
      $region32: #{lite_mla_forward.3} parent=11 // pred_fallthru
        _
      // Predicated region
      $region33: #{lite_mla_forward.3} parent=11 // pred_check
        %p248 = pneg %p192
      $region34: #{lite_mla_forward.3} parent=11 // pred_check_branch
        %250 = sbr.rel (%p248) target = $region36
      $region35: #{lite_mla_forward.3} parent=11 // pred_region
        _
      $region36: #{lite_mla_forward.3} parent=11 // pred_fallthru
        _
    $region12: #{lite_mla_forward.3} parent=5 // pred_fallthru
      _
    %p251 = scmp.lt.s32.totalorder %s14, 2
    // Predicated region
    $region37: #{lite_mla_forward.3} parent=5 // pred_check
      %p252 = pneg %p251
    $region38: #{lite_mla_forward.3} parent=5 // pred_check_branch
      %254 = sbr.rel (%p252) target = $region40
    $region39: #{lite_mla_forward.3} parent=5 // pred_region
      // Predicated region
      $region41: #{lite_mla_forward.3} parent=39 // pred_check
        %p255 = pneg %p34
      $region42: #{lite_mla_forward.3} parent=39 // pred_check_branch
        %257 = sbr.rel (%p255) target = $region44
      $region43: #{lite_mla_forward.3} parent=39 // pred_region
        %p258 = scmp.lt.s32.totalorder %s14, 1
        %s259 = scalar_select %p258, %s14, 1
        %s260 = smul.addr %s259, 32
        %s261 = smul.addr %s260, 8
        %s262 = scalar_lea.vmem %s0, %s261
      $region44: #{lite_mla_forward.3} parent=39 // pred_fallthru
        _
      // Predicated region
      $region45: #{lite_mla_forward.3} parent=39 // pred_check
        %p263 = pneg %p60
      $region46: #{lite_mla_forward.3} parent=39 // pred_check_branch
        %265 = sbr.rel (%p263) target = $region48
      $region47: #{lite_mla_forward.3} parent=39 // pred_region
        %p266 = scmp.lt.s32.totalorder %s14, 1
        %s267 = scalar_select %p266, %s14, 1
        %s268 = smul.addr %s267, 60
        %s269 = smul.addr %s268, 8
        %s270 = scalar_lea.vmem %s1, %s269
      $region48: #{lite_mla_forward.3} parent=39 // pred_fallthru
        _
    $region40: #{lite_mla_forward.3} parent=5 // pred_fallthru
      _
    %p271 = scmp.le.s32.totalorder 1, %s14
    %p272 = scmp.lt.s32.totalorder %s14, 3
    %p273 = pnand %p271, %p272
    %p274 = pneg %p273
    // Predicated region
    $region49: #{lite_mla_forward.3} parent=5 // pred_check
      _
    $region50: #{lite_mla_forward.3} parent=5 // pred_check_branch
      %276 = sbr.rel (%p273) target = $region52
    $region51: #{lite_mla_forward.3} parent=5 // pred_region
      %s277 = ssub.s32 %s14, 1
      %p278 = scmp.lt.s32.totalorder %s19, 1
      %s279 = scalar_select %p278, %s19, 1
      %s280 = smul.addr %s279, 32
      %s281 = smul.addr %s280, 8
      %s282 = scalar_lea.vmem %s0, %s281
      %p283 = pneg %p40
      %p284 = pneg %p37
      %p285 = scmp.lt.s32.totalorder %s19, 1
      %s286 = scalar_select %p285, %s19, 1
      %s287 = smul.addr %s286, 60
      %s288 = smul.addr %s287, 8
      %s289 = scalar_lea.vmem %s1, %s288
      %p290 = pneg %p66
      %p291 = pneg %p63
      %p292 = pneg %p87
      %p293 = pneg %p84
      %p294 = pneg %p108
      %p295 = pneg %p105
      %p296 = pneg %p129
      %p297 = pneg %p126
      %p298 = pneg %p150
      %p299 = pneg %p147
      %p300 = pneg %p171
      %p301 = pneg %p168
      %p302 = pneg %p192
      %p303 = pneg %p189
      %p304 = pneg %p218
      %p305 = pneg %p215
      %p306 = scmp.lt.s32.totalorder %s19, 1
      %s307 = scalar_select %p306, %s19, 1
      %s308 = smul.addr %s307, 8
      %s309 = smul.addr %s308, 8
      %s310 = scalar_lea.vmem %s8, %s309
      %p311 = scmp.lt.s32.totalorder %s19, 1
      %s312 = scalar_select %p311, %s19, 1
      %s313 = smul.addr %s312, 32
      %s314 = smul.addr %s313, 8
      %s315 = scalar_lea.vmem %s0, %s314
      %p316 = scmp.lt.s32.totalorder %s19, 1
      %s317 = scalar_select %p316, %s19, 1
      %s318 = smul.addr %s317, 60
      %s319 = smul.addr %s318, 8
      %s320 = scalar_lea.vmem %s1, %s319
      %p321 = scmp.lt.s32.totalorder %s19, 1
      %s322 = scalar_select %p321, %s19, 1
      %s323 = smul.addr %s322, 8
      %s324 = smul.addr %s323, 8
      %s325 = scalar_lea.vmem %s8, %s324
      %v326 = vld [vmem:[%s320] sm:$0xff]
      %v327 = vld [vmem:[%s320 + $0x8] sm:$0xff]
      %v328 = vld [vmem:[%s320 + $0x10] sm:$0xf]
      %v329 = vld [vmem:[%s320 + $0x18] sm:$0xff]
      %v330 = vld [vmem:[%s320 + $0x20] sm:$0xff]
      %v331 = vld [vmem:[%s320 + $0x28] sm:$0xf]
      %v332 = vld [vmem:[%s320 + $0x30] sm:$0xff]
      %v333 = vld [vmem:[%s320 + $0x38] sm:$0xff]
      %v334 = vld [vmem:[%s320 + $0x40] sm:$0xf]
      %v335 = vld [vmem:[%s320 + $0x48] sm:$0xff]
      %v336 = vld [vmem:[%s320 + $0x50] sm:$0xff]
      %v337 = vld [vmem:[%s320 + $0x58] sm:$0xf]
      %v338 = vld [vmem:[%s320 + $0x60] sm:$0xff]
      %v339 = vld [vmem:[%s320 + $0x68] sm:$0xff]
      %v340 = vld [vmem:[%s320 + $0x70] sm:$0xf]
      %v341 = vld [vmem:[%s320 + $0x78] sm:$0xff]
      %v342 = vld [vmem:[%s320 + $0x80] sm:$0xff]
      %v343 = vld [vmem:[%s320 + $0x88] sm:$0xf]
      %v344 = vld [vmem:[%s320 + $0x90] sm:$0xff]
      %v345 = vld [vmem:[%s320 + $0x98] sm:$0xff]
      %v346 = vld [vmem:[%s320 + $0xa0] sm:$0xf]
      %v347 = vld [vmem:[%s320 + $0xa8] sm:$0xff]
      %v348 = vld [vmem:[%s320 + $0xb0] sm:$0xff]
      %v349 = vld [vmem:[%s320 + $0xb8] sm:$0xf]
      %v350 = vld [vmem:[%s320 + $0xc0] sm:$0xff]
      %v351 = vld [vmem:[%s320 + $0xc8] sm:$0xff]
      %v352 = vld [vmem:[%s320 + $0xd0] sm:$0xf]
      %v353 = vld [vmem:[%s320 + $0xd8] sm:$0xff]
      %v354 = vld [vmem:[%s320 + $0xe0] sm:$0xff]
      %v355 = vld [vmem:[%s320 + $0xe8] sm:$0xf]
      %v356 = vld [vmem:[%s320 + $0xf0] sm:$0xff]
      %v357 = vld [vmem:[%s320 + $0xf8] sm:$0xff]
      %v358 = vld [vmem:[%s320 + $0x100] sm:$0xf]
      %v359 = vld [vmem:[%s320 + $0x108] sm:$0xff]
      %v360 = vld [vmem:[%s320 + $0x110] sm:$0xff]
      %v361 = vld [vmem:[%s320 + $0x118] sm:$0xf]
      %v362 = vld [vmem:[%s320 + $0x120] sm:$0xff]
      %v363 = vld [vmem:[%s320 + $0x128] sm:$0xff]
      %v364 = vld [vmem:[%s320 + $0x130] sm:$0xf]
      %v365 = vld [vmem:[%s320 + $0x138] sm:$0xff]
      %v366 = vld [vmem:[%s320 + $0x140] sm:$0xff]
      %v367 = vld [vmem:[%s320 + $0x148] sm:$0xf]
      %v368 = vld [vmem:[%s320 + $0x150] sm:$0xff]
      %v369 = vld [vmem:[%s320 + $0x158] sm:$0xff]
      %v370 = vld [vmem:[%s320 + $0x160] sm:$0xf]
      %v371 = vld [vmem:[%s320 + $0x168] sm:$0xff]
      %v372 = vld [vmem:[%s320 + $0x170] sm:$0xff]
      %v373 = vld [vmem:[%s320 + $0x178] sm:$0xf]
      %v374 = vld [vmem:[%s320 + $0x180] sm:$0xff]
      %v375 = vld [vmem:[%s320 + $0x188] sm:$0xff]
      %v376 = vld [vmem:[%s320 + $0x190] sm:$0xf]
      %v377 = vld [vmem:[%s320 + $0x198] sm:$0xff]
      %v378 = vld [vmem:[%s320 + $0x1a0] sm:$0xff]
      %v379 = vld [vmem:[%s320 + $0x1a8] sm:$0xf]
      %v380 = vld [vmem:[%s320 + $0x1b0] sm:$0xff]
      %v381 = vld [vmem:[%s320 + $0x1b8] sm:$0xff]
      %v382 = vld [vmem:[%s320 + $0x1c0] sm:$0xf]
      %v383 = vld [vmem:[%s320 + $0x1c8] sm:$0xff]
      %v384 = vld [vmem:[%s320 + $0x1d0] sm:$0xff]
      %v385 = vld [vmem:[%s320 + $0x1d8] sm:$0xf]
      %v386 = vld [vmem:[%s2] sm:$0x1]
      %v387 = vlaneseq
      %v388 = vshrl.u32 %v387, 7
      %v389 = vsub.s32 0, %v388
      %v390 = vrot.slane %v386, %v389
      %v391 = vmul.f32 %v326, %v390
      %v392 = vmul.f32 %v327, %v390
      %v393 = vmul.f32 %v329, %v390
      %v394 = vmul.f32 %v330, %v390
      %v395 = vmul.f32 %v332, %v390
      %v396 = vmul.f32 %v333, %v390
      %v397 = vmul.f32 %v335, %v390
      %v398 = vmul.f32 %v336, %v390
      %v399 = vmul.f32 %v338, %v390
      %v400 = vmul.f32 %v339, %v390
      %v401 = vmul.f32 %v341, %v390
      %v402 = vmul.f32 %v342, %v390
      %v403 = vmul.f32 %v344, %v390
      %v404 = vmul.f32 %v345, %v390
      %v405 = vmul.f32 %v347, %v390
      %v406 = vmul.f32 %v348, %v390
      %v407 = vmul.f32 %v350, %v390
      %v408 = vmul.f32 %v351, %v390
      %v409 = vmul.f32 %v353, %v390
      %v410 = vmul.f32 %v354, %v390
      %v411 = vmul.f32 %v356, %v390
      %v412 = vmul.f32 %v357, %v390
      %v413 = vmul.f32 %v359, %v390
      %v414 = vmul.f32 %v360, %v390
      %v415 = vmul.f32 %v362, %v390
      %v416 = vmul.f32 %v363, %v390
      %v417 = vmul.f32 %v365, %v390
      %v418 = vmul.f32 %v366, %v390
      %v419 = vmul.f32 %v368, %v390
      %v420 = vmul.f32 %v369, %v390
      %v421 = vmul.f32 %v371, %v390
      %v422 = vmul.f32 %v372, %v390
      %v423 = vadd.f32 %v391, 0.0
      %v424 = vadd.f32 %v392, 0.0
      %v425 = vadd.f32 %v393, 0.0
      %v426 = vadd.f32 %v394, 0.0
      %v427 = vadd.f32 %v395, 0.0
      %v428 = vadd.f32 %v396, 0.0
      %v429 = vadd.f32 %v397, 0.0
      %v430 = vadd.f32 %v398, 0.0
      %v431 = vadd.f32 %v399, 0.0
      %v432 = vadd.f32 %v400, 0.0
      %v433 = vadd.f32 %v401, 0.0
      %v434 = vadd.f32 %v402, 0.0
      %v435 = vadd.f32 %v403, 0.0
      %v436 = vadd.f32 %v404, 0.0
      %v437 = vadd.f32 %v405, 0.0
      %v438 = vadd.f32 %v406, 0.0
      %v439 = vadd.f32 %v407, 0.0
      %v440 = vadd.f32 %v408, 0.0
      %v441 = vadd.f32 %v409, 0.0
      %v442 = vadd.f32 %v410, 0.0
      %v443 = vadd.f32 %v411, 0.0
      %v444 = vadd.f32 %v412, 0.0
      %v445 = vadd.f32 %v413, 0.0
      %v446 = vadd.f32 %v414, 0.0
      %v447 = vadd.f32 %v415, 0.0
      %v448 = vadd.f32 %v416, 0.0
      %v449 = vadd.f32 %v417, 0.0
      %v450 = vadd.f32 %v418, 0.0
      %v451 = vadd.f32 %v419, 0.0
      %v452 = vadd.f32 %v420, 0.0
      %v453 = vadd.f32 %v421, 0.0
      %v454 = vadd.f32 %v422, 0.0
      %s455 = scalar_lea.vmem %s2, 8
      %v456 = vld [vmem:[%s455] sm:$0x1]
      %v457 = vlaneseq
      %v458 = vshrl.u32 %v457, 7
      %v459 = vsub.s32 0, %v458
      %v460 = vrot.slane %v456, %v459
      %v461 = vmul.f32 %v329, %v460
      %v462 = vmul.f32 %v330, %v460
      %v463 = vmul.f32 %v332, %v460
      %v464 = vmul.f32 %v333, %v460
      %v465 = vmul.f32 %v335, %v460
      %v466 = vmul.f32 %v336, %v460
      %v467 = vmul.f32 %v338, %v460
      %v468 = vmul.f32 %v339, %v460
      %v469 = vmul.f32 %v341, %v460
      %v470 = vmul.f32 %v342, %v460
      %v471 = vmul.f32 %v344, %v460
      %v472 = vmul.f32 %v345, %v460
      %v473 = vmul.f32 %v347, %v460
      %v474 = vmul.f32 %v348, %v460
      %v475 = vmul.f32 %v350, %v460
      %v476 = vmul.f32 %v351, %v460
      %v477 = vmul.f32 %v353, %v460
      %v478 = vmul.f32 %v354, %v460
      %v479 = vmul.f32 %v356, %v460
      %v480 = vmul.f32 %v357, %v460
      %v481 = vmul.f32 %v359, %v460
      %v482 = vmul.f32 %v360, %v460
      %v483 = vmul.f32 %v362, %v460
      %v484 = vmul.f32 %v363, %v460
      %v485 = vmul.f32 %v365, %v460
      %v486 = vmul.f32 %v366, %v460
      %v487 = vmul.f32 %v368, %v460
      %v488 = vmul.f32 %v369, %v460
      %v489 = vmul.f32 %v371, %v460
      %v490 = vmul.f32 %v372, %v460
      %v491 = vmul.f32 %v374, %v460
      %v492 = vmul.f32 %v375, %v460
      %v493 = vadd.f32 %v423, %v461
      %v494 = vadd.f32 %v424, %v462
      %v495 = vadd.f32 %v425, %v463
      %v496 = vadd.f32 %v426, %v464
      %v497 = vadd.f32 %v427, %v465
      %v498 = vadd.f32 %v428, %v466
      %v499 = vadd.f32 %v429, %v467
      %v500 = vadd.f32 %v430, %v468
      %v501 = vadd.f32 %v431, %v469
      %v502 = vadd.f32 %v432, %v470
      %v503 = vadd.f32 %v433, %v471
      %v504 = vadd.f32 %v434, %v472
      %v505 = vadd.f32 %v435, %v473
      %v506 = vadd.f32 %v436, %v474
      %v507 = vadd.f32 %v437, %v475
      %v508 = vadd.f32 %v438, %v476
      %v509 = vadd.f32 %v439, %v477
      %v510 = vadd.f32 %v440, %v478
      %v511 = vadd.f32 %v441, %v479
      %v512 = vadd.f32 %v442, %v480
      %v513 = vadd.f32 %v443, %v481
      %v514 = vadd.f32 %v444, %v482
      %v515 = vadd.f32 %v445, %v483
      %v516 = vadd.f32 %v446, %v484
      %v517 = vadd.f32 %v447, %v485
      %v518 = vadd.f32 %v448, %v486
      %v519 = vadd.f32 %v449, %v487
      %v520 = vadd.f32 %v450, %v488
      %v521 = vadd.f32 %v451, %v489
      %v522 = vadd.f32 %v452, %v490
      %v523 = vadd.f32 %v453, %v491
      %v524 = vadd.f32 %v454, %v492
      %s525 = scalar_lea.vmem %s2, 16
      %v526 = vld [vmem:[%s525] sm:$0x1]
      %v527 = vlaneseq
      %v528 = vshrl.u32 %v527, 7
      %v529 = vsub.s32 0, %v528
      %v530 = vrot.slane %v526, %v529
      %v531 = vmul.f32 %v332, %v530
      %v532 = vmul.f32 %v333, %v530
      %v533 = vmul.f32 %v335, %v530
      %v534 = vmul.f32 %v336, %v530
      %v535 = vmul.f32 %v338, %v530
      %v536 = vmul.f32 %v339, %v530
      %v537 = vmul.f32 %v341, %v530
      %v538 = vmul.f32 %v342, %v530
      %v539 = vmul.f32 %v344, %v530
      %v540 = vmul.f32 %v345, %v530
      %v541 = vmul.f32 %v347, %v530
      %v542 = vmul.f32 %v348, %v530
      %v543 = vmul.f32 %v350, %v530
      %v544 = vmul.f32 %v351, %v530
      %v545 = vmul.f32 %v353, %v530
      %v546 = vmul.f32 %v354, %v530
      %v547 = vmul.f32 %v356, %v530
      %v548 = vmul.f32 %v357, %v530
      %v549 = vmul.f32 %v359, %v530
      %v550 = vmul.f32 %v360, %v530
      %v551 = vmul.f32 %v362, %v530
      %v552 = vmul.f32 %v363, %v530
      %v553 = vmul.f32 %v365, %v530
      %v554 = vmul.f32 %v366, %v530
      %v555 = vmul.f32 %v368, %v530
      %v556 = vmul.f32 %v369, %v530
      %v557 = vmul.f32 %v371, %v530
      %v558 = vmul.f32 %v372, %v530
      %v559 = vmul.f32 %v374, %v530
      %v560 = vmul.f32 %v375, %v530
      %v561 = vmul.f32 %v377, %v530
      %v562 = vmul.f32 %v378, %v530
      %v563 = vadd.f32 %v493, %v531
      %v564 = vadd.f32 %v494, %v532
      %v565 = vadd.f32 %v495, %v533
      %v566 = vadd.f32 %v496, %v534
      %v567 = vadd.f32 %v497, %v535
      %v568 = vadd.f32 %v498, %v536
      %v569 = vadd.f32 %v499, %v537
      %v570 = vadd.f32 %v500, %v538
      %v571 = vadd.f32 %v501, %v539
      %v572 = vadd.f32 %v502, %v540
      %v573 = vadd.f32 %v503, %v541
      %v574 = vadd.f32 %v504, %v542
      %v575 = vadd.f32 %v505, %v543
      %v576 = vadd.f32 %v506, %v544
      %v577 = vadd.f32 %v507, %v545
      %v578 = vadd.f32 %v508, %v546
      %v579 = vadd.f32 %v509, %v547
      %v580 = vadd.f32 %v510, %v548
      %v581 = vadd.f32 %v511, %v549
      %v582 = vadd.f32 %v512, %v550
      %v583 = vadd.f32 %v513, %v551
      %v584 = vadd.f32 %v514, %v552
      %v585 = vadd.f32 %v515, %v553
      %v586 = vadd.f32 %v516, %v554
      %v587 = vadd.f32 %v517, %v555
      %v588 = vadd.f32 %v518, %v556
      %v589 = vadd.f32 %v519, %v557
      %v590 = vadd.f32 %v520, %v558
      %v591 = vadd.f32 %v521, %v559
      %v592 = vadd.f32 %v522, %v560
      %v593 = vadd.f32 %v523, %v561
      %v594 = vadd.f32 %v524, %v562
      %s595 = scalar_lea.vmem %s2, 24
      %v596 = vld [vmem:[%s595] sm:$0x1]
      %v597 = vlaneseq
      %v598 = vshrl.u32 %v597, 7
      %v599 = vsub.s32 0, %v598
      %v600 = vrot.slane %v596, %v599
      %v601 = vmul.f32 %v335, %v600
      %v602 = vmul.f32 %v336, %v600
      %v603 = vmul.f32 %v338, %v600
      %v604 = vmul.f32 %v339, %v600
      %v605 = vmul.f32 %v341, %v600
      %v606 = vmul.f32 %v342, %v600
      %v607 = vmul.f32 %v344, %v600
      %v608 = vmul.f32 %v345, %v600
      %v609 = vmul.f32 %v347, %v600
      %v610 = vmul.f32 %v348, %v600
      %v611 = vmul.f32 %v350, %v600
      %v612 = vmul.f32 %v351, %v600
      %v613 = vmul.f32 %v353, %v600
      %v614 = vmul.f32 %v354, %v600
      %v615 = vmul.f32 %v356, %v600
      %v616 = vmul.f32 %v357, %v600
      %v617 = vmul.f32 %v359, %v600
      %v618 = vmul.f32 %v360, %v600
      %v619 = vmul.f32 %v362, %v600
      %v620 = vmul.f32 %v363, %v600
      %v621 = vmul.f32 %v365, %v600
      %v622 = vmul.f32 %v366, %v600
      %v623 = vmul.f32 %v368, %v600
      %v624 = vmul.f32 %v369, %v600
      %v625 = vmul.f32 %v371, %v600
      %v626 = vmul.f32 %v372, %v600
      %v627 = vmul.f32 %v374, %v600
      %v628 = vmul.f32 %v375, %v600
      %v629 = vmul.f32 %v377, %v600
      %v630 = vmul.f32 %v378, %v600
      %v631 = vmul.f32 %v380, %v600
      %v632 = vmul.f32 %v381, %v600
      %v633 = vadd.f32 %v563, %v601
      %v634 = vadd.f32 %v564, %v602
      %v635 = vadd.f32 %v565, %v603
      %v636 = vadd.f32 %v566, %v604
      %v637 = vadd.f32 %v567, %v605
      %v638 = vadd.f32 %v568, %v606
      %v639 = vadd.f32 %v569, %v607
      %v640 = vadd.f32 %v570, %v608
      %v641 = vadd.f32 %v571, %v609
      %v642 = vadd.f32 %v572, %v610
      %v643 = vadd.f32 %v573, %v611
      %v644 = vadd.f32 %v574, %v612
      %v645 = vadd.f32 %v575, %v613
      %v646 = vadd.f32 %v576, %v614
      %v647 = vadd.f32 %v577, %v615
      %v648 = vadd.f32 %v578, %v616
      %v649 = vadd.f32 %v579, %v617
      %v650 = vadd.f32 %v580, %v618
      %v651 = vadd.f32 %v581, %v619
      %v652 = vadd.f32 %v582, %v620
      %v653 = vadd.f32 %v583, %v621
      %v654 = vadd.f32 %v584, %v622
      %v655 = vadd.f32 %v585, %v623
      %v656 = vadd.f32 %v586, %v624
      %v657 = vadd.f32 %v587, %v625
      %v658 = vadd.f32 %v588, %v626
      %v659 = vadd.f32 %v589, %v627
      %v660 = vadd.f32 %v590, %v628
      %v661 = vadd.f32 %v591, %v629
      %v662 = vadd.f32 %v592, %v630
      %v663 = vadd.f32 %v593, %v631
      %v664 = vadd.f32 %v594, %v632
      %s665 = scalar_lea.vmem %s2, 32
      %v666 = vld [vmem:[%s665] sm:$0x1]
      %v667 = vlaneseq
      %v668 = vshrl.u32 %v667, 7
      %v669 = vsub.s32 0, %v668
      %v670 = vrot.slane %v666, %v669
      %v671 = vmul.f32 %v338, %v670
      %v672 = vmul.f32 %v339, %v670
      %v673 = vmul.f32 %v341, %v670
      %v674 = vmul.f32 %v342, %v670
      %v675 = vmul.f32 %v344, %v670
      %v676 = vmul.f32 %v345, %v670
      %v677 = vmul.f32 %v347, %v670
      %v678 = vmul.f32 %v348, %v670
      %v679 = vmul.f32 %v350, %v670
      %v680 = vmul.f32 %v351, %v670
      %v681 = vmul.f32 %v353, %v670
      %v682 = vmul.f32 %v354, %v670
      %v683 = vmul.f32 %v356, %v670
      %v684 = vmul.f32 %v357, %v670
      %v685 = vmul.f32 %v359, %v670
      %v686 = vmul.f32 %v360, %v670
      %v687 = vmul.f32 %v362, %v670
      %v688 = vmul.f32 %v363, %v670
      %v689 = vmul.f32 %v365, %v670
      %v690 = vmul.f32 %v366, %v670
      %v691 = vmul.f32 %v368, %v670
      %v692 = vmul.f32 %v369, %v670
      %v693 = vmul.f32 %v371, %v670
      %v694 = vmul.f32 %v372, %v670
      %v695 = vmul.f32 %v374, %v670
      %v696 = vmul.f32 %v375, %v670
      %v697 = vmul.f32 %v377, %v670
      %v698 = vmul.f32 %v378, %v670
      %v699 = vmul.f32 %v380, %v670
      %v700 = vmul.f32 %v381, %v670
      %v701 = vmul.f32 %v383, %v670
      %v702 = vmul.f32 %v384, %v670
      %v703 = vadd.f32 %v633, %v671
      %v704 = vadd.f32 %v634, %v672
      %v705 = vadd.f32 %v635, %v673
      %v706 = vadd.f32 %v636, %v674
      %v707 = vadd.f32 %v637, %v675
      %v708 = vadd.f32 %v638, %v676
      %v709 = vadd.f32 %v639, %v677
      %v710 = vadd.f32 %v640, %v678
      %v711 = vadd.f32 %v641, %v679
      %v712 = vadd.f32 %v642, %v680
      %v713 = vadd.f32 %v643, %v681
      %v714 = vadd.f32 %v644, %v682
      %v715 = vadd.f32 %v645, %v683
      %v716 = vadd.f32 %v646, %v684
      %v717 = vadd.f32 %v647, %v685
      %v718 = vadd.f32 %v648, %v686
      %v719 = vadd.f32 %v649, %v687
      %v720 = vadd.f32 %v650, %v688
      %v721 = vadd.f32 %v651, %v689
      %v722 = vadd.f32 %v652, %v690
      %v723 = vadd.f32 %v653, %v691
      %v724 = vadd.f32 %v654, %v692
      %v725 = vadd.f32 %v655, %v693
      %v726 = vadd.f32 %v656, %v694
      %v727 = vadd.f32 %v657, %v695
      %v728 = vadd.f32 %v658, %v696
      %v729 = vadd.f32 %v659, %v697
      %v730 = vadd.f32 %v660, %v698
      %v731 = vadd.f32 %v661, %v699
      %v732 = vadd.f32 %v662, %v700
      %v733 = vadd.f32 %v663, %v701
      %v734 = vadd.f32 %v664, %v702
      %v735 = vld [vmem:[%s2 + $0x1] sm:$0x1]
      %v736 = vlaneseq
      %v737 = vshrl.u32 %v736, 7
      %v738 = vsub.s32 0, %v737
      %v739 = vrot.slane %v735, %v738
      %v740 = vmul.f32 %v326, %v739
      %v741 = vmul.f32 %v327, %v739
      %v742 = vmul.f32 %v328, %v739
      %v743 = vmul.f32 %v329, %v739
      %v744 = vmul.f32 %v330, %v739
      %v745 = vmul.f32 %v331, %v739
      %v746 = vmul.f32 %v332, %v739
      %v747 = vmul.f32 %v333, %v739
      %v748 = vmul.f32 %v334, %v739
      %v749 = vmul.f32 %v335, %v739
      %v750 = vmul.f32 %v336, %v739
      %v751 = vmul.f32 %v337, %v739
      %v752 = vmul.f32 %v338, %v739
      %v753 = vmul.f32 %v339, %v739
      %v754 = vmul.f32 %v340, %v739
      %v755 = vmul.f32 %v341, %v739
      %v756 = vmul.f32 %v342, %v739
      %v757 = vmul.f32 %v343, %v739
      %v758 = vmul.f32 %v344, %v739
      %v759 = vmul.f32 %v345, %v739
      %v760 = vmul.f32 %v346, %v739
      %v761 = vmul.f32 %v347, %v739
      %v762 = vmul.f32 %v348, %v739
      %v763 = vmul.f32 %v349, %v739
      %v764 = vmul.f32 %v350, %v739
      %v765 = vmul.f32 %v351, %v739
      %v766 = vmul.f32 %v352, %v739
      %v767 = vmul.f32 %v353, %v739
      %v768 = vmul.f32 %v354, %v739
      %v769 = vmul.f32 %v355, %v739
      %v770 = vmul.f32 %v356, %v739
      %v771 = vmul.f32 %v357, %v739
      %v772 = vmul.f32 %v358, %v739
      %v773 = vmul.f32 %v359, %v739
      %v774 = vmul.f32 %v360, %v739
      %v775 = vmul.f32 %v361, %v739
      %v776 = vmul.f32 %v362, %v739
      %v777 = vmul.f32 %v363, %v739
      %v778 = vmul.f32 %v364, %v739
      %v779 = vmul.f32 %v365, %v739
      %v780 = vmul.f32 %v366, %v739
      %v781 = vmul.f32 %v367, %v739
      %v782 = vmul.f32 %v368, %v739
      %v783 = vmul.f32 %v369, %v739
      %v784 = vmul.f32 %v370, %v739
      %v785 = vmul.f32 %v371, %v739
      %v786 = vmul.f32 %v372, %v739
      %v787 = vmul.f32 %v373, %v739
      %vm836 = vcmask 1046528
      %v837 = vrot.slane %v740, 1
      %v838 = vrot.slane %v741, 1
      %v839 = vsel %vm836, %v837, %v838
      %v840 = vrot.slane %v742, 1
      %v841 = vsel %vm836, %v838, %v840
      %v842 = vrot.slane %v743, 1
      %v843 = vrot.slane %v744, 1
      %v844 = vsel %vm836, %v842, %v843
      %v845 = vrot.slane %v745, 1
      %v846 = vsel %vm836, %v843, %v845
      %v847 = vrot.slane %v746, 1
      %v848 = vrot.slane %v747, 1
      %v849 = vsel %vm836, %v847, %v848
      %v850 = vrot.slane %v748, 1
      %v851 = vsel %vm836, %v848, %v850
      %v852 = vrot.slane %v749, 1
      %v853 = vrot.slane %v750, 1
      %v854 = vsel %vm836, %v852, %v853
      %v855 = vrot.slane %v751, 1
      %v856 = vsel %vm836, %v853, %v855
      %v857 = vrot.slane %v752, 1
      %v858 = vrot.slane %v753, 1
      %v859 = vsel %vm836, %v857, %v858
      %v860 = vrot.slane %v754, 1
      %v861 = vsel %vm836, %v858, %v860
      %v862 = vrot.slane %v755, 1
      %v863 = vrot.slane %v756, 1
      %v864 = vsel %vm836, %v862, %v863
      %v865 = vrot.slane %v757, 1
      %v866 = vsel %vm836, %v863, %v865
      %v867 = vrot.slane %v758, 1
      %v868 = vrot.slane %v759, 1
      %v869 = vsel %vm836, %v867, %v868
      %v870 = vrot.slane %v760, 1
      %v871 = vsel %vm836, %v868, %v870
      %v872 = vrot.slane %v761, 1
      %v873 = vrot.slane %v762, 1
      %v874 = vsel %vm836, %v872, %v873
      %v875 = vrot.slane %v763, 1
      %v876 = vsel %vm836, %v873, %v875
      %v877 = vrot.slane %v764, 1
      %v878 = vrot.slane %v765, 1
      %v879 = vsel %vm836, %v877, %v878
      %v880 = vrot.slane %v766, 1
      %v881 = vsel %vm836, %v878, %v880
      %v882 = vrot.slane %v767, 1
      %v883 = vrot.slane %v768, 1
      %v884 = vsel %vm836, %v882, %v883
      %v885 = vrot.slane %v769, 1
      %v886 = vsel %vm836, %v883, %v885
      %v887 = vrot.slane %v770, 1
      %v888 = vrot.slane %v771, 1
      %v889 = vsel %vm836, %v887, %v888
      %v890 = vrot.slane %v772, 1
      %v891 = vsel %vm836, %v888, %v890
      %v892 = vrot.slane %v773, 1
      %v893 = vrot.slane %v774, 1
      %v894 = vsel %vm836, %v892, %v893
      %v895 = vrot.slane %v775, 1
      %v896 = vsel %vm836, %v893, %v895
      %v897 = vrot.slane %v776, 1
      %v898 = vrot.slane %v777, 1
      %v899 = vsel %vm836, %v897, %v898
      %v900 = vrot.slane %v778, 1
      %v901 = vsel %vm836, %v898, %v900
      %v902 = vrot.slane %v779, 1
      %v903 = vrot.slane %v780, 1
      %v904 = vsel %vm836, %v902, %v903
      %v905 = vrot.slane %v781, 1
      %v906 = vsel %vm836, %v903, %v905
      %v907 = vrot.slane %v782, 1
      %v908 = vrot.slane %v783, 1
      %v909 = vsel %vm836, %v907, %v908
      %v910 = vrot.slane %v784, 1
      %v911 = vsel %vm836, %v908, %v910
      %v912 = vrot.slane %v785, 1
      %v913 = vrot.slane %v786, 1
      %v914 = vsel %vm836, %v912, %v913
      %v915 = vrot.slane %v787, 1
      %v916 = vsel %vm836, %v913, %v915
      %v949 = vadd.f32 %v703, %v839
      %v950 = vadd.f32 %v704, %v841
      %v951 = vadd.f32 %v705, %v844
      %v952 = vadd.f32 %v706, %v846
      %v953 = vadd.f32 %v707, %v849
      %v954 = vadd.f32 %v708, %v851
      %v955 = vadd.f32 %v709, %v854
      %v956 = vadd.f32 %v710, %v856
      %v957 = vadd.f32 %v711, %v859
      %v958 = vadd.f32 %v712, %v861
      %v959 = vadd.f32 %v713, %v864
      %v960 = vadd.f32 %v714, %v866
      %v961 = vadd.f32 %v715, %v869
      %v962 = vadd.f32 %v716, %v871
      %v963 = vadd.f32 %v717, %v874
      %v964 = vadd.f32 %v718, %v876
      %v965 = vadd.f32 %v719, %v879
      %v966 = vadd.f32 %v720, %v881
      %v967 = vadd.f32 %v721, %v884
      %v968 = vadd.f32 %v722, %v886
      %v969 = vadd.f32 %v723, %v889
      %v970 = vadd.f32 %v724, %v891
      %v971 = vadd.f32 %v725, %v894
      %v972 = vadd.f32 %v726, %v896
      %v973 = vadd.f32 %v727, %v899
      %v974 = vadd.f32 %v728, %v901
      %v975 = vadd.f32 %v729, %v904
      %v976 = vadd.f32 %v730, %v906
      %v977 = vadd.f32 %v731, %v909
      %v978 = vadd.f32 %v732, %v911
      %v979 = vadd.f32 %v733, %v914
      %v980 = vadd.f32 %v734, %v916
      %v981 = vld [vmem:[%s455 + $0x1] sm:$0x1]
      %v982 = vlaneseq
      %v983 = vshrl.u32 %v982, 7
      %v984 = vsub.s32 0, %v983
      %v985 = vrot.slane %v981, %v984
      %v986 = vmul.f32 %v329, %v985
      %v987 = vmul.f32 %v330, %v985
      %v988 = vmul.f32 %v331, %v985
      %v989 = vmul.f32 %v332, %v985
      %v990 = vmul.f32 %v333, %v985
      %v991 = vmul.f32 %v334, %v985
      %v992 = vmul.f32 %v335, %v985
      %v993 = vmul.f32 %v336, %v985
      %v994 = vmul.f32 %v337, %v985
      %v995 = vmul.f32 %v338, %v985
      %v996 = vmul.f32 %v339, %v985
      %v997 = vmul.f32 %v340, %v985
      %v998 = vmul.f32 %v341, %v985
      %v999 = vmul.f32 %v342, %v985
      %v1000 = vmul.f32 %v343, %v985
      %v1001 = vmul.f32 %v344, %v985
      %v1002 = vmul.f32 %v345, %v985
      %v1003 = vmul.f32 %v346, %v985
      %v1004 = vmul.f32 %v347, %v985
      %v1005 = vmul.f32 %v348, %v985
      %v1006 = vmul.f32 %v349, %v985
      %v1007 = vmul.f32 %v350, %v985
      %v1008 = vmul.f32 %v351, %v985
      %v1009 = vmul.f32 %v352, %v985
      %v1010 = vmul.f32 %v353, %v985
      %v1011 = vmul.f32 %v354, %v985
      %v1012 = vmul.f32 %v355, %v985
      %v1013 = vmul.f32 %v356, %v985
      %v1014 = vmul.f32 %v357, %v985
      %v1015 = vmul.f32 %v358, %v985
      %v1016 = vmul.f32 %v359, %v985
      %v1017 = vmul.f32 %v360, %v985
      %v1018 = vmul.f32 %v361, %v985
      %v1019 = vmul.f32 %v362, %v985
      %v1020 = vmul.f32 %v363, %v985
      %v1021 = vmul.f32 %v364, %v985
      %v1022 = vmul.f32 %v365, %v985
      %v1023 = vmul.f32 %v366, %v985
      %v1024 = vmul.f32 %v367, %v985
      %v1025 = vmul.f32 %v368, %v985
      %v1026 = vmul.f32 %v369, %v985
      %v1027 = vmul.f32 %v370, %v985
      %v1028 = vmul.f32 %v371, %v985
      %v1029 = vmul.f32 %v372, %v985
      %v1030 = vmul.f32 %v373, %v985
      %v1031 = vmul.f32 %v374, %v985
      %v1032 = vmul.f32 %v375, %v985
      %v1033 = vmul.f32 %v376, %v985
      %v1082 = vrot.slane %v986, 1
      %v1083 = vrot.slane %v987, 1
      %v1084 = vsel %vm836, %v1082, %v1083
      %v1085 = vrot.slane %v988, 1
      %v1086 = vsel %vm836, %v1083, %v1085
      %v1087 = vrot.slane %v989, 1
      %v1088 = vrot.slane %v990, 1
      %v1089 = vsel %vm836, %v1087, %v1088
      %v1090 = vrot.slane %v991, 1
      %v1091 = vsel %vm836, %v1088, %v1090
      %v1092 = vrot.slane %v992, 1
      %v1093 = vrot.slane %v993, 1
      %v1094 = vsel %vm836, %v1092, %v1093
      %v1095 = vrot.slane %v994, 1
      %v1096 = vsel %vm836, %v1093, %v1095
      %v1097 = vrot.slane %v995, 1
      %v1098 = vrot.slane %v996, 1
      %v1099 = vsel %vm836, %v1097, %v1098
      %v1100 = vrot.slane %v997, 1
      %v1101 = vsel %vm836, %v1098, %v1100
      %v1102 = vrot.slane %v998, 1
      %v1103 = vrot.slane %v999, 1
      %v1104 = vsel %vm836, %v1102, %v1103
      %v1105 = vrot.slane %v1000, 1
      %v1106 = vsel %vm836, %v1103, %v1105
      %v1107 = vrot.slane %v1001, 1
      %v1108 = vrot.slane %v1002, 1
      %v1109 = vsel %vm836, %v1107, %v1108
      %v1110 = vrot.slane %v1003, 1
      %v1111 = vsel %vm836, %v1108, %v1110
      %v1112 = vrot.slane %v1004, 1
      %v1113 = vrot.slane %v1005, 1
      %v1114 = vsel %vm836, %v1112, %v1113
      %v1115 = vrot.slane %v1006, 1
      %v1116 = vsel %vm836, %v1113, %v1115
      %v1117 = vrot.slane %v1007, 1
      %v1118 = vrot.slane %v1008, 1
      %v1119 = vsel %vm836, %v1117, %v1118
      %v1120 = vrot.slane %v1009, 1
      %v1121 = vsel %vm836, %v1118, %v1120
      %v1122 = vrot.slane %v1010, 1
      %v1123 = vrot.slane %v1011, 1
      %v1124 = vsel %vm836, %v1122, %v1123
      %v1125 = vrot.slane %v1012, 1
      %v1126 = vsel %vm836, %v1123, %v1125
      %v1127 = vrot.slane %v1013, 1
      %v1128 = vrot.slane %v1014, 1
      %v1129 = vsel %vm836, %v1127, %v1128
      %v1130 = vrot.slane %v1015, 1
      %v1131 = vsel %vm836, %v1128, %v1130
      %v1132 = vrot.slane %v1016, 1
      %v1133 = vrot.slane %v1017, 1
      %v1134 = vsel %vm836, %v1132, %v1133
      %v1135 = vrot.slane %v1018, 1
      %v1136 = vsel %vm836, %v1133, %v1135
      %v1137 = vrot.slane %v1019, 1
      %v1138 = vrot.slane %v1020, 1
      %v1139 = vsel %vm836, %v1137, %v1138
      %v1140 = vrot.slane %v1021, 1
      %v1141 = vsel %vm836, %v1138, %v1140
      %v1142 = vrot.slane %v1022, 1
      %v1143 = vrot.slane %v1023, 1
      %v1144 = vsel %vm836, %v1142, %v1143
      %v1145 = vrot.slane %v1024, 1
      %v1146 = vsel %vm836, %v1143, %v1145
      %v1147 = vrot.slane %v1025, 1
      %v1148 = vrot.slane %v1026, 1
      %v1149 = vsel %vm836, %v1147, %v1148
      %v1150 = vrot.slane %v1027, 1
      %v1151 = vsel %vm836, %v1148, %v1150
      %v1152 = vrot.slane %v1028, 1
      %v1153 = vrot.slane %v1029, 1
      %v1154 = vsel %vm836, %v1152, %v1153
      %v1155 = vrot.slane %v1030, 1
      %v1156 = vsel %vm836, %v1153, %v1155
      %v1157 = vrot.slane %v1031, 1
      %v1158 = vrot.slane %v1032, 1
      %v1159 = vsel %vm836, %v1157, %v1158
      %v1160 = vrot.slane %v1033, 1
      %v1161 = vsel %vm836, %v1158, %v1160
      %v1194 = vadd.f32 %v949, %v1084
      %v1195 = vadd.f32 %v950, %v1086
      %v1196 = vadd.f32 %v951, %v1089
      %v1197 = vadd.f32 %v952, %v1091
      %v1198 = vadd.f32 %v953, %v1094
      %v1199 = vadd.f32 %v954, %v1096
      %v1200 = vadd.f32 %v955, %v1099
      %v1201 = vadd.f32 %v956, %v1101
      %v1202 = vadd.f32 %v957, %v1104
      %v1203 = vadd.f32 %v958, %v1106
      %v1204 = vadd.f32 %v959, %v1109
      %v1205 = vadd.f32 %v960, %v1111
      %v1206 = vadd.f32 %v961, %v1114
      %v1207 = vadd.f32 %v962, %v1116
      %v1208 = vadd.f32 %v963, %v1119
      %v1209 = vadd.f32 %v964, %v1121
      %v1210 = vadd.f32 %v965, %v1124
      %v1211 = vadd.f32 %v966, %v1126
      %v1212 = vadd.f32 %v967, %v1129
      %v1213 = vadd.f32 %v968, %v1131
      %v1214 = vadd.f32 %v969, %v1134
      %v1215 = vadd.f32 %v970, %v1136
      %v1216 = vadd.f32 %v971, %v1139
      %v1217 = vadd.f32 %v972, %v1141
      %v1218 = vadd.f32 %v973, %v1144
      %v1219 = vadd.f32 %v974, %v1146
      %v1220 = vadd.f32 %v975, %v1149
      %v1221 = vadd.f32 %v976, %v1151
      %v1222 = vadd.f32 %v977, %v1154
      %v1223 = vadd.f32 %v978, %v1156
      %v1224 = vadd.f32 %v979, %v1159
      %v1225 = vadd.f32 %v980, %v1161
      %v1226 = vld [vmem:[%s525 + $0x1] sm:$0x1]
      %v1227 = vlaneseq
      %v1228 = vshrl.u32 %v1227, 7
      %v1229 = vsub.s32 0, %v1228
      %v1230 = vrot.slane %v1226, %v1229
      %v1231 = vmul.f32 %v332, %v1230
      %v1232 = vmul.f32 %v333, %v1230
      %v1233 = vmul.f32 %v334, %v1230
      %v1234 = vmul.f32 %v335, %v1230
      %v1235 = vmul.f32 %v336, %v1230
      %v1236 = vmul.f32 %v337, %v1230
      %v1237 = vmul.f32 %v338, %v1230
      %v1238 = vmul.f32 %v339, %v1230
      %v1239 = vmul.f32 %v340, %v1230
      %v1240 = vmul.f32 %v341, %v1230
      %v1241 = vmul.f32 %v342, %v1230
      %v1242 = vmul.f32 %v343, %v1230
      %v1243 = vmul.f32 %v344, %v1230
      %v1244 = vmul.f32 %v345, %v1230
      %v1245 = vmul.f32 %v346, %v1230
      %v1246 = vmul.f32 %v347, %v1230
      %v1247 = vmul.f32 %v348, %v1230
      %v1248 = vmul.f32 %v349, %v1230
      %v1249 = vmul.f32 %v350, %v1230
      %v1250 = vmul.f32 %v351, %v1230
      %v1251 = vmul.f32 %v352, %v1230
      %v1252 = vmul.f32 %v353, %v1230
      %v1253 = vmul.f32 %v354, %v1230
      %v1254 = vmul.f32 %v355, %v1230
      %v1255 = vmul.f32 %v356, %v1230
      %v1256 = vmul.f32 %v357, %v1230
      %v1257 = vmul.f32 %v358, %v1230
      %v1258 = vmul.f32 %v359, %v1230
      %v1259 = vmul.f32 %v360, %v1230
      %v1260 = vmul.f32 %v361, %v1230
      %v1261 = vmul.f32 %v362, %v1230
      %v1262 = vmul.f32 %v363, %v1230
      %v1263 = vmul.f32 %v364, %v1230
      %v1264 = vmul.f32 %v365, %v1230
      %v1265 = vmul.f32 %v366, %v1230
      %v1266 = vmul.f32 %v367, %v1230
      %v1267 = vmul.f32 %v368, %v1230
      %v1268 = vmul.f32 %v369, %v1230
      %v1269 = vmul.f32 %v370, %v1230
      %v1270 = vmul.f32 %v371, %v1230
      %v1271 = vmul.f32 %v372, %v1230
      %v1272 = vmul.f32 %v373, %v1230
      %v1273 = vmul.f32 %v374, %v1230
      %v1274 = vmul.f32 %v375, %v1230
      %v1275 = vmul.f32 %v376, %v1230
      %v1276 = vmul.f32 %v377, %v1230
      %v1277 = vmul.f32 %v378, %v1230
      %v1278 = vmul.f32 %v379, %v1230
      %v1327 = vrot.slane %v1231, 1
      %v1328 = vrot.slane %v1232, 1
      %v1329 = vsel %vm836, %v1327, %v1328
      %v1330 = vrot.slane %v1233, 1
      %v1331 = vsel %vm836, %v1328, %v1330
      %v1332 = vrot.slane %v1234, 1
      %v1333 = vrot.slane %v1235, 1
      %v1334 = vsel %vm836, %v1332, %v1333
      %v1335 = vrot.slane %v1236, 1
      %v1336 = vsel %vm836, %v1333, %v1335
      %v1337 = vrot.slane %v1237, 1
      %v1338 = vrot.slane %v1238, 1
      %v1339 = vsel %vm836, %v1337, %v1338
      %v1340 = vrot.slane %v1239, 1
      %v1341 = vsel %vm836, %v1338, %v1340
      %v1342 = vrot.slane %v1240, 1
      %v1343 = vrot.slane %v1241, 1
      %v1344 = vsel %vm836, %v1342, %v1343
      %v1345 = vrot.slane %v1242, 1
      %v1346 = vsel %vm836, %v1343, %v1345
      %v1347 = vrot.slane %v1243, 1
      %v1348 = vrot.slane %v1244, 1
      %v1349 = vsel %vm836, %v1347, %v1348
      %v1350 = vrot.slane %v1245, 1
      %v1351 = vsel %vm836, %v1348, %v1350
      %v1352 = vrot.slane %v1246, 1
      %v1353 = vrot.slane %v1247, 1
      %v1354 = vsel %vm836, %v1352, %v1353
      %v1355 = vrot.slane %v1248, 1
      %v1356 = vsel %vm836, %v1353, %v1355
      %v1357 = vrot.slane %v1249, 1
      %v1358 = vrot.slane %v1250, 1
      %v1359 = vsel %vm836, %v1357, %v1358
      %v1360 = vrot.slane %v1251, 1
      %v1361 = vsel %vm836, %v1358, %v1360
      %v1362 = vrot.slane %v1252, 1
      %v1363 = vrot.slane %v1253, 1
      %v1364 = vsel %vm836, %v1362, %v1363
      %v1365 = vrot.slane %v1254, 1
      %v1366 = vsel %vm836, %v1363, %v1365
      %v1367 = vrot.slane %v1255, 1
      %v1368 = vrot.slane %v1256, 1
      %v1369 = vsel %vm836, %v1367, %v1368
      %v1370 = vrot.slane %v1257, 1
      %v1371 = vsel %vm836, %v1368, %v1370
      %v1372 = vrot.slane %v1258, 1
      %v1373 = vrot.slane %v1259, 1
      %v1374 = vsel %vm836, %v1372, %v1373
      %v1375 = vrot.slane %v1260, 1
      %v1376 = vsel %vm836, %v1373, %v1375
      %v1377 = vrot.slane %v1261, 1
      %v1378 = vrot.slane %v1262, 1
      %v1379 = vsel %vm836, %v1377, %v1378
      %v1380 = vrot.slane %v1263, 1
      %v1381 = vsel %vm836, %v1378, %v1380
      %v1382 = vrot.slane %v1264, 1
      %v1383 = vrot.slane %v1265, 1
      %v1384 = vsel %vm836, %v1382, %v1383
      %v1385 = vrot.slane %v1266, 1
      %v1386 = vsel %vm836, %v1383, %v1385
      %v1387 = vrot.slane %v1267, 1
      %v1388 = vrot.slane %v1268, 1
      %v1389 = vsel %vm836, %v1387, %v1388
      %v1390 = vrot.slane %v1269, 1
      %v1391 = vsel %vm836, %v1388, %v1390
      %v1392 = vrot.slane %v1270, 1
      %v1393 = vrot.slane %v1271, 1
      %v1394 = vsel %vm836, %v1392, %v1393
      %v1395 = vrot.slane %v1272, 1
      %v1396 = vsel %vm836, %v1393, %v1395
      %v1397 = vrot.slane %v1273, 1
      %v1398 = vrot.slane %v1274, 1
      %v1399 = vsel %vm836, %v1397, %v1398
      %v1400 = vrot.slane %v1275, 1
      %v1401 = vsel %vm836, %v1398, %v1400
      %v1402 = vrot.slane %v1276, 1
      %v1403 = vrot.slane %v1277, 1
      %v1404 = vsel %vm836, %v1402, %v1403
      %v1405 = vrot.slane %v1278, 1
      %v1406 = vsel %vm836, %v1403, %v1405
      %v1439 = vadd.f32 %v1194, %v1329
      %v1440 = vadd.f32 %v1195, %v1331
      %v1441 = vadd.f32 %v1196, %v1334
      %v1442 = vadd.f32 %v1197, %v1336
      %v1443 = vadd.f32 %v1198, %v1339
      %v1444 = vadd.f32 %v1199, %v1341
      %v1445 = vadd.f32 %v1200, %v1344
      %v1446 = vadd.f32 %v1201, %v1346
      %v1447 = vadd.f32 %v1202, %v1349
      %v1448 = vadd.f32 %v1203, %v1351
      %v1449 = vadd.f32 %v1204, %v1354
      %v1450 = vadd.f32 %v1205, %v1356
      %v1451 = vadd.f32 %v1206, %v1359
      %v1452 = vadd.f32 %v1207, %v1361
      %v1453 = vadd.f32 %v1208, %v1364
      %v1454 = vadd.f32 %v1209, %v1366
      %v1455 = vadd.f32 %v1210, %v1369
      %v1456 = vadd.f32 %v1211, %v1371
      %v1457 = vadd.f32 %v1212, %v1374
      %v1458 = vadd.f32 %v1213, %v1376
      %v1459 = vadd.f32 %v1214, %v1379
      %v1460 = vadd.f32 %v1215, %v1381
      %v1461 = vadd.f32 %v1216, %v1384
      %v1462 = vadd.f32 %v1217, %v1386
      %v1463 = vadd.f32 %v1218, %v1389
      %v1464 = vadd.f32 %v1219, %v1391
      %v1465 = vadd.f32 %v1220, %v1394
      %v1466 = vadd.f32 %v1221, %v1396
      %v1467 = vadd.f32 %v1222, %v1399
      %v1468 = vadd.f32 %v1223, %v1401
      %v1469 = vadd.f32 %v1224, %v1404
      %v1470 = vadd.f32 %v1225, %v1406
      %v1471 = vld [vmem:[%s595 + $0x1] sm:$0x1]
      %v1472 = vlaneseq
      %v1473 = vshrl.u32 %v1472, 7
      %v1474 = vsub.s32 0, %v1473
      %v1475 = vrot.slane %v1471, %v1474
      %v1476 = vmul.f32 %v335, %v1475
      %v1477 = vmul.f32 %v336, %v1475
      %v1478 = vmul.f32 %v337, %v1475
      %v1479 = vmul.f32 %v338, %v1475
      %v1480 = vmul.f32 %v339, %v1475
      %v1481 = vmul.f32 %v340, %v1475
      %v1482 = vmul.f32 %v341, %v1475
      %v1483 = vmul.f32 %v342, %v1475
      %v1484 = vmul.f32 %v343, %v1475
      %v1485 = vmul.f32 %v344, %v1475
      %v1486 = vmul.f32 %v345, %v1475
      %v1487 = vmul.f32 %v346, %v1475
      %v1488 = vmul.f32 %v347, %v1475
      %v1489 = vmul.f32 %v348, %v1475
      %v1490 = vmul.f32 %v349, %v1475
      %v1491 = vmul.f32 %v350, %v1475
      %v1492 = vmul.f32 %v351, %v1475
      %v1493 = vmul.f32 %v352, %v1475
      %v1494 = vmul.f32 %v353, %v1475
      %v1495 = vmul.f32 %v354, %v1475
      %v1496 = vmul.f32 %v355, %v1475
      %v1497 = vmul.f32 %v356, %v1475
      %v1498 = vmul.f32 %v357, %v1475
      %v1499 = vmul.f32 %v358, %v1475
      %v1500 = vmul.f32 %v359, %v1475
      %v1501 = vmul.f32 %v360, %v1475
      %v1502 = vmul.f32 %v361, %v1475
      %v1503 = vmul.f32 %v362, %v1475
      %v1504 = vmul.f32 %v363, %v1475
      %v1505 = vmul.f32 %v364, %v1475
      %v1506 = vmul.f32 %v365, %v1475
      %v1507 = vmul.f32 %v366, %v1475
      %v1508 = vmul.f32 %v367, %v1475
      %v1509 = vmul.f32 %v368, %v1475
      %v1510 = vmul.f32 %v369, %v1475
      %v1511 = vmul.f32 %v370, %v1475
      %v1512 = vmul.f32 %v371, %v1475
      %v1513 = vmul.f32 %v372, %v1475
      %v1514 = vmul.f32 %v373, %v1475
      %v1515 = vmul.f32 %v374, %v1475
      %v1516 = vmul.f32 %v375, %v1475
      %v1517 = vmul.f32 %v376, %v1475
      %v1518 = vmul.f32 %v377, %v1475
      %v1519 = vmul.f32 %v378, %v1475
      %v1520 = vmul.f32 %v379, %v1475
      %v1521 = vmul.f32 %v380, %v1475
      %v1522 = vmul.f32 %v381, %v1475
      %v1523 = vmul.f32 %v382, %v1475
      %v1572 = vrot.slane %v1476, 1
      %v1573 = vrot.slane %v1477, 1
      %v1574 = vsel %vm836, %v1572, %v1573
      %v1575 = vrot.slane %v1478, 1
      %v1576 = vsel %vm836, %v1573, %v1575
      %v1577 = vrot.slane %v1479, 1
      %v1578 = vrot.slane %v1480, 1
      %v1579 = vsel %vm836, %v1577, %v1578
      %v1580 = vrot.slane %v1481, 1
      %v1581 = vsel %vm836, %v1578, %v1580
      %v1582 = vrot.slane %v1482, 1
      %v1583 = vrot.slane %v1483, 1
      %v1584 = vsel %vm836, %v1582, %v1583
      %v1585 = vrot.slane %v1484, 1
      %v1586 = vsel %vm836, %v1583, %v1585
      %v1587 = vrot.slane %v1485, 1
      %v1588 = vrot.slane %v1486, 1
      %v1589 = vsel %vm836, %v1587, %v1588
      %v1590 = vrot.slane %v1487, 1
      %v1591 = vsel %vm836, %v1588, %v1590
      %v1592 = vrot.slane %v1488, 1
      %v1593 = vrot.slane %v1489, 1
      %v1594 = vsel %vm836, %v1592, %v1593
      %v1595 = vrot.slane %v1490, 1
      %v1596 = vsel %vm836, %v1593, %v1595
      %v1597 = vrot.slane %v1491, 1
      %v1598 = vrot.slane %v1492, 1
      %v1599 = vsel %vm836, %v1597, %v1598
      %v1600 = vrot.slane %v1493, 1
      %v1601 = vsel %vm836, %v1598, %v1600
      %v1602 = vrot.slane %v1494, 1
      %v1603 = vrot.slane %v1495, 1
      %v1604 = vsel %vm836, %v1602, %v1603
      %v1605 = vrot.slane %v1496, 1
      %v1606 = vsel %vm836, %v1603, %v1605
      %v1607 = vrot.slane %v1497, 1
      %v1608 = vrot.slane %v1498, 1
      %v1609 = vsel %vm836, %v1607, %v1608
      %v1610 = vrot.slane %v1499, 1
      %v1611 = vsel %vm836, %v1608, %v1610
      %v1612 = vrot.slane %v1500, 1
      %v1613 = vrot.slane %v1501, 1
      %v1614 = vsel %vm836, %v1612, %v1613
      %v1615 = vrot.slane %v1502, 1
      %v1616 = vsel %vm836, %v1613, %v1615
      %v1617 = vrot.slane %v1503, 1
      %v1618 = vrot.slane %v1504, 1
      %v1619 = vsel %vm836, %v1617, %v1618
      %v1620 = vrot.slane %v1505, 1
      %v1621 = vsel %vm836, %v1618, %v1620
      %v1622 = vrot.slane %v1506, 1
      %v1623 = vrot.slane %v1507, 1
      %v1624 = vsel %vm836, %v1622, %v1623
      %v1625 = vrot.slane %v1508, 1
      %v1626 = vsel %vm836, %v1623, %v1625
      %v1627 = vrot.slane %v1509, 1
      %v1628 = vrot.slane %v1510, 1
      %v1629 = vsel %vm836, %v1627, %v1628
      %v1630 = vrot.slane %v1511, 1
      %v1631 = vsel %vm836, %v1628, %v1630
      %v1632 = vrot.slane %v1512, 1
      %v1633 = vrot.slane %v1513, 1
      %v1634 = vsel %vm836, %v1632, %v1633
      %v1635 = vrot.slane %v1514, 1
      %v1636 = vsel %vm836, %v1633, %v1635
      %v1637 = vrot.slane %v1515, 1
      %v1638 = vrot.slane %v1516, 1
      %v1639 = vsel %vm836, %v1637, %v1638
      %v1640 = vrot.slane %v1517, 1
      %v1641 = vsel %vm836, %v1638, %v1640
      %v1642 = vrot.slane %v1518, 1
      %v1643 = vrot.slane %v1519, 1
      %v1644 = vsel %vm836, %v1642, %v1643
      %v1645 = vrot.slane %v1520, 1
      %v1646 = vsel %vm836, %v1643, %v1645
      %v1647 = vrot.slane %v1521, 1
      %v1648 = vrot.slane %v1522, 1
      %v1649 = vsel %vm836, %v1647, %v1648
      %v1650 = vrot.slane %v1523, 1
      %v1651 = vsel %vm836, %v1648, %v1650
      %v1684 = vadd.f32 %v1439, %v1574
      %v1685 = vadd.f32 %v1440, %v1576
      %v1686 = vadd.f32 %v1441, %v1579
      %v1687 = vadd.f32 %v1442, %v1581
      %v1688 = vadd.f32 %v1443, %v1584
      %v1689 = vadd.f32 %v1444, %v1586
      %v1690 = vadd.f32 %v1445, %v1589
      %v1691 = vadd.f32 %v1446, %v1591
      %v1692 = vadd.f32 %v1447, %v1594
      %v1693 = vadd.f32 %v1448, %v1596
      %v1694 = vadd.f32 %v1449, %v1599
      %v1695 = vadd.f32 %v1450, %v1601
      %v1696 = vadd.f32 %v1451, %v1604
      %v1697 = vadd.f32 %v1452, %v1606
      %v1698 = vadd.f32 %v1453, %v1609
      %v1699 = vadd.f32 %v1454, %v1611
      %v1700 = vadd.f32 %v1455, %v1614
      %v1701 = vadd.f32 %v1456, %v1616
      %v1702 = vadd.f32 %v1457, %v1619
      %v1703 = vadd.f32 %v1458, %v1621
      %v1704 = vadd.f32 %v1459, %v1624
      %v1705 = vadd.f32 %v1460, %v1626
      %v1706 = vadd.f32 %v1461, %v1629
      %v1707 = vadd.f32 %v1462, %v1631
      %v1708 = vadd.f32 %v1463, %v1634
      %v1709 = vadd.f32 %v1464, %v1636
      %v1710 = vadd.f32 %v1465, %v1639
      %v1711 = vadd.f32 %v1466, %v1641
      %v1712 = vadd.f32 %v1467, %v1644
      %v1713 = vadd.f32 %v1468, %v1646
      %v1714 = vadd.f32 %v1469, %v1649
      %v1715 = vadd.f32 %v1470, %v1651
      %v1716 = vld [vmem:[%s665 + $0x1] sm:$0x1]
      %v1717 = vlaneseq
      %v1718 = vshrl.u32 %v1717, 7
      %v1719 = vsub.s32 0, %v1718
      %v1720 = vrot.slane %v1716, %v1719
      %v1721 = vmul.f32 %v338, %v1720
      %v1722 = vmul.f32 %v339, %v1720
      %v1723 = vmul.f32 %v340, %v1720
      %v1724 = vmul.f32 %v341, %v1720
      %v1725 = vmul.f32 %v342, %v1720
      %v1726 = vmul.f32 %v343, %v1720
      %v1727 = vmul.f32 %v344, %v1720
      %v1728 = vmul.f32 %v345, %v1720
      %v1729 = vmul.f32 %v346, %v1720
      %v1730 = vmul.f32 %v347, %v1720
      %v1731 = vmul.f32 %v348, %v1720
      %v1732 = vmul.f32 %v349, %v1720
      %v1733 = vmul.f32 %v350, %v1720
      %v1734 = vmul.f32 %v351, %v1720
      %v1735 = vmul.f32 %v352, %v1720
      %v1736 = vmul.f32 %v353, %v1720
      %v1737 = vmul.f32 %v354, %v1720
      %v1738 = vmul.f32 %v355, %v1720
      %v1739 = vmul.f32 %v356, %v1720
      %v1740 = vmul.f32 %v357, %v1720
      %v1741 = vmul.f32 %v358, %v1720
      %v1742 = vmul.f32 %v359, %v1720
      %v1743 = vmul.f32 %v360, %v1720
      %v1744 = vmul.f32 %v361, %v1720
      %v1745 = vmul.f32 %v362, %v1720
      %v1746 = vmul.f32 %v363, %v1720
      %v1747 = vmul.f32 %v364, %v1720
      %v1748 = vmul.f32 %v365, %v1720
      %v1749 = vmul.f32 %v366, %v1720
      %v1750 = vmul.f32 %v367, %v1720
      %v1751 = vmul.f32 %v368, %v1720
      %v1752 = vmul.f32 %v369, %v1720
      %v1753 = vmul.f32 %v370, %v1720
      %v1754 = vmul.f32 %v371, %v1720
      %v1755 = vmul.f32 %v372, %v1720
      %v1756 = vmul.f32 %v373, %v1720
      %v1757 = vmul.f32 %v374, %v1720
      %v1758 = vmul.f32 %v375, %v1720
      %v1759 = vmul.f32 %v376, %v1720
      %v1760 = vmul.f32 %v377, %v1720
      %v1761 = vmul.f32 %v378, %v1720
      %v1762 = vmul.f32 %v379, %v1720
      %v1763 = vmul.f32 %v380, %v1720
      %v1764 = vmul.f32 %v381, %v1720
      %v1765 = vmul.f32 %v382, %v1720
      %v1766 = vmul.f32 %v383, %v1720
      %v1767 = vmul.f32 %v384, %v1720
      %v1768 = vmul.f32 %v385, %v1720
      %v1817 = vrot.slane %v1721, 1
      %v1818 = vrot.slane %v1722, 1
      %v1819 = vsel %vm836, %v1817, %v1818
      %v1820 = vrot.slane %v1723, 1
      %v1821 = vsel %vm836, %v1818, %v1820
      %v1822 = vrot.slane %v1724, 1
      %v1823 = vrot.slane %v1725, 1
      %v1824 = vsel %vm836, %v1822, %v1823
      %v1825 = vrot.slane %v1726, 1
      %v1826 = vsel %vm836, %v1823, %v1825
      %v1827 = vrot.slane %v1727, 1
      %v1828 = vrot.slane %v1728, 1
      %v1829 = vsel %vm836, %v1827, %v1828
      %v1830 = vrot.slane %v1729, 1
      %v1831 = vsel %vm836, %v1828, %v1830
      %v1832 = vrot.slane %v1730, 1
      %v1833 = vrot.slane %v1731, 1
      %v1834 = vsel %vm836, %v1832, %v1833
      %v1835 = vrot.slane %v1732, 1
      %v1836 = vsel %vm836, %v1833, %v1835
      %v1837 = vrot.slane %v1733, 1
      %v1838 = vrot.slane %v1734, 1
      %v1839 = vsel %vm836, %v1837, %v1838
      %v1840 = vrot.slane %v1735, 1
      %v1841 = vsel %vm836, %v1838, %v1840
      %v1842 = vrot.slane %v1736, 1
      %v1843 = vrot.slane %v1737, 1
      %v1844 = vsel %vm836, %v1842, %v1843
      %v1845 = vrot.slane %v1738, 1
      %v1846 = vsel %vm836, %v1843, %v1845
      %v1847 = vrot.slane %v1739, 1
      %v1848 = vrot.slane %v1740, 1
      %v1849 = vsel %vm836, %v1847, %v1848
      %v1850 = vrot.slane %v1741, 1
      %v1851 = vsel %vm836, %v1848, %v1850
      %v1852 = vrot.slane %v1742, 1
      %v1853 = vrot.slane %v1743, 1
      %v1854 = vsel %vm836, %v1852, %v1853
      %v1855 = vrot.slane %v1744, 1
      %v1856 = vsel %vm836, %v1853, %v1855
      %v1857 = vrot.slane %v1745, 1
      %v1858 = vrot.slane %v1746, 1
      %v1859 = vsel %vm836, %v1857, %v1858
      %v1860 = vrot.slane %v1747, 1
      %v1861 = vsel %vm836, %v1858, %v1860
      %v1862 = vrot.slane %v1748, 1
      %v1863 = vrot.slane %v1749, 1
      %v1864 = vsel %vm836, %v1862, %v1863
      %v1865 = vrot.slane %v1750, 1
      %v1866 = vsel %vm836, %v1863, %v1865
      %v1867 = vrot.slane %v1751, 1
      %v1868 = vrot.slane %v1752, 1
      %v1869 = vsel %vm836, %v1867, %v1868
      %v1870 = vrot.slane %v1753, 1
      %v1871 = vsel %vm836, %v1868, %v1870
      %v1872 = vrot.slane %v1754, 1
      %v1873 = vrot.slane %v1755, 1
      %v1874 = vsel %vm836, %v1872, %v1873
      %v1875 = vrot.slane %v1756, 1
      %v1876 = vsel %vm836, %v1873, %v1875
      %v1877 = vrot.slane %v1757, 1
      %v1878 = vrot.slane %v1758, 1
      %v1879 = vsel %vm836, %v1877, %v1878
      %v1880 = vrot.slane %v1759, 1
      %v1881 = vsel %vm836, %v1878, %v1880
      %v1882 = vrot.slane %v1760, 1
      %v1883 = vrot.slane %v1761, 1
      %v1884 = vsel %vm836, %v1882, %v1883
      %v1885 = vrot.slane %v1762, 1
      %v1886 = vsel %vm836, %v1883, %v1885
      %v1887 = vrot.slane %v1763, 1
      %v1888 = vrot.slane %v1764, 1
      %v1889 = vsel %vm836, %v1887, %v1888
      %v1890 = vrot.slane %v1765, 1
      %v1891 = vsel %vm836, %v1888, %v1890
      %v1892 = vrot.slane %v1766, 1
      %v1893 = vrot.slane %v1767, 1
      %v1894 = vsel %vm836, %v1892, %v1893
      %v1895 = vrot.slane %v1768, 1
      %v1896 = vsel %vm836, %v1893, %v1895
      %v1929 = vadd.f32 %v1684, %v1819
      %v1930 = vadd.f32 %v1685, %v1821
      %v1931 = vadd.f32 %v1686, %v1824
      %v1932 = vadd.f32 %v1687, %v1826
      %v1933 = vadd.f32 %v1688, %v1829
      %v1934 = vadd.f32 %v1689, %v1831
      %v1935 = vadd.f32 %v1690, %v1834
      %v1936 = vadd.f32 %v1691, %v1836
      %v1937 = vadd.f32 %v1692, %v1839
      %v1938 = vadd.f32 %v1693, %v1841
      %v1939 = vadd.f32 %v1694, %v1844
      %v1940 = vadd.f32 %v1695, %v1846
      %v1941 = vadd.f32 %v1696, %v1849
      %v1942 = vadd.f32 %v1697, %v1851
      %v1943 = vadd.f32 %v1698, %v1854
      %v1944 = vadd.f32 %v1699, %v1856
      %v1945 = vadd.f32 %v1700, %v1859
      %v1946 = vadd.f32 %v1701, %v1861
      %v1947 = vadd.f32 %v1702, %v1864
      %v1948 = vadd.f32 %v1703, %v1866
      %v1949 = vadd.f32 %v1704, %v1869
      %v1950 = vadd.f32 %v1705, %v1871
      %v1951 = vadd.f32 %v1706, %v1874
      %v1952 = vadd.f32 %v1707, %v1876
      %v1953 = vadd.f32 %v1708, %v1879
      %v1954 = vadd.f32 %v1709, %v1881
      %v1955 = vadd.f32 %v1710, %v1884
      %v1956 = vadd.f32 %v1711, %v1886
      %v1957 = vadd.f32 %v1712, %v1889
      %v1958 = vadd.f32 %v1713, %v1891
      %v1959 = vadd.f32 %v1714, %v1894
      %v1960 = vadd.f32 %v1715, %v1896
      %v1961 = vld [vmem:[%s2 + $0x2] sm:$0x1]
      %v1962 = vlaneseq
      %v1963 = vshrl.u32 %v1962, 7
      %v1964 = vsub.s32 0, %v1963
      %v1965 = vrot.slane %v1961, %v1964
      %v1966 = vmul.f32 %v326, %v1965
      %v1967 = vmul.f32 %v327, %v1965
      %v1968 = vmul.f32 %v328, %v1965
      %v1969 = vmul.f32 %v329, %v1965
      %v1970 = vmul.f32 %v330, %v1965
      %v1971 = vmul.f32 %v331, %v1965
      %v1972 = vmul.f32 %v332, %v1965
      %v1973 = vmul.f32 %v333, %v1965
      %v1974 = vmul.f32 %v334, %v1965
      %v1975 = vmul.f32 %v335, %v1965
      %v1976 = vmul.f32 %v336, %v1965
      %v1977 = vmul.f32 %v337, %v1965
      %v1978 = vmul.f32 %v338, %v1965
      %v1979 = vmul.f32 %v339, %v1965
      %v1980 = vmul.f32 %v340, %v1965
      %v1981 = vmul.f32 %v341, %v1965
      %v1982 = vmul.f32 %v342, %v1965
      %v1983 = vmul.f32 %v343, %v1965
      %v1984 = vmul.f32 %v344, %v1965
      %v1985 = vmul.f32 %v345, %v1965
      %v1986 = vmul.f32 %v346, %v1965
      %v1987 = vmul.f32 %v347, %v1965
      %v1988 = vmul.f32 %v348, %v1965
      %v1989 = vmul.f32 %v349, %v1965
      %v1990 = vmul.f32 %v350, %v1965
      %v1991 = vmul.f32 %v351, %v1965
      %v1992 = vmul.f32 %v352, %v1965
      %v1993 = vmul.f32 %v353, %v1965
      %v1994 = vmul.f32 %v354, %v1965
      %v1995 = vmul.f32 %v355, %v1965
      %v1996 = vmul.f32 %v356, %v1965
      %v1997 = vmul.f32 %v357, %v1965
      %v1998 = vmul.f32 %v358, %v1965
      %v1999 = vmul.f32 %v359, %v1965
      %v2000 = vmul.f32 %v360, %v1965
      %v2001 = vmul.f32 %v361, %v1965
      %v2002 = vmul.f32 %v362, %v1965
      %v2003 = vmul.f32 %v363, %v1965
      %v2004 = vmul.f32 %v364, %v1965
      %v2005 = vmul.f32 %v365, %v1965
      %v2006 = vmul.f32 %v366, %v1965
      %v2007 = vmul.f32 %v367, %v1965
      %v2008 = vmul.f32 %v368, %v1965
      %v2009 = vmul.f32 %v369, %v1965
      %v2010 = vmul.f32 %v370, %v1965
      %v2011 = vmul.f32 %v371, %v1965
      %v2012 = vmul.f32 %v372, %v1965
      %v2013 = vmul.f32 %v373, %v1965
      %vm2062 = vcmask 1045504
      %v2063 = vrot.slane %v1966, 2
      %v2064 = vrot.slane %v1967, 2
      %v2065 = vsel %vm2062, %v2063, %v2064
      %v2066 = vrot.slane %v1968, 2
      %v2067 = vsel %vm2062, %v2064, %v2066
      %v2068 = vrot.slane %v1969, 2
      %v2069 = vrot.slane %v1970, 2
      %v2070 = vsel %vm2062, %v2068, %v2069
      %v2071 = vrot.slane %v1971, 2
      %v2072 = vsel %vm2062, %v2069, %v2071
      %v2073 = vrot.slane %v1972, 2
      %v2074 = vrot.slane %v1973, 2
      %v2075 = vsel %vm2062, %v2073, %v2074
      %v2076 = vrot.slane %v1974, 2
      %v2077 = vsel %vm2062, %v2074, %v2076
      %v2078 = vrot.slane %v1975, 2
      %v2079 = vrot.slane %v1976, 2
      %v2080 = vsel %vm2062, %v2078, %v2079
      %v2081 = vrot.slane %v1977, 2
      %v2082 = vsel %vm2062, %v2079, %v2081
      %v2083 = vrot.slane %v1978, 2
      %v2084 = vrot.slane %v1979, 2
      %v2085 = vsel %vm2062, %v2083, %v2084
      %v2086 = vrot.slane %v1980, 2
      %v2087 = vsel %vm2062, %v2084, %v2086
      %v2088 = vrot.slane %v1981, 2
      %v2089 = vrot.slane %v1982, 2
      %v2090 = vsel %vm2062, %v2088, %v2089
      %v2091 = vrot.slane %v1983, 2
      %v2092 = vsel %vm2062, %v2089, %v2091
      %v2093 = vrot.slane %v1984, 2
      %v2094 = vrot.slane %v1985, 2
      %v2095 = vsel %vm2062, %v2093, %v2094
      %v2096 = vrot.slane %v1986, 2
      %v2097 = vsel %vm2062, %v2094, %v2096
      %v2098 = vrot.slane %v1987, 2
      %v2099 = vrot.slane %v1988, 2
      %v2100 = vsel %vm2062, %v2098, %v2099
      %v2101 = vrot.slane %v1989, 2
      %v2102 = vsel %vm2062, %v2099, %v2101
      %v2103 = vrot.slane %v1990, 2
      %v2104 = vrot.slane %v1991, 2
      %v2105 = vsel %vm2062, %v2103, %v2104
      %v2106 = vrot.slane %v1992, 2
      %v2107 = vsel %vm2062, %v2104, %v2106
      %v2108 = vrot.slane %v1993, 2
      %v2109 = vrot.slane %v1994, 2
      %v2110 = vsel %vm2062, %v2108, %v2109
      %v2111 = vrot.slane %v1995, 2
      %v2112 = vsel %vm2062, %v2109, %v2111
      %v2113 = vrot.slane %v1996, 2
      %v2114 = vrot.slane %v1997, 2
      %v2115 = vsel %vm2062, %v2113, %v2114
      %v2116 = vrot.slane %v1998, 2
      %v2117 = vsel %vm2062, %v2114, %v2116
      %v2118 = vrot.slane %v1999, 2
      %v2119 = vrot.slane %v2000, 2
      %v2120 = vsel %vm2062, %v2118, %v2119
      %v2121 = vrot.slane %v2001, 2
      %v2122 = vsel %vm2062, %v2119, %v2121
      %v2123 = vrot.slane %v2002, 2
      %v2124 = vrot.slane %v2003, 2
      %v2125 = vsel %vm2062, %v2123, %v2124
      %v2126 = vrot.slane %v2004, 2
      %v2127 = vsel %vm2062, %v2124, %v2126
      %v2128 = vrot.slane %v2005, 2
      %v2129 = vrot.slane %v2006, 2
      %v2130 = vsel %vm2062, %v2128, %v2129
      %v2131 = vrot.slane %v2007, 2
      %v2132 = vsel %vm2062, %v2129, %v2131
      %v2133 = vrot.slane %v2008, 2
      %v2134 = vrot.slane %v2009, 2
      %v2135 = vsel %vm2062, %v2133, %v2134
      %v2136 = vrot.slane %v2010, 2
      %v2137 = vsel %vm2062, %v2134, %v2136
      %v2138 = vrot.slane %v2011, 2
      %v2139 = vrot.slane %v2012, 2
      %v2140 = vsel %vm2062, %v2138, %v2139
      %v2141 = vrot.slane %v2013, 2
      %v2142 = vsel %vm2062, %v2139, %v2141
      %v2175 = vadd.f32 %v1929, %v2065
      %v2176 = vadd.f32 %v1930, %v2067
      %v2177 = vadd.f32 %v1931, %v2070
      %v2178 = vadd.f32 %v1932, %v2072
      %v2179 = vadd.f32 %v1933, %v2075
      %v2180 = vadd.f32 %v1934, %v2077
      %v2181 = vadd.f32 %v1935, %v2080
      %v2182 = vadd.f32 %v1936, %v2082
      %v2183 = vadd.f32 %v1937, %v2085
      %v2184 = vadd.f32 %v1938, %v2087
      %v2185 = vadd.f32 %v1939, %v2090
      %v2186 = vadd.f32 %v1940, %v2092
      %v2187 = vadd.f32 %v1941, %v2095
      %v2188 = vadd.f32 %v1942, %v2097
      %v2189 = vadd.f32 %v1943, %v2100
      %v2190 = vadd.f32 %v1944, %v2102
      %v2191 = vadd.f32 %v1945, %v2105
      %v2192 = vadd.f32 %v1946, %v2107
      %v2193 = vadd.f32 %v1947, %v2110
      %v2194 = vadd.f32 %v1948, %v2112
      %v2195 = vadd.f32 %v1949, %v2115
      %v2196 = vadd.f32 %v1950, %v2117
      %v2197 = vadd.f32 %v1951, %v2120
      %v2198 = vadd.f32 %v1952, %v2122
      %v2199 = vadd.f32 %v1953, %v2125
      %v2200 = vadd.f32 %v1954, %v2127
      %v2201 = vadd.f32 %v1955, %v2130
      %v2202 = vadd.f32 %v1956, %v2132
      %v2203 = vadd.f32 %v1957, %v2135
      %v2204 = vadd.f32 %v1958, %v2137
      %v2205 = vadd.f32 %v1959, %v2140
      %v2206 = vadd.f32 %v1960, %v2142
      %v2207 = vld [vmem:[%s455 + $0x2] sm:$0x1]
      %v2208 = vlaneseq
      %v2209 = vshrl.u32 %v2208, 7
      %v2210 = vsub.s32 0, %v2209
      %v2211 = vrot.slane %v2207, %v2210
      %v2212 = vmul.f32 %v329, %v2211
      %v2213 = vmul.f32 %v330, %v2211
      %v2214 = vmul.f32 %v331, %v2211
      %v2215 = vmul.f32 %v332, %v2211
      %v2216 = vmul.f32 %v333, %v2211
      %v2217 = vmul.f32 %v334, %v2211
      %v2218 = vmul.f32 %v335, %v2211
      %v2219 = vmul.f32 %v336, %v2211
      %v2220 = vmul.f32 %v337, %v2211
      %v2221 = vmul.f32 %v338, %v2211
      %v2222 = vmul.f32 %v339, %v2211
      %v2223 = vmul.f32 %v340, %v2211
      %v2224 = vmul.f32 %v341, %v2211
      %v2225 = vmul.f32 %v342, %v2211
      %v2226 = vmul.f32 %v343, %v2211
      %v2227 = vmul.f32 %v344, %v2211
      %v2228 = vmul.f32 %v345, %v2211
      %v2229 = vmul.f32 %v346, %v2211
      %v2230 = vmul.f32 %v347, %v2211
      %v2231 = vmul.f32 %v348, %v2211
      %v2232 = vmul.f32 %v349, %v2211
      %v2233 = vmul.f32 %v350, %v2211
      %v2234 = vmul.f32 %v351, %v2211
      %v2235 = vmul.f32 %v352, %v2211
      %v2236 = vmul.f32 %v353, %v2211
      %v2237 = vmul.f32 %v354, %v2211
      %v2238 = vmul.f32 %v355, %v2211
      %v2239 = vmul.f32 %v356, %v2211
      %v2240 = vmul.f32 %v357, %v2211
      %v2241 = vmul.f32 %v358, %v2211
      %v2242 = vmul.f32 %v359, %v2211
      %v2243 = vmul.f32 %v360, %v2211
      %v2244 = vmul.f32 %v361, %v2211
      %v2245 = vmul.f32 %v362, %v2211
      %v2246 = vmul.f32 %v363, %v2211
      %v2247 = vmul.f32 %v364, %v2211
      %v2248 = vmul.f32 %v365, %v2211
      %v2249 = vmul.f32 %v366, %v2211
      %v2250 = vmul.f32 %v367, %v2211
      %v2251 = vmul.f32 %v368, %v2211
      %v2252 = vmul.f32 %v369, %v2211
      %v2253 = vmul.f32 %v370, %v2211
      %v2254 = vmul.f32 %v371, %v2211
      %v2255 = vmul.f32 %v372, %v2211
      %v2256 = vmul.f32 %v373, %v2211
      %v2257 = vmul.f32 %v374, %v2211
      %v2258 = vmul.f32 %v375, %v2211
      %v2259 = vmul.f32 %v376, %v2211
      %v2308 = vrot.slane %v2212, 2
      %v2309 = vrot.slane %v2213, 2
      %v2310 = vsel %vm2062, %v2308, %v2309
      %v2311 = vrot.slane %v2214, 2
      %v2312 = vsel %vm2062, %v2309, %v2311
      %v2313 = vrot.slane %v2215, 2
      %v2314 = vrot.slane %v2216, 2
      %v2315 = vsel %vm2062, %v2313, %v2314
      %v2316 = vrot.slane %v2217, 2
      %v2317 = vsel %vm2062, %v2314, %v2316
      %v2318 = vrot.slane %v2218, 2
      %v2319 = vrot.slane %v2219, 2
      %v2320 = vsel %vm2062, %v2318, %v2319
      %v2321 = vrot.slane %v2220, 2
      %v2322 = vsel %vm2062, %v2319, %v2321
      %v2323 = vrot.slane %v2221, 2
      %v2324 = vrot.slane %v2222, 2
      %v2325 = vsel %vm2062, %v2323, %v2324
      %v2326 = vrot.slane %v2223, 2
      %v2327 = vsel %vm2062, %v2324, %v2326
      %v2328 = vrot.slane %v2224, 2
      %v2329 = vrot.slane %v2225, 2
      %v2330 = vsel %vm2062, %v2328, %v2329
      %v2331 = vrot.slane %v2226, 2
      %v2332 = vsel %vm2062, %v2329, %v2331
      %v2333 = vrot.slane %v2227, 2
      %v2334 = vrot.slane %v2228, 2
      %v2335 = vsel %vm2062, %v2333, %v2334
      %v2336 = vrot.slane %v2229, 2
      %v2337 = vsel %vm2062, %v2334, %v2336
      %v2338 = vrot.slane %v2230, 2
      %v2339 = vrot.slane %v2231, 2
      %v2340 = vsel %vm2062, %v2338, %v2339
      %v2341 = vrot.slane %v2232, 2
      %v2342 = vsel %vm2062, %v2339, %v2341
      %v2343 = vrot.slane %v2233, 2
      %v2344 = vrot.slane %v2234, 2
      %v2345 = vsel %vm2062, %v2343, %v2344
      %v2346 = vrot.slane %v2235, 2
      %v2347 = vsel %vm2062, %v2344, %v2346
      %v2348 = vrot.slane %v2236, 2
      %v2349 = vrot.slane %v2237, 2
      %v2350 = vsel %vm2062, %v2348, %v2349
      %v2351 = vrot.slane %v2238, 2
      %v2352 = vsel %vm2062, %v2349, %v2351
      %v2353 = vrot.slane %v2239, 2
      %v2354 = vrot.slane %v2240, 2
      %v2355 = vsel %vm2062, %v2353, %v2354
      %v2356 = vrot.slane %v2241, 2
      %v2357 = vsel %vm2062, %v2354, %v2356
      %v2358 = vrot.slane %v2242, 2
      %v2359 = vrot.slane %v2243, 2
      %v2360 = vsel %vm2062, %v2358, %v2359
      %v2361 = vrot.slane %v2244, 2
      %v2362 = vsel %vm2062, %v2359, %v2361
      %v2363 = vrot.slane %v2245, 2
      %v2364 = vrot.slane %v2246, 2
      %v2365 = vsel %vm2062, %v2363, %v2364
      %v2366 = vrot.slane %v2247, 2
      %v2367 = vsel %vm2062, %v2364, %v2366
      %v2368 = vrot.slane %v2248, 2
      %v2369 = vrot.slane %v2249, 2
      %v2370 = vsel %vm2062, %v2368, %v2369
      %v2371 = vrot.slane %v2250, 2
      %v2372 = vsel %vm2062, %v2369, %v2371
      %v2373 = vrot.slane %v2251, 2
      %v2374 = vrot.slane %v2252, 2
      %v2375 = vsel %vm2062, %v2373, %v2374
      %v2376 = vrot.slane %v2253, 2
      %v2377 = vsel %vm2062, %v2374, %v2376
      %v2378 = vrot.slane %v2254, 2
      %v2379 = vrot.slane %v2255, 2
      %v2380 = vsel %vm2062, %v2378, %v2379
      %v2381 = vrot.slane %v2256, 2
      %v2382 = vsel %vm2062, %v2379, %v2381
      %v2383 = vrot.slane %v2257, 2
      %v2384 = vrot.slane %v2258, 2
      %v2385 = vsel %vm2062, %v2383, %v2384
      %v2386 = vrot.slane %v2259, 2
      %v2387 = vsel %vm2062, %v2384, %v2386
      %v2420 = vadd.f32 %v2175, %v2310
      %v2421 = vadd.f32 %v2176, %v2312
      %v2422 = vadd.f32 %v2177, %v2315
      %v2423 = vadd.f32 %v2178, %v2317
      %v2424 = vadd.f32 %v2179, %v2320
      %v2425 = vadd.f32 %v2180, %v2322
      %v2426 = vadd.f32 %v2181, %v2325
      %v2427 = vadd.f32 %v2182, %v2327
      %v2428 = vadd.f32 %v2183, %v2330
      %v2429 = vadd.f32 %v2184, %v2332
      %v2430 = vadd.f32 %v2185, %v2335
      %v2431 = vadd.f32 %v2186, %v2337
      %v2432 = vadd.f32 %v2187, %v2340
      %v2433 = vadd.f32 %v2188, %v2342
      %v2434 = vadd.f32 %v2189, %v2345
      %v2435 = vadd.f32 %v2190, %v2347
      %v2436 = vadd.f32 %v2191, %v2350
      %v2437 = vadd.f32 %v2192, %v2352
      %v2438 = vadd.f32 %v2193, %v2355
      %v2439 = vadd.f32 %v2194, %v2357
      %v2440 = vadd.f32 %v2195, %v2360
      %v2441 = vadd.f32 %v2196, %v2362
      %v2442 = vadd.f32 %v2197, %v2365
      %v2443 = vadd.f32 %v2198, %v2367
      %v2444 = vadd.f32 %v2199, %v2370
      %v2445 = vadd.f32 %v2200, %v2372
      %v2446 = vadd.f32 %v2201, %v2375
      %v2447 = vadd.f32 %v2202, %v2377
      %v2448 = vadd.f32 %v2203, %v2380
      %v2449 = vadd.f32 %v2204, %v2382
      %v2450 = vadd.f32 %v2205, %v2385
      %v2451 = vadd.f32 %v2206, %v2387
      %v2452 = vld [vmem:[%s525 + $0x2] sm:$0x1]
      %v2453 = vlaneseq
      %v2454 = vshrl.u32 %v2453, 7
      %v2455 = vsub.s32 0, %v2454
      %v2456 = vrot.slane %v2452, %v2455
      %v2457 = vmul.f32 %v332, %v2456
      %v2458 = vmul.f32 %v333, %v2456
      %v2459 = vmul.f32 %v334, %v2456
      %v2460 = vmul.f32 %v335, %v2456
      %v2461 = vmul.f32 %v336, %v2456
      %v2462 = vmul.f32 %v337, %v2456
      %v2463 = vmul.f32 %v338, %v2456
      %v2464 = vmul.f32 %v339, %v2456
      %v2465 = vmul.f32 %v340, %v2456
      %v2466 = vmul.f32 %v341, %v2456
      %v2467 = vmul.f32 %v342, %v2456
      %v2468 = vmul.f32 %v343, %v2456
      %v2469 = vmul.f32 %v344, %v2456
      %v2470 = vmul.f32 %v345, %v2456
      %v2471 = vmul.f32 %v346, %v2456
      %v2472 = vmul.f32 %v347, %v2456
      %v2473 = vmul.f32 %v348, %v2456
      %v2474 = vmul.f32 %v349, %v2456
      %v2475 = vmul.f32 %v350, %v2456
      %v2476 = vmul.f32 %v351, %v2456
      %v2477 = vmul.f32 %v352, %v2456
      %v2478 = vmul.f32 %v353, %v2456
      %v2479 = vmul.f32 %v354, %v2456
      %v2480 = vmul.f32 %v355, %v2456
      %v2481 = vmul.f32 %v356, %v2456
      %v2482 = vmul.f32 %v357, %v2456
      %v2483 = vmul.f32 %v358, %v2456
      %v2484 = vmul.f32 %v359, %v2456
      %v2485 = vmul.f32 %v360, %v2456
      %v2486 = vmul.f32 %v361, %v2456
      %v2487 = vmul.f32 %v362, %v2456
      %v2488 = vmul.f32 %v363, %v2456
      %v2489 = vmul.f32 %v364, %v2456
      %v2490 = vmul.f32 %v365, %v2456
      %v2491 = vmul.f32 %v366, %v2456
      %v2492 = vmul.f32 %v367, %v2456
      %v2493 = vmul.f32 %v368, %v2456
      %v2494 = vmul.f32 %v369, %v2456
      %v2495 = vmul.f32 %v370, %v2456
      %v2496 = vmul.f32 %v371, %v2456
      %v2497 = vmul.f32 %v372, %v2456
      %v2498 = vmul.f32 %v373, %v2456
      %v2499 = vmul.f32 %v374, %v2456
      %v2500 = vmul.f32 %v375, %v2456
      %v2501 = vmul.f32 %v376, %v2456
      %v2502 = vmul.f32 %v377, %v2456
      %v2503 = vmul.f32 %v378, %v2456
      %v2504 = vmul.f32 %v379, %v2456
      %v2553 = vrot.slane %v2457, 2
      %v2554 = vrot.slane %v2458, 2
      %v2555 = vsel %vm2062, %v2553, %v2554
      %v2556 = vrot.slane %v2459, 2
      %v2557 = vsel %vm2062, %v2554, %v2556
      %v2558 = vrot.slane %v2460, 2
      %v2559 = vrot.slane %v2461, 2
      %v2560 = vsel %vm2062, %v2558, %v2559
      %v2561 = vrot.slane %v2462, 2
      %v2562 = vsel %vm2062, %v2559, %v2561
      %v2563 = vrot.slane %v2463, 2
      %v2564 = vrot.slane %v2464, 2
      %v2565 = vsel %vm2062, %v2563, %v2564
      %v2566 = vrot.slane %v2465, 2
      %v2567 = vsel %vm2062, %v2564, %v2566
      %v2568 = vrot.slane %v2466, 2
      %v2569 = vrot.slane %v2467, 2
      %v2570 = vsel %vm2062, %v2568, %v2569
      %v2571 = vrot.slane %v2468, 2
      %v2572 = vsel %vm2062, %v2569, %v2571
      %v2573 = vrot.slane %v2469, 2
      %v2574 = vrot.slane %v2470, 2
      %v2575 = vsel %vm2062, %v2573, %v2574
      %v2576 = vrot.slane %v2471, 2
      %v2577 = vsel %vm2062, %v2574, %v2576
      %v2578 = vrot.slane %v2472, 2
      %v2579 = vrot.slane %v2473, 2
      %v2580 = vsel %vm2062, %v2578, %v2579
      %v2581 = vrot.slane %v2474, 2
      %v2582 = vsel %vm2062, %v2579, %v2581
      %v2583 = vrot.slane %v2475, 2
      %v2584 = vrot.slane %v2476, 2
      %v2585 = vsel %vm2062, %v2583, %v2584
      %v2586 = vrot.slane %v2477, 2
      %v2587 = vsel %vm2062, %v2584, %v2586
      %v2588 = vrot.slane %v2478, 2
      %v2589 = vrot.slane %v2479, 2
      %v2590 = vsel %vm2062, %v2588, %v2589
      %v2591 = vrot.slane %v2480, 2
      %v2592 = vsel %vm2062, %v2589, %v2591
      %v2593 = vrot.slane %v2481, 2
      %v2594 = vrot.slane %v2482, 2
      %v2595 = vsel %vm2062, %v2593, %v2594
      %v2596 = vrot.slane %v2483, 2
      %v2597 = vsel %vm2062, %v2594, %v2596
      %v2598 = vrot.slane %v2484, 2
      %v2599 = vrot.slane %v2485, 2
      %v2600 = vsel %vm2062, %v2598, %v2599
      %v2601 = vrot.slane %v2486, 2
      %v2602 = vsel %vm2062, %v2599, %v2601
      %v2603 = vrot.slane %v2487, 2
      %v2604 = vrot.slane %v2488, 2
      %v2605 = vsel %vm2062, %v2603, %v2604
      %v2606 = vrot.slane %v2489, 2
      %v2607 = vsel %vm2062, %v2604, %v2606
      %v2608 = vrot.slane %v2490, 2
      %v2609 = vrot.slane %v2491, 2
      %v2610 = vsel %vm2062, %v2608, %v2609
      %v2611 = vrot.slane %v2492, 2
      %v2612 = vsel %vm2062, %v2609, %v2611
      %v2613 = vrot.slane %v2493, 2
      %v2614 = vrot.slane %v2494, 2
      %v2615 = vsel %vm2062, %v2613, %v2614
      %v2616 = vrot.slane %v2495, 2
      %v2617 = vsel %vm2062, %v2614, %v2616
      %v2618 = vrot.slane %v2496, 2
      %v2619 = vrot.slane %v2497, 2
      %v2620 = vsel %vm2062, %v2618, %v2619
      %v2621 = vrot.slane %v2498, 2
      %v2622 = vsel %vm2062, %v2619, %v2621
      %v2623 = vrot.slane %v2499, 2
      %v2624 = vrot.slane %v2500, 2
      %v2625 = vsel %vm2062, %v2623, %v2624
      %v2626 = vrot.slane %v2501, 2
      %v2627 = vsel %vm2062, %v2624, %v2626
      %v2628 = vrot.slane %v2502, 2
      %v2629 = vrot.slane %v2503, 2
      %v2630 = vsel %vm2062, %v2628, %v2629
      %v2631 = vrot.slane %v2504, 2
      %v2632 = vsel %vm2062, %v2629, %v2631
      %v2665 = vadd.f32 %v2420, %v2555
      %v2666 = vadd.f32 %v2421, %v2557
      %v2667 = vadd.f32 %v2422, %v2560
      %v2668 = vadd.f32 %v2423, %v2562
      %v2669 = vadd.f32 %v2424, %v2565
      %v2670 = vadd.f32 %v2425, %v2567
      %v2671 = vadd.f32 %v2426, %v2570
      %v2672 = vadd.f32 %v2427, %v2572
      %v2673 = vadd.f32 %v2428, %v2575
      %v2674 = vadd.f32 %v2429, %v2577
      %v2675 = vadd.f32 %v2430, %v2580
      %v2676 = vadd.f32 %v2431, %v2582
      %v2677 = vadd.f32 %v2432, %v2585
      %v2678 = vadd.f32 %v2433, %v2587
      %v2679 = vadd.f32 %v2434, %v2590
      %v2680 = vadd.f32 %v2435, %v2592
      %v2681 = vadd.f32 %v2436, %v2595
      %v2682 = vadd.f32 %v2437, %v2597
      %v2683 = vadd.f32 %v2438, %v2600
      %v2684 = vadd.f32 %v2439, %v2602
      %v2685 = vadd.f32 %v2440, %v2605
      %v2686 = vadd.f32 %v2441, %v2607
      %v2687 = vadd.f32 %v2442, %v2610
      %v2688 = vadd.f32 %v2443, %v2612
      %v2689 = vadd.f32 %v2444, %v2615
      %v2690 = vadd.f32 %v2445, %v2617
      %v2691 = vadd.f32 %v2446, %v2620
      %v2692 = vadd.f32 %v2447, %v2622
      %v2693 = vadd.f32 %v2448, %v2625
      %v2694 = vadd.f32 %v2449, %v2627
      %v2695 = vadd.f32 %v2450, %v2630
      %v2696 = vadd.f32 %v2451, %v2632
      %v2697 = vld [vmem:[%s595 + $0x2] sm:$0x1]
      %v2698 = vlaneseq
      %v2699 = vshrl.u32 %v2698, 7
      %v2700 = vsub.s32 0, %v2699
      %v2701 = vrot.slane %v2697, %v2700
      %v2702 = vmul.f32 %v335, %v2701
      %v2703 = vmul.f32 %v336, %v2701
      %v2704 = vmul.f32 %v337, %v2701
      %v2705 = vmul.f32 %v338, %v2701
      %v2706 = vmul.f32 %v339, %v2701
      %v2707 = vmul.f32 %v340, %v2701
      %v2708 = vmul.f32 %v341, %v2701
      %v2709 = vmul.f32 %v342, %v2701
      %v2710 = vmul.f32 %v343, %v2701
      %v2711 = vmul.f32 %v344, %v2701
      %v2712 = vmul.f32 %v345, %v2701
      %v2713 = vmul.f32 %v346, %v2701
      %v2714 = vmul.f32 %v347, %v2701
      %v2715 = vmul.f32 %v348, %v2701
      %v2716 = vmul.f32 %v349, %v2701
      %v2717 = vmul.f32 %v350, %v2701
      %v2718 = vmul.f32 %v351, %v2701
      %v2719 = vmul.f32 %v352, %v2701
      %v2720 = vmul.f32 %v353, %v2701
      %v2721 = vmul.f32 %v354, %v2701
      %v2722 = vmul.f32 %v355, %v2701
      %v2723 = vmul.f32 %v356, %v2701
      %v2724 = vmul.f32 %v357, %v2701
      %v2725 = vmul.f32 %v358, %v2701
      %v2726 = vmul.f32 %v359, %v2701
      %v2727 = vmul.f32 %v360, %v2701
      %v2728 = vmul.f32 %v361, %v2701
      %v2729 = vmul.f32 %v362, %v2701
      %v2730 = vmul.f32 %v363, %v2701
      %v2731 = vmul.f32 %v364, %v2701
      %v2732 = vmul.f32 %v365, %v2701
      %v2733 = vmul.f32 %v366, %v2701
      %v2734 = vmul.f32 %v367, %v2701
      %v2735 = vmul.f32 %v368, %v2701
      %v2736 = vmul.f32 %v369, %v2701
      %v2737 = vmul.f32 %v370, %v2701
      %v2738 = vmul.f32 %v371, %v2701
      %v2739 = vmul.f32 %v372, %v2701
      %v2740 = vmul.f32 %v373, %v2701
      %v2741 = vmul.f32 %v374, %v2701
      %v2742 = vmul.f32 %v375, %v2701
      %v2743 = vmul.f32 %v376, %v2701
      %v2744 = vmul.f32 %v377, %v2701
      %v2745 = vmul.f32 %v378, %v2701
      %v2746 = vmul.f32 %v379, %v2701
      %v2747 = vmul.f32 %v380, %v2701
      %v2748 = vmul.f32 %v381, %v2701
      %v2749 = vmul.f32 %v382, %v2701
      %v2798 = vrot.slane %v2702, 2
      %v2799 = vrot.slane %v2703, 2
      %v2800 = vsel %vm2062, %v2798, %v2799
      %v2801 = vrot.slane %v2704, 2
      %v2802 = vsel %vm2062, %v2799, %v2801
      %v2803 = vrot.slane %v2705, 2
      %v2804 = vrot.slane %v2706, 2
      %v2805 = vsel %vm2062, %v2803, %v2804
      %v2806 = vrot.slane %v2707, 2
      %v2807 = vsel %vm2062, %v2804, %v2806
      %v2808 = vrot.slane %v2708, 2
      %v2809 = vrot.slane %v2709, 2
      %v2810 = vsel %vm2062, %v2808, %v2809
      %v2811 = vrot.slane %v2710, 2
      %v2812 = vsel %vm2062, %v2809, %v2811
      %v2813 = vrot.slane %v2711, 2
      %v2814 = vrot.slane %v2712, 2
      %v2815 = vsel %vm2062, %v2813, %v2814
      %v2816 = vrot.slane %v2713, 2
      %v2817 = vsel %vm2062, %v2814, %v2816
      %v2818 = vrot.slane %v2714, 2
      %v2819 = vrot.slane %v2715, 2
      %v2820 = vsel %vm2062, %v2818, %v2819
      %v2821 = vrot.slane %v2716, 2
      %v2822 = vsel %vm2062, %v2819, %v2821
      %v2823 = vrot.slane %v2717, 2
      %v2824 = vrot.slane %v2718, 2
      %v2825 = vsel %vm2062, %v2823, %v2824
      %v2826 = vrot.slane %v2719, 2
      %v2827 = vsel %vm2062, %v2824, %v2826
      %v2828 = vrot.slane %v2720, 2
      %v2829 = vrot.slane %v2721, 2
      %v2830 = vsel %vm2062, %v2828, %v2829
      %v2831 = vrot.slane %v2722, 2
      %v2832 = vsel %vm2062, %v2829, %v2831
      %v2833 = vrot.slane %v2723, 2
      %v2834 = vrot.slane %v2724, 2
      %v2835 = vsel %vm2062, %v2833, %v2834
      %v2836 = vrot.slane %v2725, 2
      %v2837 = vsel %vm2062, %v2834, %v2836
      %v2838 = vrot.slane %v2726, 2
      %v2839 = vrot.slane %v2727, 2
      %v2840 = vsel %vm2062, %v2838, %v2839
      %v2841 = vrot.slane %v2728, 2
      %v2842 = vsel %vm2062, %v2839, %v2841
      %v2843 = vrot.slane %v2729, 2
      %v2844 = vrot.slane %v2730, 2
      %v2845 = vsel %vm2062, %v2843, %v2844
      %v2846 = vrot.slane %v2731, 2
      %v2847 = vsel %vm2062, %v2844, %v2846
      %v2848 = vrot.slane %v2732, 2
      %v2849 = vrot.slane %v2733, 2
      %v2850 = vsel %vm2062, %v2848, %v2849
      %v2851 = vrot.slane %v2734, 2
      %v2852 = vsel %vm2062, %v2849, %v2851
      %v2853 = vrot.slane %v2735, 2
      %v2854 = vrot.slane %v2736, 2
      %v2855 = vsel %vm2062, %v2853, %v2854
      %v2856 = vrot.slane %v2737, 2
      %v2857 = vsel %vm2062, %v2854, %v2856
      %v2858 = vrot.slane %v2738, 2
      %v2859 = vrot.slane %v2739, 2
      %v2860 = vsel %vm2062, %v2858, %v2859
      %v2861 = vrot.slane %v2740, 2
      %v2862 = vsel %vm2062, %v2859, %v2861
      %v2863 = vrot.slane %v2741, 2
      %v2864 = vrot.slane %v2742, 2
      %v2865 = vsel %vm2062, %v2863, %v2864
      %v2866 = vrot.slane %v2743, 2
      %v2867 = vsel %vm2062, %v2864, %v2866
      %v2868 = vrot.slane %v2744, 2
      %v2869 = vrot.slane %v2745, 2
      %v2870 = vsel %vm2062, %v2868, %v2869
      %v2871 = vrot.slane %v2746, 2
      %v2872 = vsel %vm2062, %v2869, %v2871
      %v2873 = vrot.slane %v2747, 2
      %v2874 = vrot.slane %v2748, 2
      %v2875 = vsel %vm2062, %v2873, %v2874
      %v2876 = vrot.slane %v2749, 2
      %v2877 = vsel %vm2062, %v2874, %v2876
      %v2910 = vadd.f32 %v2665, %v2800
      %v2911 = vadd.f32 %v2666, %v2802
      %v2912 = vadd.f32 %v2667, %v2805
      %v2913 = vadd.f32 %v2668, %v2807
      %v2914 = vadd.f32 %v2669, %v2810
      %v2915 = vadd.f32 %v2670, %v2812
      %v2916 = vadd.f32 %v2671, %v2815
      %v2917 = vadd.f32 %v2672, %v2817
      %v2918 = vadd.f32 %v2673, %v2820
      %v2919 = vadd.f32 %v2674, %v2822
      %v2920 = vadd.f32 %v2675, %v2825
      %v2921 = vadd.f32 %v2676, %v2827
      %v2922 = vadd.f32 %v2677, %v2830
      %v2923 = vadd.f32 %v2678, %v2832
      %v2924 = vadd.f32 %v2679, %v2835
      %v2925 = vadd.f32 %v2680, %v2837
      %v2926 = vadd.f32 %v2681, %v2840
      %v2927 = vadd.f32 %v2682, %v2842
      %v2928 = vadd.f32 %v2683, %v2845
      %v2929 = vadd.f32 %v2684, %v2847
      %v2930 = vadd.f32 %v2685, %v2850
      %v2931 = vadd.f32 %v2686, %v2852
      %v2932 = vadd.f32 %v2687, %v2855
      %v2933 = vadd.f32 %v2688, %v2857
      %v2934 = vadd.f32 %v2689, %v2860
      %v2935 = vadd.f32 %v2690, %v2862
      %v2936 = vadd.f32 %v2691, %v2865
      %v2937 = vadd.f32 %v2692, %v2867
      %v2938 = vadd.f32 %v2693, %v2870
      %v2939 = vadd.f32 %v2694, %v2872
      %v2940 = vadd.f32 %v2695, %v2875
      %v2941 = vadd.f32 %v2696, %v2877
      %v2942 = vld [vmem:[%s665 + $0x2] sm:$0x1]
      %v2943 = vlaneseq
      %v2944 = vshrl.u32 %v2943, 7
      %v2945 = vsub.s32 0, %v2944
      %v2946 = vrot.slane %v2942, %v2945
      %v2947 = vmul.f32 %v338, %v2946
      %v2948 = vmul.f32 %v339, %v2946
      %v2949 = vmul.f32 %v340, %v2946
      %v2950 = vmul.f32 %v341, %v2946
      %v2951 = vmul.f32 %v342, %v2946
      %v2952 = vmul.f32 %v343, %v2946
      %v2953 = vmul.f32 %v344, %v2946
      %v2954 = vmul.f32 %v345, %v2946
      %v2955 = vmul.f32 %v346, %v2946
      %v2956 = vmul.f32 %v347, %v2946
      %v2957 = vmul.f32 %v348, %v2946
      %v2958 = vmul.f32 %v349, %v2946
      %v2959 = vmul.f32 %v350, %v2946
      %v2960 = vmul.f32 %v351, %v2946
      %v2961 = vmul.f32 %v352, %v2946
      %v2962 = vmul.f32 %v353, %v2946
      %v2963 = vmul.f32 %v354, %v2946
      %v2964 = vmul.f32 %v355, %v2946
      %v2965 = vmul.f32 %v356, %v2946
      %v2966 = vmul.f32 %v357, %v2946
      %v2967 = vmul.f32 %v358, %v2946
      %v2968 = vmul.f32 %v359, %v2946
      %v2969 = vmul.f32 %v360, %v2946
      %v2970 = vmul.f32 %v361, %v2946
      %v2971 = vmul.f32 %v362, %v2946
      %v2972 = vmul.f32 %v363, %v2946
      %v2973 = vmul.f32 %v364, %v2946
      %v2974 = vmul.f32 %v365, %v2946
      %v2975 = vmul.f32 %v366, %v2946
      %v2976 = vmul.f32 %v367, %v2946
      %v2977 = vmul.f32 %v368, %v2946
      %v2978 = vmul.f32 %v369, %v2946
      %v2979 = vmul.f32 %v370, %v2946
      %v2980 = vmul.f32 %v371, %v2946
      %v2981 = vmul.f32 %v372, %v2946
      %v2982 = vmul.f32 %v373, %v2946
      %v2983 = vmul.f32 %v374, %v2946
      %v2984 = vmul.f32 %v375, %v2946
      %v2985 = vmul.f32 %v376, %v2946
      %v2986 = vmul.f32 %v377, %v2946
      %v2987 = vmul.f32 %v378, %v2946
      %v2988 = vmul.f32 %v379, %v2946
      %v2989 = vmul.f32 %v380, %v2946
      %v2990 = vmul.f32 %v381, %v2946
      %v2991 = vmul.f32 %v382, %v2946
      %v2992 = vmul.f32 %v383, %v2946
      %v2993 = vmul.f32 %v384, %v2946
      %v2994 = vmul.f32 %v385, %v2946
      %v3043 = vrot.slane %v2947, 2
      %v3044 = vrot.slane %v2948, 2
      %v3045 = vsel %vm2062, %v3043, %v3044
      %v3046 = vrot.slane %v2949, 2
      %v3047 = vsel %vm2062, %v3044, %v3046
      %v3048 = vrot.slane %v2950, 2
      %v3049 = vrot.slane %v2951, 2
      %v3050 = vsel %vm2062, %v3048, %v3049
      %v3051 = vrot.slane %v2952, 2
      %v3052 = vsel %vm2062, %v3049, %v3051
      %v3053 = vrot.slane %v2953, 2
      %v3054 = vrot.slane %v2954, 2
      %v3055 = vsel %vm2062, %v3053, %v3054
      %v3056 = vrot.slane %v2955, 2
      %v3057 = vsel %vm2062, %v3054, %v3056
      %v3058 = vrot.slane %v2956, 2
      %v3059 = vrot.slane %v2957, 2
      %v3060 = vsel %vm2062, %v3058, %v3059
      %v3061 = vrot.slane %v2958, 2
      %v3062 = vsel %vm2062, %v3059, %v3061
      %v3063 = vrot.slane %v2959, 2
      %v3064 = vrot.slane %v2960, 2
      %v3065 = vsel %vm2062, %v3063, %v3064
      %v3066 = vrot.slane %v2961, 2
      %v3067 = vsel %vm2062, %v3064, %v3066
      %v3068 = vrot.slane %v2962, 2
      %v3069 = vrot.slane %v2963, 2
      %v3070 = vsel %vm2062, %v3068, %v3069
      %v3071 = vrot.slane %v2964, 2
      %v3072 = vsel %vm2062, %v3069, %v3071
      %v3073 = vrot.slane %v2965, 2
      %v3074 = vrot.slane %v2966, 2
      %v3075 = vsel %vm2062, %v3073, %v3074
      %v3076 = vrot.slane %v2967, 2
      %v3077 = vsel %vm2062, %v3074, %v3076
      %v3078 = vrot.slane %v2968, 2
      %v3079 = vrot.slane %v2969, 2
      %v3080 = vsel %vm2062, %v3078, %v3079
      %v3081 = vrot.slane %v2970, 2
      %v3082 = vsel %vm2062, %v3079, %v3081
      %v3083 = vrot.slane %v2971, 2
      %v3084 = vrot.slane %v2972, 2
      %v3085 = vsel %vm2062, %v3083, %v3084
      %v3086 = vrot.slane %v2973, 2
      %v3087 = vsel %vm2062, %v3084, %v3086
      %v3088 = vrot.slane %v2974, 2
      %v3089 = vrot.slane %v2975, 2
      %v3090 = vsel %vm2062, %v3088, %v3089
      %v3091 = vrot.slane %v2976, 2
      %v3092 = vsel %vm2062, %v3089, %v3091
      %v3093 = vrot.slane %v2977, 2
      %v3094 = vrot.slane %v2978, 2
      %v3095 = vsel %vm2062, %v3093, %v3094
      %v3096 = vrot.slane %v2979, 2
      %v3097 = vsel %vm2062, %v3094, %v3096
      %v3098 = vrot.slane %v2980, 2
      %v3099 = vrot.slane %v2981, 2
      %v3100 = vsel %vm2062, %v3098, %v3099
      %v3101 = vrot.slane %v2982, 2
      %v3102 = vsel %vm2062, %v3099, %v3101
      %v3103 = vrot.slane %v2983, 2
      %v3104 = vrot.slane %v2984, 2
      %v3105 = vsel %vm2062, %v3103, %v3104
      %v3106 = vrot.slane %v2985, 2
      %v3107 = vsel %vm2062, %v3104, %v3106
      %v3108 = vrot.slane %v2986, 2
      %v3109 = vrot.slane %v2987, 2
      %v3110 = vsel %vm2062, %v3108, %v3109
      %v3111 = vrot.slane %v2988, 2
      %v3112 = vsel %vm2062, %v3109, %v3111
      %v3113 = vrot.slane %v2989, 2
      %v3114 = vrot.slane %v2990, 2
      %v3115 = vsel %vm2062, %v3113, %v3114
      %v3116 = vrot.slane %v2991, 2
      %v3117 = vsel %vm2062, %v3114, %v3116
      %v3118 = vrot.slane %v2992, 2
      %v3119 = vrot.slane %v2993, 2
      %v3120 = vsel %vm2062, %v3118, %v3119
      %v3121 = vrot.slane %v2994, 2
      %v3122 = vsel %vm2062, %v3119, %v3121
      %v3155 = vadd.f32 %v2910, %v3045
      %v3156 = vadd.f32 %v2911, %v3047
      %v3157 = vadd.f32 %v2912, %v3050
      %v3158 = vadd.f32 %v2913, %v3052
      %v3159 = vadd.f32 %v2914, %v3055
      %v3160 = vadd.f32 %v2915, %v3057
      %v3161 = vadd.f32 %v2916, %v3060
      %v3162 = vadd.f32 %v2917, %v3062
      %v3163 = vadd.f32 %v2918, %v3065
      %v3164 = vadd.f32 %v2919, %v3067
      %v3165 = vadd.f32 %v2920, %v3070
      %v3166 = vadd.f32 %v2921, %v3072
      %v3167 = vadd.f32 %v2922, %v3075
      %v3168 = vadd.f32 %v2923, %v3077
      %v3169 = vadd.f32 %v2924, %v3080
      %v3170 = vadd.f32 %v2925, %v3082
      %v3171 = vadd.f32 %v2926, %v3085
      %v3172 = vadd.f32 %v2927, %v3087
      %v3173 = vadd.f32 %v2928, %v3090
      %v3174 = vadd.f32 %v2929, %v3092
      %v3175 = vadd.f32 %v2930, %v3095
      %v3176 = vadd.f32 %v2931, %v3097
      %v3177 = vadd.f32 %v2932, %v3100
      %v3178 = vadd.f32 %v2933, %v3102
      %v3179 = vadd.f32 %v2934, %v3105
      %v3180 = vadd.f32 %v2935, %v3107
      %v3181 = vadd.f32 %v2936, %v3110
      %v3182 = vadd.f32 %v2937, %v3112
      %v3183 = vadd.f32 %v2938, %v3115
      %v3184 = vadd.f32 %v2939, %v3117
      %v3185 = vadd.f32 %v2940, %v3120
      %v3186 = vadd.f32 %v2941, %v3122
      %v3187 = vld [vmem:[%s2 + $0x3] sm:$0x1]
      %v3188 = vlaneseq
      %v3189 = vshrl.u32 %v3188, 7
      %v3190 = vsub.s32 0, %v3189
      %v3191 = vrot.slane %v3187, %v3190
      %v3192 = vmul.f32 %v326, %v3191
      %v3193 = vmul.f32 %v327, %v3191
      %v3194 = vmul.f32 %v328, %v3191
      %v3195 = vmul.f32 %v329, %v3191
      %v3196 = vmul.f32 %v330, %v3191
      %v3197 = vmul.f32 %v331, %v3191
      %v3198 = vmul.f32 %v332, %v3191
      %v3199 = vmul.f32 %v333, %v3191
      %v3200 = vmul.f32 %v334, %v3191
      %v3201 = vmul.f32 %v335, %v3191
      %v3202 = vmul.f32 %v336, %v3191
      %v3203 = vmul.f32 %v337, %v3191
      %v3204 = vmul.f32 %v338, %v3191
      %v3205 = vmul.f32 %v339, %v3191
      %v3206 = vmul.f32 %v340, %v3191
      %v3207 = vmul.f32 %v341, %v3191
      %v3208 = vmul.f32 %v342, %v3191
      %v3209 = vmul.f32 %v343, %v3191
      %v3210 = vmul.f32 %v344, %v3191
      %v3211 = vmul.f32 %v345, %v3191
      %v3212 = vmul.f32 %v346, %v3191
      %v3213 = vmul.f32 %v347, %v3191
      %v3214 = vmul.f32 %v348, %v3191
      %v3215 = vmul.f32 %v349, %v3191
      %v3216 = vmul.f32 %v350, %v3191
      %v3217 = vmul.f32 %v351, %v3191
      %v3218 = vmul.f32 %v352, %v3191
      %v3219 = vmul.f32 %v353, %v3191
      %v3220 = vmul.f32 %v354, %v3191
      %v3221 = vmul.f32 %v355, %v3191
      %v3222 = vmul.f32 %v356, %v3191
      %v3223 = vmul.f32 %v357, %v3191
      %v3224 = vmul.f32 %v358, %v3191
      %v3225 = vmul.f32 %v359, %v3191
      %v3226 = vmul.f32 %v360, %v3191
      %v3227 = vmul.f32 %v361, %v3191
      %v3228 = vmul.f32 %v362, %v3191
      %v3229 = vmul.f32 %v363, %v3191
      %v3230 = vmul.f32 %v364, %v3191
      %v3231 = vmul.f32 %v365, %v3191
      %v3232 = vmul.f32 %v366, %v3191
      %v3233 = vmul.f32 %v367, %v3191
      %v3234 = vmul.f32 %v368, %v3191
      %v3235 = vmul.f32 %v369, %v3191
      %v3236 = vmul.f32 %v370, %v3191
      %v3237 = vmul.f32 %v371, %v3191
      %v3238 = vmul.f32 %v372, %v3191
      %v3239 = vmul.f32 %v373, %v3191
      %vm3288 = vcmask 1044480
      %v3289 = vrot.slane %v3192, 3
      %v3290 = vrot.slane %v3193, 3
      %v3291 = vsel %vm3288, %v3289, %v3290
      %v3292 = vrot.slane %v3194, 3
      %v3293 = vsel %vm3288, %v3290, %v3292
      %v3294 = vrot.slane %v3195, 3
      %v3295 = vrot.slane %v3196, 3
      %v3296 = vsel %vm3288, %v3294, %v3295
      %v3297 = vrot.slane %v3197, 3
      %v3298 = vsel %vm3288, %v3295, %v3297
      %v3299 = vrot.slane %v3198, 3
      %v3300 = vrot.slane %v3199, 3
      %v3301 = vsel %vm3288, %v3299, %v3300
      %v3302 = vrot.slane %v3200, 3
      %v3303 = vsel %vm3288, %v3300, %v3302
      %v3304 = vrot.slane %v3201, 3
      %v3305 = vrot.slane %v3202, 3
      %v3306 = vsel %vm3288, %v3304, %v3305
      %v3307 = vrot.slane %v3203, 3
      %v3308 = vsel %vm3288, %v3305, %v3307
      %v3309 = vrot.slane %v3204, 3
      %v3310 = vrot.slane %v3205, 3
      %v3311 = vsel %vm3288, %v3309, %v3310
      %v3312 = vrot.slane %v3206, 3
      %v3313 = vsel %vm3288, %v3310, %v3312
      %v3314 = vrot.slane %v3207, 3
      %v3315 = vrot.slane %v3208, 3
      %v3316 = vsel %vm3288, %v3314, %v3315
      %v3317 = vrot.slane %v3209, 3
      %v3318 = vsel %vm3288, %v3315, %v3317
      %v3319 = vrot.slane %v3210, 3
      %v3320 = vrot.slane %v3211, 3
      %v3321 = vsel %vm3288, %v3319, %v3320
      %v3322 = vrot.slane %v3212, 3
      %v3323 = vsel %vm3288, %v3320, %v3322
      %v3324 = vrot.slane %v3213, 3
      %v3325 = vrot.slane %v3214, 3
      %v3326 = vsel %vm3288, %v3324, %v3325
      %v3327 = vrot.slane %v3215, 3
      %v3328 = vsel %vm3288, %v3325, %v3327
      %v3329 = vrot.slane %v3216, 3
      %v3330 = vrot.slane %v3217, 3
      %v3331 = vsel %vm3288, %v3329, %v3330
      %v3332 = vrot.slane %v3218, 3
      %v3333 = vsel %vm3288, %v3330, %v3332
      %v3334 = vrot.slane %v3219, 3
      %v3335 = vrot.slane %v3220, 3
      %v3336 = vsel %vm3288, %v3334, %v3335
      %v3337 = vrot.slane %v3221, 3
      %v3338 = vsel %vm3288, %v3335, %v3337
      %v3339 = vrot.slane %v3222, 3
      %v3340 = vrot.slane %v3223, 3
      %v3341 = vsel %vm3288, %v3339, %v3340
      %v3342 = vrot.slane %v3224, 3
      %v3343 = vsel %vm3288, %v3340, %v3342
      %v3344 = vrot.slane %v3225, 3
      %v3345 = vrot.slane %v3226, 3
      %v3346 = vsel %vm3288, %v3344, %v3345
      %v3347 = vrot.slane %v3227, 3
      %v3348 = vsel %vm3288, %v3345, %v3347
      %v3349 = vrot.slane %v3228, 3
      %v3350 = vrot.slane %v3229, 3
      %v3351 = vsel %vm3288, %v3349, %v3350
      %v3352 = vrot.slane %v3230, 3
      %v3353 = vsel %vm3288, %v3350, %v3352
      %v3354 = vrot.slane %v3231, 3
      %v3355 = vrot.slane %v3232, 3
      %v3356 = vsel %vm3288, %v3354, %v3355
      %v3357 = vrot.slane %v3233, 3
      %v3358 = vsel %vm3288, %v3355, %v3357
      %v3359 = vrot.slane %v3234, 3
      %v3360 = vrot.slane %v3235, 3
      %v3361 = vsel %vm3288, %v3359, %v3360
      %v3362 = vrot.slane %v3236, 3
      %v3363 = vsel %vm3288, %v3360, %v3362
      %v3364 = vrot.slane %v3237, 3
      %v3365 = vrot.slane %v3238, 3
      %v3366 = vsel %vm3288, %v3364, %v3365
      %v3367 = vrot.slane %v3239, 3
      %v3368 = vsel %vm3288, %v3365, %v3367
      %v3401 = vadd.f32 %v3155, %v3291
      %v3402 = vadd.f32 %v3156, %v3293
      %v3403 = vadd.f32 %v3157, %v3296
      %v3404 = vadd.f32 %v3158, %v3298
      %v3405 = vadd.f32 %v3159, %v3301
      %v3406 = vadd.f32 %v3160, %v3303
      %v3407 = vadd.f32 %v3161, %v3306
      %v3408 = vadd.f32 %v3162, %v3308
      %v3409 = vadd.f32 %v3163, %v3311
      %v3410 = vadd.f32 %v3164, %v3313
      %v3411 = vadd.f32 %v3165, %v3316
      %v3412 = vadd.f32 %v3166, %v3318
      %v3413 = vadd.f32 %v3167, %v3321
      %v3414 = vadd.f32 %v3168, %v3323
      %v3415 = vadd.f32 %v3169, %v3326
      %v3416 = vadd.f32 %v3170, %v3328
      %v3417 = vadd.f32 %v3171, %v3331
      %v3418 = vadd.f32 %v3172, %v3333
      %v3419 = vadd.f32 %v3173, %v3336
      %v3420 = vadd.f32 %v3174, %v3338
      %v3421 = vadd.f32 %v3175, %v3341
      %v3422 = vadd.f32 %v3176, %v3343
      %v3423 = vadd.f32 %v3177, %v3346
      %v3424 = vadd.f32 %v3178, %v3348
      %v3425 = vadd.f32 %v3179, %v3351
      %v3426 = vadd.f32 %v3180, %v3353
      %v3427 = vadd.f32 %v3181, %v3356
      %v3428 = vadd.f32 %v3182, %v3358
      %v3429 = vadd.f32 %v3183, %v3361
      %v3430 = vadd.f32 %v3184, %v3363
      %v3431 = vadd.f32 %v3185, %v3366
      %v3432 = vadd.f32 %v3186, %v3368
      %v3433 = vld [vmem:[%s455 + $0x3] sm:$0x1]
      %v3434 = vlaneseq
      %v3435 = vshrl.u32 %v3434, 7
      %v3436 = vsub.s32 0, %v3435
      %v3437 = vrot.slane %v3433, %v3436
      %v3438 = vmul.f32 %v329, %v3437
      %v3439 = vmul.f32 %v330, %v3437
      %v3440 = vmul.f32 %v331, %v3437
      %v3441 = vmul.f32 %v332, %v3437
      %v3442 = vmul.f32 %v333, %v3437
      %v3443 = vmul.f32 %v334, %v3437
      %v3444 = vmul.f32 %v335, %v3437
      %v3445 = vmul.f32 %v336, %v3437
      %v3446 = vmul.f32 %v337, %v3437
      %v3447 = vmul.f32 %v338, %v3437
      %v3448 = vmul.f32 %v339, %v3437
      %v3449 = vmul.f32 %v340, %v3437
      %v3450 = vmul.f32 %v341, %v3437
      %v3451 = vmul.f32 %v342, %v3437
      %v3452 = vmul.f32 %v343, %v3437
      %v3453 = vmul.f32 %v344, %v3437
      %v3454 = vmul.f32 %v345, %v3437
      %v3455 = vmul.f32 %v346, %v3437
      %v3456 = vmul.f32 %v347, %v3437
      %v3457 = vmul.f32 %v348, %v3437
      %v3458 = vmul.f32 %v349, %v3437
      %v3459 = vmul.f32 %v350, %v3437
      %v3460 = vmul.f32 %v351, %v3437
      %v3461 = vmul.f32 %v352, %v3437
      %v3462 = vmul.f32 %v353, %v3437
      %v3463 = vmul.f32 %v354, %v3437
      %v3464 = vmul.f32 %v355, %v3437
      %v3465 = vmul.f32 %v356, %v3437
      %v3466 = vmul.f32 %v357, %v3437
      %v3467 = vmul.f32 %v358, %v3437
      %v3468 = vmul.f32 %v359, %v3437
      %v3469 = vmul.f32 %v360, %v3437
      %v3470 = vmul.f32 %v361, %v3437
      %v3471 = vmul.f32 %v362, %v3437
      %v3472 = vmul.f32 %v363, %v3437
      %v3473 = vmul.f32 %v364, %v3437
      %v3474 = vmul.f32 %v365, %v3437
      %v3475 = vmul.f32 %v366, %v3437
      %v3476 = vmul.f32 %v367, %v3437
      %v3477 = vmul.f32 %v368, %v3437
      %v3478 = vmul.f32 %v369, %v3437
      %v3479 = vmul.f32 %v370, %v3437
      %v3480 = vmul.f32 %v371, %v3437
      %v3481 = vmul.f32 %v372, %v3437
      %v3482 = vmul.f32 %v373, %v3437
      %v3483 = vmul.f32 %v374, %v3437
      %v3484 = vmul.f32 %v375, %v3437
      %v3485 = vmul.f32 %v376, %v3437
      %v3534 = vrot.slane %v3438, 3
      %v3535 = vrot.slane %v3439, 3
      %v3536 = vsel %vm3288, %v3534, %v3535
      %v3537 = vrot.slane %v3440, 3
      %v3538 = vsel %vm3288, %v3535, %v3537
      %v3539 = vrot.slane %v3441, 3
      %v3540 = vrot.slane %v3442, 3
      %v3541 = vsel %vm3288, %v3539, %v3540
      %v3542 = vrot.slane %v3443, 3
      %v3543 = vsel %vm3288, %v3540, %v3542
      %v3544 = vrot.slane %v3444, 3
      %v3545 = vrot.slane %v3445, 3
      %v3546 = vsel %vm3288, %v3544, %v3545
      %v3547 = vrot.slane %v3446, 3
      %v3548 = vsel %vm3288, %v3545, %v3547
      %v3549 = vrot.slane %v3447, 3
      %v3550 = vrot.slane %v3448, 3
      %v3551 = vsel %vm3288, %v3549, %v3550
      %v3552 = vrot.slane %v3449, 3
      %v3553 = vsel %vm3288, %v3550, %v3552
      %v3554 = vrot.slane %v3450, 3
      %v3555 = vrot.slane %v3451, 3
      %v3556 = vsel %vm3288, %v3554, %v3555
      %v3557 = vrot.slane %v3452, 3
      %v3558 = vsel %vm3288, %v3555, %v3557
      %v3559 = vrot.slane %v3453, 3
      %v3560 = vrot.slane %v3454, 3
      %v3561 = vsel %vm3288, %v3559, %v3560
      %v3562 = vrot.slane %v3455, 3
      %v3563 = vsel %vm3288, %v3560, %v3562
      %v3564 = vrot.slane %v3456, 3
      %v3565 = vrot.slane %v3457, 3
      %v3566 = vsel %vm3288, %v3564, %v3565
      %v3567 = vrot.slane %v3458, 3
      %v3568 = vsel %vm3288, %v3565, %v3567
      %v3569 = vrot.slane %v3459, 3
      %v3570 = vrot.slane %v3460, 3
      %v3571 = vsel %vm3288, %v3569, %v3570
      %v3572 = vrot.slane %v3461, 3
      %v3573 = vsel %vm3288, %v3570, %v3572
      %v3574 = vrot.slane %v3462, 3
      %v3575 = vrot.slane %v3463, 3
      %v3576 = vsel %vm3288, %v3574, %v3575
      %v3577 = vrot.slane %v3464, 3
      %v3578 = vsel %vm3288, %v3575, %v3577
      %v3579 = vrot.slane %v3465, 3
      %v3580 = vrot.slane %v3466, 3
      %v3581 = vsel %vm3288, %v3579, %v3580
      %v3582 = vrot.slane %v3467, 3
      %v3583 = vsel %vm3288, %v3580, %v3582
      %v3584 = vrot.slane %v3468, 3
      %v3585 = vrot.slane %v3469, 3
      %v3586 = vsel %vm3288, %v3584, %v3585
      %v3587 = vrot.slane %v3470, 3
      %v3588 = vsel %vm3288, %v3585, %v3587
      %v3589 = vrot.slane %v3471, 3
      %v3590 = vrot.slane %v3472, 3
      %v3591 = vsel %vm3288, %v3589, %v3590
      %v3592 = vrot.slane %v3473, 3
      %v3593 = vsel %vm3288, %v3590, %v3592
      %v3594 = vrot.slane %v3474, 3
      %v3595 = vrot.slane %v3475, 3
      %v3596 = vsel %vm3288, %v3594, %v3595
      %v3597 = vrot.slane %v3476, 3
      %v3598 = vsel %vm3288, %v3595, %v3597
      %v3599 = vrot.slane %v3477, 3
      %v3600 = vrot.slane %v3478, 3
      %v3601 = vsel %vm3288, %v3599, %v3600
      %v3602 = vrot.slane %v3479, 3
      %v3603 = vsel %vm3288, %v3600, %v3602
      %v3604 = vrot.slane %v3480, 3
      %v3605 = vrot.slane %v3481, 3
      %v3606 = vsel %vm3288, %v3604, %v3605
      %v3607 = vrot.slane %v3482, 3
      %v3608 = vsel %vm3288, %v3605, %v3607
      %v3609 = vrot.slane %v3483, 3
      %v3610 = vrot.slane %v3484, 3
      %v3611 = vsel %vm3288, %v3609, %v3610
      %v3612 = vrot.slane %v3485, 3
      %v3613 = vsel %vm3288, %v3610, %v3612
      %v3646 = vadd.f32 %v3401, %v3536
      %v3647 = vadd.f32 %v3402, %v3538
      %v3648 = vadd.f32 %v3403, %v3541
      %v3649 = vadd.f32 %v3404, %v3543
      %v3650 = vadd.f32 %v3405, %v3546
      %v3651 = vadd.f32 %v3406, %v3548
      %v3652 = vadd.f32 %v3407, %v3551
      %v3653 = vadd.f32 %v3408, %v3553
      %v3654 = vadd.f32 %v3409, %v3556
      %v3655 = vadd.f32 %v3410, %v3558
      %v3656 = vadd.f32 %v3411, %v3561
      %v3657 = vadd.f32 %v3412, %v3563
      %v3658 = vadd.f32 %v3413, %v3566
      %v3659 = vadd.f32 %v3414, %v3568
      %v3660 = vadd.f32 %v3415, %v3571
      %v3661 = vadd.f32 %v3416, %v3573
      %v3662 = vadd.f32 %v3417, %v3576
      %v3663 = vadd.f32 %v3418, %v3578
      %v3664 = vadd.f32 %v3419, %v3581
      %v3665 = vadd.f32 %v3420, %v3583
      %v3666 = vadd.f32 %v3421, %v3586
      %v3667 = vadd.f32 %v3422, %v3588
      %v3668 = vadd.f32 %v3423, %v3591
      %v3669 = vadd.f32 %v3424, %v3593
      %v3670 = vadd.f32 %v3425, %v3596
      %v3671 = vadd.f32 %v3426, %v3598
      %v3672 = vadd.f32 %v3427, %v3601
      %v3673 = vadd.f32 %v3428, %v3603
      %v3674 = vadd.f32 %v3429, %v3606
      %v3675 = vadd.f32 %v3430, %v3608
      %v3676 = vadd.f32 %v3431, %v3611
      %v3677 = vadd.f32 %v3432, %v3613
      %v3678 = vld [vmem:[%s525 + $0x3] sm:$0x1]
      %v3679 = vlaneseq
      %v3680 = vshrl.u32 %v3679, 7
      %v3681 = vsub.s32 0, %v3680
      %v3682 = vrot.slane %v3678, %v3681
      %v3683 = vmul.f32 %v332, %v3682
      %v3684 = vmul.f32 %v333, %v3682
      %v3685 = vmul.f32 %v334, %v3682
      %v3686 = vmul.f32 %v335, %v3682
      %v3687 = vmul.f32 %v336, %v3682
      %v3688 = vmul.f32 %v337, %v3682
      %v3689 = vmul.f32 %v338, %v3682
      %v3690 = vmul.f32 %v339, %v3682
      %v3691 = vmul.f32 %v340, %v3682
      %v3692 = vmul.f32 %v341, %v3682
      %v3693 = vmul.f32 %v342, %v3682
      %v3694 = vmul.f32 %v343, %v3682
      %v3695 = vmul.f32 %v344, %v3682
      %v3696 = vmul.f32 %v345, %v3682
      %v3697 = vmul.f32 %v346, %v3682
      %v3698 = vmul.f32 %v347, %v3682
      %v3699 = vmul.f32 %v348, %v3682
      %v3700 = vmul.f32 %v349, %v3682
      %v3701 = vmul.f32 %v350, %v3682
      %v3702 = vmul.f32 %v351, %v3682
      %v3703 = vmul.f32 %v352, %v3682
      %v3704 = vmul.f32 %v353, %v3682
      %v3705 = vmul.f32 %v354, %v3682
      %v3706 = vmul.f32 %v355, %v3682
      %v3707 = vmul.f32 %v356, %v3682
      %v3708 = vmul.f32 %v357, %v3682
      %v3709 = vmul.f32 %v358, %v3682
      %v3710 = vmul.f32 %v359, %v3682
      %v3711 = vmul.f32 %v360, %v3682
      %v3712 = vmul.f32 %v361, %v3682
      %v3713 = vmul.f32 %v362, %v3682
      %v3714 = vmul.f32 %v363, %v3682
      %v3715 = vmul.f32 %v364, %v3682
      %v3716 = vmul.f32 %v365, %v3682
      %v3717 = vmul.f32 %v366, %v3682
      %v3718 = vmul.f32 %v367, %v3682
      %v3719 = vmul.f32 %v368, %v3682
      %v3720 = vmul.f32 %v369, %v3682
      %v3721 = vmul.f32 %v370, %v3682
      %v3722 = vmul.f32 %v371, %v3682
      %v3723 = vmul.f32 %v372, %v3682
      %v3724 = vmul.f32 %v373, %v3682
      %v3725 = vmul.f32 %v374, %v3682
      %v3726 = vmul.f32 %v375, %v3682
      %v3727 = vmul.f32 %v376, %v3682
      %v3728 = vmul.f32 %v377, %v3682
      %v3729 = vmul.f32 %v378, %v3682
      %v3730 = vmul.f32 %v379, %v3682
      %v3779 = vrot.slane %v3683, 3
      %v3780 = vrot.slane %v3684, 3
      %v3781 = vsel %vm3288, %v3779, %v3780
      %v3782 = vrot.slane %v3685, 3
      %v3783 = vsel %vm3288, %v3780, %v3782
      %v3784 = vrot.slane %v3686, 3
      %v3785 = vrot.slane %v3687, 3
      %v3786 = vsel %vm3288, %v3784, %v3785
      %v3787 = vrot.slane %v3688, 3
      %v3788 = vsel %vm3288, %v3785, %v3787
      %v3789 = vrot.slane %v3689, 3
      %v3790 = vrot.slane %v3690, 3
      %v3791 = vsel %vm3288, %v3789, %v3790
      %v3792 = vrot.slane %v3691, 3
      %v3793 = vsel %vm3288, %v3790, %v3792
      %v3794 = vrot.slane %v3692, 3
      %v3795 = vrot.slane %v3693, 3
      %v3796 = vsel %vm3288, %v3794, %v3795
      %v3797 = vrot.slane %v3694, 3
      %v3798 = vsel %vm3288, %v3795, %v3797
      %v3799 = vrot.slane %v3695, 3
      %v3800 = vrot.slane %v3696, 3
      %v3801 = vsel %vm3288, %v3799, %v3800
      %v3802 = vrot.slane %v3697, 3
      %v3803 = vsel %vm3288, %v3800, %v3802
      %v3804 = vrot.slane %v3698, 3
      %v3805 = vrot.slane %v3699, 3
      %v3806 = vsel %vm3288, %v3804, %v3805
      %v3807 = vrot.slane %v3700, 3
      %v3808 = vsel %vm3288, %v3805, %v3807
      %v3809 = vrot.slane %v3701, 3
      %v3810 = vrot.slane %v3702, 3
      %v3811 = vsel %vm3288, %v3809, %v3810
      %v3812 = vrot.slane %v3703, 3
      %v3813 = vsel %vm3288, %v3810, %v3812
      %v3814 = vrot.slane %v3704, 3
      %v3815 = vrot.slane %v3705, 3
      %v3816 = vsel %vm3288, %v3814, %v3815
      %v3817 = vrot.slane %v3706, 3
      %v3818 = vsel %vm3288, %v3815, %v3817
      %v3819 = vrot.slane %v3707, 3
      %v3820 = vrot.slane %v3708, 3
      %v3821 = vsel %vm3288, %v3819, %v3820
      %v3822 = vrot.slane %v3709, 3
      %v3823 = vsel %vm3288, %v3820, %v3822
      %v3824 = vrot.slane %v3710, 3
      %v3825 = vrot.slane %v3711, 3
      %v3826 = vsel %vm3288, %v3824, %v3825
      %v3827 = vrot.slane %v3712, 3
      %v3828 = vsel %vm3288, %v3825, %v3827
      %v3829 = vrot.slane %v3713, 3
      %v3830 = vrot.slane %v3714, 3
      %v3831 = vsel %vm3288, %v3829, %v3830
      %v3832 = vrot.slane %v3715, 3
      %v3833 = vsel %vm3288, %v3830, %v3832
      %v3834 = vrot.slane %v3716, 3
      %v3835 = vrot.slane %v3717, 3
      %v3836 = vsel %vm3288, %v3834, %v3835
      %v3837 = vrot.slane %v3718, 3
      %v3838 = vsel %vm3288, %v3835, %v3837
      %v3839 = vrot.slane %v3719, 3
      %v3840 = vrot.slane %v3720, 3
      %v3841 = vsel %vm3288, %v3839, %v3840
      %v3842 = vrot.slane %v3721, 3
      %v3843 = vsel %vm3288, %v3840, %v3842
      %v3844 = vrot.slane %v3722, 3
      %v3845 = vrot.slane %v3723, 3
      %v3846 = vsel %vm3288, %v3844, %v3845
      %v3847 = vrot.slane %v3724, 3
      %v3848 = vsel %vm3288, %v3845, %v3847
      %v3849 = vrot.slane %v3725, 3
      %v3850 = vrot.slane %v3726, 3
      %v3851 = vsel %vm3288, %v3849, %v3850
      %v3852 = vrot.slane %v3727, 3
      %v3853 = vsel %vm3288, %v3850, %v3852
      %v3854 = vrot.slane %v3728, 3
      %v3855 = vrot.slane %v3729, 3
      %v3856 = vsel %vm3288, %v3854, %v3855
      %v3857 = vrot.slane %v3730, 3
      %v3858 = vsel %vm3288, %v3855, %v3857
      %v3891 = vadd.f32 %v3646, %v3781
      %v3892 = vadd.f32 %v3647, %v3783
      %v3893 = vadd.f32 %v3648, %v3786
      %v3894 = vadd.f32 %v3649, %v3788
      %v3895 = vadd.f32 %v3650, %v3791
      %v3896 = vadd.f32 %v3651, %v3793
      %v3897 = vadd.f32 %v3652, %v3796
      %v3898 = vadd.f32 %v3653, %v3798
      %v3899 = vadd.f32 %v3654, %v3801
      %v3900 = vadd.f32 %v3655, %v3803
      %v3901 = vadd.f32 %v3656, %v3806
      %v3902 = vadd.f32 %v3657, %v3808
      %v3903 = vadd.f32 %v3658, %v3811
      %v3904 = vadd.f32 %v3659, %v3813
      %v3905 = vadd.f32 %v3660, %v3816
      %v3906 = vadd.f32 %v3661, %v3818
      %v3907 = vadd.f32 %v3662, %v3821
      %v3908 = vadd.f32 %v3663, %v3823
      %v3909 = vadd.f32 %v3664, %v3826
      %v3910 = vadd.f32 %v3665, %v3828
      %v3911 = vadd.f32 %v3666, %v3831
      %v3912 = vadd.f32 %v3667, %v3833
      %v3913 = vadd.f32 %v3668, %v3836
      %v3914 = vadd.f32 %v3669, %v3838
      %v3915 = vadd.f32 %v3670, %v3841
      %v3916 = vadd.f32 %v3671, %v3843
      %v3917 = vadd.f32 %v3672, %v3846
      %v3918 = vadd.f32 %v3673, %v3848
      %v3919 = vadd.f32 %v3674, %v3851
      %v3920 = vadd.f32 %v3675, %v3853
      %v3921 = vadd.f32 %v3676, %v3856
      %v3922 = vadd.f32 %v3677, %v3858
      %v3923 = vld [vmem:[%s595 + $0x3] sm:$0x1]
      %v3924 = vlaneseq
      %v3925 = vshrl.u32 %v3924, 7
      %v3926 = vsub.s32 0, %v3925
      %v3927 = vrot.slane %v3923, %v3926
      %v3928 = vmul.f32 %v335, %v3927
      %v3929 = vmul.f32 %v336, %v3927
      %v3930 = vmul.f32 %v337, %v3927
      %v3931 = vmul.f32 %v338, %v3927
      %v3932 = vmul.f32 %v339, %v3927
      %v3933 = vmul.f32 %v340, %v3927
      %v3934 = vmul.f32 %v341, %v3927
      %v3935 = vmul.f32 %v342, %v3927
      %v3936 = vmul.f32 %v343, %v3927
      %v3937 = vmul.f32 %v344, %v3927
      %v3938 = vmul.f32 %v345, %v3927
      %v3939 = vmul.f32 %v346, %v3927
      %v3940 = vmul.f32 %v347, %v3927
      %v3941 = vmul.f32 %v348, %v3927
      %v3942 = vmul.f32 %v349, %v3927
      %v3943 = vmul.f32 %v350, %v3927
      %v3944 = vmul.f32 %v351, %v3927
      %v3945 = vmul.f32 %v352, %v3927
      %v3946 = vmul.f32 %v353, %v3927
      %v3947 = vmul.f32 %v354, %v3927
      %v3948 = vmul.f32 %v355, %v3927
      %v3949 = vmul.f32 %v356, %v3927
      %v3950 = vmul.f32 %v357, %v3927
      %v3951 = vmul.f32 %v358, %v3927
      %v3952 = vmul.f32 %v359, %v3927
      %v3953 = vmul.f32 %v360, %v3927
      %v3954 = vmul.f32 %v361, %v3927
      %v3955 = vmul.f32 %v362, %v3927
      %v3956 = vmul.f32 %v363, %v3927
      %v3957 = vmul.f32 %v364, %v3927
      %v3958 = vmul.f32 %v365, %v3927
      %v3959 = vmul.f32 %v366, %v3927
      %v3960 = vmul.f32 %v367, %v3927
      %v3961 = vmul.f32 %v368, %v3927
      %v3962 = vmul.f32 %v369, %v3927
      %v3963 = vmul.f32 %v370, %v3927
      %v3964 = vmul.f32 %v371, %v3927
      %v3965 = vmul.f32 %v372, %v3927
      %v3966 = vmul.f32 %v373, %v3927
      %v3967 = vmul.f32 %v374, %v3927
      %v3968 = vmul.f32 %v375, %v3927
      %v3969 = vmul.f32 %v376, %v3927
      %v3970 = vmul.f32 %v377, %v3927
      %v3971 = vmul.f32 %v378, %v3927
      %v3972 = vmul.f32 %v379, %v3927
      %v3973 = vmul.f32 %v380, %v3927
      %v3974 = vmul.f32 %v381, %v3927
      %v3975 = vmul.f32 %v382, %v3927
      %v4024 = vrot.slane %v3928, 3
      %v4025 = vrot.slane %v3929, 3
      %v4026 = vsel %vm3288, %v4024, %v4025
      %v4027 = vrot.slane %v3930, 3
      %v4028 = vsel %vm3288, %v4025, %v4027
      %v4029 = vrot.slane %v3931, 3
      %v4030 = vrot.slane %v3932, 3
      %v4031 = vsel %vm3288, %v4029, %v4030
      %v4032 = vrot.slane %v3933, 3
      %v4033 = vsel %vm3288, %v4030, %v4032
      %v4034 = vrot.slane %v3934, 3
      %v4035 = vrot.slane %v3935, 3
      %v4036 = vsel %vm3288, %v4034, %v4035
      %v4037 = vrot.slane %v3936, 3
      %v4038 = vsel %vm3288, %v4035, %v4037
      %v4039 = vrot.slane %v3937, 3
      %v4040 = vrot.slane %v3938, 3
      %v4041 = vsel %vm3288, %v4039, %v4040
      %v4042 = vrot.slane %v3939, 3
      %v4043 = vsel %vm3288, %v4040, %v4042
      %v4044 = vrot.slane %v3940, 3
      %v4045 = vrot.slane %v3941, 3
      %v4046 = vsel %vm3288, %v4044, %v4045
      %v4047 = vrot.slane %v3942, 3
      %v4048 = vsel %vm3288, %v4045, %v4047
      %v4049 = vrot.slane %v3943, 3
      %v4050 = vrot.slane %v3944, 3
      %v4051 = vsel %vm3288, %v4049, %v4050
      %v4052 = vrot.slane %v3945, 3
      %v4053 = vsel %vm3288, %v4050, %v4052
      %v4054 = vrot.slane %v3946, 3
      %v4055 = vrot.slane %v3947, 3
      %v4056 = vsel %vm3288, %v4054, %v4055
      %v4057 = vrot.slane %v3948, 3
      %v4058 = vsel %vm3288, %v4055, %v4057
      %v4059 = vrot.slane %v3949, 3
      %v4060 = vrot.slane %v3950, 3
      %v4061 = vsel %vm3288, %v4059, %v4060
      %v4062 = vrot.slane %v3951, 3
      %v4063 = vsel %vm3288, %v4060, %v4062
      %v4064 = vrot.slane %v3952, 3
      %v4065 = vrot.slane %v3953, 3
      %v4066 = vsel %vm3288, %v4064, %v4065
      %v4067 = vrot.slane %v3954, 3
      %v4068 = vsel %vm3288, %v4065, %v4067
      %v4069 = vrot.slane %v3955, 3
      %v4070 = vrot.slane %v3956, 3
      %v4071 = vsel %vm3288, %v4069, %v4070
      %v4072 = vrot.slane %v3957, 3
      %v4073 = vsel %vm3288, %v4070, %v4072
      %v4074 = vrot.slane %v3958, 3
      %v4075 = vrot.slane %v3959, 3
      %v4076 = vsel %vm3288, %v4074, %v4075
      %v4077 = vrot.slane %v3960, 3
      %v4078 = vsel %vm3288, %v4075, %v4077
      %v4079 = vrot.slane %v3961, 3
      %v4080 = vrot.slane %v3962, 3
      %v4081 = vsel %vm3288, %v4079, %v4080
      %v4082 = vrot.slane %v3963, 3
      %v4083 = vsel %vm3288, %v4080, %v4082
      %v4084 = vrot.slane %v3964, 3
      %v4085 = vrot.slane %v3965, 3
      %v4086 = vsel %vm3288, %v4084, %v4085
      %v4087 = vrot.slane %v3966, 3
      %v4088 = vsel %vm3288, %v4085, %v4087
      %v4089 = vrot.slane %v3967, 3
      %v4090 = vrot.slane %v3968, 3
      %v4091 = vsel %vm3288, %v4089, %v4090
      %v4092 = vrot.slane %v3969, 3
      %v4093 = vsel %vm3288, %v4090, %v4092
      %v4094 = vrot.slane %v3970, 3
      %v4095 = vrot.slane %v3971, 3
      %v4096 = vsel %vm3288, %v4094, %v4095
      %v4097 = vrot.slane %v3972, 3
      %v4098 = vsel %vm3288, %v4095, %v4097
      %v4099 = vrot.slane %v3973, 3
      %v4100 = vrot.slane %v3974, 3
      %v4101 = vsel %vm3288, %v4099, %v4100
      %v4102 = vrot.slane %v3975, 3
      %v4103 = vsel %vm3288, %v4100, %v4102
      %v4136 = vadd.f32 %v3891, %v4026
      %v4137 = vadd.f32 %v3892, %v4028
      %v4138 = vadd.f32 %v3893, %v4031
      %v4139 = vadd.f32 %v3894, %v4033
      %v4140 = vadd.f32 %v3895, %v4036
      %v4141 = vadd.f32 %v3896, %v4038
      %v4142 = vadd.f32 %v3897, %v4041
      %v4143 = vadd.f32 %v3898, %v4043
      %v4144 = vadd.f32 %v3899, %v4046
      %v4145 = vadd.f32 %v3900, %v4048
      %v4146 = vadd.f32 %v3901, %v4051
      %v4147 = vadd.f32 %v3902, %v4053
      %v4148 = vadd.f32 %v3903, %v4056
      %v4149 = vadd.f32 %v3904, %v4058
      %v4150 = vadd.f32 %v3905, %v4061
      %v4151 = vadd.f32 %v3906, %v4063
      %v4152 = vadd.f32 %v3907, %v4066
      %v4153 = vadd.f32 %v3908, %v4068
      %v4154 = vadd.f32 %v3909, %v4071
      %v4155 = vadd.f32 %v3910, %v4073
      %v4156 = vadd.f32 %v3911, %v4076
      %v4157 = vadd.f32 %v3912, %v4078
      %v4158 = vadd.f32 %v3913, %v4081
      %v4159 = vadd.f32 %v3914, %v4083
      %v4160 = vadd.f32 %v3915, %v4086
      %v4161 = vadd.f32 %v3916, %v4088
      %v4162 = vadd.f32 %v3917, %v4091
      %v4163 = vadd.f32 %v3918, %v4093
      %v4164 = vadd.f32 %v3919, %v4096
      %v4165 = vadd.f32 %v3920, %v4098
      %v4166 = vadd.f32 %v3921, %v4101
      %v4167 = vadd.f32 %v3922, %v4103
      %v4168 = vld [vmem:[%s665 + $0x3] sm:$0x1]
      %v4169 = vlaneseq
      %v4170 = vshrl.u32 %v4169, 7
      %v4171 = vsub.s32 0, %v4170
      %v4172 = vrot.slane %v4168, %v4171
      %v4173 = vmul.f32 %v338, %v4172
      %v4174 = vmul.f32 %v339, %v4172
      %v4175 = vmul.f32 %v340, %v4172
      %v4176 = vmul.f32 %v341, %v4172
      %v4177 = vmul.f32 %v342, %v4172
      %v4178 = vmul.f32 %v343, %v4172
      %v4179 = vmul.f32 %v344, %v4172
      %v4180 = vmul.f32 %v345, %v4172
      %v4181 = vmul.f32 %v346, %v4172
      %v4182 = vmul.f32 %v347, %v4172
      %v4183 = vmul.f32 %v348, %v4172
      %v4184 = vmul.f32 %v349, %v4172
      %v4185 = vmul.f32 %v350, %v4172
      %v4186 = vmul.f32 %v351, %v4172
      %v4187 = vmul.f32 %v352, %v4172
      %v4188 = vmul.f32 %v353, %v4172
      %v4189 = vmul.f32 %v354, %v4172
      %v4190 = vmul.f32 %v355, %v4172
      %v4191 = vmul.f32 %v356, %v4172
      %v4192 = vmul.f32 %v357, %v4172
      %v4193 = vmul.f32 %v358, %v4172
      %v4194 = vmul.f32 %v359, %v4172
      %v4195 = vmul.f32 %v360, %v4172
      %v4196 = vmul.f32 %v361, %v4172
      %v4197 = vmul.f32 %v362, %v4172
      %v4198 = vmul.f32 %v363, %v4172
      %v4199 = vmul.f32 %v364, %v4172
      %v4200 = vmul.f32 %v365, %v4172
      %v4201 = vmul.f32 %v366, %v4172
      %v4202 = vmul.f32 %v367, %v4172
      %v4203 = vmul.f32 %v368, %v4172
      %v4204 = vmul.f32 %v369, %v4172
      %v4205 = vmul.f32 %v370, %v4172
      %v4206 = vmul.f32 %v371, %v4172
      %v4207 = vmul.f32 %v372, %v4172
      %v4208 = vmul.f32 %v373, %v4172
      %v4209 = vmul.f32 %v374, %v4172
      %v4210 = vmul.f32 %v375, %v4172
      %v4211 = vmul.f32 %v376, %v4172
      %v4212 = vmul.f32 %v377, %v4172
      %v4213 = vmul.f32 %v378, %v4172
      %v4214 = vmul.f32 %v379, %v4172
      %v4215 = vmul.f32 %v380, %v4172
      %v4216 = vmul.f32 %v381, %v4172
      %v4217 = vmul.f32 %v382, %v4172
      %v4218 = vmul.f32 %v383, %v4172
      %v4219 = vmul.f32 %v384, %v4172
      %v4220 = vmul.f32 %v385, %v4172
      %v4269 = vrot.slane %v4173, 3
      %v4270 = vrot.slane %v4174, 3
      %v4271 = vsel %vm3288, %v4269, %v4270
      %v4272 = vrot.slane %v4175, 3
      %v4273 = vsel %vm3288, %v4270, %v4272
      %v4274 = vrot.slane %v4176, 3
      %v4275 = vrot.slane %v4177, 3
      %v4276 = vsel %vm3288, %v4274, %v4275
      %v4277 = vrot.slane %v4178, 3
      %v4278 = vsel %vm3288, %v4275, %v4277
      %v4279 = vrot.slane %v4179, 3
      %v4280 = vrot.slane %v4180, 3
      %v4281 = vsel %vm3288, %v4279, %v4280
      %v4282 = vrot.slane %v4181, 3
      %v4283 = vsel %vm3288, %v4280, %v4282
      %v4284 = vrot.slane %v4182, 3
      %v4285 = vrot.slane %v4183, 3
      %v4286 = vsel %vm3288, %v4284, %v4285
      %v4287 = vrot.slane %v4184, 3
      %v4288 = vsel %vm3288, %v4285, %v4287
      %v4289 = vrot.slane %v4185, 3
      %v4290 = vrot.slane %v4186, 3
      %v4291 = vsel %vm3288, %v4289, %v4290
      %v4292 = vrot.slane %v4187, 3
      %v4293 = vsel %vm3288, %v4290, %v4292
      %v4294 = vrot.slane %v4188, 3
      %v4295 = vrot.slane %v4189, 3
      %v4296 = vsel %vm3288, %v4294, %v4295
      %v4297 = vrot.slane %v4190, 3
      %v4298 = vsel %vm3288, %v4295, %v4297
      %v4299 = vrot.slane %v4191, 3
      %v4300 = vrot.slane %v4192, 3
      %v4301 = vsel %vm3288, %v4299, %v4300
      %v4302 = vrot.slane %v4193, 3
      %v4303 = vsel %vm3288, %v4300, %v4302
      %v4304 = vrot.slane %v4194, 3
      %v4305 = vrot.slane %v4195, 3
      %v4306 = vsel %vm3288, %v4304, %v4305
      %v4307 = vrot.slane %v4196, 3
      %v4308 = vsel %vm3288, %v4305, %v4307
      %v4309 = vrot.slane %v4197, 3
      %v4310 = vrot.slane %v4198, 3
      %v4311 = vsel %vm3288, %v4309, %v4310
      %v4312 = vrot.slane %v4199, 3
      %v4313 = vsel %vm3288, %v4310, %v4312
      %v4314 = vrot.slane %v4200, 3
      %v4315 = vrot.slane %v4201, 3
      %v4316 = vsel %vm3288, %v4314, %v4315
      %v4317 = vrot.slane %v4202, 3
      %v4318 = vsel %vm3288, %v4315, %v4317
      %v4319 = vrot.slane %v4203, 3
      %v4320 = vrot.slane %v4204, 3
      %v4321 = vsel %vm3288, %v4319, %v4320
      %v4322 = vrot.slane %v4205, 3
      %v4323 = vsel %vm3288, %v4320, %v4322
      %v4324 = vrot.slane %v4206, 3
      %v4325 = vrot.slane %v4207, 3
      %v4326 = vsel %vm3288, %v4324, %v4325
      %v4327 = vrot.slane %v4208, 3
      %v4328 = vsel %vm3288, %v4325, %v4327
      %v4329 = vrot.slane %v4209, 3
      %v4330 = vrot.slane %v4210, 3
      %v4331 = vsel %vm3288, %v4329, %v4330
      %v4332 = vrot.slane %v4211, 3
      %v4333 = vsel %vm3288, %v4330, %v4332
      %v4334 = vrot.slane %v4212, 3
      %v4335 = vrot.slane %v4213, 3
      %v4336 = vsel %vm3288, %v4334, %v4335
      %v4337 = vrot.slane %v4214, 3
      %v4338 = vsel %vm3288, %v4335, %v4337
      %v4339 = vrot.slane %v4215, 3
      %v4340 = vrot.slane %v4216, 3
      %v4341 = vsel %vm3288, %v4339, %v4340
      %v4342 = vrot.slane %v4217, 3
      %v4343 = vsel %vm3288, %v4340, %v4342
      %v4344 = vrot.slane %v4218, 3
      %v4345 = vrot.slane %v4219, 3
      %v4346 = vsel %vm3288, %v4344, %v4345
      %v4347 = vrot.slane %v4220, 3
      %v4348 = vsel %vm3288, %v4345, %v4347
      %v4381 = vadd.f32 %v4136, %v4271
      %v4382 = vadd.f32 %v4137, %v4273
      %v4383 = vadd.f32 %v4138, %v4276
      %v4384 = vadd.f32 %v4139, %v4278
      %v4385 = vadd.f32 %v4140, %v4281
      %v4386 = vadd.f32 %v4141, %v4283
      %v4387 = vadd.f32 %v4142, %v4286
      %v4388 = vadd.f32 %v4143, %v4288
      %v4389 = vadd.f32 %v4144, %v4291
      %v4390 = vadd.f32 %v4145, %v4293
      %v4391 = vadd.f32 %v4146, %v4296
      %v4392 = vadd.f32 %v4147, %v4298
      %v4393 = vadd.f32 %v4148, %v4301
      %v4394 = vadd.f32 %v4149, %v4303
      %v4395 = vadd.f32 %v4150, %v4306
      %v4396 = vadd.f32 %v4151, %v4308
      %v4397 = vadd.f32 %v4152, %v4311
      %v4398 = vadd.f32 %v4153, %v4313
      %v4399 = vadd.f32 %v4154, %v4316
      %v4400 = vadd.f32 %v4155, %v4318
      %v4401 = vadd.f32 %v4156, %v4321
      %v4402 = vadd.f32 %v4157, %v4323
      %v4403 = vadd.f32 %v4158, %v4326
      %v4404 = vadd.f32 %v4159, %v4328
      %v4405 = vadd.f32 %v4160, %v4331
      %v4406 = vadd.f32 %v4161, %v4333
      %v4407 = vadd.f32 %v4162, %v4336
      %v4408 = vadd.f32 %v4163, %v4338
      %v4409 = vadd.f32 %v4164, %v4341
      %v4410 = vadd.f32 %v4165, %v4343
      %v4411 = vadd.f32 %v4166, %v4346
      %v4412 = vadd.f32 %v4167, %v4348
      %v4413 = vld [vmem:[%s2 + $0x4] sm:$0x1]
      %v4414 = vlaneseq
      %v4415 = vshrl.u32 %v4414, 7
      %v4416 = vsub.s32 0, %v4415
      %v4417 = vrot.slane %v4413, %v4416
      %v4418 = vmul.f32 %v326, %v4417
      %v4419 = vmul.f32 %v327, %v4417
      %v4420 = vmul.f32 %v328, %v4417
      %v4421 = vmul.f32 %v329, %v4417
      %v4422 = vmul.f32 %v330, %v4417
      %v4423 = vmul.f32 %v331, %v4417
      %v4424 = vmul.f32 %v332, %v4417
      %v4425 = vmul.f32 %v333, %v4417
      %v4426 = vmul.f32 %v334, %v4417
      %v4427 = vmul.f32 %v335, %v4417
      %v4428 = vmul.f32 %v336, %v4417
      %v4429 = vmul.f32 %v337, %v4417
      %v4430 = vmul.f32 %v338, %v4417
      %v4431 = vmul.f32 %v339, %v4417
      %v4432 = vmul.f32 %v340, %v4417
      %v4433 = vmul.f32 %v341, %v4417
      %v4434 = vmul.f32 %v342, %v4417
      %v4435 = vmul.f32 %v343, %v4417
      %v4436 = vmul.f32 %v344, %v4417
      %v4437 = vmul.f32 %v345, %v4417
      %v4438 = vmul.f32 %v346, %v4417
      %v4439 = vmul.f32 %v347, %v4417
      %v4440 = vmul.f32 %v348, %v4417
      %v4441 = vmul.f32 %v349, %v4417
      %v4442 = vmul.f32 %v350, %v4417
      %v4443 = vmul.f32 %v351, %v4417
      %v4444 = vmul.f32 %v352, %v4417
      %v4445 = vmul.f32 %v353, %v4417
      %v4446 = vmul.f32 %v354, %v4417
      %v4447 = vmul.f32 %v355, %v4417
      %v4448 = vmul.f32 %v356, %v4417
      %v4449 = vmul.f32 %v357, %v4417
      %v4450 = vmul.f32 %v358, %v4417
      %v4451 = vmul.f32 %v359, %v4417
      %v4452 = vmul.f32 %v360, %v4417
      %v4453 = vmul.f32 %v361, %v4417
      %v4454 = vmul.f32 %v362, %v4417
      %v4455 = vmul.f32 %v363, %v4417
      %v4456 = vmul.f32 %v364, %v4417
      %v4457 = vmul.f32 %v365, %v4417
      %v4458 = vmul.f32 %v366, %v4417
      %v4459 = vmul.f32 %v367, %v4417
      %v4460 = vmul.f32 %v368, %v4417
      %v4461 = vmul.f32 %v369, %v4417
      %v4462 = vmul.f32 %v370, %v4417
      %v4463 = vmul.f32 %v371, %v4417
      %v4464 = vmul.f32 %v372, %v4417
      %v4465 = vmul.f32 %v373, %v4417
      %vm4514 = vcmask 1043456
      %v4515 = vrot.slane %v4418, 4
      %v4516 = vrot.slane %v4419, 4
      %v4517 = vsel %vm4514, %v4515, %v4516
      %v4518 = vrot.slane %v4420, 4
      %v4519 = vsel %vm4514, %v4516, %v4518
      %v4520 = vrot.slane %v4421, 4
      %v4521 = vrot.slane %v4422, 4
      %v4522 = vsel %vm4514, %v4520, %v4521
      %v4523 = vrot.slane %v4423, 4
      %v4524 = vsel %vm4514, %v4521, %v4523
      %v4525 = vrot.slane %v4424, 4
      %v4526 = vrot.slane %v4425, 4
      %v4527 = vsel %vm4514, %v4525, %v4526
      %v4528 = vrot.slane %v4426, 4
      %v4529 = vsel %vm4514, %v4526, %v4528
      %v4530 = vrot.slane %v4427, 4
      %v4531 = vrot.slane %v4428, 4
      %v4532 = vsel %vm4514, %v4530, %v4531
      %v4533 = vrot.slane %v4429, 4
      %v4534 = vsel %vm4514, %v4531, %v4533
      %v4535 = vrot.slane %v4430, 4
      %v4536 = vrot.slane %v4431, 4
      %v4537 = vsel %vm4514, %v4535, %v4536
      %v4538 = vrot.slane %v4432, 4
      %v4539 = vsel %vm4514, %v4536, %v4538
      %v4540 = vrot.slane %v4433, 4
      %v4541 = vrot.slane %v4434, 4
      %v4542 = vsel %vm4514, %v4540, %v4541
      %v4543 = vrot.slane %v4435, 4
      %v4544 = vsel %vm4514, %v4541, %v4543
      %v4545 = vrot.slane %v4436, 4
      %v4546 = vrot.slane %v4437, 4
      %v4547 = vsel %vm4514, %v4545, %v4546
      %v4548 = vrot.slane %v4438, 4
      %v4549 = vsel %vm4514, %v4546, %v4548
      %v4550 = vrot.slane %v4439, 4
      %v4551 = vrot.slane %v4440, 4
      %v4552 = vsel %vm4514, %v4550, %v4551
      %v4553 = vrot.slane %v4441, 4
      %v4554 = vsel %vm4514, %v4551, %v4553
      %v4555 = vrot.slane %v4442, 4
      %v4556 = vrot.slane %v4443, 4
      %v4557 = vsel %vm4514, %v4555, %v4556
      %v4558 = vrot.slane %v4444, 4
      %v4559 = vsel %vm4514, %v4556, %v4558
      %v4560 = vrot.slane %v4445, 4
      %v4561 = vrot.slane %v4446, 4
      %v4562 = vsel %vm4514, %v4560, %v4561
      %v4563 = vrot.slane %v4447, 4
      %v4564 = vsel %vm4514, %v4561, %v4563
      %v4565 = vrot.slane %v4448, 4
      %v4566 = vrot.slane %v4449, 4
      %v4567 = vsel %vm4514, %v4565, %v4566
      %v4568 = vrot.slane %v4450, 4
      %v4569 = vsel %vm4514, %v4566, %v4568
      %v4570 = vrot.slane %v4451, 4
      %v4571 = vrot.slane %v4452, 4
      %v4572 = vsel %vm4514, %v4570, %v4571
      %v4573 = vrot.slane %v4453, 4
      %v4574 = vsel %vm4514, %v4571, %v4573
      %v4575 = vrot.slane %v4454, 4
      %v4576 = vrot.slane %v4455, 4
      %v4577 = vsel %vm4514, %v4575, %v4576
      %v4578 = vrot.slane %v4456, 4
      %v4579 = vsel %vm4514, %v4576, %v4578
      %v4580 = vrot.slane %v4457, 4
      %v4581 = vrot.slane %v4458, 4
      %v4582 = vsel %vm4514, %v4580, %v4581
      %v4583 = vrot.slane %v4459, 4
      %v4584 = vsel %vm4514, %v4581, %v4583
      %v4585 = vrot.slane %v4460, 4
      %v4586 = vrot.slane %v4461, 4
      %v4587 = vsel %vm4514, %v4585, %v4586
      %v4588 = vrot.slane %v4462, 4
      %v4589 = vsel %vm4514, %v4586, %v4588
      %v4590 = vrot.slane %v4463, 4
      %v4591 = vrot.slane %v4464, 4
      %v4592 = vsel %vm4514, %v4590, %v4591
      %v4593 = vrot.slane %v4465, 4
      %v4594 = vsel %vm4514, %v4591, %v4593
      %v4627 = vadd.f32 %v4381, %v4517
      %v4628 = vadd.f32 %v4382, %v4519
      %v4629 = vadd.f32 %v4383, %v4522
      %v4630 = vadd.f32 %v4384, %v4524
      %v4631 = vadd.f32 %v4385, %v4527
      %v4632 = vadd.f32 %v4386, %v4529
      %v4633 = vadd.f32 %v4387, %v4532
      %v4634 = vadd.f32 %v4388, %v4534
      %v4635 = vadd.f32 %v4389, %v4537
      %v4636 = vadd.f32 %v4390, %v4539
      %v4637 = vadd.f32 %v4391, %v4542
      %v4638 = vadd.f32 %v4392, %v4544
      %v4639 = vadd.f32 %v4393, %v4547
      %v4640 = vadd.f32 %v4394, %v4549
      %v4641 = vadd.f32 %v4395, %v4552
      %v4642 = vadd.f32 %v4396, %v4554
      %v4643 = vadd.f32 %v4397, %v4557
      %v4644 = vadd.f32 %v4398, %v4559
      %v4645 = vadd.f32 %v4399, %v4562
      %v4646 = vadd.f32 %v4400, %v4564
      %v4647 = vadd.f32 %v4401, %v4567
      %v4648 = vadd.f32 %v4402, %v4569
      %v4649 = vadd.f32 %v4403, %v4572
      %v4650 = vadd.f32 %v4404, %v4574
      %v4651 = vadd.f32 %v4405, %v4577
      %v4652 = vadd.f32 %v4406, %v4579
      %v4653 = vadd.f32 %v4407, %v4582
      %v4654 = vadd.f32 %v4408, %v4584
      %v4655 = vadd.f32 %v4409, %v4587
      %v4656 = vadd.f32 %v4410, %v4589
      %v4657 = vadd.f32 %v4411, %v4592
      %v4658 = vadd.f32 %v4412, %v4594
      %v4659 = vld [vmem:[%s455 + $0x4] sm:$0x1]
      %v4660 = vlaneseq
      %v4661 = vshrl.u32 %v4660, 7
      %v4662 = vsub.s32 0, %v4661
      %v4663 = vrot.slane %v4659, %v4662
      %v4664 = vmul.f32 %v329, %v4663
      %v4665 = vmul.f32 %v330, %v4663
      %v4666 = vmul.f32 %v331, %v4663
      %v4667 = vmul.f32 %v332, %v4663
      %v4668 = vmul.f32 %v333, %v4663
      %v4669 = vmul.f32 %v334, %v4663
      %v4670 = vmul.f32 %v335, %v4663
      %v4671 = vmul.f32 %v336, %v4663
      %v4672 = vmul.f32 %v337, %v4663
      %v4673 = vmul.f32 %v338, %v4663
      %v4674 = vmul.f32 %v339, %v4663
      %v4675 = vmul.f32 %v340, %v4663
      %v4676 = vmul.f32 %v341, %v4663
      %v4677 = vmul.f32 %v342, %v4663
      %v4678 = vmul.f32 %v343, %v4663
      %v4679 = vmul.f32 %v344, %v4663
      %v4680 = vmul.f32 %v345, %v4663
      %v4681 = vmul.f32 %v346, %v4663
      %v4682 = vmul.f32 %v347, %v4663
      %v4683 = vmul.f32 %v348, %v4663
      %v4684 = vmul.f32 %v349, %v4663
      %v4685 = vmul.f32 %v350, %v4663
      %v4686 = vmul.f32 %v351, %v4663
      %v4687 = vmul.f32 %v352, %v4663
      %v4688 = vmul.f32 %v353, %v4663
      %v4689 = vmul.f32 %v354, %v4663
      %v4690 = vmul.f32 %v355, %v4663
      %v4691 = vmul.f32 %v356, %v4663
      %v4692 = vmul.f32 %v357, %v4663
      %v4693 = vmul.f32 %v358, %v4663
      %v4694 = vmul.f32 %v359, %v4663
      %v4695 = vmul.f32 %v360, %v4663
      %v4696 = vmul.f32 %v361, %v4663
      %v4697 = vmul.f32 %v362, %v4663
      %v4698 = vmul.f32 %v363, %v4663
      %v4699 = vmul.f32 %v364, %v4663
      %v4700 = vmul.f32 %v365, %v4663
      %v4701 = vmul.f32 %v366, %v4663
      %v4702 = vmul.f32 %v367, %v4663
      %v4703 = vmul.f32 %v368, %v4663
      %v4704 = vmul.f32 %v369, %v4663
      %v4705 = vmul.f32 %v370, %v4663
      %v4706 = vmul.f32 %v371, %v4663
      %v4707 = vmul.f32 %v372, %v4663
      %v4708 = vmul.f32 %v373, %v4663
      %v4709 = vmul.f32 %v374, %v4663
      %v4710 = vmul.f32 %v375, %v4663
      %v4711 = vmul.f32 %v376, %v4663
      %v4760 = vrot.slane %v4664, 4
      %v4761 = vrot.slane %v4665, 4
      %v4762 = vsel %vm4514, %v4760, %v4761
      %v4763 = vrot.slane %v4666, 4
      %v4764 = vsel %vm4514, %v4761, %v4763
      %v4765 = vrot.slane %v4667, 4
      %v4766 = vrot.slane %v4668, 4
      %v4767 = vsel %vm4514, %v4765, %v4766
      %v4768 = vrot.slane %v4669, 4
      %v4769 = vsel %vm4514, %v4766, %v4768
      %v4770 = vrot.slane %v4670, 4
      %v4771 = vrot.slane %v4671, 4
      %v4772 = vsel %vm4514, %v4770, %v4771
      %v4773 = vrot.slane %v4672, 4
      %v4774 = vsel %vm4514, %v4771, %v4773
      %v4775 = vrot.slane %v4673, 4
      %v4776 = vrot.slane %v4674, 4
      %v4777 = vsel %vm4514, %v4775, %v4776
      %v4778 = vrot.slane %v4675, 4
      %v4779 = vsel %vm4514, %v4776, %v4778
      %v4780 = vrot.slane %v4676, 4
      %v4781 = vrot.slane %v4677, 4
      %v4782 = vsel %vm4514, %v4780, %v4781
      %v4783 = vrot.slane %v4678, 4
      %v4784 = vsel %vm4514, %v4781, %v4783
      %v4785 = vrot.slane %v4679, 4
      %v4786 = vrot.slane %v4680, 4
      %v4787 = vsel %vm4514, %v4785, %v4786
      %v4788 = vrot.slane %v4681, 4
      %v4789 = vsel %vm4514, %v4786, %v4788
      %v4790 = vrot.slane %v4682, 4
      %v4791 = vrot.slane %v4683, 4
      %v4792 = vsel %vm4514, %v4790, %v4791
      %v4793 = vrot.slane %v4684, 4
      %v4794 = vsel %vm4514, %v4791, %v4793
      %v4795 = vrot.slane %v4685, 4
      %v4796 = vrot.slane %v4686, 4
      %v4797 = vsel %vm4514, %v4795, %v4796
      %v4798 = vrot.slane %v4687, 4
      %v4799 = vsel %vm4514, %v4796, %v4798
      %v4800 = vrot.slane %v4688, 4
      %v4801 = vrot.slane %v4689, 4
      %v4802 = vsel %vm4514, %v4800, %v4801
      %v4803 = vrot.slane %v4690, 4
      %v4804 = vsel %vm4514, %v4801, %v4803
      %v4805 = vrot.slane %v4691, 4
      %v4806 = vrot.slane %v4692, 4
      %v4807 = vsel %vm4514, %v4805, %v4806
      %v4808 = vrot.slane %v4693, 4
      %v4809 = vsel %vm4514, %v4806, %v4808
      %v4810 = vrot.slane %v4694, 4
      %v4811 = vrot.slane %v4695, 4
      %v4812 = vsel %vm4514, %v4810, %v4811
      %v4813 = vrot.slane %v4696, 4
      %v4814 = vsel %vm4514, %v4811, %v4813
      %v4815 = vrot.slane %v4697, 4
      %v4816 = vrot.slane %v4698, 4
      %v4817 = vsel %vm4514, %v4815, %v4816
      %v4818 = vrot.slane %v4699, 4
      %v4819 = vsel %vm4514, %v4816, %v4818
      %v4820 = vrot.slane %v4700, 4
      %v4821 = vrot.slane %v4701, 4
      %v4822 = vsel %vm4514, %v4820, %v4821
      %v4823 = vrot.slane %v4702, 4
      %v4824 = vsel %vm4514, %v4821, %v4823
      %v4825 = vrot.slane %v4703, 4
      %v4826 = vrot.slane %v4704, 4
      %v4827 = vsel %vm4514, %v4825, %v4826
      %v4828 = vrot.slane %v4705, 4
      %v4829 = vsel %vm4514, %v4826, %v4828
      %v4830 = vrot.slane %v4706, 4
      %v4831 = vrot.slane %v4707, 4
      %v4832 = vsel %vm4514, %v4830, %v4831
      %v4833 = vrot.slane %v4708, 4
      %v4834 = vsel %vm4514, %v4831, %v4833
      %v4835 = vrot.slane %v4709, 4
      %v4836 = vrot.slane %v4710, 4
      %v4837 = vsel %vm4514, %v4835, %v4836
      %v4838 = vrot.slane %v4711, 4
      %v4839 = vsel %vm4514, %v4836, %v4838
      %v4872 = vadd.f32 %v4627, %v4762
      %v4873 = vadd.f32 %v4628, %v4764
      %v4874 = vadd.f32 %v4629, %v4767
      %v4875 = vadd.f32 %v4630, %v4769
      %v4876 = vadd.f32 %v4631, %v4772
      %v4877 = vadd.f32 %v4632, %v4774
      %v4878 = vadd.f32 %v4633, %v4777
      %v4879 = vadd.f32 %v4634, %v4779
      %v4880 = vadd.f32 %v4635, %v4782
      %v4881 = vadd.f32 %v4636, %v4784
      %v4882 = vadd.f32 %v4637, %v4787
      %v4883 = vadd.f32 %v4638, %v4789
      %v4884 = vadd.f32 %v4639, %v4792
      %v4885 = vadd.f32 %v4640, %v4794
      %v4886 = vadd.f32 %v4641, %v4797
      %v4887 = vadd.f32 %v4642, %v4799
      %v4888 = vadd.f32 %v4643, %v4802
      %v4889 = vadd.f32 %v4644, %v4804
      %v4890 = vadd.f32 %v4645, %v4807
      %v4891 = vadd.f32 %v4646, %v4809
      %v4892 = vadd.f32 %v4647, %v4812
      %v4893 = vadd.f32 %v4648, %v4814
      %v4894 = vadd.f32 %v4649, %v4817
      %v4895 = vadd.f32 %v4650, %v4819
      %v4896 = vadd.f32 %v4651, %v4822
      %v4897 = vadd.f32 %v4652, %v4824
      %v4898 = vadd.f32 %v4653, %v4827
      %v4899 = vadd.f32 %v4654, %v4829
      %v4900 = vadd.f32 %v4655, %v4832
      %v4901 = vadd.f32 %v4656, %v4834
      %v4902 = vadd.f32 %v4657, %v4837
      %v4903 = vadd.f32 %v4658, %v4839
      %v4904 = vld [vmem:[%s525 + $0x4] sm:$0x1]
      %v4905 = vlaneseq
      %v4906 = vshrl.u32 %v4905, 7
      %v4907 = vsub.s32 0, %v4906
      %v4908 = vrot.slane %v4904, %v4907
      %v4909 = vmul.f32 %v332, %v4908
      %v4910 = vmul.f32 %v333, %v4908
      %v4911 = vmul.f32 %v334, %v4908
      %v4912 = vmul.f32 %v335, %v4908
      %v4913 = vmul.f32 %v336, %v4908
      %v4914 = vmul.f32 %v337, %v4908
      %v4915 = vmul.f32 %v338, %v4908
      %v4916 = vmul.f32 %v339, %v4908
      %v4917 = vmul.f32 %v340, %v4908
      %v4918 = vmul.f32 %v341, %v4908
      %v4919 = vmul.f32 %v342, %v4908
      %v4920 = vmul.f32 %v343, %v4908
      %v4921 = vmul.f32 %v344, %v4908
      %v4922 = vmul.f32 %v345, %v4908
      %v4923 = vmul.f32 %v346, %v4908
      %v4924 = vmul.f32 %v347, %v4908
      %v4925 = vmul.f32 %v348, %v4908
      %v4926 = vmul.f32 %v349, %v4908
      %v4927 = vmul.f32 %v350, %v4908
      %v4928 = vmul.f32 %v351, %v4908
      %v4929 = vmul.f32 %v352, %v4908
      %v4930 = vmul.f32 %v353, %v4908
      %v4931 = vmul.f32 %v354, %v4908
      %v4932 = vmul.f32 %v355, %v4908
      %v4933 = vmul.f32 %v356, %v4908
      %v4934 = vmul.f32 %v357, %v4908
      %v4935 = vmul.f32 %v358, %v4908
      %v4936 = vmul.f32 %v359, %v4908
      %v4937 = vmul.f32 %v360, %v4908
      %v4938 = vmul.f32 %v361, %v4908
      %v4939 = vmul.f32 %v362, %v4908
      %v4940 = vmul.f32 %v363, %v4908
      %v4941 = vmul.f32 %v364, %v4908
      %v4942 = vmul.f32 %v365, %v4908
      %v4943 = vmul.f32 %v366, %v4908
      %v4944 = vmul.f32 %v367, %v4908
      %v4945 = vmul.f32 %v368, %v4908
      %v4946 = vmul.f32 %v369, %v4908
      %v4947 = vmul.f32 %v370, %v4908
      %v4948 = vmul.f32 %v371, %v4908
      %v4949 = vmul.f32 %v372, %v4908
      %v4950 = vmul.f32 %v373, %v4908
      %v4951 = vmul.f32 %v374, %v4908
      %v4952 = vmul.f32 %v375, %v4908
      %v4953 = vmul.f32 %v376, %v4908
      %v4954 = vmul.f32 %v377, %v4908
      %v4955 = vmul.f32 %v378, %v4908
      %v4956 = vmul.f32 %v379, %v4908
      %v5005 = vrot.slane %v4909, 4
      %v5006 = vrot.slane %v4910, 4
      %v5007 = vsel %vm4514, %v5005, %v5006
      %v5008 = vrot.slane %v4911, 4
      %v5009 = vsel %vm4514, %v5006, %v5008
      %v5010 = vrot.slane %v4912, 4
      %v5011 = vrot.slane %v4913, 4
      %v5012 = vsel %vm4514, %v5010, %v5011
      %v5013 = vrot.slane %v4914, 4
      %v5014 = vsel %vm4514, %v5011, %v5013
      %v5015 = vrot.slane %v4915, 4
      %v5016 = vrot.slane %v4916, 4
      %v5017 = vsel %vm4514, %v5015, %v5016
      %v5018 = vrot.slane %v4917, 4
      %v5019 = vsel %vm4514, %v5016, %v5018
      %v5020 = vrot.slane %v4918, 4
      %v5021 = vrot.slane %v4919, 4
      %v5022 = vsel %vm4514, %v5020, %v5021
      %v5023 = vrot.slane %v4920, 4
      %v5024 = vsel %vm4514, %v5021, %v5023
      %v5025 = vrot.slane %v4921, 4
      %v5026 = vrot.slane %v4922, 4
      %v5027 = vsel %vm4514, %v5025, %v5026
      %v5028 = vrot.slane %v4923, 4
      %v5029 = vsel %vm4514, %v5026, %v5028
      %v5030 = vrot.slane %v4924, 4
      %v5031 = vrot.slane %v4925, 4
      %v5032 = vsel %vm4514, %v5030, %v5031
      %v5033 = vrot.slane %v4926, 4
      %v5034 = vsel %vm4514, %v5031, %v5033
      %v5035 = vrot.slane %v4927, 4
      %v5036 = vrot.slane %v4928, 4
      %v5037 = vsel %vm4514, %v5035, %v5036
      %v5038 = vrot.slane %v4929, 4
      %v5039 = vsel %vm4514, %v5036, %v5038
      %v5040 = vrot.slane %v4930, 4
      %v5041 = vrot.slane %v4931, 4
      %v5042 = vsel %vm4514, %v5040, %v5041
      %v5043 = vrot.slane %v4932, 4
      %v5044 = vsel %vm4514, %v5041, %v5043
      %v5045 = vrot.slane %v4933, 4
      %v5046 = vrot.slane %v4934, 4
      %v5047 = vsel %vm4514, %v5045, %v5046
      %v5048 = vrot.slane %v4935, 4
      %v5049 = vsel %vm4514, %v5046, %v5048
      %v5050 = vrot.slane %v4936, 4
      %v5051 = vrot.slane %v4937, 4
      %v5052 = vsel %vm4514, %v5050, %v5051
      %v5053 = vrot.slane %v4938, 4
      %v5054 = vsel %vm4514, %v5051, %v5053
      %v5055 = vrot.slane %v4939, 4
      %v5056 = vrot.slane %v4940, 4
      %v5057 = vsel %vm4514, %v5055, %v5056
      %v5058 = vrot.slane %v4941, 4
      %v5059 = vsel %vm4514, %v5056, %v5058
      %v5060 = vrot.slane %v4942, 4
      %v5061 = vrot.slane %v4943, 4
      %v5062 = vsel %vm4514, %v5060, %v5061
      %v5063 = vrot.slane %v4944, 4
      %v5064 = vsel %vm4514, %v5061, %v5063
      %v5065 = vrot.slane %v4945, 4
      %v5066 = vrot.slane %v4946, 4
      %v5067 = vsel %vm4514, %v5065, %v5066
      %v5068 = vrot.slane %v4947, 4
      %v5069 = vsel %vm4514, %v5066, %v5068
      %v5070 = vrot.slane %v4948, 4
      %v5071 = vrot.slane %v4949, 4
      %v5072 = vsel %vm4514, %v5070, %v5071
      %v5073 = vrot.slane %v4950, 4
      %v5074 = vsel %vm4514, %v5071, %v5073
      %v5075 = vrot.slane %v4951, 4
      %v5076 = vrot.slane %v4952, 4
      %v5077 = vsel %vm4514, %v5075, %v5076
      %v5078 = vrot.slane %v4953, 4
      %v5079 = vsel %vm4514, %v5076, %v5078
      %v5080 = vrot.slane %v4954, 4
      %v5081 = vrot.slane %v4955, 4
      %v5082 = vsel %vm4514, %v5080, %v5081
      %v5083 = vrot.slane %v4956, 4
      %v5084 = vsel %vm4514, %v5081, %v5083
      %v5117 = vadd.f32 %v4872, %v5007
      %v5118 = vadd.f32 %v4873, %v5009
      %v5119 = vadd.f32 %v4874, %v5012
      %v5120 = vadd.f32 %v4875, %v5014
      %v5121 = vadd.f32 %v4876, %v5017
      %v5122 = vadd.f32 %v4877, %v5019
      %v5123 = vadd.f32 %v4878, %v5022
      %v5124 = vadd.f32 %v4879, %v5024
      %v5125 = vadd.f32 %v4880, %v5027
      %v5126 = vadd.f32 %v4881, %v5029
      %v5127 = vadd.f32 %v4882, %v5032
      %v5128 = vadd.f32 %v4883, %v5034
      %v5129 = vadd.f32 %v4884, %v5037
      %v5130 = vadd.f32 %v4885, %v5039
      %v5131 = vadd.f32 %v4886, %v5042
      %v5132 = vadd.f32 %v4887, %v5044
      %v5133 = vadd.f32 %v4888, %v5047
      %v5134 = vadd.f32 %v4889, %v5049
      %v5135 = vadd.f32 %v4890, %v5052
      %v5136 = vadd.f32 %v4891, %v5054
      %v5137 = vadd.f32 %v4892, %v5057
      %v5138 = vadd.f32 %v4893, %v5059
      %v5139 = vadd.f32 %v4894, %v5062
      %v5140 = vadd.f32 %v4895, %v5064
      %v5141 = vadd.f32 %v4896, %v5067
      %v5142 = vadd.f32 %v4897, %v5069
      %v5143 = vadd.f32 %v4898, %v5072
      %v5144 = vadd.f32 %v4899, %v5074
      %v5145 = vadd.f32 %v4900, %v5077
      %v5146 = vadd.f32 %v4901, %v5079
      %v5147 = vadd.f32 %v4902, %v5082
      %v5148 = vadd.f32 %v4903, %v5084
      %v5149 = vld [vmem:[%s595 + $0x4] sm:$0x1]
      %v5150 = vlaneseq
      %v5151 = vshrl.u32 %v5150, 7
      %v5152 = vsub.s32 0, %v5151
      %v5153 = vrot.slane %v5149, %v5152
      %v5154 = vmul.f32 %v335, %v5153
      %v5155 = vmul.f32 %v336, %v5153
      %v5156 = vmul.f32 %v337, %v5153
      %v5157 = vmul.f32 %v338, %v5153
      %v5158 = vmul.f32 %v339, %v5153
      %v5159 = vmul.f32 %v340, %v5153
      %v5160 = vmul.f32 %v341, %v5153
      %v5161 = vmul.f32 %v342, %v5153
      %v5162 = vmul.f32 %v343, %v5153
      %v5163 = vmul.f32 %v344, %v5153
      %v5164 = vmul.f32 %v345, %v5153
      %v5165 = vmul.f32 %v346, %v5153
      %v5166 = vmul.f32 %v347, %v5153
      %v5167 = vmul.f32 %v348, %v5153
      %v5168 = vmul.f32 %v349, %v5153
      %v5169 = vmul.f32 %v350, %v5153
      %v5170 = vmul.f32 %v351, %v5153
      %v5171 = vmul.f32 %v352, %v5153
      %v5172 = vmul.f32 %v353, %v5153
      %v5173 = vmul.f32 %v354, %v5153
      %v5174 = vmul.f32 %v355, %v5153
      %v5175 = vmul.f32 %v356, %v5153
      %v5176 = vmul.f32 %v357, %v5153
      %v5177 = vmul.f32 %v358, %v5153
      %v5178 = vmul.f32 %v359, %v5153
      %v5179 = vmul.f32 %v360, %v5153
      %v5180 = vmul.f32 %v361, %v5153
      %v5181 = vmul.f32 %v362, %v5153
      %v5182 = vmul.f32 %v363, %v5153
      %v5183 = vmul.f32 %v364, %v5153
      %v5184 = vmul.f32 %v365, %v5153
      %v5185 = vmul.f32 %v366, %v5153
      %v5186 = vmul.f32 %v367, %v5153
      %v5187 = vmul.f32 %v368, %v5153
      %v5188 = vmul.f32 %v369, %v5153
      %v5189 = vmul.f32 %v370, %v5153
      %v5190 = vmul.f32 %v371, %v5153
      %v5191 = vmul.f32 %v372, %v5153
      %v5192 = vmul.f32 %v373, %v5153
      %v5193 = vmul.f32 %v374, %v5153
      %v5194 = vmul.f32 %v375, %v5153
      %v5195 = vmul.f32 %v376, %v5153
      %v5196 = vmul.f32 %v377, %v5153
      %v5197 = vmul.f32 %v378, %v5153
      %v5198 = vmul.f32 %v379, %v5153
      %v5199 = vmul.f32 %v380, %v5153
      %v5200 = vmul.f32 %v381, %v5153
      %v5201 = vmul.f32 %v382, %v5153
      %v5250 = vrot.slane %v5154, 4
      %v5251 = vrot.slane %v5155, 4
      %v5252 = vsel %vm4514, %v5250, %v5251
      %v5253 = vrot.slane %v5156, 4
      %v5254 = vsel %vm4514, %v5251, %v5253
      %v5255 = vrot.slane %v5157, 4
      %v5256 = vrot.slane %v5158, 4
      %v5257 = vsel %vm4514, %v5255, %v5256
      %v5258 = vrot.slane %v5159, 4
      %v5259 = vsel %vm4514, %v5256, %v5258
      %v5260 = vrot.slane %v5160, 4
      %v5261 = vrot.slane %v5161, 4
      %v5262 = vsel %vm4514, %v5260, %v5261
      %v5263 = vrot.slane %v5162, 4
      %v5264 = vsel %vm4514, %v5261, %v5263
      %v5265 = vrot.slane %v5163, 4
      %v5266 = vrot.slane %v5164, 4
      %v5267 = vsel %vm4514, %v5265, %v5266
      %v5268 = vrot.slane %v5165, 4
      %v5269 = vsel %vm4514, %v5266, %v5268
      %v5270 = vrot.slane %v5166, 4
      %v5271 = vrot.slane %v5167, 4
      %v5272 = vsel %vm4514, %v5270, %v5271
      %v5273 = vrot.slane %v5168, 4
      %v5274 = vsel %vm4514, %v5271, %v5273
      %v5275 = vrot.slane %v5169, 4
      %v5276 = vrot.slane %v5170, 4
      %v5277 = vsel %vm4514, %v5275, %v5276
      %v5278 = vrot.slane %v5171, 4
      %v5279 = vsel %vm4514, %v5276, %v5278
      %v5280 = vrot.slane %v5172, 4
      %v5281 = vrot.slane %v5173, 4
      %v5282 = vsel %vm4514, %v5280, %v5281
      %v5283 = vrot.slane %v5174, 4
      %v5284 = vsel %vm4514, %v5281, %v5283
      %v5285 = vrot.slane %v5175, 4
      %v5286 = vrot.slane %v5176, 4
      %v5287 = vsel %vm4514, %v5285, %v5286
      %v5288 = vrot.slane %v5177, 4
      %v5289 = vsel %vm4514, %v5286, %v5288
      %v5290 = vrot.slane %v5178, 4
      %v5291 = vrot.slane %v5179, 4
      %v5292 = vsel %vm4514, %v5290, %v5291
      %v5293 = vrot.slane %v5180, 4
      %v5294 = vsel %vm4514, %v5291, %v5293
      %v5295 = vrot.slane %v5181, 4
      %v5296 = vrot.slane %v5182, 4
      %v5297 = vsel %vm4514, %v5295, %v5296
      %v5298 = vrot.slane %v5183, 4
      %v5299 = vsel %vm4514, %v5296, %v5298
      %v5300 = vrot.slane %v5184, 4
      %v5301 = vrot.slane %v5185, 4
      %v5302 = vsel %vm4514, %v5300, %v5301
      %v5303 = vrot.slane %v5186, 4
      %v5304 = vsel %vm4514, %v5301, %v5303
      %v5305 = vrot.slane %v5187, 4
      %v5306 = vrot.slane %v5188, 4
      %v5307 = vsel %vm4514, %v5305, %v5306
      %v5308 = vrot.slane %v5189, 4
      %v5309 = vsel %vm4514, %v5306, %v5308
      %v5310 = vrot.slane %v5190, 4
      %v5311 = vrot.slane %v5191, 4
      %v5312 = vsel %vm4514, %v5310, %v5311
      %v5313 = vrot.slane %v5192, 4
      %v5314 = vsel %vm4514, %v5311, %v5313
      %v5315 = vrot.slane %v5193, 4
      %v5316 = vrot.slane %v5194, 4
      %v5317 = vsel %vm4514, %v5315, %v5316
      %v5318 = vrot.slane %v5195, 4
      %v5319 = vsel %vm4514, %v5316, %v5318
      %v5320 = vrot.slane %v5196, 4
      %v5321 = vrot.slane %v5197, 4
      %v5322 = vsel %vm4514, %v5320, %v5321
      %v5323 = vrot.slane %v5198, 4
      %v5324 = vsel %vm4514, %v5321, %v5323
      %v5325 = vrot.slane %v5199, 4
      %v5326 = vrot.slane %v5200, 4
      %v5327 = vsel %vm4514, %v5325, %v5326
      %v5328 = vrot.slane %v5201, 4
      %v5329 = vsel %vm4514, %v5326, %v5328
      %v5362 = vadd.f32 %v5117, %v5252
      %v5363 = vadd.f32 %v5118, %v5254
      %v5364 = vadd.f32 %v5119, %v5257
      %v5365 = vadd.f32 %v5120, %v5259
      %v5366 = vadd.f32 %v5121, %v5262
      %v5367 = vadd.f32 %v5122, %v5264
      %v5368 = vadd.f32 %v5123, %v5267
      %v5369 = vadd.f32 %v5124, %v5269
      %v5370 = vadd.f32 %v5125, %v5272
      %v5371 = vadd.f32 %v5126, %v5274
      %v5372 = vadd.f32 %v5127, %v5277
      %v5373 = vadd.f32 %v5128, %v5279
      %v5374 = vadd.f32 %v5129, %v5282
      %v5375 = vadd.f32 %v5130, %v5284
      %v5376 = vadd.f32 %v5131, %v5287
      %v5377 = vadd.f32 %v5132, %v5289
      %v5378 = vadd.f32 %v5133, %v5292
      %v5379 = vadd.f32 %v5134, %v5294
      %v5380 = vadd.f32 %v5135, %v5297
      %v5381 = vadd.f32 %v5136, %v5299
      %v5382 = vadd.f32 %v5137, %v5302
      %v5383 = vadd.f32 %v5138, %v5304
      %v5384 = vadd.f32 %v5139, %v5307
      %v5385 = vadd.f32 %v5140, %v5309
      %v5386 = vadd.f32 %v5141, %v5312
      %v5387 = vadd.f32 %v5142, %v5314
      %v5388 = vadd.f32 %v5143, %v5317
      %v5389 = vadd.f32 %v5144, %v5319
      %v5390 = vadd.f32 %v5145, %v5322
      %v5391 = vadd.f32 %v5146, %v5324
      %v5392 = vadd.f32 %v5147, %v5327
      %v5393 = vadd.f32 %v5148, %v5329
      %v5394 = vld [vmem:[%s665 + $0x4] sm:$0x1]
      %v5395 = vlaneseq
      %v5396 = vshrl.u32 %v5395, 7
      %v5397 = vsub.s32 0, %v5396
      %v5398 = vrot.slane %v5394, %v5397
      %v5399 = vmul.f32 %v338, %v5398
      %v5400 = vmul.f32 %v339, %v5398
      %v5401 = vmul.f32 %v340, %v5398
      %v5402 = vmul.f32 %v341, %v5398
      %v5403 = vmul.f32 %v342, %v5398
      %v5404 = vmul.f32 %v343, %v5398
      %v5405 = vmul.f32 %v344, %v5398
      %v5406 = vmul.f32 %v345, %v5398
      %v5407 = vmul.f32 %v346, %v5398
      %v5408 = vmul.f32 %v347, %v5398
      %v5409 = vmul.f32 %v348, %v5398
      %v5410 = vmul.f32 %v349, %v5398
      %v5411 = vmul.f32 %v350, %v5398
      %v5412 = vmul.f32 %v351, %v5398
      %v5413 = vmul.f32 %v352, %v5398
      %v5414 = vmul.f32 %v353, %v5398
      %v5415 = vmul.f32 %v354, %v5398
      %v5416 = vmul.f32 %v355, %v5398
      %v5417 = vmul.f32 %v356, %v5398
      %v5418 = vmul.f32 %v357, %v5398
      %v5419 = vmul.f32 %v358, %v5398
      %v5420 = vmul.f32 %v359, %v5398
      %v5421 = vmul.f32 %v360, %v5398
      %v5422 = vmul.f32 %v361, %v5398
      %v5423 = vmul.f32 %v362, %v5398
      %v5424 = vmul.f32 %v363, %v5398
      %v5425 = vmul.f32 %v364, %v5398
      %v5426 = vmul.f32 %v365, %v5398
      %v5427 = vmul.f32 %v366, %v5398
      %v5428 = vmul.f32 %v367, %v5398
      %v5429 = vmul.f32 %v368, %v5398
      %v5430 = vmul.f32 %v369, %v5398
      %v5431 = vmul.f32 %v370, %v5398
      %v5432 = vmul.f32 %v371, %v5398
      %v5433 = vmul.f32 %v372, %v5398
      %v5434 = vmul.f32 %v373, %v5398
      %v5435 = vmul.f32 %v374, %v5398
      %v5436 = vmul.f32 %v375, %v5398
      %v5437 = vmul.f32 %v376, %v5398
      %v5438 = vmul.f32 %v377, %v5398
      %v5439 = vmul.f32 %v378, %v5398
      %v5440 = vmul.f32 %v379, %v5398
      %v5441 = vmul.f32 %v380, %v5398
      %v5442 = vmul.f32 %v381, %v5398
      %v5443 = vmul.f32 %v382, %v5398
      %v5444 = vmul.f32 %v383, %v5398
      %v5445 = vmul.f32 %v384, %v5398
      %v5446 = vmul.f32 %v385, %v5398
      %v5495 = vrot.slane %v5399, 4
      %v5496 = vrot.slane %v5400, 4
      %v5497 = vsel %vm4514, %v5495, %v5496
      %v5498 = vrot.slane %v5401, 4
      %v5499 = vsel %vm4514, %v5496, %v5498
      %v5500 = vrot.slane %v5402, 4
      %v5501 = vrot.slane %v5403, 4
      %v5502 = vsel %vm4514, %v5500, %v5501
      %v5503 = vrot.slane %v5404, 4
      %v5504 = vsel %vm4514, %v5501, %v5503
      %v5505 = vrot.slane %v5405, 4
      %v5506 = vrot.slane %v5406, 4
      %v5507 = vsel %vm4514, %v5505, %v5506
      %v5508 = vrot.slane %v5407, 4
      %v5509 = vsel %vm4514, %v5506, %v5508
      %v5510 = vrot.slane %v5408, 4
      %v5511 = vrot.slane %v5409, 4
      %v5512 = vsel %vm4514, %v5510, %v5511
      %v5513 = vrot.slane %v5410, 4
      %v5514 = vsel %vm4514, %v5511, %v5513
      %v5515 = vrot.slane %v5411, 4
      %v5516 = vrot.slane %v5412, 4
      %v5517 = vsel %vm4514, %v5515, %v5516
      %v5518 = vrot.slane %v5413, 4
      %v5519 = vsel %vm4514, %v5516, %v5518
      %v5520 = vrot.slane %v5414, 4
      %v5521 = vrot.slane %v5415, 4
      %v5522 = vsel %vm4514, %v5520, %v5521
      %v5523 = vrot.slane %v5416, 4
      %v5524 = vsel %vm4514, %v5521, %v5523
      %v5525 = vrot.slane %v5417, 4
      %v5526 = vrot.slane %v5418, 4
      %v5527 = vsel %vm4514, %v5525, %v5526
      %v5528 = vrot.slane %v5419, 4
      %v5529 = vsel %vm4514, %v5526, %v5528
      %v5530 = vrot.slane %v5420, 4
      %v5531 = vrot.slane %v5421, 4
      %v5532 = vsel %vm4514, %v5530, %v5531
      %v5533 = vrot.slane %v5422, 4
      %v5534 = vsel %vm4514, %v5531, %v5533
      %v5535 = vrot.slane %v5423, 4
      %v5536 = vrot.slane %v5424, 4
      %v5537 = vsel %vm4514, %v5535, %v5536
      %v5538 = vrot.slane %v5425, 4
      %v5539 = vsel %vm4514, %v5536, %v5538
      %v5540 = vrot.slane %v5426, 4
      %v5541 = vrot.slane %v5427, 4
      %v5542 = vsel %vm4514, %v5540, %v5541
      %v5543 = vrot.slane %v5428, 4
      %v5544 = vsel %vm4514, %v5541, %v5543
      %v5545 = vrot.slane %v5429, 4
      %v5546 = vrot.slane %v5430, 4
      %v5547 = vsel %vm4514, %v5545, %v5546
      %v5548 = vrot.slane %v5431, 4
      %v5549 = vsel %vm4514, %v5546, %v5548
      %v5550 = vrot.slane %v5432, 4
      %v5551 = vrot.slane %v5433, 4
      %v5552 = vsel %vm4514, %v5550, %v5551
      %v5553 = vrot.slane %v5434, 4
      %v5554 = vsel %vm4514, %v5551, %v5553
      %v5555 = vrot.slane %v5435, 4
      %v5556 = vrot.slane %v5436, 4
      %v5557 = vsel %vm4514, %v5555, %v5556
      %v5558 = vrot.slane %v5437, 4
      %v5559 = vsel %vm4514, %v5556, %v5558
      %v5560 = vrot.slane %v5438, 4
      %v5561 = vrot.slane %v5439, 4
      %v5562 = vsel %vm4514, %v5560, %v5561
      %v5563 = vrot.slane %v5440, 4
      %v5564 = vsel %vm4514, %v5561, %v5563
      %v5565 = vrot.slane %v5441, 4
      %v5566 = vrot.slane %v5442, 4
      %v5567 = vsel %vm4514, %v5565, %v5566
      %v5568 = vrot.slane %v5443, 4
      %v5569 = vsel %vm4514, %v5566, %v5568
      %v5570 = vrot.slane %v5444, 4
      %v5571 = vrot.slane %v5445, 4
      %v5572 = vsel %vm4514, %v5570, %v5571
      %v5573 = vrot.slane %v5446, 4
      %v5574 = vsel %vm4514, %v5571, %v5573
      %v5607 = vadd.f32 %v5362, %v5497
      %v5608 = vadd.f32 %v5363, %v5499
      %v5609 = vadd.f32 %v5364, %v5502
      %v5610 = vadd.f32 %v5365, %v5504
      %v5611 = vadd.f32 %v5366, %v5507
      %v5612 = vadd.f32 %v5367, %v5509
      %v5613 = vadd.f32 %v5368, %v5512
      %v5614 = vadd.f32 %v5369, %v5514
      %v5615 = vadd.f32 %v5370, %v5517
      %v5616 = vadd.f32 %v5371, %v5519
      %v5617 = vadd.f32 %v5372, %v5522
      %v5618 = vadd.f32 %v5373, %v5524
      %v5619 = vadd.f32 %v5374, %v5527
      %v5620 = vadd.f32 %v5375, %v5529
      %v5621 = vadd.f32 %v5376, %v5532
      %v5622 = vadd.f32 %v5377, %v5534
      %v5623 = vadd.f32 %v5378, %v5537
      %v5624 = vadd.f32 %v5379, %v5539
      %v5625 = vadd.f32 %v5380, %v5542
      %v5626 = vadd.f32 %v5381, %v5544
      %v5627 = vadd.f32 %v5382, %v5547
      %v5628 = vadd.f32 %v5383, %v5549
      %v5629 = vadd.f32 %v5384, %v5552
      %v5630 = vadd.f32 %v5385, %v5554
      %v5631 = vadd.f32 %v5386, %v5557
      %v5632 = vadd.f32 %v5387, %v5559
      %v5633 = vadd.f32 %v5388, %v5562
      %v5634 = vadd.f32 %v5389, %v5564
      %v5635 = vadd.f32 %v5390, %v5567
      %v5636 = vadd.f32 %v5391, %v5569
      %v5637 = vadd.f32 %v5392, %v5572
      %v5638 = vadd.f32 %v5393, %v5574
      %v5639 = vld [vmem:[%s3] sm:$0xff]
      %v5640 = vld [vmem:[%s3 + $0x8] sm:$0xff]
      %v5641 = vld [vmem:[%s3 + $0x10] sm:$0xff]
      %v5642 = vld [vmem:[%s3 + $0x18] sm:$0xff]
      %v5643 = vld [vmem:[%s3 + $0x20] sm:$0xff]
      %v5644 = vld [vmem:[%s3 + $0x28] sm:$0xff]
      %v5645 = vld [vmem:[%s3 + $0x30] sm:$0xff]
      %v5646 = vld [vmem:[%s3 + $0x38] sm:$0xff]
      %v5647 = vld [vmem:[%s3 + $0x40] sm:$0xff]
      %v5648 = vld [vmem:[%s3 + $0x48] sm:$0xff]
      %v5649 = vld [vmem:[%s3 + $0x50] sm:$0xff]
      %v5650 = vld [vmem:[%s3 + $0x58] sm:$0xff]
      %vm5651 = vcmask 785408
      %v5653 = vsel %vm5651, %v5607, 0
      %v5656 = vsel %vm5651, %v5608, 0
      %v5659 = vsel %vm5651, %v5609, 0
      %v5662 = vsel %vm5651, %v5610, 0
      %v5665 = vsel %vm5651, %v5611, 0
      %v5668 = vsel %vm5651, %v5612, 0
      %v5671 = vsel %vm5651, %v5613, 0
      %v5674 = vsel %vm5651, %v5614, 0
      %v5677 = vsel %vm5651, %v5615, 0
      %v5680 = vsel %vm5651, %v5616, 0
      %v5683 = vsel %vm5651, %v5617, 0
      %v5686 = vsel %vm5651, %v5618, 0
      %v5689 = vsel %vm5651, %v5619, 0
      %v5692 = vsel %vm5651, %v5620, 0
      %v5695 = vsel %vm5651, %v5621, 0
      %v5698 = vsel %vm5651, %v5622, 0
      %v5701 = vsel %vm5651, %v5623, 0
      %v5704 = vsel %vm5651, %v5624, 0
      %v5707 = vsel %vm5651, %v5625, 0
      %v5710 = vsel %vm5651, %v5626, 0
      %v5713 = vsel %vm5651, %v5627, 0
      %v5716 = vsel %vm5651, %v5628, 0
      %v5719 = vsel %vm5651, %v5629, 0
      %v5722 = vsel %vm5651, %v5630, 0
      %v5725 = vsel %vm5651, %v5631, 0
      %v5728 = vsel %vm5651, %v5632, 0
      %v5731 = vsel %vm5651, %v5633, 0
      %v5734 = vsel %vm5651, %v5634, 0
      %v5737 = vsel %vm5651, %v5635, 0
      %v5740 = vsel %vm5651, %v5636, 0
      %v5743 = vsel %vm5651, %v5637, 0
      %v5746 = vsel %vm5651, %v5638, 0
      %5748 = vmatprep.subr.mxu0 0.0
      %5749 = vmatpush1.msra.mxu0 %v5639
      %5750 = vmatprep.subr.mxu0 0.0
      %5751 = vmatpush1.msra.mxu0 %v5640
      %5752 = vmatprep.subr.mxu0 0.0
      %5753 = vmatpush1.msra.mxu0 %v5641
      %5754 = vmatprep.subr.mxu0 0.0
      %5755 = vmatpush1.msra.mxu0 %v5642
      %5756 = vmatprep.subr.mxu0 0.0
      %5757 = vmatpush1.msra.mxu0 %v5643
      %5758 = vmatprep.subr.mxu0 0.0
      %5759 = vmatpush1.msra.mxu0 %v5644
      %5760 = vmatprep.subr.mxu0 0.0
      %5761 = vmatpush1.msra.mxu0 %v5645
      %5762 = vmatprep.subr.mxu0 0.0
      %5763 = vmatpush1.msra.mxu0 %v5646
      %5764 = vmatprep.subr.mxu0 0.0
      %5765 = vmatpush1.msra.mxu0 %v5647
      %5766 = vmatprep.subr.mxu0 0.0
      %5767 = vmatpush1.msra.mxu0 %v5648
      %5768 = vmatprep.subr.mxu0 0.0
      %5769 = vmatpush1.msra.mxu0 %v5649
      %5770 = vmatprep.subr.mxu0 0.0
      %5771 = vmatpush1.msra.mxu0 %v5650
      %5772 = vmatprep.subr.mxu0 0.0
      %5773 = vmatpush1.msra.mxu0 0.0
      %5774 = vmatprep.subr.mxu0 0.0
      %5775 = vmatpush1.msra.mxu0 0.0
      %5776 = vmatprep.subr.mxu0 0.0
      %5777 = vmatpush1.msra.mxu0 0.0
      %5778 = vmatprep.subr.mxu0 0.0
      %5779 = vmatpush1.msra.mxu0 0.0
      %5780 = vmatprep.subr.mxu0 0.0
      %5781 = vmatpush1.msra.mxu0 0.0
      %5782 = vmatprep.subr.mxu0 0.0
      %5783 = vmatpush1.msra.mxu0 0.0
      %5784 = vmatprep.subr.mxu0 0.0
      %5785 = vmatpush1.msra.mxu0 0.0
      %5786 = vmatprep.subr.mxu0 0.0
      %5787 = vmatpush1.msra.mxu0 0.0
      %5788 = vmatprep.subr.mxu0 0.0
      %5789 = vmatpush1.msra.mxu0 0.0
      %5790 = vmatprep.subr.mxu0 0.0
      %5791 = vmatpush1.msra.mxu0 0.0
      %5792 = vmatprep.subr.mxu0 0.0
      %5793 = vmatpush1.msra.mxu0 0.0
      %5794 = vmatprep.subr.mxu0 0.0
      %5795 = vmatpush1.msra.mxu0 0.0
      %5796 = vmatprep.subr.mxu0 0.0
      %5797 = vmatpush1.msra.mxu0 0.0
      %5798 = vmatprep.subr.mxu0 0.0
      %5799 = vmatpush1.msra.mxu0 0.0
      %5800 = vmatprep.subr.mxu0 0.0
      %5801 = vmatpush1.msra.mxu0 0.0
      %5802 = vmatprep.subr.mxu0 0.0
      %5803 = vmatpush1.msra.mxu0 0.0
      %5804 = vmatprep.subr.mxu0 0.0
      %5805 = vmatpush1.msra.mxu0 0.0
      %5806 = vmatprep.subr.mxu0 0.0
      %5807 = vmatpush1.msra.mxu0 0.0
      %5808 = vmatprep.subr.mxu0 0.0
      %5809 = vmatpush1.msra.mxu0 0.0
      %5810 = vmatprep.subr.mxu0 0.0
      %5811 = vmatpush1.msra.mxu0 0.0
      %5812 = vmatprep.mubr.f32.mxu0 0.0
      %5813 = vmatmul.mubr.f32.gmra.mrb[0].mxu0 %v5653
      %v5814 = vpop.f32.mrb[0].mxu0
      %v5815 = vadd.f32 0.0, %v5814
      %v5816 = vpop.f32.mrb[0].mxu0
      %5817 = vmatprep.mubr.f32.mxu0 0.0
      %5818 = vmatmul.mubr.f32.gmra.mrb[0].mxu0 %v5656
      %v5819 = vpop.f32.mrb[0].mxu0
      %v5820 = vadd.f32 0.0, %v5819
      %v5821 = vpop.f32.mrb[0].mxu0
      %5822 = vmatprep.mubr.f32.mxu0 0.0
      %5823 = vmatmul.mubr.f32.gmra.mrb[0].mxu0 %v5659
      %v5824 = vpop.f32.mrb[0].mxu0
      %v5825 = vadd.f32 0.0, %v5824
      %v5826 = vpop.f32.mrb[0].mxu0
      %5827 = vmatprep.mubr.f32.mxu0 0.0
      %5828 = vmatmul.mubr.f32.gmra.mrb[0].mxu0 %v5662
      %v5829 = vpop.f32.mrb[0].mxu0
      %v5830 = vadd.f32 0.0, %v5829
      %v5831 = vpop.f32.mrb[0].mxu0
      %5832 = vmatprep.mubr.f32.mxu0 0.0
      %5833 = vmatmul.mubr.f32.gmra.mrb[0].mxu0 %v5665
      %v5834 = vpop.f32.mrb[0].mxu0
      %v5835 = vadd.f32 0.0, %v5834
      %v5836 = vpop.f32.mrb[0].mxu0
      %5837 = vmatprep.mubr.f32.mxu0 0.0
      %5838 = vmatmul.mubr.f32.gmra.mrb[0].mxu0 %v5668
      %v5839 = vpop.f32.mrb[0].mxu0
      %v5840 = vadd.f32 0.0, %v5839
      %v5841 = vpop.f32.mrb[0].mxu0
      %5842 = vmatprep.mubr.f32.mxu0 0.0
      %5843 = vmatmul.mubr.f32.gmra.mrb[0].mxu0 %v5671
      %v5844 = vpop.f32.mrb[0].mxu0
      %v5845 = vadd.f32 0.0, %v5844
      %v5846 = vpop.f32.mrb[0].mxu0
      %5847 = vmatprep.mubr.f32.mxu0 0.0
      %5848 = vmatmul.mubr.f32.gmra.mrb[0].mxu0 %v5674
      %v5849 = vpop.f32.mrb[0].mxu0
      %v5850 = vadd.f32 0.0, %v5849
      %v5851 = vpop.f32.mrb[0].mxu0
      %5852 = vmatprep.mubr.f32.mxu0 0.0
      %5853 = vmatmul.mubr.f32.gmra.mrb[0].mxu0 %v5677
      %v5854 = vpop.f32.mrb[0].mxu0
      %v5855 = vadd.f32 0.0, %v5854
      %v5856 = vpop.f32.mrb[0].mxu0
      %5857 = vmatprep.mubr.f32.mxu0 0.0
      %5858 = vmatmul.mubr.f32.gmra.mrb[0].mxu0 %v5680
      %v5859 = vpop.f32.mrb[0].mxu0
      %v5860 = vadd.f32 0.0, %v5859
      %v5861 = vpop.f32.mrb[0].mxu0
      %5862 = vmatprep.mubr.f32.mxu0 0.0
      %5863 = vmatmul.mubr.f32.gmra.mrb[0].mxu0 %v5683
      %v5864 = vpop.f32.mrb[0].mxu0
      %v5865 = vadd.f32 0.0, %v5864
      %v5866 = vpop.f32.mrb[0].mxu0
      %5867 = vmatprep.mubr.f32.mxu0 0.0
      %5868 = vmatmul.mubr.f32.gmra.mrb[0].mxu0 %v5686
      %v5869 = vpop.f32.mrb[0].mxu0
      %v5870 = vadd.f32 0.0, %v5869
      %v5871 = vpop.f32.mrb[0].mxu0
      %5872 = vmatprep.mubr.f32.mxu0 0.0
      %5873 = vmatmul.mubr.f32.gmra.mrb[0].mxu0 %v5689
      %v5874 = vpop.f32.mrb[0].mxu0
      %v5875 = vadd.f32 0.0, %v5874
      %v5876 = vpop.f32.mrb[0].mxu0
      %5877 = vmatprep.mubr.f32.mxu0 0.0
      %5878 = vmatmul.mubr.f32.gmra.mrb[0].mxu0 %v5692
      %v5879 = vpop.f32.mrb[0].mxu0
      %v5880 = vadd.f32 0.0, %v5879
      %v5881 = vpop.f32.mrb[0].mxu0
      %5882 = vmatprep.mubr.f32.mxu0 0.0
      %5883 = vmatmul.mubr.f32.gmra.mrb[0].mxu0 %v5695
      %v5884 = vpop.f32.mrb[0].mxu0
      %v5885 = vadd.f32 0.0, %v5884
      %v5886 = vpop.f32.mrb[0].mxu0
      %5887 = vmatprep.mubr.f32.mxu0 0.0
      %5888 = vmatmul.mubr.f32.gmra.mrb[0].mxu0 %v5698
      %v5889 = vpop.f32.mrb[0].mxu0
      %v5890 = vadd.f32 0.0, %v5889
      %v5891 = vpop.f32.mrb[0].mxu0
      %5892 = vmatprep.mubr.f32.mxu0 0.0
      %5893 = vmatmul.mubr.f32.gmra.mrb[0].mxu0 %v5701
      %v5894 = vpop.f32.mrb[0].mxu0
      %v5895 = vadd.f32 0.0, %v5894
      %v5896 = vpop.f32.mrb[0].mxu0
      %5897 = vmatprep.mubr.f32.mxu0 0.0
      %5898 = vmatmul.mubr.f32.gmra.mrb[0].mxu0 %v5704
      %v5899 = vpop.f32.mrb[0].mxu0
      %v5900 = vadd.f32 0.0, %v5899
      %v5901 = vpop.f32.mrb[0].mxu0
      %5902 = vmatprep.mubr.f32.mxu0 0.0
      %5903 = vmatmul.mubr.f32.gmra.mrb[0].mxu0 %v5707
      %v5904 = vpop.f32.mrb[0].mxu0
      %v5905 = vadd.f32 0.0, %v5904
      %v5906 = vpop.f32.mrb[0].mxu0
      %5907 = vmatprep.mubr.f32.mxu0 0.0
      %5908 = vmatmul.mubr.f32.gmra.mrb[0].mxu0 %v5710
      %v5909 = vpop.f32.mrb[0].mxu0
      %v5910 = vadd.f32 0.0, %v5909
      %v5911 = vpop.f32.mrb[0].mxu0
      %5912 = vmatprep.mubr.f32.mxu0 0.0
      %5913 = vmatmul.mubr.f32.gmra.mrb[0].mxu0 %v5713
      %v5914 = vpop.f32.mrb[0].mxu0
      %v5915 = vadd.f32 0.0, %v5914
      %v5916 = vpop.f32.mrb[0].mxu0
      %5917 = vmatprep.mubr.f32.mxu0 0.0
      %5918 = vmatmul.mubr.f32.gmra.mrb[0].mxu0 %v5716
      %v5919 = vpop.f32.mrb[0].mxu0
      %v5920 = vadd.f32 0.0, %v5919
      %v5921 = vpop.f32.mrb[0].mxu0
      %5922 = vmatprep.mubr.f32.mxu0 0.0
      %5923 = vmatmul.mubr.f32.gmra.mrb[0].mxu0 %v5719
      %v5924 = vpop.f32.mrb[0].mxu0
      %v5925 = vadd.f32 0.0, %v5924
      %v5926 = vpop.f32.mrb[0].mxu0
      %5927 = vmatprep.mubr.f32.mxu0 0.0
      %5928 = vmatmul.mubr.f32.gmra.mrb[0].mxu0 %v5722
      %v5929 = vpop.f32.mrb[0].mxu0
      %v5930 = vadd.f32 0.0, %v5929
      %v5931 = vpop.f32.mrb[0].mxu0
      %5932 = vmatprep.mubr.f32.mxu0 0.0
      %5933 = vmatmul.mubr.f32.gmra.mrb[0].mxu0 %v5725
      %v5934 = vpop.f32.mrb[0].mxu0
      %v5935 = vadd.f32 0.0, %v5934
      %v5936 = vpop.f32.mrb[0].mxu0
      %5937 = vmatprep.mubr.f32.mxu0 0.0
      %5938 = vmatmul.mubr.f32.gmra.mrb[0].mxu0 %v5728
      %v5939 = vpop.f32.mrb[0].mxu0
      %v5940 = vadd.f32 0.0, %v5939
      %v5941 = vpop.f32.mrb[0].mxu0
      %5942 = vmatprep.mubr.f32.mxu0 0.0
      %5943 = vmatmul.mubr.f32.gmra.mrb[0].mxu0 %v5731
      %v5944 = vpop.f32.mrb[0].mxu0
      %v5945 = vadd.f32 0.0, %v5944
      %v5946 = vpop.f32.mrb[0].mxu0
      %5947 = vmatprep.mubr.f32.mxu0 0.0
      %5948 = vmatmul.mubr.f32.gmra.mrb[0].mxu0 %v5734
      %v5949 = vpop.f32.mrb[0].mxu0
      %v5950 = vadd.f32 0.0, %v5949
      %v5951 = vpop.f32.mrb[0].mxu0
      %5952 = vmatprep.mubr.f32.mxu0 0.0
      %5953 = vmatmul.mubr.f32.gmra.mrb[0].mxu0 %v5737
      %v5954 = vpop.f32.mrb[0].mxu0
      %v5955 = vadd.f32 0.0, %v5954
      %v5956 = vpop.f32.mrb[0].mxu0
      %5957 = vmatprep.mubr.f32.mxu0 0.0
      %5958 = vmatmul.mubr.f32.gmra.mrb[0].mxu0 %v5740
      %v5959 = vpop.f32.mrb[0].mxu0
      %v5960 = vadd.f32 0.0, %v5959
      %v5961 = vpop.f32.mrb[0].mxu0
      %5962 = vmatprep.mubr.f32.mxu0 0.0
      %5963 = vmatmul.mubr.f32.gmra.mrb[0].mxu0 %v5743
      %v5964 = vpop.f32.mrb[0].mxu0
      %v5965 = vadd.f32 0.0, %v5964
      %v5966 = vpop.f32.mrb[0].mxu0
      %5967 = vmatprep.mubr.f32.mxu0 0.0
      %5968 = vmatmul.mubr.f32.gmra.mrb[0].mxu0 %v5746
      %v5969 = vpop.f32.mrb[0].mxu0
      %v5970 = vadd.f32 0.0, %v5969
      %v5971 = vpop.f32.mrb[0].mxu0
      %5972 = vdwg.mxu0
      %v5973 = vld [vmem:[%s4] sm:$0xff]
      %v5974 = vld [vmem:[%s4 + $0x8] sm:$0xff]
      %v5975 = vld [vmem:[%s4 + $0x10] sm:$0xff]
      %v5976 = vld [vmem:[%s4 + $0x18] sm:$0xff]
      %v5977 = vld [vmem:[%s315] sm:$0xff]
      %v5978 = vld [vmem:[%s315 + $0x8] sm:$0xff]
      %v5979 = vld [vmem:[%s315 + $0x10] sm:$0xff]
      %v5980 = vld [vmem:[%s315 + $0x18] sm:$0xff]
      %v5981 = vld [vmem:[%s315 + $0x20] sm:$0xff]
      %v5982 = vld [vmem:[%s315 + $0x28] sm:$0xff]
      %v5983 = vld [vmem:[%s315 + $0x30] sm:$0xff]
      %v5984 = vld [vmem:[%s315 + $0x38] sm:$0xff]
      %v5985 = vld [vmem:[%s315 + $0x40] sm:$0xff]
      %v5986 = vld [vmem:[%s315 + $0x48] sm:$0xff]
      %v5987 = vld [vmem:[%s315 + $0x50] sm:$0xff]
      %v5988 = vld [vmem:[%s315 + $0x58] sm:$0xff]
      %v5989 = vld [vmem:[%s315 + $0x60] sm:$0xff]
      %v5990 = vld [vmem:[%s315 + $0x68] sm:$0xff]
      %v5991 = vld [vmem:[%s315 + $0x70] sm:$0xff]
      %v5992 = vld [vmem:[%s315 + $0x78] sm:$0xff]
      %v5993 = vld [vmem:[%s315 + $0x80] sm:$0xff]
      %v5994 = vld [vmem:[%s315 + $0x88] sm:$0xff]
      %v5995 = vld [vmem:[%s315 + $0x90] sm:$0xff]
      %v5996 = vld [vmem:[%s315 + $0x98] sm:$0xff]
      %v5997 = vld [vmem:[%s315 + $0xa0] sm:$0xff]
      %v5998 = vld [vmem:[%s315 + $0xa8] sm:$0xff]
      %v5999 = vld [vmem:[%s315 + $0xb0] sm:$0xff]
      %v6000 = vld [vmem:[%s315 + $0xb8] sm:$0xff]
      %v6001 = vld [vmem:[%s315 + $0xc0] sm:$0xff]
      %v6002 = vld [vmem:[%s315 + $0xc8] sm:$0xff]
      %v6003 = vld [vmem:[%s315 + $0xd0] sm:$0xff]
      %v6004 = vld [vmem:[%s315 + $0xd8] sm:$0xff]
      %v6005 = vld [vmem:[%s315 + $0xe0] sm:$0xff]
      %v6006 = vld [vmem:[%s315 + $0xe8] sm:$0xff]
      %v6007 = vld [vmem:[%s315 + $0xf0] sm:$0xff]
      %v6008 = vld [vmem:[%s315 + $0xf8] sm:$0xff]
      %v6009 = vld [vmem:[%s5] sm:$0xff]
      %v6010 = vld [vmem:[%s5 + $0x8] sm:$0xff]
      %v6011 = vld [vmem:[%s5 + $0x10] sm:$0xff]
      %v6012 = vld [vmem:[%s5 + $0x18] sm:$0xff]
      %v6013 = vmax.f32 %v5977, 0.0
      %v6014 = vmax.f32 %v5978, 0.0
      %v6015 = vmax.f32 %v5979, 0.0
      %v6016 = vmax.f32 %v5980, 0.0
      %v6017 = vmax.f32 %v5981, 0.0
      %v6018 = vmax.f32 %v5982, 0.0
      %v6019 = vmax.f32 %v5983, 0.0
      %v6020 = vmax.f32 %v5984, 0.0
      %v6021 = vmax.f32 %v5985, 0.0
      %v6022 = vmax.f32 %v5986, 0.0
      %v6023 = vmax.f32 %v5987, 0.0
      %v6024 = vmax.f32 %v5988, 0.0
      %v6025 = vmax.f32 %v5989, 0.0
      %v6026 = vmax.f32 %v5990, 0.0
      %v6027 = vmax.f32 %v5991, 0.0
      %v6028 = vmax.f32 %v5992, 0.0
      %v6029 = vmax.f32 %v5993, 0.0
      %v6030 = vmax.f32 %v5994, 0.0
      %v6031 = vmax.f32 %v5995, 0.0
      %v6032 = vmax.f32 %v5996, 0.0
      %v6033 = vmax.f32 %v5997, 0.0
      %v6034 = vmax.f32 %v5998, 0.0
      %v6035 = vmax.f32 %v5999, 0.0
      %v6036 = vmax.f32 %v6000, 0.0
      %v6037 = vmax.f32 %v6001, 0.0
      %v6038 = vmax.f32 %v6002, 0.0
      %v6039 = vmax.f32 %v6003, 0.0
      %v6040 = vmax.f32 %v6004, 0.0
      %v6041 = vmax.f32 %v6005, 0.0
      %v6042 = vmax.f32 %v6006, 0.0
      %v6043 = vmax.f32 %v6007, 0.0
      %v6044 = vmax.f32 %v6008, 0.0
      %6077 = vrot.lane.b32.xlu0 %v6013, 96
      %v6078 = vpop.permute.xlu0 %6077
      %6079 = vrot.lane.b32.xlu0 %v6014, 96
      %v6080 = vpop.permute.xlu0 %6079
      %6081 = vrot.lane.b32.xlu0 %v6015, 96
      %v6082 = vpop.permute.xlu0 %6081
      %6083 = vrot.lane.b32.xlu0 %v6016, 96
      %v6084 = vpop.permute.xlu0 %6083
      %6085 = vrot.lane.b32.xlu0 %v6017, 96
      %v6086 = vpop.permute.xlu0 %6085
      %6087 = vrot.lane.b32.xlu0 %v6018, 96
      %v6088 = vpop.permute.xlu0 %6087
      %6089 = vrot.lane.b32.xlu0 %v6019, 96
      %v6090 = vpop.permute.xlu0 %6089
      %6091 = vrot.lane.b32.xlu0 %v6020, 96
      %v6092 = vpop.permute.xlu0 %6091
      %6093 = vrot.lane.b32.xlu0 %v6021, 96
      %v6094 = vpop.permute.xlu0 %6093
      %6095 = vrot.lane.b32.xlu0 %v6022, 96
      %v6096 = vpop.permute.xlu0 %6095
      %6097 = vrot.lane.b32.xlu0 %v6023, 96
      %v6098 = vpop.permute.xlu0 %6097
      %6099 = vrot.lane.b32.xlu0 %v6024, 96
      %v6100 = vpop.permute.xlu0 %6099
      %6101 = vrot.lane.b32.xlu0 %v6025, 96
      %v6102 = vpop.permute.xlu0 %6101
      %6103 = vrot.lane.b32.xlu0 %v6026, 96
      %v6104 = vpop.permute.xlu0 %6103
      %6105 = vrot.lane.b32.xlu0 %v6027, 96
      %v6106 = vpop.permute.xlu0 %6105
      %6107 = vrot.lane.b32.xlu0 %v6028, 96
      %v6108 = vpop.permute.xlu0 %6107
      %6109 = vrot.lane.b32.xlu0 %v6029, 96
      %v6110 = vpop.permute.xlu0 %6109
      %6111 = vrot.lane.b32.xlu0 %v6030, 96
      %v6112 = vpop.permute.xlu0 %6111
      %6113 = vrot.lane.b32.xlu0 %v6031, 96
      %v6114 = vpop.permute.xlu0 %6113
      %6115 = vrot.lane.b32.xlu0 %v6032, 96
      %v6116 = vpop.permute.xlu0 %6115
      %6117 = vrot.lane.b32.xlu0 %v6033, 96
      %v6118 = vpop.permute.xlu0 %6117
      %6119 = vrot.lane.b32.xlu0 %v6034, 96
      %v6120 = vpop.permute.xlu0 %6119
      %6121 = vrot.lane.b32.xlu0 %v6035, 96
      %v6122 = vpop.permute.xlu0 %6121
      %6123 = vrot.lane.b32.xlu0 %v6036, 96
      %v6124 = vpop.permute.xlu0 %6123
      %6125 = vrot.lane.b32.xlu0 %v6037, 96
      %v6126 = vpop.permute.xlu0 %6125
      %6127 = vrot.lane.b32.xlu0 %v6038, 96
      %v6128 = vpop.permute.xlu0 %6127
      %6129 = vrot.lane.b32.xlu0 %v6039, 96
      %v6130 = vpop.permute.xlu0 %6129
      %6131 = vrot.lane.b32.xlu0 %v6040, 96
      %v6132 = vpop.permute.xlu0 %6131
      %6133 = vrot.lane.b32.xlu0 %v6041, 96
      %v6134 = vpop.permute.xlu0 %6133
      %6135 = vrot.lane.b32.xlu0 %v6042, 96
      %v6136 = vpop.permute.xlu0 %6135
      %6137 = vrot.lane.b32.xlu0 %v6043, 96
      %v6138 = vpop.permute.xlu0 %6137
      %6139 = vrot.lane.b32.xlu0 %v6044, 96
      %v6140 = vpop.permute.xlu0 %6139
      %6173 = vxpose.xlu0.b32.start [1/16] %v6078, 128
      %6174 = vxpose.xlu0.b32.cont [2/16] %v6080, 128
      %6175 = vxpose.xlu0.b32.cont [3/16] %v6082, 128
      %6176 = vxpose.xlu0.b32.cont [4/16] %v6084, 128
      %6177 = vxpose.xlu0.b32.cont [5/16] %v6086, 128
      %6178 = vxpose.xlu0.b32.cont [6/16] %v6088, 128
      %6179 = vxpose.xlu0.b32.cont [7/16] %v6090, 128
      %6180 = vxpose.xlu0.b32.cont [8/16] %v6092, 128
      %6181 = vxpose.xlu0.b32.cont [9/16] %v6094, 128
      %6182 = vxpose.xlu0.b32.cont [10/16] %v6096, 128
      %6183 = vxpose.xlu0.b32.cont [11/16] %v6098, 128
      %6184 = vxpose.xlu0.b32.cont [12/16] %v6100, 128
      %6185 = vxpose.xlu0.b32.cont [13/16] %v6102, 128
      %6186 = vxpose.xlu0.b32.cont [14/16] %v6104, 128
      %6187 = vxpose.xlu0.b32.cont [15/16] %v6106, 128
      %6188 = vxpose.xlu0.b32.end [16/16] %v6108, 128
      %v6189 = vpop.trf.xlu0
      %v6190 = vpop.trf.xlu0
      %v6191 = vpop.trf.xlu0
      %v6192 = vpop.trf.xlu0
      %v6193 = vpop.trf.xlu0
      %v6194 = vpop.trf.xlu0
      %v6195 = vpop.trf.xlu0
      %v6196 = vpop.trf.xlu0
      %v6197 = vpop.trf.xlu0
      %v6198 = vpop.trf.xlu0
      %v6199 = vpop.trf.xlu0
      %v6200 = vpop.trf.xlu0
      %v6201 = vpop.trf.xlu0
      %v6202 = vpop.trf.xlu0
      %v6203 = vpop.trf.xlu0
      %v6204 = vpop.trf.xlu0
      %6205 = vxpose.xlu0.b32.start [1/16] %v6110, 128
      %6206 = vxpose.xlu0.b32.cont [2/16] %v6112, 128
      %6207 = vxpose.xlu0.b32.cont [3/16] %v6114, 128
      %6208 = vxpose.xlu0.b32.cont [4/16] %v6116, 128
      %6209 = vxpose.xlu0.b32.cont [5/16] %v6118, 128
      %6210 = vxpose.xlu0.b32.cont [6/16] %v6120, 128
      %6211 = vxpose.xlu0.b32.cont [7/16] %v6122, 128
      %6212 = vxpose.xlu0.b32.cont [8/16] %v6124, 128
      %6213 = vxpose.xlu0.b32.cont [9/16] %v6126, 128
      %6214 = vxpose.xlu0.b32.cont [10/16] %v6128, 128
      %6215 = vxpose.xlu0.b32.cont [11/16] %v6130, 128
      %6216 = vxpose.xlu0.b32.cont [12/16] %v6132, 128
      %6217 = vxpose.xlu0.b32.cont [13/16] %v6134, 128
      %6218 = vxpose.xlu0.b32.cont [14/16] %v6136, 128
      %6219 = vxpose.xlu0.b32.cont [15/16] %v6138, 128
      %6220 = vxpose.xlu0.b32.end [16/16] %v6140, 128
      %v6221 = vpop.trf.xlu0
      %v6222 = vpop.trf.xlu0
      %v6223 = vpop.trf.xlu0
      %v6224 = vpop.trf.xlu0
      %v6225 = vpop.trf.xlu0
      %v6226 = vpop.trf.xlu0
      %v6227 = vpop.trf.xlu0
      %v6228 = vpop.trf.xlu0
      %v6229 = vpop.trf.xlu0
      %v6230 = vpop.trf.xlu0
      %v6231 = vpop.trf.xlu0
      %v6232 = vpop.trf.xlu0
      %v6233 = vpop.trf.xlu0
      %v6234 = vpop.trf.xlu0
      %v6235 = vpop.trf.xlu0
      %v6236 = vpop.trf.xlu0
      %6269 = vrot.lane.b32.xlu0 %v5977, 64
      %v6270 = vpop.permute.xlu0 %6269
      %6271 = vrot.lane.b32.xlu0 %v5978, 64
      %v6272 = vpop.permute.xlu0 %6271
      %6273 = vrot.lane.b32.xlu0 %v5979, 64
      %v6274 = vpop.permute.xlu0 %6273
      %6275 = vrot.lane.b32.xlu0 %v5980, 64
      %v6276 = vpop.permute.xlu0 %6275
      %6277 = vrot.lane.b32.xlu0 %v5981, 64
      %v6278 = vpop.permute.xlu0 %6277
      %6279 = vrot.lane.b32.xlu0 %v5982, 64
      %v6280 = vpop.permute.xlu0 %6279
      %6281 = vrot.lane.b32.xlu0 %v5983, 64
      %v6282 = vpop.permute.xlu0 %6281
      %6283 = vrot.lane.b32.xlu0 %v5984, 64
      %v6284 = vpop.permute.xlu0 %6283
      %6285 = vrot.lane.b32.xlu0 %v5985, 64
      %v6286 = vpop.permute.xlu0 %6285
      %6287 = vrot.lane.b32.xlu0 %v5986, 64
      %v6288 = vpop.permute.xlu0 %6287
      %6289 = vrot.lane.b32.xlu0 %v5987, 64
      %v6290 = vpop.permute.xlu0 %6289
      %6291 = vrot.lane.b32.xlu0 %v5988, 64
      %v6292 = vpop.permute.xlu0 %6291
      %6293 = vrot.lane.b32.xlu0 %v5989, 64
      %v6294 = vpop.permute.xlu0 %6293
      %6295 = vrot.lane.b32.xlu0 %v5990, 64
      %v6296 = vpop.permute.xlu0 %6295
      %6297 = vrot.lane.b32.xlu0 %v5991, 64
      %v6298 = vpop.permute.xlu0 %6297
      %6299 = vrot.lane.b32.xlu0 %v5992, 64
      %v6300 = vpop.permute.xlu0 %6299
      %6301 = vrot.lane.b32.xlu0 %v5993, 64
      %v6302 = vpop.permute.xlu0 %6301
      %6303 = vrot.lane.b32.xlu0 %v5994, 64
      %v6304 = vpop.permute.xlu0 %6303
      %6305 = vrot.lane.b32.xlu0 %v5995, 64
      %v6306 = vpop.permute.xlu0 %6305
      %6307 = vrot.lane.b32.xlu0 %v5996, 64
      %v6308 = vpop.permute.xlu0 %6307
      %6309 = vrot.lane.b32.xlu0 %v5997, 64
      %v6310 = vpop.permute.xlu0 %6309
      %6311 = vrot.lane.b32.xlu0 %v5998, 64
      %v6312 = vpop.permute.xlu0 %6311
      %6313 = vrot.lane.b32.xlu0 %v5999, 64
      %v6314 = vpop.permute.xlu0 %6313
      %6315 = vrot.lane.b32.xlu0 %v6000, 64
      %v6316 = vpop.permute.xlu0 %6315
      %6317 = vrot.lane.b32.xlu0 %v6001, 64
      %v6318 = vpop.permute.xlu0 %6317
      %6319 = vrot.lane.b32.xlu0 %v6002, 64
      %v6320 = vpop.permute.xlu0 %6319
      %6321 = vrot.lane.b32.xlu0 %v6003, 64
      %v6322 = vpop.permute.xlu0 %6321
      %6323 = vrot.lane.b32.xlu0 %v6004, 64
      %v6324 = vpop.permute.xlu0 %6323
      %6325 = vrot.lane.b32.xlu0 %v6005, 64
      %v6326 = vpop.permute.xlu0 %6325
      %6327 = vrot.lane.b32.xlu0 %v6006, 64
      %v6328 = vpop.permute.xlu0 %6327
      %6329 = vrot.lane.b32.xlu0 %v6007, 64
      %v6330 = vpop.permute.xlu0 %6329
      %6331 = vrot.lane.b32.xlu0 %v6008, 64
      %v6332 = vpop.permute.xlu0 %6331
      %6365 = vmatprep.subr.mxu0 0.0
      %6366 = vmatpush1.msra.mxu0 %v6270
      %6367 = vmatprep.subr.mxu0 0.0
      %6368 = vmatpush1.msra.mxu0 %v6272
      %6369 = vmatprep.subr.mxu0 0.0
      %6370 = vmatpush1.msra.mxu0 %v6274
      %6371 = vmatprep.subr.mxu0 0.0
      %6372 = vmatpush1.msra.mxu0 %v6276
      %6373 = vmatprep.subr.mxu0 0.0
      %6374 = vmatpush1.msra.mxu0 %v6278
      %6375 = vmatprep.subr.mxu0 0.0
      %6376 = vmatpush1.msra.mxu0 %v6280
      %6377 = vmatprep.subr.mxu0 0.0
      %6378 = vmatpush1.msra.mxu0 %v6282
      %6379 = vmatprep.subr.mxu0 0.0
      %6380 = vmatpush1.msra.mxu0 %v6284
      %6381 = vmatprep.subr.mxu0 0.0
      %6382 = vmatpush1.msra.mxu0 %v6286
      %6383 = vmatprep.subr.mxu0 0.0
      %6384 = vmatpush1.msra.mxu0 %v6288
      %6385 = vmatprep.subr.mxu0 0.0
      %6386 = vmatpush1.msra.mxu0 %v6290
      %6387 = vmatprep.subr.mxu0 0.0
      %6388 = vmatpush1.msra.mxu0 %v6292
      %6389 = vmatprep.subr.mxu0 0.0
      %6390 = vmatpush1.msra.mxu0 %v6294
      %6391 = vmatprep.subr.mxu0 0.0
      %6392 = vmatpush1.msra.mxu0 %v6296
      %6393 = vmatprep.subr.mxu0 0.0
      %6394 = vmatpush1.msra.mxu0 %v6298
      %6395 = vmatprep.subr.mxu0 0.0
      %6396 = vmatpush1.msra.mxu0 %v6300
      %6397 = vmatprep.subr.mxu0 0.0
      %6398 = vmatpush1.msra.mxu0 %v6302
      %6399 = vmatprep.subr.mxu0 0.0
      %6400 = vmatpush1.msra.mxu0 %v6304
      %6401 = vmatprep.subr.mxu0 0.0
      %6402 = vmatpush1.msra.mxu0 %v6306
      %6403 = vmatprep.subr.mxu0 0.0
      %6404 = vmatpush1.msra.mxu0 %v6308
      %6405 = vmatprep.subr.mxu0 0.0
      %6406 = vmatpush1.msra.mxu0 %v6310
      %6407 = vmatprep.subr.mxu0 0.0
      %6408 = vmatpush1.msra.mxu0 %v6312
      %6409 = vmatprep.subr.mxu0 0.0
      %6410 = vmatpush1.msra.mxu0 %v6314
      %6411 = vmatprep.subr.mxu0 0.0
      %6412 = vmatpush1.msra.mxu0 %v6316
      %6413 = vmatprep.subr.mxu0 0.0
      %6414 = vmatpush1.msra.mxu0 %v6318
      %6415 = vmatprep.subr.mxu0 0.0
      %6416 = vmatpush1.msra.mxu0 %v6320
      %6417 = vmatprep.subr.mxu0 0.0
      %6418 = vmatpush1.msra.mxu0 %v6322
      %6419 = vmatprep.subr.mxu0 0.0
      %6420 = vmatpush1.msra.mxu0 %v6324
      %6421 = vmatprep.subr.mxu0 0.0
      %6422 = vmatpush1.msra.mxu0 %v6326
      %6423 = vmatprep.subr.mxu0 0.0
      %6424 = vmatpush1.msra.mxu0 %v6328
      %6425 = vmatprep.subr.mxu0 0.0
      %6426 = vmatpush1.msra.mxu0 %v6330
      %6427 = vmatprep.subr.mxu0 0.0
      %6428 = vmatpush1.msra.mxu0 %v6332
      %6429 = vmatprep.mubr.f32.mxu0 %v6221
      %6430 = vmatmul.mubr.f32.gmra.mrb[0].mxu0 %v6189
      %v6431 = vpop.f32.mrb[0].mxu0
      %v6432 = vadd.f32 0.0, %v6431
      %v6433 = vpop.f32.mrb[0].mxu0
      %6434 = vmatprep.mubr.f32.mxu0 %v6222
      %6435 = vmatmul.mubr.f32.gmra.mrb[0].mxu0 %v6190
      %v6436 = vpop.f32.mrb[0].mxu0
      %v6437 = vadd.f32 0.0, %v6436
      %v6438 = vpop.f32.mrb[0].mxu0
      %6439 = vmatprep.mubr.f32.mxu0 %v6223
      %6440 = vmatmul.mubr.f32.gmra.mrb[0].mxu0 %v6191
      %v6441 = vpop.f32.mrb[0].mxu0
      %v6442 = vadd.f32 0.0, %v6441
      %v6443 = vpop.f32.mrb[0].mxu0
      %6444 = vmatprep.mubr.f32.mxu0 %v6224
      %6445 = vmatmul.mubr.f32.gmra.mrb[0].mxu0 %v6192
      %v6446 = vpop.f32.mrb[0].mxu0
      %v6447 = vadd.f32 0.0, %v6446
      %v6448 = vpop.f32.mrb[0].mxu0
      %6449 = vdwg.mxu0
      %vm6450 = vcmask 523520
      %v6451 = vsel %vm6450, %v6013, 0.0
      %v6452 = vsel %vm6450, %v6014, 0.0
      %v6453 = vadd.f32 %v6451, %v6452
      %v6454 = vsel %vm6450, %v6015, 0.0
      %v6455 = vadd.f32 %v6453, %v6454
      %v6456 = vsel %vm6450, %v6016, 0.0
      %v6457 = vadd.f32 %v6455, %v6456
      %v6458 = vsel %vm6450, %v6017, 0.0
      %v6459 = vadd.f32 %v6457, %v6458
      %v6460 = vsel %vm6450, %v6018, 0.0
      %v6461 = vadd.f32 %v6459, %v6460
      %v6462 = vsel %vm6450, %v6019, 0.0
      %v6463 = vadd.f32 %v6461, %v6462
      %v6464 = vsel %vm6450, %v6020, 0.0
      %v6465 = vadd.f32 %v6463, %v6464
      %v6466 = vsel %vm6450, %v6021, 0.0
      %v6467 = vadd.f32 %v6465, %v6466
      %v6468 = vsel %vm6450, %v6022, 0.0
      %v6469 = vadd.f32 %v6467, %v6468
      %v6470 = vsel %vm6450, %v6023, 0.0
      %v6471 = vadd.f32 %v6469, %v6470
      %v6472 = vsel %vm6450, %v6024, 0.0
      %v6473 = vadd.f32 %v6471, %v6472
      %v6474 = vsel %vm6450, %v6025, 0.0
      %v6475 = vadd.f32 %v6473, %v6474
      %v6476 = vsel %vm6450, %v6026, 0.0
      %v6477 = vadd.f32 %v6475, %v6476
      %v6478 = vsel %vm6450, %v6027, 0.0
      %v6479 = vadd.f32 %v6477, %v6478
      %v6480 = vsel %vm6450, %v6028, 0.0
      %v6481 = vadd.f32 %v6479, %v6480
      %v6482 = vsel %vm6450, %v6029, 0.0
      %v6483 = vadd.f32 %v6481, %v6482
      %v6484 = vsel %vm6450, %v6030, 0.0
      %v6485 = vadd.f32 %v6483, %v6484
      %v6486 = vsel %vm6450, %v6031, 0.0
      %v6487 = vadd.f32 %v6485, %v6486
      %v6488 = vsel %vm6450, %v6032, 0.0
      %v6489 = vadd.f32 %v6487, %v6488
      %v6490 = vsel %vm6450, %v6033, 0.0
      %v6491 = vadd.f32 %v6489, %v6490
      %v6492 = vsel %vm6450, %v6034, 0.0
      %v6493 = vadd.f32 %v6491, %v6492
      %v6494 = vsel %vm6450, %v6035, 0.0
      %v6495 = vadd.f32 %v6493, %v6494
      %v6496 = vsel %vm6450, %v6036, 0.0
      %v6497 = vadd.f32 %v6495, %v6496
      %v6498 = vsel %vm6450, %v6037, 0.0
      %v6499 = vadd.f32 %v6497, %v6498
      %v6500 = vsel %vm6450, %v6038, 0.0
      %v6501 = vadd.f32 %v6499, %v6500
      %v6502 = vsel %vm6450, %v6039, 0.0
      %v6503 = vadd.f32 %v6501, %v6502
      %v6504 = vsel %vm6450, %v6040, 0.0
      %v6505 = vadd.f32 %v6503, %v6504
      %v6506 = vsel %vm6450, %v6041, 0.0
      %v6507 = vadd.f32 %v6505, %v6506
      %v6508 = vsel %vm6450, %v6042, 0.0
      %v6509 = vadd.f32 %v6507, %v6508
      %v6510 = vsel %vm6450, %v6043, 0.0
      %v6511 = vadd.f32 %v6509, %v6510
      %v6512 = vsel %vm6450, %v6044, 0.0
      %v6513 = vadd.f32 %v6511, %v6512
      %v6514 = vrot.slane %v6513, 4
      %v6515 = vadd.f32 %v6513, %v6514
      %v6516 = vrot.slane %v6515, 2
      %v6517 = vadd.f32 %v6515, %v6516
      %v6518 = vrot.slane %v6517, 1
      %v6519 = vadd.f32 %v6517, %v6518
      %v6520 = vmul.f32 %v6432, %v5973
      %v6521 = vmul.f32 %v6437, %v5974
      %v6522 = vmul.f32 %v6442, %v5975
      %v6523 = vmul.f32 %v6447, %v5976
      %vm6524 = vcmask 261120
      %v6525 = vsel %vm6524, %v6013, 0
      %v6527 = vsel %vm6524, %v6014, 0
      %v6529 = vsel %vm6524, %v6015, 0
      %v6531 = vsel %vm6524, %v6016, 0
      %v6533 = vsel %vm6524, %v6017, 0
      %v6535 = vsel %vm6524, %v6018, 0
      %v6537 = vsel %vm6524, %v6019, 0
      %v6539 = vsel %vm6524, %v6020, 0
      %v6541 = vsel %vm6524, %v6021, 0
      %v6543 = vsel %vm6524, %v6022, 0
      %v6545 = vsel %vm6524, %v6023, 0
      %v6547 = vsel %vm6524, %v6024, 0
      %v6549 = vsel %vm6524, %v6025, 0
      %v6551 = vsel %vm6524, %v6026, 0
      %v6553 = vsel %vm6524, %v6027, 0
      %v6555 = vsel %vm6524, %v6028, 0
      %v6557 = vsel %vm6524, %v6029, 0
      %v6559 = vsel %vm6524, %v6030, 0
      %v6561 = vsel %vm6524, %v6031, 0
      %v6563 = vsel %vm6524, %v6032, 0
      %v6565 = vsel %vm6524, %v6033, 0
      %v6567 = vsel %vm6524, %v6034, 0
      %v6569 = vsel %vm6524, %v6035, 0
      %v6571 = vsel %vm6524, %v6036, 0
      %v6573 = vsel %vm6524, %v6037, 0
      %v6575 = vsel %vm6524, %v6038, 0
      %v6577 = vsel %vm6524, %v6039, 0
      %v6579 = vsel %vm6524, %v6040, 0
      %v6581 = vsel %vm6524, %v6041, 0
      %v6583 = vsel %vm6524, %v6042, 0
      %v6585 = vsel %vm6524, %v6043, 0
      %v6587 = vsel %vm6524, %v6044, 0
      %6589 = vmatprep.subr.mxu0 0.0
      %6590 = vmatpush1.msra.mxu0 %v6520
      %6591 = vmatprep.subr.mxu0 0.0
      %6592 = vmatpush1.msra.mxu0 %v6521
      %6593 = vmatprep.subr.mxu0 0.0
      %6594 = vmatpush1.msra.mxu0 %v6522
      %6595 = vmatprep.subr.mxu0 0.0
      %6596 = vmatpush1.msra.mxu0 %v6523
      %6597 = vmatprep.subr.mxu0 0.0
      %6598 = vmatpush1.msra.mxu0 0.0
      %6599 = vmatprep.subr.mxu0 0.0
      %6600 = vmatpush1.msra.mxu0 0.0
      %6601 = vmatprep.subr.mxu0 0.0
      %6602 = vmatpush1.msra.mxu0 0.0
      %6603 = vmatprep.subr.mxu0 0.0
      %6604 = vmatpush1.msra.mxu0 0.0
      %6605 = vmatprep.subr.mxu0 0.0
      %6606 = vmatpush1.msra.mxu0 0.0
      %6607 = vmatprep.subr.mxu0 0.0
      %6608 = vmatpush1.msra.mxu0 0.0
      %6609 = vmatprep.subr.mxu0 0.0
      %6610 = vmatpush1.msra.mxu0 0.0
      %6611 = vmatprep.subr.mxu0 0.0
      %6612 = vmatpush1.msra.mxu0 0.0
      %6613 = vmatprep.subr.mxu0 0.0
      %6614 = vmatpush1.msra.mxu0 0.0
      %6615 = vmatprep.subr.mxu0 0.0
      %6616 = vmatpush1.msra.mxu0 0.0
      %6617 = vmatprep.subr.mxu0 0.0
      %6618 = vmatpush1.msra.mxu0 0.0
      %6619 = vmatprep.subr.mxu0 0.0
      %6620 = vmatpush1.msra.mxu0 0.0
      %6621 = vmatprep.subr.mxu0 0.0
      %6622 = vmatpush1.msra.mxu0 0.0
      %6623 = vmatprep.subr.mxu0 0.0
      %6624 = vmatpush1.msra.mxu0 0.0
      %6625 = vmatprep.subr.mxu0 0.0
      %6626 = vmatpush1.msra.mxu0 0.0
      %6627 = vmatprep.subr.mxu0 0.0
      %6628 = vmatpush1.msra.mxu0 0.0
      %6629 = vmatprep.subr.mxu0 0.0
      %6630 = vmatpush1.msra.mxu0 0.0
      %6631 = vmatprep.subr.mxu0 0.0
      %6632 = vmatpush1.msra.mxu0 0.0
      %6633 = vmatprep.subr.mxu0 0.0
      %6634 = vmatpush1.msra.mxu0 0.0
      %6635 = vmatprep.subr.mxu0 0.0
      %6636 = vmatpush1.msra.mxu0 0.0
      %6637 = vmatprep.subr.mxu0 0.0
      %6638 = vmatpush1.msra.mxu0 0.0
      %6639 = vmatprep.subr.mxu0 0.0
      %6640 = vmatpush1.msra.mxu0 0.0
      %6641 = vmatprep.subr.mxu0 0.0
      %6642 = vmatpush1.msra.mxu0 0.0
      %6643 = vmatprep.subr.mxu0 0.0
      %6644 = vmatpush1.msra.mxu0 0.0
      %6645 = vmatprep.subr.mxu0 0.0
      %6646 = vmatpush1.msra.mxu0 0.0
      %6647 = vmatprep.subr.mxu0 0.0
      %6648 = vmatpush1.msra.mxu0 0.0
      %6649 = vmatprep.subr.mxu0 0.0
      %6650 = vmatpush1.msra.mxu0 0.0
      %6651 = vmatprep.subr.mxu0 0.0
      %6652 = vmatpush1.msra.mxu0 0.0
      %6653 = vmatprep.mubr.f32.mxu0 0.0
      %6654 = vmatmul.mubr.f32.gmra.mrb[0].mxu0 %v6525
      %v6655 = vpop.f32.mrb[0].mxu0
      %v6656 = vadd.f32 0.0, %v6655
      %v6657 = vpop.f32.mrb[0].mxu0
      %6658 = vmatprep.mubr.f32.mxu0 0.0
      %6659 = vmatmul.mubr.f32.gmra.mrb[0].mxu0 %v6527
      %v6660 = vpop.f32.mrb[0].mxu0
      %v6661 = vadd.f32 0.0, %v6660
      %v6662 = vpop.f32.mrb[0].mxu0
      %6663 = vmatprep.mubr.f32.mxu0 0.0
      %6664 = vmatmul.mubr.f32.gmra.mrb[0].mxu0 %v6529
      %v6665 = vpop.f32.mrb[0].mxu0
      %v6666 = vadd.f32 0.0, %v6665
      %v6667 = vpop.f32.mrb[0].mxu0
      %6668 = vmatprep.mubr.f32.mxu0 0.0
      %6669 = vmatmul.mubr.f32.gmra.mrb[0].mxu0 %v6531
      %v6670 = vpop.f32.mrb[0].mxu0
      %v6671 = vadd.f32 0.0, %v6670
      %v6672 = vpop.f32.mrb[0].mxu0
      %6673 = vmatprep.mubr.f32.mxu0 0.0
      %6674 = vmatmul.mubr.f32.gmra.mrb[0].mxu0 %v6533
      %v6675 = vpop.f32.mrb[0].mxu0
      %v6676 = vadd.f32 0.0, %v6675
      %v6677 = vpop.f32.mrb[0].mxu0
      %6678 = vmatprep.mubr.f32.mxu0 0.0
      %6679 = vmatmul.mubr.f32.gmra.mrb[0].mxu0 %v6535
      %v6680 = vpop.f32.mrb[0].mxu0
      %v6681 = vadd.f32 0.0, %v6680
      %v6682 = vpop.f32.mrb[0].mxu0
      %6683 = vmatprep.mubr.f32.mxu0 0.0
      %6684 = vmatmul.mubr.f32.gmra.mrb[0].mxu0 %v6537
      %v6685 = vpop.f32.mrb[0].mxu0
      %v6686 = vadd.f32 0.0, %v6685
      %v6687 = vpop.f32.mrb[0].mxu0
      %6688 = vmatprep.mubr.f32.mxu0 0.0
      %6689 = vmatmul.mubr.f32.gmra.mrb[0].mxu0 %v6539
      %v6690 = vpop.f32.mrb[0].mxu0
      %v6691 = vadd.f32 0.0, %v6690
      %v6692 = vpop.f32.mrb[0].mxu0
      %6693 = vmatprep.mubr.f32.mxu0 0.0
      %6694 = vmatmul.mubr.f32.gmra.mrb[0].mxu0 %v6541
      %v6695 = vpop.f32.mrb[0].mxu0
      %v6696 = vadd.f32 0.0, %v6695
      %v6697 = vpop.f32.mrb[0].mxu0
      %6698 = vmatprep.mubr.f32.mxu0 0.0
      %6699 = vmatmul.mubr.f32.gmra.mrb[0].mxu0 %v6543
      %v6700 = vpop.f32.mrb[0].mxu0
      %v6701 = vadd.f32 0.0, %v6700
      %v6702 = vpop.f32.mrb[0].mxu0
      %6703 = vmatprep.mubr.f32.mxu0 0.0
      %6704 = vmatmul.mubr.f32.gmra.mrb[0].mxu0 %v6545
      %v6705 = vpop.f32.mrb[0].mxu0
      %v6706 = vadd.f32 0.0, %v6705
      %v6707 = vpop.f32.mrb[0].mxu0
      %6708 = vmatprep.mubr.f32.mxu0 0.0
      %6709 = vmatmul.mubr.f32.gmra.mrb[0].mxu0 %v6547
      %v6710 = vpop.f32.mrb[0].mxu0
      %v6711 = vadd.f32 0.0, %v6710
      %v6712 = vpop.f32.mrb[0].mxu0
      %6713 = vmatprep.mubr.f32.mxu0 0.0
      %6714 = vmatmul.mubr.f32.gmra.mrb[0].mxu0 %v6549
      %v6715 = vpop.f32.mrb[0].mxu0
      %v6716 = vadd.f32 0.0, %v6715
      %v6717 = vpop.f32.mrb[0].mxu0
      %6718 = vmatprep.mubr.f32.mxu0 0.0
      %6719 = vmatmul.mubr.f32.gmra.mrb[0].mxu0 %v6551
      %v6720 = vpop.f32.mrb[0].mxu0
      %v6721 = vadd.f32 0.0, %v6720
      %v6722 = vpop.f32.mrb[0].mxu0
      %6723 = vmatprep.mubr.f32.mxu0 0.0
      %6724 = vmatmul.mubr.f32.gmra.mrb[0].mxu0 %v6553
      %v6725 = vpop.f32.mrb[0].mxu0
      %v6726 = vadd.f32 0.0, %v6725
      %v6727 = vpop.f32.mrb[0].mxu0
      %6728 = vmatprep.mubr.f32.mxu0 0.0
      %6729 = vmatmul.mubr.f32.gmra.mrb[0].mxu0 %v6555
      %v6730 = vpop.f32.mrb[0].mxu0
      %v6731 = vadd.f32 0.0, %v6730
      %v6732 = vpop.f32.mrb[0].mxu0
      %6733 = vmatprep.mubr.f32.mxu0 0.0
      %6734 = vmatmul.mubr.f32.gmra.mrb[0].mxu0 %v6557
      %v6735 = vpop.f32.mrb[0].mxu0
      %v6736 = vadd.f32 0.0, %v6735
      %v6737 = vpop.f32.mrb[0].mxu0
      %6738 = vmatprep.mubr.f32.mxu0 0.0
      %6739 = vmatmul.mubr.f32.gmra.mrb[0].mxu0 %v6559
      %v6740 = vpop.f32.mrb[0].mxu0
      %v6741 = vadd.f32 0.0, %v6740
      %v6742 = vpop.f32.mrb[0].mxu0
      %6743 = vmatprep.mubr.f32.mxu0 0.0
      %6744 = vmatmul.mubr.f32.gmra.mrb[0].mxu0 %v6561
      %v6745 = vpop.f32.mrb[0].mxu0
      %v6746 = vadd.f32 0.0, %v6745
      %v6747 = vpop.f32.mrb[0].mxu0
      %6748 = vmatprep.mubr.f32.mxu0 0.0
      %6749 = vmatmul.mubr.f32.gmra.mrb[0].mxu0 %v6563
      %v6750 = vpop.f32.mrb[0].mxu0
      %v6751 = vadd.f32 0.0, %v6750
      %v6752 = vpop.f32.mrb[0].mxu0
      %6753 = vmatprep.mubr.f32.mxu0 0.0
      %6754 = vmatmul.mubr.f32.gmra.mrb[0].mxu0 %v6565
      %v6755 = vpop.f32.mrb[0].mxu0
      %v6756 = vadd.f32 0.0, %v6755
      %v6757 = vpop.f32.mrb[0].mxu0
      %6758 = vmatprep.mubr.f32.mxu0 0.0
      %6759 = vmatmul.mubr.f32.gmra.mrb[0].mxu0 %v6567
      %v6760 = vpop.f32.mrb[0].mxu0
      %v6761 = vadd.f32 0.0, %v6760
      %v6762 = vpop.f32.mrb[0].mxu0
      %6763 = vmatprep.mubr.f32.mxu0 0.0
      %6764 = vmatmul.mubr.f32.gmra.mrb[0].mxu0 %v6569
      %v6765 = vpop.f32.mrb[0].mxu0
      %v6766 = vadd.f32 0.0, %v6765
      %v6767 = vpop.f32.mrb[0].mxu0
      %6768 = vmatprep.mubr.f32.mxu0 0.0
      %6769 = vmatmul.mubr.f32.gmra.mrb[0].mxu0 %v6571
      %v6770 = vpop.f32.mrb[0].mxu0
      %v6771 = vadd.f32 0.0, %v6770
      %v6772 = vpop.f32.mrb[0].mxu0
      %6773 = vmatprep.mubr.f32.mxu0 0.0
      %6774 = vmatmul.mubr.f32.gmra.mrb[0].mxu0 %v6573
      %v6775 = vpop.f32.mrb[0].mxu0
      %v6776 = vadd.f32 0.0, %v6775
      %v6777 = vpop.f32.mrb[0].mxu0
      %6778 = vmatprep.mubr.f32.mxu0 0.0
      %6779 = vmatmul.mubr.f32.gmra.mrb[0].mxu0 %v6575
      %v6780 = vpop.f32.mrb[0].mxu0
      %v6781 = vadd.f32 0.0, %v6780
      %v6782 = vpop.f32.mrb[0].mxu0
      %6783 = vmatprep.mubr.f32.mxu0 0.0
      %6784 = vmatmul.mubr.f32.gmra.mrb[0].mxu0 %v6577
      %v6785 = vpop.f32.mrb[0].mxu0
      %v6786 = vadd.f32 0.0, %v6785
      %v6787 = vpop.f32.mrb[0].mxu0
      %6788 = vmatprep.mubr.f32.mxu0 0.0
      %6789 = vmatmul.mubr.f32.gmra.mrb[0].mxu0 %v6579
      %v6790 = vpop.f32.mrb[0].mxu0
      %v6791 = vadd.f32 0.0, %v6790
      %v6792 = vpop.f32.mrb[0].mxu0
      %6793 = vmatprep.mubr.f32.mxu0 0.0
      %6794 = vmatmul.mubr.f32.gmra.mrb[0].mxu0 %v6581
      %v6795 = vpop.f32.mrb[0].mxu0
      %v6796 = vadd.f32 0.0, %v6795
      %v6797 = vpop.f32.mrb[0].mxu0
      %6798 = vmatprep.mubr.f32.mxu0 0.0
      %6799 = vmatmul.mubr.f32.gmra.mrb[0].mxu0 %v6583
      %v6800 = vpop.f32.mrb[0].mxu0
      %v6801 = vadd.f32 0.0, %v6800
      %v6802 = vpop.f32.mrb[0].mxu0
      %6803 = vmatprep.mubr.f32.mxu0 0.0
      %6804 = vmatmul.mubr.f32.gmra.mrb[0].mxu0 %v6585
      %v6805 = vpop.f32.mrb[0].mxu0
      %v6806 = vadd.f32 0.0, %v6805
      %v6807 = vpop.f32.mrb[0].mxu0
      %6808 = vmatprep.mubr.f32.mxu0 0.0
      %6809 = vmatmul.mubr.f32.gmra.mrb[0].mxu0 %v6587
      %v6810 = vpop.f32.mrb[0].mxu0
      %v6811 = vadd.f32 0.0, %v6810
      %v6812 = vpop.f32.mrb[0].mxu0
      %6813 = vdwg.mxu0
      %6815 = vrot.lane.b32.xlu0 %v6519, 96
      %v6816 = vpop.permute.xlu0 %6815
      %v6818 = vmul.f32 %v6013, %v6816
      %v6819 = vmul.f32 %v6014, %v6816
      %v6820 = vmul.f32 %v6015, %v6816
      %v6821 = vmul.f32 %v6016, %v6816
      %v6822 = vmul.f32 %v6017, %v6816
      %v6823 = vmul.f32 %v6018, %v6816
      %v6824 = vmul.f32 %v6019, %v6816
      %v6825 = vmul.f32 %v6020, %v6816
      %v6826 = vmul.f32 %v6021, %v6816
      %v6827 = vmul.f32 %v6022, %v6816
      %v6828 = vmul.f32 %v6023, %v6816
      %v6829 = vmul.f32 %v6024, %v6816
      %v6830 = vmul.f32 %v6025, %v6816
      %v6831 = vmul.f32 %v6026, %v6816
      %v6832 = vmul.f32 %v6027, %v6816
      %v6833 = vmul.f32 %v6028, %v6816
      %v6834 = vmul.f32 %v6029, %v6816
      %v6835 = vmul.f32 %v6030, %v6816
      %v6836 = vmul.f32 %v6031, %v6816
      %v6837 = vmul.f32 %v6032, %v6816
      %v6838 = vmul.f32 %v6033, %v6816
      %v6839 = vmul.f32 %v6034, %v6816
      %v6840 = vmul.f32 %v6035, %v6816
      %v6841 = vmul.f32 %v6036, %v6816
      %v6842 = vmul.f32 %v6037, %v6816
      %v6843 = vmul.f32 %v6038, %v6816
      %v6844 = vmul.f32 %v6039, %v6816
      %v6845 = vmul.f32 %v6040, %v6816
      %v6846 = vmul.f32 %v6041, %v6816
      %v6847 = vmul.f32 %v6042, %v6816
      %v6848 = vmul.f32 %v6043, %v6816
      %v6849 = vmul.f32 %v6044, %v6816
      %v6851 = vsel %vm6524, %v6818, 0
      %v6854 = vsel %vm6524, %v6819, 0
      %v6857 = vsel %vm6524, %v6820, 0
      %v6860 = vsel %vm6524, %v6821, 0
      %v6863 = vsel %vm6524, %v6822, 0
      %v6866 = vsel %vm6524, %v6823, 0
      %v6869 = vsel %vm6524, %v6824, 0
      %v6872 = vsel %vm6524, %v6825, 0
      %v6875 = vsel %vm6524, %v6826, 0
      %v6878 = vsel %vm6524, %v6827, 0
      %v6881 = vsel %vm6524, %v6828, 0
      %v6884 = vsel %vm6524, %v6829, 0
      %v6887 = vsel %vm6524, %v6830, 0
      %v6890 = vsel %vm6524, %v6831, 0
      %v6893 = vsel %vm6524, %v6832, 0
      %v6896 = vsel %vm6524, %v6833, 0
      %v6899 = vsel %vm6524, %v6834, 0
      %v6902 = vsel %vm6524, %v6835, 0
      %v6905 = vsel %vm6524, %v6836, 0
      %v6908 = vsel %vm6524, %v6837, 0
      %v6911 = vsel %vm6524, %v6838, 0
      %v6914 = vsel %vm6524, %v6839, 0
      %v6917 = vsel %vm6524, %v6840, 0
      %v6920 = vsel %vm6524, %v6841, 0
      %v6923 = vsel %vm6524, %v6842, 0
      %v6926 = vsel %vm6524, %v6843, 0
      %v6929 = vsel %vm6524, %v6844, 0
      %v6932 = vsel %vm6524, %v6845, 0
      %v6935 = vsel %vm6524, %v6846, 0
      %v6938 = vsel %vm6524, %v6847, 0
      %v6941 = vsel %vm6524, %v6848, 0
      %v6944 = vsel %vm6524, %v6849, 0
      %6946 = vmatprep.subr.mxu0 0.0
      %6947 = vmatpush1.msra.mxu0 %v5973
      %6948 = vmatprep.subr.mxu0 0.0
      %6949 = vmatpush1.msra.mxu0 %v5974
      %6950 = vmatprep.subr.mxu0 0.0
      %6951 = vmatpush1.msra.mxu0 %v5975
      %6952 = vmatprep.subr.mxu0 0.0
      %6953 = vmatpush1.msra.mxu0 %v5976
      %6954 = vmatprep.subr.mxu0 0.0
      %6955 = vmatpush1.msra.mxu0 0.0
      %6956 = vmatprep.subr.mxu0 0.0
      %6957 = vmatpush1.msra.mxu0 0.0
      %6958 = vmatprep.subr.mxu0 0.0
      %6959 = vmatpush1.msra.mxu0 0.0
      %6960 = vmatprep.subr.mxu0 0.0
      %6961 = vmatpush1.msra.mxu0 0.0
      %6962 = vmatprep.subr.mxu0 0.0
      %6963 = vmatpush1.msra.mxu0 0.0
      %6964 = vmatprep.subr.mxu0 0.0
      %6965 = vmatpush1.msra.mxu0 0.0
      %6966 = vmatprep.subr.mxu0 0.0
      %6967 = vmatpush1.msra.mxu0 0.0
      %6968 = vmatprep.subr.mxu0 0.0
      %6969 = vmatpush1.msra.mxu0 0.0
      %6970 = vmatprep.subr.mxu0 0.0
      %6971 = vmatpush1.msra.mxu0 0.0
      %6972 = vmatprep.subr.mxu0 0.0
      %6973 = vmatpush1.msra.mxu0 0.0
      %6974 = vmatprep.subr.mxu0 0.0
      %6975 = vmatpush1.msra.mxu0 0.0
      %6976 = vmatprep.subr.mxu0 0.0
      %6977 = vmatpush1.msra.mxu0 0.0
      %6978 = vmatprep.subr.mxu0 0.0
      %6979 = vmatpush1.msra.mxu0 0.0
      %6980 = vmatprep.subr.mxu0 0.0
      %6981 = vmatpush1.msra.mxu0 0.0
      %6982 = vmatprep.subr.mxu0 0.0
      %6983 = vmatpush1.msra.mxu0 0.0
      %6984 = vmatprep.subr.mxu0 0.0
      %6985 = vmatpush1.msra.mxu0 0.0
      %6986 = vmatprep.subr.mxu0 0.0
      %6987 = vmatpush1.msra.mxu0 0.0
      %6988 = vmatprep.subr.mxu0 0.0
      %6989 = vmatpush1.msra.mxu0 0.0
      %6990 = vmatprep.subr.mxu0 0.0
      %6991 = vmatpush1.msra.mxu0 0.0
      %6992 = vmatprep.subr.mxu0 0.0
      %6993 = vmatpush1.msra.mxu0 0.0
      %6994 = vmatprep.subr.mxu0 0.0
      %6995 = vmatpush1.msra.mxu0 0.0
      %6996 = vmatprep.subr.mxu0 0.0
      %6997 = vmatpush1.msra.mxu0 0.0
      %6998 = vmatprep.subr.mxu0 0.0
      %6999 = vmatpush1.msra.mxu0 0.0
      %7000 = vmatprep.subr.mxu0 0.0
      %7001 = vmatpush1.msra.mxu0 0.0
      %7002 = vmatprep.subr.mxu0 0.0
      %7003 = vmatpush1.msra.mxu0 0.0
      %7004 = vmatprep.subr.mxu0 0.0
      %7005 = vmatpush1.msra.mxu0 0.0
      %7006 = vmatprep.subr.mxu0 0.0
      %7007 = vmatpush1.msra.mxu0 0.0
      %7008 = vmatprep.subr.mxu0 0.0
      %7009 = vmatpush1.msra.mxu0 0.0
      %7010 = vmatprep.mubr.f32.mxu0 0.0
      %7011 = vmatmul.mubr.f32.gmra.mrb[0].mxu0 %v6851
      %v7012 = vpop.f32.mrb[0].mxu0
      %v7013 = vadd.f32 1e-15, %v7012
      %v7014 = vpop.f32.mrb[0].mxu0
      %7015 = vmatprep.mubr.f32.mxu0 0.0
      %7016 = vmatmul.mubr.f32.gmra.mrb[0].mxu0 %v6854
      %v7017 = vpop.f32.mrb[0].mxu0
      %v7018 = vadd.f32 1e-15, %v7017
      %v7019 = vpop.f32.mrb[0].mxu0
      %7020 = vmatprep.mubr.f32.mxu0 0.0
      %7021 = vmatmul.mubr.f32.gmra.mrb[0].mxu0 %v6857
      %v7022 = vpop.f32.mrb[0].mxu0
      %v7023 = vadd.f32 1e-15, %v7022
      %v7024 = vpop.f32.mrb[0].mxu0
      %7025 = vmatprep.mubr.f32.mxu0 0.0
      %7026 = vmatmul.mubr.f32.gmra.mrb[0].mxu0 %v6860
      %v7027 = vpop.f32.mrb[0].mxu0
      %v7028 = vadd.f32 1e-15, %v7027
      %v7029 = vpop.f32.mrb[0].mxu0
      %7030 = vmatprep.mubr.f32.mxu0 0.0
      %7031 = vmatmul.mubr.f32.gmra.mrb[0].mxu0 %v6863
      %v7032 = vpop.f32.mrb[0].mxu0
      %v7033 = vadd.f32 1e-15, %v7032
      %v7034 = vpop.f32.mrb[0].mxu0
      %7035 = vmatprep.mubr.f32.mxu0 0.0
      %7036 = vmatmul.mubr.f32.gmra.mrb[0].mxu0 %v6866
      %v7037 = vpop.f32.mrb[0].mxu0
      %v7038 = vadd.f32 1e-15, %v7037
      %v7039 = vpop.f32.mrb[0].mxu0
      %7040 = vmatprep.mubr.f32.mxu0 0.0
      %7041 = vmatmul.mubr.f32.gmra.mrb[0].mxu0 %v6869
      %v7042 = vpop.f32.mrb[0].mxu0
      %v7043 = vadd.f32 1e-15, %v7042
      %v7044 = vpop.f32.mrb[0].mxu0
      %7045 = vmatprep.mubr.f32.mxu0 0.0
      %7046 = vmatmul.mubr.f32.gmra.mrb[0].mxu0 %v6872
      %v7047 = vpop.f32.mrb[0].mxu0
      %v7048 = vadd.f32 1e-15, %v7047
      %v7049 = vpop.f32.mrb[0].mxu0
      %7050 = vmatprep.mubr.f32.mxu0 0.0
      %7051 = vmatmul.mubr.f32.gmra.mrb[0].mxu0 %v6875
      %v7052 = vpop.f32.mrb[0].mxu0
      %v7053 = vadd.f32 1e-15, %v7052
      %v7054 = vpop.f32.mrb[0].mxu0
      %7055 = vmatprep.mubr.f32.mxu0 0.0
      %7056 = vmatmul.mubr.f32.gmra.mrb[0].mxu0 %v6878
      %v7057 = vpop.f32.mrb[0].mxu0
      %v7058 = vadd.f32 1e-15, %v7057
      %v7059 = vpop.f32.mrb[0].mxu0
      %7060 = vmatprep.mubr.f32.mxu0 0.0
      %7061 = vmatmul.mubr.f32.gmra.mrb[0].mxu0 %v6881
      %v7062 = vpop.f32.mrb[0].mxu0
      %v7063 = vadd.f32 1e-15, %v7062
      %v7064 = vpop.f32.mrb[0].mxu0
      %7065 = vmatprep.mubr.f32.mxu0 0.0
      %7066 = vmatmul.mubr.f32.gmra.mrb[0].mxu0 %v6884
      %v7067 = vpop.f32.mrb[0].mxu0
      %v7068 = vadd.f32 1e-15, %v7067
      %v7069 = vpop.f32.mrb[0].mxu0
      %7070 = vmatprep.mubr.f32.mxu0 0.0
      %7071 = vmatmul.mubr.f32.gmra.mrb[0].mxu0 %v6887
      %v7072 = vpop.f32.mrb[0].mxu0
      %v7073 = vadd.f32 1e-15, %v7072
      %v7074 = vpop.f32.mrb[0].mxu0
      %7075 = vmatprep.mubr.f32.mxu0 0.0
      %7076 = vmatmul.mubr.f32.gmra.mrb[0].mxu0 %v6890
      %v7077 = vpop.f32.mrb[0].mxu0
      %v7078 = vadd.f32 1e-15, %v7077
      %v7079 = vpop.f32.mrb[0].mxu0
      %7080 = vmatprep.mubr.f32.mxu0 0.0
      %7081 = vmatmul.mubr.f32.gmra.mrb[0].mxu0 %v6893
      %v7082 = vpop.f32.mrb[0].mxu0
      %v7083 = vadd.f32 1e-15, %v7082
      %v7084 = vpop.f32.mrb[0].mxu0
      %7085 = vmatprep.mubr.f32.mxu0 0.0
      %7086 = vmatmul.mubr.f32.gmra.mrb[0].mxu0 %v6896
      %v7087 = vpop.f32.mrb[0].mxu0
      %v7088 = vadd.f32 1e-15, %v7087
      %v7089 = vpop.f32.mrb[0].mxu0
      %7090 = vmatprep.mubr.f32.mxu0 0.0
      %7091 = vmatmul.mubr.f32.gmra.mrb[0].mxu0 %v6899
      %v7092 = vpop.f32.mrb[0].mxu0
      %v7093 = vadd.f32 1e-15, %v7092
      %v7094 = vpop.f32.mrb[0].mxu0
      %7095 = vmatprep.mubr.f32.mxu0 0.0
      %7096 = vmatmul.mubr.f32.gmra.mrb[0].mxu0 %v6902
      %v7097 = vpop.f32.mrb[0].mxu0
      %v7098 = vadd.f32 1e-15, %v7097
      %v7099 = vpop.f32.mrb[0].mxu0
      %7100 = vmatprep.mubr.f32.mxu0 0.0
      %7101 = vmatmul.mubr.f32.gmra.mrb[0].mxu0 %v6905
      %v7102 = vpop.f32.mrb[0].mxu0
      %v7103 = vadd.f32 1e-15, %v7102
      %v7104 = vpop.f32.mrb[0].mxu0
      %7105 = vmatprep.mubr.f32.mxu0 0.0
      %7106 = vmatmul.mubr.f32.gmra.mrb[0].mxu0 %v6908
      %v7107 = vpop.f32.mrb[0].mxu0
      %v7108 = vadd.f32 1e-15, %v7107
      %v7109 = vpop.f32.mrb[0].mxu0
      %7110 = vmatprep.mubr.f32.mxu0 0.0
      %7111 = vmatmul.mubr.f32.gmra.mrb[0].mxu0 %v6911
      %v7112 = vpop.f32.mrb[0].mxu0
      %v7113 = vadd.f32 1e-15, %v7112
      %v7114 = vpop.f32.mrb[0].mxu0
      %7115 = vmatprep.mubr.f32.mxu0 0.0
      %7116 = vmatmul.mubr.f32.gmra.mrb[0].mxu0 %v6914
      %v7117 = vpop.f32.mrb[0].mxu0
      %v7118 = vadd.f32 1e-15, %v7117
      %v7119 = vpop.f32.mrb[0].mxu0
      %7120 = vmatprep.mubr.f32.mxu0 0.0
      %7121 = vmatmul.mubr.f32.gmra.mrb[0].mxu0 %v6917
      %v7122 = vpop.f32.mrb[0].mxu0
      %v7123 = vadd.f32 1e-15, %v7122
      %v7124 = vpop.f32.mrb[0].mxu0
      %7125 = vmatprep.mubr.f32.mxu0 0.0
      %7126 = vmatmul.mubr.f32.gmra.mrb[0].mxu0 %v6920
      %v7127 = vpop.f32.mrb[0].mxu0
      %v7128 = vadd.f32 1e-15, %v7127
      %v7129 = vpop.f32.mrb[0].mxu0
      %7130 = vmatprep.mubr.f32.mxu0 0.0
      %7131 = vmatmul.mubr.f32.gmra.mrb[0].mxu0 %v6923
      %v7132 = vpop.f32.mrb[0].mxu0
      %v7133 = vadd.f32 1e-15, %v7132
      %v7134 = vpop.f32.mrb[0].mxu0
      %7135 = vmatprep.mubr.f32.mxu0 0.0
      %7136 = vmatmul.mubr.f32.gmra.mrb[0].mxu0 %v6926
      %v7137 = vpop.f32.mrb[0].mxu0
      %v7138 = vadd.f32 1e-15, %v7137
      %v7139 = vpop.f32.mrb[0].mxu0
      %7140 = vmatprep.mubr.f32.mxu0 0.0
      %7141 = vmatmul.mubr.f32.gmra.mrb[0].mxu0 %v6929
      %v7142 = vpop.f32.mrb[0].mxu0
      %v7143 = vadd.f32 1e-15, %v7142
      %v7144 = vpop.f32.mrb[0].mxu0
      %7145 = vmatprep.mubr.f32.mxu0 0.0
      %7146 = vmatmul.mubr.f32.gmra.mrb[0].mxu0 %v6932
      %v7147 = vpop.f32.mrb[0].mxu0
      %v7148 = vadd.f32 1e-15, %v7147
      %v7149 = vpop.f32.mrb[0].mxu0
      %7150 = vmatprep.mubr.f32.mxu0 0.0
      %7151 = vmatmul.mubr.f32.gmra.mrb[0].mxu0 %v6935
      %v7152 = vpop.f32.mrb[0].mxu0
      %v7153 = vadd.f32 1e-15, %v7152
      %v7154 = vpop.f32.mrb[0].mxu0
      %7155 = vmatprep.mubr.f32.mxu0 0.0
      %7156 = vmatmul.mubr.f32.gmra.mrb[0].mxu0 %v6938
      %v7157 = vpop.f32.mrb[0].mxu0
      %v7158 = vadd.f32 1e-15, %v7157
      %v7159 = vpop.f32.mrb[0].mxu0
      %7160 = vmatprep.mubr.f32.mxu0 0.0
      %7161 = vmatmul.mubr.f32.gmra.mrb[0].mxu0 %v6941
      %v7162 = vpop.f32.mrb[0].mxu0
      %v7163 = vadd.f32 1e-15, %v7162
      %v7164 = vpop.f32.mrb[0].mxu0
      %7165 = vmatprep.mubr.f32.mxu0 0.0
      %7166 = vmatmul.mubr.f32.gmra.mrb[0].mxu0 %v6944
      %v7167 = vpop.f32.mrb[0].mxu0
      %v7168 = vadd.f32 1e-15, %v7167
      %v7169 = vpop.f32.mrb[0].mxu0
      %7170 = vdwg.mxu0
      %v7171 = vrcp.pop %v7013
      %v7172 = vmul.f32 %v6656, %v7171
      %v7173 = vrcp.pop %v7018
      %v7174 = vmul.f32 %v6661, %v7173
      %v7175 = vrcp.pop %v7023
      %v7176 = vmul.f32 %v6666, %v7175
      %v7177 = vrcp.pop %v7028
      %v7178 = vmul.f32 %v6671, %v7177
      %v7179 = vrcp.pop %v7033
      %v7180 = vmul.f32 %v6676, %v7179
      %v7181 = vrcp.pop %v7038
      %v7182 = vmul.f32 %v6681, %v7181
      %v7183 = vrcp.pop %v7043
      %v7184 = vmul.f32 %v6686, %v7183
      %v7185 = vrcp.pop %v7048
      %v7186 = vmul.f32 %v6691, %v7185
      %v7187 = vrcp.pop %v7053
      %v7188 = vmul.f32 %v6696, %v7187
      %v7189 = vrcp.pop %v7058
      %v7190 = vmul.f32 %v6701, %v7189
      %v7191 = vrcp.pop %v7063
      %v7192 = vmul.f32 %v6706, %v7191
      %v7193 = vrcp.pop %v7068
      %v7194 = vmul.f32 %v6711, %v7193
      %v7195 = vrcp.pop %v7073
      %v7196 = vmul.f32 %v6716, %v7195
      %v7197 = vrcp.pop %v7078
      %v7198 = vmul.f32 %v6721, %v7197
      %v7199 = vrcp.pop %v7083
      %v7200 = vmul.f32 %v6726, %v7199
      %v7201 = vrcp.pop %v7088
      %v7202 = vmul.f32 %v6731, %v7201
      %v7203 = vrcp.pop %v7093
      %v7204 = vmul.f32 %v6736, %v7203
      %v7205 = vrcp.pop %v7098
      %v7206 = vmul.f32 %v6741, %v7205
      %v7207 = vrcp.pop %v7103
      %v7208 = vmul.f32 %v6746, %v7207
      %v7209 = vrcp.pop %v7108
      %v7210 = vmul.f32 %v6751, %v7209
      %v7211 = vrcp.pop %v7113
      %v7212 = vmul.f32 %v6756, %v7211
      %v7213 = vrcp.pop %v7118
      %v7214 = vmul.f32 %v6761, %v7213
      %v7215 = vrcp.pop %v7123
      %v7216 = vmul.f32 %v6766, %v7215
      %v7217 = vrcp.pop %v7128
      %v7218 = vmul.f32 %v6771, %v7217
      %v7219 = vrcp.pop %v7133
      %v7220 = vmul.f32 %v6776, %v7219
      %v7221 = vrcp.pop %v7138
      %v7222 = vmul.f32 %v6781, %v7221
      %v7223 = vrcp.pop %v7143
      %v7224 = vmul.f32 %v6786, %v7223
      %v7225 = vrcp.pop %v7148
      %v7226 = vmul.f32 %v6791, %v7225
      %v7227 = vrcp.pop %v7153
      %v7228 = vmul.f32 %v6796, %v7227
      %v7229 = vrcp.pop %v7158
      %v7230 = vmul.f32 %v6801, %v7229
      %v7231 = vrcp.pop %v7163
      %v7232 = vmul.f32 %v6806, %v7231
      %v7233 = vrcp.pop %v7168
      %v7234 = vmul.f32 %v6811, %v7233
      %v7235 = vld [vmem:[%s6] sm:$0xff]
      %v7236 = vld [vmem:[%s6 + $0x8] sm:$0xff]
      %v7237 = vld [vmem:[%s6 + $0x10] sm:$0xff]
      %v7238 = vld [vmem:[%s6 + $0x18] sm:$0xff]
      %v7239 = vmax.f32 %v5815, 0.0
      %v7240 = vmax.f32 %v5820, 0.0
      %v7241 = vmax.f32 %v5825, 0.0
      %v7242 = vmax.f32 %v5830, 0.0
      %v7243 = vmax.f32 %v5835, 0.0
      %v7244 = vmax.f32 %v5840, 0.0
      %v7245 = vmax.f32 %v5845, 0.0
      %v7246 = vmax.f32 %v5850, 0.0
      %v7247 = vmax.f32 %v5855, 0.0
      %v7248 = vmax.f32 %v5860, 0.0
      %v7249 = vmax.f32 %v5865, 0.0
      %v7250 = vmax.f32 %v5870, 0.0
      %v7251 = vmax.f32 %v5875, 0.0
      %v7252 = vmax.f32 %v5880, 0.0
      %v7253 = vmax.f32 %v5885, 0.0
      %v7254 = vmax.f32 %v5890, 0.0
      %v7255 = vmax.f32 %v5895, 0.0
      %v7256 = vmax.f32 %v5900, 0.0
      %v7257 = vmax.f32 %v5905, 0.0
      %v7258 = vmax.f32 %v5910, 0.0
      %v7259 = vmax.f32 %v5915, 0.0
      %v7260 = vmax.f32 %v5920, 0.0
      %v7261 = vmax.f32 %v5925, 0.0
      %v7262 = vmax.f32 %v5930, 0.0
      %v7263 = vmax.f32 %v5935, 0.0
      %v7264 = vmax.f32 %v5940, 0.0
      %v7265 = vmax.f32 %v5945, 0.0
      %v7266 = vmax.f32 %v5950, 0.0
      %v7267 = vmax.f32 %v5955, 0.0
      %v7268 = vmax.f32 %v5960, 0.0
      %v7269 = vmax.f32 %v5965, 0.0
      %v7270 = vmax.f32 %v5970, 0.0
      %7303 = vrot.lane.b32.xlu0 %v7239, 96
      %v7304 = vpop.permute.xlu0 %7303
      %7305 = vrot.lane.b32.xlu0 %v7240, 96
      %v7306 = vpop.permute.xlu0 %7305
      %7307 = vrot.lane.b32.xlu0 %v7241, 96
      %v7308 = vpop.permute.xlu0 %7307
      %7309 = vrot.lane.b32.xlu0 %v7242, 96
      %v7310 = vpop.permute.xlu0 %7309
      %7311 = vrot.lane.b32.xlu0 %v7243, 96
      %v7312 = vpop.permute.xlu0 %7311
      %7313 = vrot.lane.b32.xlu0 %v7244, 96
      %v7314 = vpop.permute.xlu0 %7313
      %7315 = vrot.lane.b32.xlu0 %v7245, 96
      %v7316 = vpop.permute.xlu0 %7315
      %7317 = vrot.lane.b32.xlu0 %v7246, 96
      %v7318 = vpop.permute.xlu0 %7317
      %7319 = vrot.lane.b32.xlu0 %v7247, 96
      %v7320 = vpop.permute.xlu0 %7319
      %7321 = vrot.lane.b32.xlu0 %v7248, 96
      %v7322 = vpop.permute.xlu0 %7321
      %7323 = vrot.lane.b32.xlu0 %v7249, 96
      %v7324 = vpop.permute.xlu0 %7323
      %7325 = vrot.lane.b32.xlu0 %v7250, 96
      %v7326 = vpop.permute.xlu0 %7325
      %7327 = vrot.lane.b32.xlu0 %v7251, 96
      %v7328 = vpop.permute.xlu0 %7327
      %7329 = vrot.lane.b32.xlu0 %v7252, 96
      %v7330 = vpop.permute.xlu0 %7329
      %7331 = vrot.lane.b32.xlu0 %v7253, 96
      %v7332 = vpop.permute.xlu0 %7331
      %7333 = vrot.lane.b32.xlu0 %v7254, 96
      %v7334 = vpop.permute.xlu0 %7333
      %7335 = vrot.lane.b32.xlu0 %v7255, 96
      %v7336 = vpop.permute.xlu0 %7335
      %7337 = vrot.lane.b32.xlu0 %v7256, 96
      %v7338 = vpop.permute.xlu0 %7337
      %7339 = vrot.lane.b32.xlu0 %v7257, 96
      %v7340 = vpop.permute.xlu0 %7339
      %7341 = vrot.lane.b32.xlu0 %v7258, 96
      %v7342 = vpop.permute.xlu0 %7341
      %7343 = vrot.lane.b32.xlu0 %v7259, 96
      %v7344 = vpop.permute.xlu0 %7343
      %7345 = vrot.lane.b32.xlu0 %v7260, 96
      %v7346 = vpop.permute.xlu0 %7345
      %7347 = vrot.lane.b32.xlu0 %v7261, 96
      %v7348 = vpop.permute.xlu0 %7347
      %7349 = vrot.lane.b32.xlu0 %v7262, 96
      %v7350 = vpop.permute.xlu0 %7349
      %7351 = vrot.lane.b32.xlu0 %v7263, 96
      %v7352 = vpop.permute.xlu0 %7351
      %7353 = vrot.lane.b32.xlu0 %v7264, 96
      %v7354 = vpop.permute.xlu0 %7353
      %7355 = vrot.lane.b32.xlu0 %v7265, 96
      %v7356 = vpop.permute.xlu0 %7355
      %7357 = vrot.lane.b32.xlu0 %v7266, 96
      %v7358 = vpop.permute.xlu0 %7357
      %7359 = vrot.lane.b32.xlu0 %v7267, 96
      %v7360 = vpop.permute.xlu0 %7359
      %7361 = vrot.lane.b32.xlu0 %v7268, 96
      %v7362 = vpop.permute.xlu0 %7361
      %7363 = vrot.lane.b32.xlu0 %v7269, 96
      %v7364 = vpop.permute.xlu0 %7363
      %7365 = vrot.lane.b32.xlu0 %v7270, 96
      %v7366 = vpop.permute.xlu0 %7365
      %7399 = vxpose.xlu0.b32.start [1/16] %v7304, 128
      %7400 = vxpose.xlu0.b32.cont [2/16] %v7306, 128
      %7401 = vxpose.xlu0.b32.cont [3/16] %v7308, 128
      %7402 = vxpose.xlu0.b32.cont [4/16] %v7310, 128
      %7403 = vxpose.xlu0.b32.cont [5/16] %v7312, 128
      %7404 = vxpose.xlu0.b32.cont [6/16] %v7314, 128
      %7405 = vxpose.xlu0.b32.cont [7/16] %v7316, 128
      %7406 = vxpose.xlu0.b32.cont [8/16] %v7318, 128
      %7407 = vxpose.xlu0.b32.cont [9/16] %v7320, 128
      %7408 = vxpose.xlu0.b32.cont [10/16] %v7322, 128
      %7409 = vxpose.xlu0.b32.cont [11/16] %v7324, 128
      %7410 = vxpose.xlu0.b32.cont [12/16] %v7326, 128
      %7411 = vxpose.xlu0.b32.cont [13/16] %v7328, 128
      %7412 = vxpose.xlu0.b32.cont [14/16] %v7330, 128
      %7413 = vxpose.xlu0.b32.cont [15/16] %v7332, 128
      %7414 = vxpose.xlu0.b32.end [16/16] %v7334, 128
      %v7415 = vpop.trf.xlu0
      %v7416 = vpop.trf.xlu0
      %v7417 = vpop.trf.xlu0
      %v7418 = vpop.trf.xlu0
      %v7419 = vpop.trf.xlu0
      %v7420 = vpop.trf.xlu0
      %v7421 = vpop.trf.xlu0
      %v7422 = vpop.trf.xlu0
      %v7423 = vpop.trf.xlu0
      %v7424 = vpop.trf.xlu0
      %v7425 = vpop.trf.xlu0
      %v7426 = vpop.trf.xlu0
      %v7427 = vpop.trf.xlu0
      %v7428 = vpop.trf.xlu0
      %v7429 = vpop.trf.xlu0
      %v7430 = vpop.trf.xlu0
      %7431 = vxpose.xlu0.b32.start [1/16] %v7336, 128
      %7432 = vxpose.xlu0.b32.cont [2/16] %v7338, 128
      %7433 = vxpose.xlu0.b32.cont [3/16] %v7340, 128
      %7434 = vxpose.xlu0.b32.cont [4/16] %v7342, 128
      %7435 = vxpose.xlu0.b32.cont [5/16] %v7344, 128
      %7436 = vxpose.xlu0.b32.cont [6/16] %v7346, 128
      %7437 = vxpose.xlu0.b32.cont [7/16] %v7348, 128
      %7438 = vxpose.xlu0.b32.cont [8/16] %v7350, 128
      %7439 = vxpose.xlu0.b32.cont [9/16] %v7352, 128
      %7440 = vxpose.xlu0.b32.cont [10/16] %v7354, 128
      %7441 = vxpose.xlu0.b32.cont [11/16] %v7356, 128
      %7442 = vxpose.xlu0.b32.cont [12/16] %v7358, 128
      %7443 = vxpose.xlu0.b32.cont [13/16] %v7360, 128
      %7444 = vxpose.xlu0.b32.cont [14/16] %v7362, 128
      %7445 = vxpose.xlu0.b32.cont [15/16] %v7364, 128
      %7446 = vxpose.xlu0.b32.end [16/16] %v7366, 128
      %v7447 = vpop.trf.xlu0
      %v7448 = vpop.trf.xlu0
      %v7449 = vpop.trf.xlu0
      %v7450 = vpop.trf.xlu0
      %v7451 = vpop.trf.xlu0
      %v7452 = vpop.trf.xlu0
      %v7453 = vpop.trf.xlu0
      %v7454 = vpop.trf.xlu0
      %v7455 = vpop.trf.xlu0
      %v7456 = vpop.trf.xlu0
      %v7457 = vpop.trf.xlu0
      %v7458 = vpop.trf.xlu0
      %v7459 = vpop.trf.xlu0
      %v7460 = vpop.trf.xlu0
      %v7461 = vpop.trf.xlu0
      %v7462 = vpop.trf.xlu0
      %7495 = vrot.lane.b32.xlu0 %v5815, 64
      %v7496 = vpop.permute.xlu0 %7495
      %7497 = vrot.lane.b32.xlu0 %v5820, 64
      %v7498 = vpop.permute.xlu0 %7497
      %7499 = vrot.lane.b32.xlu0 %v5825, 64
      %v7500 = vpop.permute.xlu0 %7499
      %7501 = vrot.lane.b32.xlu0 %v5830, 64
      %v7502 = vpop.permute.xlu0 %7501
      %7503 = vrot.lane.b32.xlu0 %v5835, 64
      %v7504 = vpop.permute.xlu0 %7503
      %7505 = vrot.lane.b32.xlu0 %v5840, 64
      %v7506 = vpop.permute.xlu0 %7505
      %7507 = vrot.lane.b32.xlu0 %v5845, 64
      %v7508 = vpop.permute.xlu0 %7507
      %7509 = vrot.lane.b32.xlu0 %v5850, 64
      %v7510 = vpop.permute.xlu0 %7509
      %7511 = vrot.lane.b32.xlu0 %v5855, 64
      %v7512 = vpop.permute.xlu0 %7511
      %7513 = vrot.lane.b32.xlu0 %v5860, 64
      %v7514 = vpop.permute.xlu0 %7513
      %7515 = vrot.lane.b32.xlu0 %v5865, 64
      %v7516 = vpop.permute.xlu0 %7515
      %7517 = vrot.lane.b32.xlu0 %v5870, 64
      %v7518 = vpop.permute.xlu0 %7517
      %7519 = vrot.lane.b32.xlu0 %v5875, 64
      %v7520 = vpop.permute.xlu0 %7519
      %7521 = vrot.lane.b32.xlu0 %v5880, 64
      %v7522 = vpop.permute.xlu0 %7521
      %7523 = vrot.lane.b32.xlu0 %v5885, 64
      %v7524 = vpop.permute.xlu0 %7523
      %7525 = vrot.lane.b32.xlu0 %v5890, 64
      %v7526 = vpop.permute.xlu0 %7525
      %7527 = vrot.lane.b32.xlu0 %v5895, 64
      %v7528 = vpop.permute.xlu0 %7527
      %7529 = vrot.lane.b32.xlu0 %v5900, 64
      %v7530 = vpop.permute.xlu0 %7529
      %7531 = vrot.lane.b32.xlu0 %v5905, 64
      %v7532 = vpop.permute.xlu0 %7531
      %7533 = vrot.lane.b32.xlu0 %v5910, 64
      %v7534 = vpop.permute.xlu0 %7533
      %7535 = vrot.lane.b32.xlu0 %v5915, 64
      %v7536 = vpop.permute.xlu0 %7535
      %7537 = vrot.lane.b32.xlu0 %v5920, 64
      %v7538 = vpop.permute.xlu0 %7537
      %7539 = vrot.lane.b32.xlu0 %v5925, 64
      %v7540 = vpop.permute.xlu0 %7539
      %7541 = vrot.lane.b32.xlu0 %v5930, 64
      %v7542 = vpop.permute.xlu0 %7541
      %7543 = vrot.lane.b32.xlu0 %v5935, 64
      %v7544 = vpop.permute.xlu0 %7543
      %7545 = vrot.lane.b32.xlu0 %v5940, 64
      %v7546 = vpop.permute.xlu0 %7545
      %7547 = vrot.lane.b32.xlu0 %v5945, 64
      %v7548 = vpop.permute.xlu0 %7547
      %7549 = vrot.lane.b32.xlu0 %v5950, 64
      %v7550 = vpop.permute.xlu0 %7549
      %7551 = vrot.lane.b32.xlu0 %v5955, 64
      %v7552 = vpop.permute.xlu0 %7551
      %7553 = vrot.lane.b32.xlu0 %v5960, 64
      %v7554 = vpop.permute.xlu0 %7553
      %7555 = vrot.lane.b32.xlu0 %v5965, 64
      %v7556 = vpop.permute.xlu0 %7555
      %7557 = vrot.lane.b32.xlu0 %v5970, 64
      %v7558 = vpop.permute.xlu0 %7557
      %7591 = vmatprep.subr.mxu0 0.0
      %7592 = vmatpush1.msra.mxu0 %v7496
      %7593 = vmatprep.subr.mxu0 0.0
      %7594 = vmatpush1.msra.mxu0 %v7498
      %7595 = vmatprep.subr.mxu0 0.0
      %7596 = vmatpush1.msra.mxu0 %v7500
      %7597 = vmatprep.subr.mxu0 0.0
      %7598 = vmatpush1.msra.mxu0 %v7502
      %7599 = vmatprep.subr.mxu0 0.0
      %7600 = vmatpush1.msra.mxu0 %v7504
      %7601 = vmatprep.subr.mxu0 0.0
      %7602 = vmatpush1.msra.mxu0 %v7506
      %7603 = vmatprep.subr.mxu0 0.0
      %7604 = vmatpush1.msra.mxu0 %v7508
      %7605 = vmatprep.subr.mxu0 0.0
      %7606 = vmatpush1.msra.mxu0 %v7510
      %7607 = vmatprep.subr.mxu0 0.0
      %7608 = vmatpush1.msra.mxu0 %v7512
      %7609 = vmatprep.subr.mxu0 0.0
      %7610 = vmatpush1.msra.mxu0 %v7514
      %7611 = vmatprep.subr.mxu0 0.0
      %7612 = vmatpush1.msra.mxu0 %v7516
      %7613 = vmatprep.subr.mxu0 0.0
      %7614 = vmatpush1.msra.mxu0 %v7518
      %7615 = vmatprep.subr.mxu0 0.0
      %7616 = vmatpush1.msra.mxu0 %v7520
      %7617 = vmatprep.subr.mxu0 0.0
      %7618 = vmatpush1.msra.mxu0 %v7522
      %7619 = vmatprep.subr.mxu0 0.0
      %7620 = vmatpush1.msra.mxu0 %v7524
      %7621 = vmatprep.subr.mxu0 0.0
      %7622 = vmatpush1.msra.mxu0 %v7526
      %7623 = vmatprep.subr.mxu0 0.0
      %7624 = vmatpush1.msra.mxu0 %v7528
      %7625 = vmatprep.subr.mxu0 0.0
      %7626 = vmatpush1.msra.mxu0 %v7530
      %7627 = vmatprep.subr.mxu0 0.0
      %7628 = vmatpush1.msra.mxu0 %v7532
      %7629 = vmatprep.subr.mxu0 0.0
      %7630 = vmatpush1.msra.mxu0 %v7534
      %7631 = vmatprep.subr.mxu0 0.0
      %7632 = vmatpush1.msra.mxu0 %v7536
      %7633 = vmatprep.subr.mxu0 0.0
      %7634 = vmatpush1.msra.mxu0 %v7538
      %7635 = vmatprep.subr.mxu0 0.0
      %7636 = vmatpush1.msra.mxu0 %v7540
      %7637 = vmatprep.subr.mxu0 0.0
      %7638 = vmatpush1.msra.mxu0 %v7542
      %7639 = vmatprep.subr.mxu0 0.0
      %7640 = vmatpush1.msra.mxu0 %v7544
      %7641 = vmatprep.subr.mxu0 0.0
      %7642 = vmatpush1.msra.mxu0 %v7546
      %7643 = vmatprep.subr.mxu0 0.0
      %7644 = vmatpush1.msra.mxu0 %v7548
      %7645 = vmatprep.subr.mxu0 0.0
      %7646 = vmatpush1.msra.mxu0 %v7550
      %7647 = vmatprep.subr.mxu0 0.0
      %7648 = vmatpush1.msra.mxu0 %v7552
      %7649 = vmatprep.subr.mxu0 0.0
      %7650 = vmatpush1.msra.mxu0 %v7554
      %7651 = vmatprep.subr.mxu0 0.0
      %7652 = vmatpush1.msra.mxu0 %v7556
      %7653 = vmatprep.subr.mxu0 0.0
      %7654 = vmatpush1.msra.mxu0 %v7558
      %7655 = vmatprep.mubr.f32.mxu0 %v7447
      %7656 = vmatmul.mubr.f32.gmra.mrb[0].mxu0 %v7415
      %v7657 = vpop.f32.mrb[0].mxu0
      %v7658 = vadd.f32 0.0, %v7657
      %v7659 = vpop.f32.mrb[0].mxu0
      %7660 = vmatprep.mubr.f32.mxu0 %v7448
      %7661 = vmatmul.mubr.f32.gmra.mrb[0].mxu0 %v7416
      %v7662 = vpop.f32.mrb[0].mxu0
      %v7663 = vadd.f32 0.0, %v7662
      %v7664 = vpop.f32.mrb[0].mxu0
      %7665 = vmatprep.mubr.f32.mxu0 %v7449
      %7666 = vmatmul.mubr.f32.gmra.mrb[0].mxu0 %v7417
      %v7667 = vpop.f32.mrb[0].mxu0
      %v7668 = vadd.f32 0.0, %v7667
      %v7669 = vpop.f32.mrb[0].mxu0
      %7670 = vmatprep.mubr.f32.mxu0 %v7450
      %7671 = vmatmul.mubr.f32.gmra.mrb[0].mxu0 %v7418
      %v7672 = vpop.f32.mrb[0].mxu0
      %v7673 = vadd.f32 0.0, %v7672
      %v7674 = vpop.f32.mrb[0].mxu0
      %7675 = vdwg.mxu0
      %v7676 = vsel %vm6450, %v7239, 0.0
      %v7677 = vsel %vm6450, %v7240, 0.0
      %v7678 = vadd.f32 %v7676, %v7677
      %v7679 = vsel %vm6450, %v7241, 0.0
      %v7680 = vadd.f32 %v7678, %v7679
      %v7681 = vsel %vm6450, %v7242, 0.0
      %v7682 = vadd.f32 %v7680, %v7681
      %v7683 = vsel %vm6450, %v7243, 0.0
      %v7684 = vadd.f32 %v7682, %v7683
      %v7685 = vsel %vm6450, %v7244, 0.0
      %v7686 = vadd.f32 %v7684, %v7685
      %v7687 = vsel %vm6450, %v7245, 0.0
      %v7688 = vadd.f32 %v7686, %v7687
      %v7689 = vsel %vm6450, %v7246, 0.0
      %v7690 = vadd.f32 %v7688, %v7689
      %v7691 = vsel %vm6450, %v7247, 0.0
      %v7692 = vadd.f32 %v7690, %v7691
      %v7693 = vsel %vm6450, %v7248, 0.0
      %v7694 = vadd.f32 %v7692, %v7693
      %v7695 = vsel %vm6450, %v7249, 0.0
      %v7696 = vadd.f32 %v7694, %v7695
      %v7697 = vsel %vm6450, %v7250, 0.0
      %v7698 = vadd.f32 %v7696, %v7697
      %v7699 = vsel %vm6450, %v7251, 0.0
      %v7700 = vadd.f32 %v7698, %v7699
      %v7701 = vsel %vm6450, %v7252, 0.0
      %v7702 = vadd.f32 %v7700, %v7701
      %v7703 = vsel %vm6450, %v7253, 0.0
      %v7704 = vadd.f32 %v7702, %v7703
      %v7705 = vsel %vm6450, %v7254, 0.0
      %v7706 = vadd.f32 %v7704, %v7705
      %v7707 = vsel %vm6450, %v7255, 0.0
      %v7708 = vadd.f32 %v7706, %v7707
      %v7709 = vsel %vm6450, %v7256, 0.0
      %v7710 = vadd.f32 %v7708, %v7709
      %v7711 = vsel %vm6450, %v7257, 0.0
      %v7712 = vadd.f32 %v7710, %v7711
      %v7713 = vsel %vm6450, %v7258, 0.0
      %v7714 = vadd.f32 %v7712, %v7713
      %v7715 = vsel %vm6450, %v7259, 0.0
      %v7716 = vadd.f32 %v7714, %v7715
      %v7717 = vsel %vm6450, %v7260, 0.0
      %v7718 = vadd.f32 %v7716, %v7717
      %v7719 = vsel %vm6450, %v7261, 0.0
      %v7720 = vadd.f32 %v7718, %v7719
      %v7721 = vsel %vm6450, %v7262, 0.0
      %v7722 = vadd.f32 %v7720, %v7721
      %v7723 = vsel %vm6450, %v7263, 0.0
      %v7724 = vadd.f32 %v7722, %v7723
      %v7725 = vsel %vm6450, %v7264, 0.0
      %v7726 = vadd.f32 %v7724, %v7725
      %v7727 = vsel %vm6450, %v7265, 0.0
      %v7728 = vadd.f32 %v7726, %v7727
      %v7729 = vsel %vm6450, %v7266, 0.0
      %v7730 = vadd.f32 %v7728, %v7729
      %v7731 = vsel %vm6450, %v7267, 0.0
      %v7732 = vadd.f32 %v7730, %v7731
      %v7733 = vsel %vm6450, %v7268, 0.0
      %v7734 = vadd.f32 %v7732, %v7733
      %v7735 = vsel %vm6450, %v7269, 0.0
      %v7736 = vadd.f32 %v7734, %v7735
      %v7737 = vsel %vm6450, %v7270, 0.0
      %v7738 = vadd.f32 %v7736, %v7737
      %v7739 = vrot.slane %v7738, 4
      %v7740 = vadd.f32 %v7738, %v7739
      %v7741 = vrot.slane %v7740, 2
      %v7742 = vadd.f32 %v7740, %v7741
      %v7743 = vrot.slane %v7742, 1
      %v7744 = vadd.f32 %v7742, %v7743
      %v7745 = vmul.f32 %v7658, %v5973
      %v7746 = vmul.f32 %v7663, %v5974
      %v7747 = vmul.f32 %v7668, %v5975
      %v7748 = vmul.f32 %v7673, %v5976
      %v7749 = vsel %vm6524, %v7239, 0
      %v7751 = vsel %vm6524, %v7240, 0
      %v7753 = vsel %vm6524, %v7241, 0
      %v7755 = vsel %vm6524, %v7242, 0
      %v7757 = vsel %vm6524, %v7243, 0
      %v7759 = vsel %vm6524, %v7244, 0
      %v7761 = vsel %vm6524, %v7245, 0
      %v7763 = vsel %vm6524, %v7246, 0
      %v7765 = vsel %vm6524, %v7247, 0
      %v7767 = vsel %vm6524, %v7248, 0
      %v7769 = vsel %vm6524, %v7249, 0
      %v7771 = vsel %vm6524, %v7250, 0
      %v7773 = vsel %vm6524, %v7251, 0
      %v7775 = vsel %vm6524, %v7252, 0
      %v7777 = vsel %vm6524, %v7253, 0
      %v7779 = vsel %vm6524, %v7254, 0
      %v7781 = vsel %vm6524, %v7255, 0
      %v7783 = vsel %vm6524, %v7256, 0
      %v7785 = vsel %vm6524, %v7257, 0
      %v7787 = vsel %vm6524, %v7258, 0
      %v7789 = vsel %vm6524, %v7259, 0
      %v7791 = vsel %vm6524, %v7260, 0
      %v7793 = vsel %vm6524, %v7261, 0
      %v7795 = vsel %vm6524, %v7262, 0
      %v7797 = vsel %vm6524, %v7263, 0
      %v7799 = vsel %vm6524, %v7264, 0
      %v7801 = vsel %vm6524, %v7265, 0
      %v7803 = vsel %vm6524, %v7266, 0
      %v7805 = vsel %vm6524, %v7267, 0
      %v7807 = vsel %vm6524, %v7268, 0
      %v7809 = vsel %vm6524, %v7269, 0
      %v7811 = vsel %vm6524, %v7270, 0
      %7813 = vmatprep.subr.mxu0 0.0
      %7814 = vmatpush1.msra.mxu0 %v7745
      %7815 = vmatprep.subr.mxu0 0.0
      %7816 = vmatpush1.msra.mxu0 %v7746
      %7817 = vmatprep.subr.mxu0 0.0
      %7818 = vmatpush1.msra.mxu0 %v7747
      %7819 = vmatprep.subr.mxu0 0.0
      %7820 = vmatpush1.msra.mxu0 %v7748
      %7821 = vmatprep.subr.mxu0 0.0
      %7822 = vmatpush1.msra.mxu0 0.0
      %7823 = vmatprep.subr.mxu0 0.0
      %7824 = vmatpush1.msra.mxu0 0.0
      %7825 = vmatprep.subr.mxu0 0.0
      %7826 = vmatpush1.msra.mxu0 0.0
      %7827 = vmatprep.subr.mxu0 0.0
      %7828 = vmatpush1.msra.mxu0 0.0
      %7829 = vmatprep.subr.mxu0 0.0
      %7830 = vmatpush1.msra.mxu0 0.0
      %7831 = vmatprep.subr.mxu0 0.0
      %7832 = vmatpush1.msra.mxu0 0.0
      %7833 = vmatprep.subr.mxu0 0.0
      %7834 = vmatpush1.msra.mxu0 0.0
      %7835 = vmatprep.subr.mxu0 0.0
      %7836 = vmatpush1.msra.mxu0 0.0
      %7837 = vmatprep.subr.mxu0 0.0
      %7838 = vmatpush1.msra.mxu0 0.0
      %7839 = vmatprep.subr.mxu0 0.0
      %7840 = vmatpush1.msra.mxu0 0.0
      %7841 = vmatprep.subr.mxu0 0.0
      %7842 = vmatpush1.msra.mxu0 0.0
      %7843 = vmatprep.subr.mxu0 0.0
      %7844 = vmatpush1.msra.mxu0 0.0
      %7845 = vmatprep.subr.mxu0 0.0
      %7846 = vmatpush1.msra.mxu0 0.0
      %7847 = vmatprep.subr.mxu0 0.0
      %7848 = vmatpush1.msra.mxu0 0.0
      %7849 = vmatprep.subr.mxu0 0.0
      %7850 = vmatpush1.msra.mxu0 0.0
      %7851 = vmatprep.subr.mxu0 0.0
      %7852 = vmatpush1.msra.mxu0 0.0
      %7853 = vmatprep.subr.mxu0 0.0
      %7854 = vmatpush1.msra.mxu0 0.0
      %7855 = vmatprep.subr.mxu0 0.0
      %7856 = vmatpush1.msra.mxu0 0.0
      %7857 = vmatprep.subr.mxu0 0.0
      %7858 = vmatpush1.msra.mxu0 0.0
      %7859 = vmatprep.subr.mxu0 0.0
      %7860 = vmatpush1.msra.mxu0 0.0
      %7861 = vmatprep.subr.mxu0 0.0
      %7862 = vmatpush1.msra.mxu0 0.0
      %7863 = vmatprep.subr.mxu0 0.0
      %7864 = vmatpush1.msra.mxu0 0.0
      %7865 = vmatprep.subr.mxu0 0.0
      %7866 = vmatpush1.msra.mxu0 0.0
      %7867 = vmatprep.subr.mxu0 0.0
      %7868 = vmatpush1.msra.mxu0 0.0
      %7869 = vmatprep.subr.mxu0 0.0
      %7870 = vmatpush1.msra.mxu0 0.0
      %7871 = vmatprep.subr.mxu0 0.0
      %7872 = vmatpush1.msra.mxu0 0.0
      %7873 = vmatprep.subr.mxu0 0.0
      %7874 = vmatpush1.msra.mxu0 0.0
      %7875 = vmatprep.subr.mxu0 0.0
      %7876 = vmatpush1.msra.mxu0 0.0
      %7877 = vmatprep.mubr.f32.mxu0 0.0
      %7878 = vmatmul.mubr.f32.gmra.mrb[0].mxu0 %v7749
      %v7879 = vpop.f32.mrb[0].mxu0
      %v7880 = vadd.f32 0.0, %v7879
      %v7881 = vpop.f32.mrb[0].mxu0
      %7882 = vmatprep.mubr.f32.mxu0 0.0
      %7883 = vmatmul.mubr.f32.gmra.mrb[0].mxu0 %v7751
      %v7884 = vpop.f32.mrb[0].mxu0
      %v7885 = vadd.f32 0.0, %v7884
      %v7886 = vpop.f32.mrb[0].mxu0
      %7887 = vmatprep.mubr.f32.mxu0 0.0
      %7888 = vmatmul.mubr.f32.gmra.mrb[0].mxu0 %v7753
      %v7889 = vpop.f32.mrb[0].mxu0
      %v7890 = vadd.f32 0.0, %v7889
      %v7891 = vpop.f32.mrb[0].mxu0
      %7892 = vmatprep.mubr.f32.mxu0 0.0
      %7893 = vmatmul.mubr.f32.gmra.mrb[0].mxu0 %v7755
      %v7894 = vpop.f32.mrb[0].mxu0
      %v7895 = vadd.f32 0.0, %v7894
      %v7896 = vpop.f32.mrb[0].mxu0
      %7897 = vmatprep.mubr.f32.mxu0 0.0
      %7898 = vmatmul.mubr.f32.gmra.mrb[0].mxu0 %v7757
      %v7899 = vpop.f32.mrb[0].mxu0
      %v7900 = vadd.f32 0.0, %v7899
      %v7901 = vpop.f32.mrb[0].mxu0
      %7902 = vmatprep.mubr.f32.mxu0 0.0
      %7903 = vmatmul.mubr.f32.gmra.mrb[0].mxu0 %v7759
      %v7904 = vpop.f32.mrb[0].mxu0
      %v7905 = vadd.f32 0.0, %v7904
      %v7906 = vpop.f32.mrb[0].mxu0
      %7907 = vmatprep.mubr.f32.mxu0 0.0
      %7908 = vmatmul.mubr.f32.gmra.mrb[0].mxu0 %v7761
      %v7909 = vpop.f32.mrb[0].mxu0
      %v7910 = vadd.f32 0.0, %v7909
      %v7911 = vpop.f32.mrb[0].mxu0
      %7912 = vmatprep.mubr.f32.mxu0 0.0
      %7913 = vmatmul.mubr.f32.gmra.mrb[0].mxu0 %v7763
      %v7914 = vpop.f32.mrb[0].mxu0
      %v7915 = vadd.f32 0.0, %v7914
      %v7916 = vpop.f32.mrb[0].mxu0
      %7917 = vmatprep.mubr.f32.mxu0 0.0
      %7918 = vmatmul.mubr.f32.gmra.mrb[0].mxu0 %v7765
      %v7919 = vpop.f32.mrb[0].mxu0
      %v7920 = vadd.f32 0.0, %v7919
      %v7921 = vpop.f32.mrb[0].mxu0
      %7922 = vmatprep.mubr.f32.mxu0 0.0
      %7923 = vmatmul.mubr.f32.gmra.mrb[0].mxu0 %v7767
      %v7924 = vpop.f32.mrb[0].mxu0
      %v7925 = vadd.f32 0.0, %v7924
      %v7926 = vpop.f32.mrb[0].mxu0
      %7927 = vmatprep.mubr.f32.mxu0 0.0
      %7928 = vmatmul.mubr.f32.gmra.mrb[0].mxu0 %v7769
      %v7929 = vpop.f32.mrb[0].mxu0
      %v7930 = vadd.f32 0.0, %v7929
      %v7931 = vpop.f32.mrb[0].mxu0
      %7932 = vmatprep.mubr.f32.mxu0 0.0
      %7933 = vmatmul.mubr.f32.gmra.mrb[0].mxu0 %v7771
      %v7934 = vpop.f32.mrb[0].mxu0
      %v7935 = vadd.f32 0.0, %v7934
      %v7936 = vpop.f32.mrb[0].mxu0
      %7937 = vmatprep.mubr.f32.mxu0 0.0
      %7938 = vmatmul.mubr.f32.gmra.mrb[0].mxu0 %v7773
      %v7939 = vpop.f32.mrb[0].mxu0
      %v7940 = vadd.f32 0.0, %v7939
      %v7941 = vpop.f32.mrb[0].mxu0
      %7942 = vmatprep.mubr.f32.mxu0 0.0
      %7943 = vmatmul.mubr.f32.gmra.mrb[0].mxu0 %v7775
      %v7944 = vpop.f32.mrb[0].mxu0
      %v7945 = vadd.f32 0.0, %v7944
      %v7946 = vpop.f32.mrb[0].mxu0
      %7947 = vmatprep.mubr.f32.mxu0 0.0
      %7948 = vmatmul.mubr.f32.gmra.mrb[0].mxu0 %v7777
      %v7949 = vpop.f32.mrb[0].mxu0
      %v7950 = vadd.f32 0.0, %v7949
      %v7951 = vpop.f32.mrb[0].mxu0
      %7952 = vmatprep.mubr.f32.mxu0 0.0
      %7953 = vmatmul.mubr.f32.gmra.mrb[0].mxu0 %v7779
      %v7954 = vpop.f32.mrb[0].mxu0
      %v7955 = vadd.f32 0.0, %v7954
      %v7956 = vpop.f32.mrb[0].mxu0
      %7957 = vmatprep.mubr.f32.mxu0 0.0
      %7958 = vmatmul.mubr.f32.gmra.mrb[0].mxu0 %v7781
      %v7959 = vpop.f32.mrb[0].mxu0
      %v7960 = vadd.f32 0.0, %v7959
      %v7961 = vpop.f32.mrb[0].mxu0
      %7962 = vmatprep.mubr.f32.mxu0 0.0
      %7963 = vmatmul.mubr.f32.gmra.mrb[0].mxu0 %v7783
      %v7964 = vpop.f32.mrb[0].mxu0
      %v7965 = vadd.f32 0.0, %v7964
      %v7966 = vpop.f32.mrb[0].mxu0
      %7967 = vmatprep.mubr.f32.mxu0 0.0
      %7968 = vmatmul.mubr.f32.gmra.mrb[0].mxu0 %v7785
      %v7969 = vpop.f32.mrb[0].mxu0
      %v7970 = vadd.f32 0.0, %v7969
      %v7971 = vpop.f32.mrb[0].mxu0
      %7972 = vmatprep.mubr.f32.mxu0 0.0
      %7973 = vmatmul.mubr.f32.gmra.mrb[0].mxu0 %v7787
      %v7974 = vpop.f32.mrb[0].mxu0
      %v7975 = vadd.f32 0.0, %v7974
      %v7976 = vpop.f32.mrb[0].mxu0
      %7977 = vmatprep.mubr.f32.mxu0 0.0
      %7978 = vmatmul.mubr.f32.gmra.mrb[0].mxu0 %v7789
      %v7979 = vpop.f32.mrb[0].mxu0
      %v7980 = vadd.f32 0.0, %v7979
      %v7981 = vpop.f32.mrb[0].mxu0
      %7982 = vmatprep.mubr.f32.mxu0 0.0
      %7983 = vmatmul.mubr.f32.gmra.mrb[0].mxu0 %v7791
      %v7984 = vpop.f32.mrb[0].mxu0
      %v7985 = vadd.f32 0.0, %v7984
      %v7986 = vpop.f32.mrb[0].mxu0
      %7987 = vmatprep.mubr.f32.mxu0 0.0
      %7988 = vmatmul.mubr.f32.gmra.mrb[0].mxu0 %v7793
      %v7989 = vpop.f32.mrb[0].mxu0
      %v7990 = vadd.f32 0.0, %v7989
      %v7991 = vpop.f32.mrb[0].mxu0
      %7992 = vmatprep.mubr.f32.mxu0 0.0
      %7993 = vmatmul.mubr.f32.gmra.mrb[0].mxu0 %v7795
      %v7994 = vpop.f32.mrb[0].mxu0
      %v7995 = vadd.f32 0.0, %v7994
      %v7996 = vpop.f32.mrb[0].mxu0
      %7997 = vmatprep.mubr.f32.mxu0 0.0
      %7998 = vmatmul.mubr.f32.gmra.mrb[0].mxu0 %v7797
      %v7999 = vpop.f32.mrb[0].mxu0
      %v8000 = vadd.f32 0.0, %v7999
      %v8001 = vpop.f32.mrb[0].mxu0
      %8002 = vmatprep.mubr.f32.mxu0 0.0
      %8003 = vmatmul.mubr.f32.gmra.mrb[0].mxu0 %v7799
      %v8004 = vpop.f32.mrb[0].mxu0
      %v8005 = vadd.f32 0.0, %v8004
      %v8006 = vpop.f32.mrb[0].mxu0
      %8007 = vmatprep.mubr.f32.mxu0 0.0
      %8008 = vmatmul.mubr.f32.gmra.mrb[0].mxu0 %v7801
      %v8009 = vpop.f32.mrb[0].mxu0
      %v8010 = vadd.f32 0.0, %v8009
      %v8011 = vpop.f32.mrb[0].mxu0
      %8012 = vmatprep.mubr.f32.mxu0 0.0
      %8013 = vmatmul.mubr.f32.gmra.mrb[0].mxu0 %v7803
      %v8014 = vpop.f32.mrb[0].mxu0
      %v8015 = vadd.f32 0.0, %v8014
      %v8016 = vpop.f32.mrb[0].mxu0
      %8017 = vmatprep.mubr.f32.mxu0 0.0
      %8018 = vmatmul.mubr.f32.gmra.mrb[0].mxu0 %v7805
      %v8019 = vpop.f32.mrb[0].mxu0
      %v8020 = vadd.f32 0.0, %v8019
      %v8021 = vpop.f32.mrb[0].mxu0
      %8022 = vmatprep.mubr.f32.mxu0 0.0
      %8023 = vmatmul.mubr.f32.gmra.mrb[0].mxu0 %v7807
      %v8024 = vpop.f32.mrb[0].mxu0
      %v8025 = vadd.f32 0.0, %v8024
      %v8026 = vpop.f32.mrb[0].mxu0
      %8027 = vmatprep.mubr.f32.mxu0 0.0
      %8028 = vmatmul.mubr.f32.gmra.mrb[0].mxu0 %v7809
      %v8029 = vpop.f32.mrb[0].mxu0
      %v8030 = vadd.f32 0.0, %v8029
      %v8031 = vpop.f32.mrb[0].mxu0
      %8032 = vmatprep.mubr.f32.mxu0 0.0
      %8033 = vmatmul.mubr.f32.gmra.mrb[0].mxu0 %v7811
      %v8034 = vpop.f32.mrb[0].mxu0
      %v8035 = vadd.f32 0.0, %v8034
      %v8036 = vpop.f32.mrb[0].mxu0
      %8037 = vdwg.mxu0
      %8039 = vrot.lane.b32.xlu0 %v7744, 96
      %v8040 = vpop.permute.xlu0 %8039
      %v8042 = vmul.f32 %v7239, %v8040
      %v8043 = vmul.f32 %v7240, %v8040
      %v8044 = vmul.f32 %v7241, %v8040
      %v8045 = vmul.f32 %v7242, %v8040
      %v8046 = vmul.f32 %v7243, %v8040
      %v8047 = vmul.f32 %v7244, %v8040
      %v8048 = vmul.f32 %v7245, %v8040
      %v8049 = vmul.f32 %v7246, %v8040
      %v8050 = vmul.f32 %v7247, %v8040
      %v8051 = vmul.f32 %v7248, %v8040
      %v8052 = vmul.f32 %v7249, %v8040
      %v8053 = vmul.f32 %v7250, %v8040
      %v8054 = vmul.f32 %v7251, %v8040
      %v8055 = vmul.f32 %v7252, %v8040
      %v8056 = vmul.f32 %v7253, %v8040
      %v8057 = vmul.f32 %v7254, %v8040
      %v8058 = vmul.f32 %v7255, %v8040
      %v8059 = vmul.f32 %v7256, %v8040
      %v8060 = vmul.f32 %v7257, %v8040
      %v8061 = vmul.f32 %v7258, %v8040
      %v8062 = vmul.f32 %v7259, %v8040
      %v8063 = vmul.f32 %v7260, %v8040
      %v8064 = vmul.f32 %v7261, %v8040
      %v8065 = vmul.f32 %v7262, %v8040
      %v8066 = vmul.f32 %v7263, %v8040
      %v8067 = vmul.f32 %v7264, %v8040
      %v8068 = vmul.f32 %v7265, %v8040
      %v8069 = vmul.f32 %v7266, %v8040
      %v8070 = vmul.f32 %v7267, %v8040
      %v8071 = vmul.f32 %v7268, %v8040
      %v8072 = vmul.f32 %v7269, %v8040
      %v8073 = vmul.f32 %v7270, %v8040
      %v8075 = vsel %vm6524, %v8042, 0
      %v8078 = vsel %vm6524, %v8043, 0
      %v8081 = vsel %vm6524, %v8044, 0
      %v8084 = vsel %vm6524, %v8045, 0
      %v8087 = vsel %vm6524, %v8046, 0
      %v8090 = vsel %vm6524, %v8047, 0
      %v8093 = vsel %vm6524, %v8048, 0
      %v8096 = vsel %vm6524, %v8049, 0
      %v8099 = vsel %vm6524, %v8050, 0
      %v8102 = vsel %vm6524, %v8051, 0
      %v8105 = vsel %vm6524, %v8052, 0
      %v8108 = vsel %vm6524, %v8053, 0
      %v8111 = vsel %vm6524, %v8054, 0
      %v8114 = vsel %vm6524, %v8055, 0
      %v8117 = vsel %vm6524, %v8056, 0
      %v8120 = vsel %vm6524, %v8057, 0
      %v8123 = vsel %vm6524, %v8058, 0
      %v8126 = vsel %vm6524, %v8059, 0
      %v8129 = vsel %vm6524, %v8060, 0
      %v8132 = vsel %vm6524, %v8061, 0
      %v8135 = vsel %vm6524, %v8062, 0
      %v8138 = vsel %vm6524, %v8063, 0
      %v8141 = vsel %vm6524, %v8064, 0
      %v8144 = vsel %vm6524, %v8065, 0
      %v8147 = vsel %vm6524, %v8066, 0
      %v8150 = vsel %vm6524, %v8067, 0
      %v8153 = vsel %vm6524, %v8068, 0
      %v8156 = vsel %vm6524, %v8069, 0
      %v8159 = vsel %vm6524, %v8070, 0
      %v8162 = vsel %vm6524, %v8071, 0
      %v8165 = vsel %vm6524, %v8072, 0
      %v8168 = vsel %vm6524, %v8073, 0
      %8170 = vmatprep.subr.mxu0 0.0
      %8171 = vmatpush1.msra.mxu0 %v5973
      %8172 = vmatprep.subr.mxu0 0.0
      %8173 = vmatpush1.msra.mxu0 %v5974
      %8174 = vmatprep.subr.mxu0 0.0
      %8175 = vmatpush1.msra.mxu0 %v5975
      %8176 = vmatprep.subr.mxu0 0.0
      %8177 = vmatpush1.msra.mxu0 %v5976
      %8178 = vmatprep.subr.mxu0 0.0
      %8179 = vmatpush1.msra.mxu0 0.0
      %8180 = vmatprep.subr.mxu0 0.0
      %8181 = vmatpush1.msra.mxu0 0.0
      %8182 = vmatprep.subr.mxu0 0.0
      %8183 = vmatpush1.msra.mxu0 0.0
      %8184 = vmatprep.subr.mxu0 0.0
      %8185 = vmatpush1.msra.mxu0 0.0
      %8186 = vmatprep.subr.mxu0 0.0
      %8187 = vmatpush1.msra.mxu0 0.0
      %8188 = vmatprep.subr.mxu0 0.0
      %8189 = vmatpush1.msra.mxu0 0.0
      %8190 = vmatprep.subr.mxu0 0.0
      %8191 = vmatpush1.msra.mxu0 0.0
      %8192 = vmatprep.subr.mxu0 0.0
      %8193 = vmatpush1.msra.mxu0 0.0
      %8194 = vmatprep.subr.mxu0 0.0
      %8195 = vmatpush1.msra.mxu0 0.0
      %8196 = vmatprep.subr.mxu0 0.0
      %8197 = vmatpush1.msra.mxu0 0.0
      %8198 = vmatprep.subr.mxu0 0.0
      %8199 = vmatpush1.msra.mxu0 0.0
      %8200 = vmatprep.subr.mxu0 0.0
      %8201 = vmatpush1.msra.mxu0 0.0
      %8202 = vmatprep.subr.mxu0 0.0
      %8203 = vmatpush1.msra.mxu0 0.0
      %8204 = vmatprep.subr.mxu0 0.0
      %8205 = vmatpush1.msra.mxu0 0.0
      %8206 = vmatprep.subr.mxu0 0.0
      %8207 = vmatpush1.msra.mxu0 0.0
      %8208 = vmatprep.subr.mxu0 0.0
      %8209 = vmatpush1.msra.mxu0 0.0
      %8210 = vmatprep.subr.mxu0 0.0
      %8211 = vmatpush1.msra.mxu0 0.0
      %8212 = vmatprep.subr.mxu0 0.0
      %8213 = vmatpush1.msra.mxu0 0.0
      %8214 = vmatprep.subr.mxu0 0.0
      %8215 = vmatpush1.msra.mxu0 0.0
      %8216 = vmatprep.subr.mxu0 0.0
      %8217 = vmatpush1.msra.mxu0 0.0
      %8218 = vmatprep.subr.mxu0 0.0
      %8219 = vmatpush1.msra.mxu0 0.0
      %8220 = vmatprep.subr.mxu0 0.0
      %8221 = vmatpush1.msra.mxu0 0.0
      %8222 = vmatprep.subr.mxu0 0.0
      %8223 = vmatpush1.msra.mxu0 0.0
      %8224 = vmatprep.subr.mxu0 0.0
      %8225 = vmatpush1.msra.mxu0 0.0
      %8226 = vmatprep.subr.mxu0 0.0
      %8227 = vmatpush1.msra.mxu0 0.0
      %8228 = vmatprep.subr.mxu0 0.0
      %8229 = vmatpush1.msra.mxu0 0.0
      %8230 = vmatprep.subr.mxu0 0.0
      %8231 = vmatpush1.msra.mxu0 0.0
      %8232 = vmatprep.subr.mxu0 0.0
      %8233 = vmatpush1.msra.mxu0 0.0
      %8234 = vmatprep.mubr.f32.mxu0 0.0
      %8235 = vmatmul.mubr.f32.gmra.mrb[0].mxu0 %v8075
      %v8236 = vpop.f32.mrb[0].mxu0
      %v8237 = vadd.f32 1e-15, %v8236
      %v8238 = vpop.f32.mrb[0].mxu0
      %8239 = vmatprep.mubr.f32.mxu0 0.0
      %8240 = vmatmul.mubr.f32.gmra.mrb[0].mxu0 %v8078
      %v8241 = vpop.f32.mrb[0].mxu0
      %v8242 = vadd.f32 1e-15, %v8241
      %v8243 = vpop.f32.mrb[0].mxu0
      %8244 = vmatprep.mubr.f32.mxu0 0.0
      %8245 = vmatmul.mubr.f32.gmra.mrb[0].mxu0 %v8081
      %v8246 = vpop.f32.mrb[0].mxu0
      %v8247 = vadd.f32 1e-15, %v8246
      %v8248 = vpop.f32.mrb[0].mxu0
      %8249 = vmatprep.mubr.f32.mxu0 0.0
      %8250 = vmatmul.mubr.f32.gmra.mrb[0].mxu0 %v8084
      %v8251 = vpop.f32.mrb[0].mxu0
      %v8252 = vadd.f32 1e-15, %v8251
      %v8253 = vpop.f32.mrb[0].mxu0
      %8254 = vmatprep.mubr.f32.mxu0 0.0
      %8255 = vmatmul.mubr.f32.gmra.mrb[0].mxu0 %v8087
      %v8256 = vpop.f32.mrb[0].mxu0
      %v8257 = vadd.f32 1e-15, %v8256
      %v8258 = vpop.f32.mrb[0].mxu0
      %8259 = vmatprep.mubr.f32.mxu0 0.0
      %8260 = vmatmul.mubr.f32.gmra.mrb[0].mxu0 %v8090
      %v8261 = vpop.f32.mrb[0].mxu0
      %v8262 = vadd.f32 1e-15, %v8261
      %v8263 = vpop.f32.mrb[0].mxu0
      %8264 = vmatprep.mubr.f32.mxu0 0.0
      %8265 = vmatmul.mubr.f32.gmra.mrb[0].mxu0 %v8093
      %v8266 = vpop.f32.mrb[0].mxu0
      %v8267 = vadd.f32 1e-15, %v8266
      %v8268 = vpop.f32.mrb[0].mxu0
      %8269 = vmatprep.mubr.f32.mxu0 0.0
      %8270 = vmatmul.mubr.f32.gmra.mrb[0].mxu0 %v8096
      %v8271 = vpop.f32.mrb[0].mxu0
      %v8272 = vadd.f32 1e-15, %v8271
      %v8273 = vpop.f32.mrb[0].mxu0
      %8274 = vmatprep.mubr.f32.mxu0 0.0
      %8275 = vmatmul.mubr.f32.gmra.mrb[0].mxu0 %v8099
      %v8276 = vpop.f32.mrb[0].mxu0
      %v8277 = vadd.f32 1e-15, %v8276
      %v8278 = vpop.f32.mrb[0].mxu0
      %8279 = vmatprep.mubr.f32.mxu0 0.0
      %8280 = vmatmul.mubr.f32.gmra.mrb[0].mxu0 %v8102
      %v8281 = vpop.f32.mrb[0].mxu0
      %v8282 = vadd.f32 1e-15, %v8281
      %v8283 = vpop.f32.mrb[0].mxu0
      %8284 = vmatprep.mubr.f32.mxu0 0.0
      %8285 = vmatmul.mubr.f32.gmra.mrb[0].mxu0 %v8105
      %v8286 = vpop.f32.mrb[0].mxu0
      %v8287 = vadd.f32 1e-15, %v8286
      %v8288 = vpop.f32.mrb[0].mxu0
      %8289 = vmatprep.mubr.f32.mxu0 0.0
      %8290 = vmatmul.mubr.f32.gmra.mrb[0].mxu0 %v8108
      %v8291 = vpop.f32.mrb[0].mxu0
      %v8292 = vadd.f32 1e-15, %v8291
      %v8293 = vpop.f32.mrb[0].mxu0
      %8294 = vmatprep.mubr.f32.mxu0 0.0
      %8295 = vmatmul.mubr.f32.gmra.mrb[0].mxu0 %v8111
      %v8296 = vpop.f32.mrb[0].mxu0
      %v8297 = vadd.f32 1e-15, %v8296
      %v8298 = vpop.f32.mrb[0].mxu0
      %8299 = vmatprep.mubr.f32.mxu0 0.0
      %8300 = vmatmul.mubr.f32.gmra.mrb[0].mxu0 %v8114
      %v8301 = vpop.f32.mrb[0].mxu0
      %v8302 = vadd.f32 1e-15, %v8301
      %v8303 = vpop.f32.mrb[0].mxu0
      %8304 = vmatprep.mubr.f32.mxu0 0.0
      %8305 = vmatmul.mubr.f32.gmra.mrb[0].mxu0 %v8117
      %v8306 = vpop.f32.mrb[0].mxu0
      %v8307 = vadd.f32 1e-15, %v8306
      %v8308 = vpop.f32.mrb[0].mxu0
      %8309 = vmatprep.mubr.f32.mxu0 0.0
      %8310 = vmatmul.mubr.f32.gmra.mrb[0].mxu0 %v8120
      %v8311 = vpop.f32.mrb[0].mxu0
      %v8312 = vadd.f32 1e-15, %v8311
      %v8313 = vpop.f32.mrb[0].mxu0
      %8314 = vmatprep.mubr.f32.mxu0 0.0
      %8315 = vmatmul.mubr.f32.gmra.mrb[0].mxu0 %v8123
      %v8316 = vpop.f32.mrb[0].mxu0
      %v8317 = vadd.f32 1e-15, %v8316
      %v8318 = vpop.f32.mrb[0].mxu0
      %8319 = vmatprep.mubr.f32.mxu0 0.0
      %8320 = vmatmul.mubr.f32.gmra.mrb[0].mxu0 %v8126
      %v8321 = vpop.f32.mrb[0].mxu0
      %v8322 = vadd.f32 1e-15, %v8321
      %v8323 = vpop.f32.mrb[0].mxu0
      %8324 = vmatprep.mubr.f32.mxu0 0.0
      %8325 = vmatmul.mubr.f32.gmra.mrb[0].mxu0 %v8129
      %v8326 = vpop.f32.mrb[0].mxu0
      %v8327 = vadd.f32 1e-15, %v8326
      %v8328 = vpop.f32.mrb[0].mxu0
      %8329 = vmatprep.mubr.f32.mxu0 0.0
      %8330 = vmatmul.mubr.f32.gmra.mrb[0].mxu0 %v8132
      %v8331 = vpop.f32.mrb[0].mxu0
      %v8332 = vadd.f32 1e-15, %v8331
      %v8333 = vpop.f32.mrb[0].mxu0
      %8334 = vmatprep.mubr.f32.mxu0 0.0
      %8335 = vmatmul.mubr.f32.gmra.mrb[0].mxu0 %v8135
      %v8336 = vpop.f32.mrb[0].mxu0
      %v8337 = vadd.f32 1e-15, %v8336
      %v8338 = vpop.f32.mrb[0].mxu0
      %8339 = vmatprep.mubr.f32.mxu0 0.0
      %8340 = vmatmul.mubr.f32.gmra.mrb[0].mxu0 %v8138
      %v8341 = vpop.f32.mrb[0].mxu0
      %v8342 = vadd.f32 1e-15, %v8341
      %v8343 = vpop.f32.mrb[0].mxu0
      %8344 = vmatprep.mubr.f32.mxu0 0.0
      %8345 = vmatmul.mubr.f32.gmra.mrb[0].mxu0 %v8141
      %v8346 = vpop.f32.mrb[0].mxu0
      %v8347 = vadd.f32 1e-15, %v8346
      %v8348 = vpop.f32.mrb[0].mxu0
      %8349 = vmatprep.mubr.f32.mxu0 0.0
      %8350 = vmatmul.mubr.f32.gmra.mrb[0].mxu0 %v8144
      %v8351 = vpop.f32.mrb[0].mxu0
      %v8352 = vadd.f32 1e-15, %v8351
      %v8353 = vpop.f32.mrb[0].mxu0
      %8354 = vmatprep.mubr.f32.mxu0 0.0
      %8355 = vmatmul.mubr.f32.gmra.mrb[0].mxu0 %v8147
      %v8356 = vpop.f32.mrb[0].mxu0
      %v8357 = vadd.f32 1e-15, %v8356
      %v8358 = vpop.f32.mrb[0].mxu0
      %8359 = vmatprep.mubr.f32.mxu0 0.0
      %8360 = vmatmul.mubr.f32.gmra.mrb[0].mxu0 %v8150
      %v8361 = vpop.f32.mrb[0].mxu0
      %v8362 = vadd.f32 1e-15, %v8361
      %v8363 = vpop.f32.mrb[0].mxu0
      %8364 = vmatprep.mubr.f32.mxu0 0.0
      %8365 = vmatmul.mubr.f32.gmra.mrb[0].mxu0 %v8153
      %v8366 = vpop.f32.mrb[0].mxu0
      %v8367 = vadd.f32 1e-15, %v8366
      %v8368 = vpop.f32.mrb[0].mxu0
      %8369 = vmatprep.mubr.f32.mxu0 0.0
      %8370 = vmatmul.mubr.f32.gmra.mrb[0].mxu0 %v8156
      %v8371 = vpop.f32.mrb[0].mxu0
      %v8372 = vadd.f32 1e-15, %v8371
      %v8373 = vpop.f32.mrb[0].mxu0
      %8374 = vmatprep.mubr.f32.mxu0 0.0
      %8375 = vmatmul.mubr.f32.gmra.mrb[0].mxu0 %v8159
      %v8376 = vpop.f32.mrb[0].mxu0
      %v8377 = vadd.f32 1e-15, %v8376
      %v8378 = vpop.f32.mrb[0].mxu0
      %8379 = vmatprep.mubr.f32.mxu0 0.0
      %8380 = vmatmul.mubr.f32.gmra.mrb[0].mxu0 %v8162
      %v8381 = vpop.f32.mrb[0].mxu0
      %v8382 = vadd.f32 1e-15, %v8381
      %v8383 = vpop.f32.mrb[0].mxu0
      %8384 = vmatprep.mubr.f32.mxu0 0.0
      %8385 = vmatmul.mubr.f32.gmra.mrb[0].mxu0 %v8165
      %v8386 = vpop.f32.mrb[0].mxu0
      %v8387 = vadd.f32 1e-15, %v8386
      %v8388 = vpop.f32.mrb[0].mxu0
      %8389 = vmatprep.mubr.f32.mxu0 0.0
      %8390 = vmatmul.mubr.f32.gmra.mrb[0].mxu0 %v8168
      %v8391 = vpop.f32.mrb[0].mxu0
      %v8392 = vadd.f32 1e-15, %v8391
      %v8393 = vpop.f32.mrb[0].mxu0
      %8394 = vdwg.mxu0
      %v8395 = vrcp.pop %v8237
      %v8396 = vmul.f32 %v7880, %v8395
      %v8397 = vrcp.pop %v8242
      %v8398 = vmul.f32 %v7885, %v8397
      %v8399 = vrcp.pop %v8247
      %v8400 = vmul.f32 %v7890, %v8399
      %v8401 = vrcp.pop %v8252
      %v8402 = vmul.f32 %v7895, %v8401
      %v8403 = vrcp.pop %v8257
      %v8404 = vmul.f32 %v7900, %v8403
      %v8405 = vrcp.pop %v8262
      %v8406 = vmul.f32 %v7905, %v8405
      %v8407 = vrcp.pop %v8267
      %v8408 = vmul.f32 %v7910, %v8407
      %v8409 = vrcp.pop %v8272
      %v8410 = vmul.f32 %v7915, %v8409
      %v8411 = vrcp.pop %v8277
      %v8412 = vmul.f32 %v7920, %v8411
      %v8413 = vrcp.pop %v8282
      %v8414 = vmul.f32 %v7925, %v8413
      %v8415 = vrcp.pop %v8287
      %v8416 = vmul.f32 %v7930, %v8415
      %v8417 = vrcp.pop %v8292
      %v8418 = vmul.f32 %v7935, %v8417
      %v8419 = vrcp.pop %v8297
      %v8420 = vmul.f32 %v7940, %v8419
      %v8421 = vrcp.pop %v8302
      %v8422 = vmul.f32 %v7945, %v8421
      %v8423 = vrcp.pop %v8307
      %v8424 = vmul.f32 %v7950, %v8423
      %v8425 = vrcp.pop %v8312
      %v8426 = vmul.f32 %v7955, %v8425
      %v8427 = vrcp.pop %v8317
      %v8428 = vmul.f32 %v7960, %v8427
      %v8429 = vrcp.pop %v8322
      %v8430 = vmul.f32 %v7965, %v8429
      %v8431 = vrcp.pop %v8327
      %v8432 = vmul.f32 %v7970, %v8431
      %v8433 = vrcp.pop %v8332
      %v8434 = vmul.f32 %v7975, %v8433
      %v8435 = vrcp.pop %v8337
      %v8436 = vmul.f32 %v7980, %v8435
      %v8437 = vrcp.pop %v8342
      %v8438 = vmul.f32 %v7985, %v8437
      %v8439 = vrcp.pop %v8347
      %v8440 = vmul.f32 %v7990, %v8439
      %v8441 = vrcp.pop %v8352
      %v8442 = vmul.f32 %v7995, %v8441
      %v8443 = vrcp.pop %v8357
      %v8444 = vmul.f32 %v8000, %v8443
      %v8445 = vrcp.pop %v8362
      %v8446 = vmul.f32 %v8005, %v8445
      %v8447 = vrcp.pop %v8367
      %v8448 = vmul.f32 %v8010, %v8447
      %v8449 = vrcp.pop %v8372
      %v8450 = vmul.f32 %v8015, %v8449
      %v8451 = vrcp.pop %v8377
      %v8452 = vmul.f32 %v8020, %v8451
      %v8453 = vrcp.pop %v8382
      %v8454 = vmul.f32 %v8025, %v8453
      %v8455 = vrcp.pop %v8387
      %v8456 = vmul.f32 %v8030, %v8455
      %v8457 = vrcp.pop %v8392
      %v8458 = vmul.f32 %v8035, %v8457
      %v8460 = vsel %vm6524, %v7235, 0
      %v8463 = vsel %vm6524, %v7236, 0
      %v8466 = vsel %vm6524, %v7237, 0
      %v8469 = vsel %vm6524, %v7238, 0
      %v8472 = vsel %vm6524, %v8396, 0
      %v8475 = vsel %vm6524, %v8398, 0
      %v8478 = vsel %vm6524, %v8400, 0
      %v8481 = vsel %vm6524, %v8402, 0
      %v8484 = vsel %vm6524, %v8404, 0
      %v8487 = vsel %vm6524, %v8406, 0
      %v8490 = vsel %vm6524, %v8408, 0
      %v8493 = vsel %vm6524, %v8410, 0
      %v8496 = vsel %vm6524, %v8412, 0
      %v8499 = vsel %vm6524, %v8414, 0
      %v8502 = vsel %vm6524, %v8416, 0
      %v8505 = vsel %vm6524, %v8418, 0
      %v8508 = vsel %vm6524, %v8420, 0
      %v8511 = vsel %vm6524, %v8422, 0
      %v8514 = vsel %vm6524, %v8424, 0
      %v8517 = vsel %vm6524, %v8426, 0
      %v8520 = vsel %vm6524, %v8428, 0
      %v8523 = vsel %vm6524, %v8430, 0
      %v8526 = vsel %vm6524, %v8432, 0
      %v8529 = vsel %vm6524, %v8434, 0
      %v8532 = vsel %vm6524, %v8436, 0
      %v8535 = vsel %vm6524, %v8438, 0
      %v8538 = vsel %vm6524, %v8440, 0
      %v8541 = vsel %vm6524, %v8442, 0
      %v8544 = vsel %vm6524, %v8444, 0
      %v8547 = vsel %vm6524, %v8446, 0
      %v8550 = vsel %vm6524, %v8448, 0
      %v8553 = vsel %vm6524, %v8450, 0
      %v8556 = vsel %vm6524, %v8452, 0
      %v8559 = vsel %vm6524, %v8454, 0
      %v8562 = vsel %vm6524, %v8456, 0
      %v8565 = vsel %vm6524, %v8458, 0
      %8567 = vmatprep.subr.mxu0 0.0
      %8568 = vmatpush1.xpose.msra.mxu0 %v8472
      %8569 = vmatprep.subr.mxu0 0.0
      %8570 = vmatpush1.xpose.msra.mxu0 %v8475
      %8571 = vmatprep.subr.mxu0 0.0
      %8572 = vmatpush1.xpose.msra.mxu0 %v8478
      %8573 = vmatprep.subr.mxu0 0.0
      %8574 = vmatpush1.xpose.msra.mxu0 %v8481
      %8575 = vmatprep.subr.mxu0 0.0
      %8576 = vmatpush1.xpose.msra.mxu0 %v8484
      %8577 = vmatprep.subr.mxu0 0.0
      %8578 = vmatpush1.xpose.msra.mxu0 %v8487
      %8579 = vmatprep.subr.mxu0 0.0
      %8580 = vmatpush1.xpose.msra.mxu0 %v8490
      %8581 = vmatprep.subr.mxu0 0.0
      %8582 = vmatpush1.xpose.msra.mxu0 %v8493
      %8583 = vmatprep.subr.mxu0 0.0
      %8584 = vmatpush1.xpose.msra.mxu0 %v8496
      %8585 = vmatprep.subr.mxu0 0.0
      %8586 = vmatpush1.xpose.msra.mxu0 %v8499
      %8587 = vmatprep.subr.mxu0 0.0
      %8588 = vmatpush1.xpose.msra.mxu0 %v8502
      %8589 = vmatprep.subr.mxu0 0.0
      %8590 = vmatpush1.xpose.msra.mxu0 %v8505
      %8591 = vmatprep.subr.mxu0 0.0
      %8592 = vmatpush1.xpose.msra.mxu0 %v8508
      %8593 = vmatprep.subr.mxu0 0.0
      %8594 = vmatpush1.xpose.msra.mxu0 %v8511
      %8595 = vmatprep.subr.mxu0 0.0
      %8596 = vmatpush1.xpose.msra.mxu0 %v8514
      %8597 = vmatprep.subr.mxu0 0.0
      %8598 = vmatpush1.xpose.msra.mxu0 %v8517
      %8599 = vmatprep.subr.mxu0 0.0
      %8600 = vmatpush1.xpose.msra.mxu0 %v8520
      %8601 = vmatprep.subr.mxu0 0.0
      %8602 = vmatpush1.xpose.msra.mxu0 %v8523
      %8603 = vmatprep.subr.mxu0 0.0
      %8604 = vmatpush1.xpose.msra.mxu0 %v8526
      %8605 = vmatprep.subr.mxu0 0.0
      %8606 = vmatpush1.xpose.msra.mxu0 %v8529
      %8607 = vmatprep.subr.mxu0 0.0
      %8608 = vmatpush1.xpose.msra.mxu0 %v8532
      %8609 = vmatprep.subr.mxu0 0.0
      %8610 = vmatpush1.xpose.msra.mxu0 %v8535
      %8611 = vmatprep.subr.mxu0 0.0
      %8612 = vmatpush1.xpose.msra.mxu0 %v8538
      %8613 = vmatprep.subr.mxu0 0.0
      %8614 = vmatpush1.xpose.msra.mxu0 %v8541
      %8615 = vmatprep.subr.mxu0 0.0
      %8616 = vmatpush1.xpose.msra.mxu0 %v8544
      %8617 = vmatprep.subr.mxu0 0.0
      %8618 = vmatpush1.xpose.msra.mxu0 %v8547
      %8619 = vmatprep.subr.mxu0 0.0
      %8620 = vmatpush1.xpose.msra.mxu0 %v8550
      %8621 = vmatprep.subr.mxu0 0.0
      %8622 = vmatpush1.xpose.msra.mxu0 %v8553
      %8623 = vmatprep.subr.mxu0 0.0
      %8624 = vmatpush1.xpose.msra.mxu0 %v8556
      %8625 = vmatprep.subr.mxu0 0.0
      %8626 = vmatpush1.xpose.msra.mxu0 %v8559
      %8627 = vmatprep.subr.mxu0 0.0
      %8628 = vmatpush1.xpose.msra.mxu0 %v8562
      %8629 = vmatprep.subr.mxu0 0.0
      %8630 = vmatpush1.xpose.msra.mxu0 %v8565
      %8631 = vmatprep.mubr.f32.mxu0 0.0
      %8632 = vmatmul.mubr.f32.gmra.mrb[0].mxu0 %v8460
      %v8633 = vpop.f32.mrb[0].mxu0
      %v8634 = vadd.f32 0.0, %v8633
      %v8635 = vpop.f32.mrb[0].mxu0
      %v8636 = vadd.f32 0.0, %v8635
      %8637 = vmatprep.mubr.f32.mxu0 0.0
      %8638 = vmatmul.mubr.f32.gmra.mrb[0].mxu0 %v8463
      %v8639 = vpop.f32.mrb[0].mxu0
      %v8640 = vadd.f32 0.0, %v8639
      %v8641 = vpop.f32.mrb[0].mxu0
      %v8642 = vadd.f32 0.0, %v8641
      %8643 = vmatprep.mubr.f32.mxu0 0.0
      %8644 = vmatmul.mubr.f32.gmra.mrb[0].mxu0 %v8466
      %v8645 = vpop.f32.mrb[0].mxu0
      %v8646 = vadd.f32 0.0, %v8645
      %v8647 = vpop.f32.mrb[0].mxu0
      %v8648 = vadd.f32 0.0, %v8647
      %8649 = vmatprep.mubr.f32.mxu0 0.0
      %8650 = vmatmul.mubr.f32.gmra.mrb[0].mxu0 %v8469
      %v8651 = vpop.f32.mrb[0].mxu0
      %v8652 = vadd.f32 0.0, %v8651
      %v8653 = vpop.f32.mrb[0].mxu0
      %v8654 = vadd.f32 0.0, %v8653
      %8655 = vdwg.mxu0
      %v8657 = vsel %vm6524, %v6009, 0
      %v8660 = vsel %vm6524, %v6010, 0
      %v8663 = vsel %vm6524, %v6011, 0
      %v8666 = vsel %vm6524, %v6012, 0
      %v8669 = vsel %vm6524, %v7172, 0
      %v8672 = vsel %vm6524, %v7174, 0
      %v8675 = vsel %vm6524, %v7176, 0
      %v8678 = vsel %vm6524, %v7178, 0
      %v8681 = vsel %vm6524, %v7180, 0
      %v8684 = vsel %vm6524, %v7182, 0
      %v8687 = vsel %vm6524, %v7184, 0
      %v8690 = vsel %vm6524, %v7186, 0
      %v8693 = vsel %vm6524, %v7188, 0
      %v8696 = vsel %vm6524, %v7190, 0
      %v8699 = vsel %vm6524, %v7192, 0
      %v8702 = vsel %vm6524, %v7194, 0
      %v8705 = vsel %vm6524, %v7196, 0
      %v8708 = vsel %vm6524, %v7198, 0
      %v8711 = vsel %vm6524, %v7200, 0
      %v8714 = vsel %vm6524, %v7202, 0
      %v8717 = vsel %vm6524, %v7204, 0
      %v8720 = vsel %vm6524, %v7206, 0
      %v8723 = vsel %vm6524, %v7208, 0
      %v8726 = vsel %vm6524, %v7210, 0
      %v8729 = vsel %vm6524, %v7212, 0
      %v8732 = vsel %vm6524, %v7214, 0
      %v8735 = vsel %vm6524, %v7216, 0
      %v8738 = vsel %vm6524, %v7218, 0
      %v8741 = vsel %vm6524, %v7220, 0
      %v8744 = vsel %vm6524, %v7222, 0
      %v8747 = vsel %vm6524, %v7224, 0
      %v8750 = vsel %vm6524, %v7226, 0
      %v8753 = vsel %vm6524, %v7228, 0
      %v8756 = vsel %vm6524, %v7230, 0
      %v8759 = vsel %vm6524, %v7232, 0
      %v8762 = vsel %vm6524, %v7234, 0
      %8764 = vmatprep.subr.mxu0 0.0
      %8765 = vmatpush1.xpose.msra.mxu0 %v8669
      %8766 = vmatprep.subr.mxu0 0.0
      %8767 = vmatpush1.xpose.msra.mxu0 %v8672
      %8768 = vmatprep.subr.mxu0 0.0
      %8769 = vmatpush1.xpose.msra.mxu0 %v8675
      %8770 = vmatprep.subr.mxu0 0.0
      %8771 = vmatpush1.xpose.msra.mxu0 %v8678
      %8772 = vmatprep.subr.mxu0 0.0
      %8773 = vmatpush1.xpose.msra.mxu0 %v8681
      %8774 = vmatprep.subr.mxu0 0.0
      %8775 = vmatpush1.xpose.msra.mxu0 %v8684
      %8776 = vmatprep.subr.mxu0 0.0
      %8777 = vmatpush1.xpose.msra.mxu0 %v8687
      %8778 = vmatprep.subr.mxu0 0.0
      %8779 = vmatpush1.xpose.msra.mxu0 %v8690
      %8780 = vmatprep.subr.mxu0 0.0
      %8781 = vmatpush1.xpose.msra.mxu0 %v8693
      %8782 = vmatprep.subr.mxu0 0.0
      %8783 = vmatpush1.xpose.msra.mxu0 %v8696
      %8784 = vmatprep.subr.mxu0 0.0
      %8785 = vmatpush1.xpose.msra.mxu0 %v8699
      %8786 = vmatprep.subr.mxu0 0.0
      %8787 = vmatpush1.xpose.msra.mxu0 %v8702
      %8788 = vmatprep.subr.mxu0 0.0
      %8789 = vmatpush1.xpose.msra.mxu0 %v8705
      %8790 = vmatprep.subr.mxu0 0.0
      %8791 = vmatpush1.xpose.msra.mxu0 %v8708
      %8792 = vmatprep.subr.mxu0 0.0
      %8793 = vmatpush1.xpose.msra.mxu0 %v8711
      %8794 = vmatprep.subr.mxu0 0.0
      %8795 = vmatpush1.xpose.msra.mxu0 %v8714
      %8796 = vmatprep.subr.mxu0 0.0
      %8797 = vmatpush1.xpose.msra.mxu0 %v8717
      %8798 = vmatprep.subr.mxu0 0.0
      %8799 = vmatpush1.xpose.msra.mxu0 %v8720
      %8800 = vmatprep.subr.mxu0 0.0
      %8801 = vmatpush1.xpose.msra.mxu0 %v8723
      %8802 = vmatprep.subr.mxu0 0.0
      %8803 = vmatpush1.xpose.msra.mxu0 %v8726
      %8804 = vmatprep.subr.mxu0 0.0
      %8805 = vmatpush1.xpose.msra.mxu0 %v8729
      %8806 = vmatprep.subr.mxu0 0.0
      %8807 = vmatpush1.xpose.msra.mxu0 %v8732
      %8808 = vmatprep.subr.mxu0 0.0
      %8809 = vmatpush1.xpose.msra.mxu0 %v8735
      %8810 = vmatprep.subr.mxu0 0.0
      %8811 = vmatpush1.xpose.msra.mxu0 %v8738
      %8812 = vmatprep.subr.mxu0 0.0
      %8813 = vmatpush1.xpose.msra.mxu0 %v8741
      %8814 = vmatprep.subr.mxu0 0.0
      %8815 = vmatpush1.xpose.msra.mxu0 %v8744
      %8816 = vmatprep.subr.mxu0 0.0
      %8817 = vmatpush1.xpose.msra.mxu0 %v8747
      %8818 = vmatprep.subr.mxu0 0.0
      %8819 = vmatpush1.xpose.msra.mxu0 %v8750
      %8820 = vmatprep.subr.mxu0 0.0
      %8821 = vmatpush1.xpose.msra.mxu0 %v8753
      %8822 = vmatprep.subr.mxu0 0.0
      %8823 = vmatpush1.xpose.msra.mxu0 %v8756
      %8824 = vmatprep.subr.mxu0 0.0
      %8825 = vmatpush1.xpose.msra.mxu0 %v8759
      %8826 = vmatprep.subr.mxu0 0.0
      %8827 = vmatpush1.xpose.msra.mxu0 %v8762
      %8828 = vmatprep.mubr.f32.mxu0 0.0
      %8829 = vmatmul.mubr.f32.gmra.mrb[0].mxu0 %v8657
      %v8830 = vpop.f32.mrb[0].mxu0
      %v8831 = vadd.f32 %v8634, %v8830
      %v8832 = vpop.f32.mrb[0].mxu0
      %v8833 = vadd.f32 %v8636, %v8832
      %8834 = vmatprep.mubr.f32.mxu0 0.0
      %8835 = vmatmul.mubr.f32.gmra.mrb[0].mxu0 %v8660
      %v8836 = vpop.f32.mrb[0].mxu0
      %v8837 = vadd.f32 %v8640, %v8836
      %v8838 = vpop.f32.mrb[0].mxu0
      %v8839 = vadd.f32 %v8642, %v8838
      %8840 = vmatprep.mubr.f32.mxu0 0.0
      %8841 = vmatmul.mubr.f32.gmra.mrb[0].mxu0 %v8663
      %v8842 = vpop.f32.mrb[0].mxu0
      %v8843 = vadd.f32 %v8646, %v8842
      %v8844 = vpop.f32.mrb[0].mxu0
      %v8845 = vadd.f32 %v8648, %v8844
      %8846 = vmatprep.mubr.f32.mxu0 0.0
      %8847 = vmatmul.mubr.f32.gmra.mrb[0].mxu0 %v8666
      %v8848 = vpop.f32.mrb[0].mxu0
      %v8849 = vadd.f32 %v8652, %v8848
      %v8850 = vpop.f32.mrb[0].mxu0
      %v8851 = vadd.f32 %v8654, %v8850
      %8852 = vdwg.mxu0
      %v8853 = vld [vmem:[%s7] sm:$0xff]
      %v8854 = vld [vmem:[%s7 + $0x8] sm:$0xff]
      %v8855 = vld [vmem:[%s7 + $0x10] sm:$0xff]
      %v8856 = vld [vmem:[%s7 + $0x18] sm:$0xff]
      %8858 = vset.pattern.permute.xlu0 0
      %8859 = vperm.xlu0 %8858, %v8853
      %v8860 = vpop.permute.xlu0 %8859
      %8863 = vset.pattern.permute.xlu0 0
      %8864 = vperm.xlu0 %8863, %v8854
      %v8865 = vpop.permute.xlu0 %8864
      %8868 = vset.pattern.permute.xlu0 0
      %8869 = vperm.xlu0 %8868, %v8855
      %v8870 = vpop.permute.xlu0 %8869
      %8873 = vset.pattern.permute.xlu0 0
      %8874 = vperm.xlu0 %8873, %v8856
      %v8875 = vpop.permute.xlu0 %8874
      %v8877 = vadd.f32 %v8831, %v8860
      %v8878 = vadd.f32 %v8833, %v8860
      %v8879 = vadd.f32 %v8837, %v8865
      %v8880 = vadd.f32 %v8839, %v8865
      %v8881 = vadd.f32 %v8843, %v8870
      %v8882 = vadd.f32 %v8845, %v8870
      %v8883 = vadd.f32 %v8849, %v8875
      %v8884 = vadd.f32 %v8851, %v8875
      %8885 = vst [vmem:[%s325] sm:$0xff] %v8877
      %8886 = vst [vmem:[%s325 + $0x8] sm:$0xff] %v8878
      %8887 = vst [vmem:[%s325 + $0x10] sm:$0xff] %v8879
      %8888 = vst [vmem:[%s325 + $0x18] sm:$0xff] %v8880
      %8889 = vst [vmem:[%s325 + $0x20] sm:$0xff] %v8881
      %8890 = vst [vmem:[%s325 + $0x28] sm:$0xff] %v8882
      %8891 = vst [vmem:[%s325 + $0x30] sm:$0xff] %v8883
      %8892 = vst [vmem:[%s325 + $0x38] sm:$0xff] %v8884
      %p8893 = scmp.lt.s32.totalorder %s19, 1
      %s8894 = scalar_select %p8893, %s19, 1
      %s8895 = smul.addr %s8894, 8
      %s8896 = smul.addr %s8895, 8
      %s8897 = scalar_lea.vmem %s8, %s8896
      // Predicated region
      $region53: #{lite_mla_forward.3} parent=51 // pred_check
        %p8898 = pneg %p215
      $region54: #{lite_mla_forward.3} parent=51 // pred_check_branch
        %8900 = sbr.rel (%p8898) target = $region56
      $region55: #{lite_mla_forward.3} parent=51 // pred_region
        _
      $region56: #{lite_mla_forward.3} parent=51 // pred_fallthru
        _
    $region52: #{lite_mla_forward.3} parent=5 // pred_fallthru
      _
    %p8901 = scmp.le.s32.totalorder 2, %s14
    // Predicated region
    $region57: #{lite_mla_forward.3} parent=5 // pred_check
      %p8902 = pneg %p8901
    $region58: #{lite_mla_forward.3} parent=5 // pred_check_branch
      %8904 = sbr.rel (%p8902) target = $region60
    $region59: #{lite_mla_forward.3} parent=5 // pred_region
      %s8905 = ssub.s32 %s14, 2
      // Predicated region
      $region61: #{lite_mla_forward.3} parent=59 // pred_check
        %p8906 = pneg %p221
      $region62: #{lite_mla_forward.3} parent=59 // pred_check_branch
        %8908 = sbr.rel (%p8906) target = $region64
      $region63: #{lite_mla_forward.3} parent=59 // pred_region
        %p8909 = scmp.lt.s32.totalorder %s20, 1
        %s8910 = scalar_select %p8909, %s20, 1
        %s8911 = smul.addr %s8910, 8
        %s8912 = smul.addr %s8911, 8
        %s8913 = scalar_lea.vmem %s8, %s8912
      $region64: #{lite_mla_forward.3} parent=59 // pred_fallthru
        _
    $region60: #{lite_mla_forward.3} parent=5 // pred_fallthru
      _
  $region6: #{lite_mla_forward.3} parent=0 // loop_footer
    %s18 = sadd.s32 1, %s14
  $region7: #{lite_mla_forward.3} parent=0 // loop_footer_branch
    %13 = sbr.rel target = $region3
  $region8: #{lite_mla_forward.3} parent=0 // loop_exit
    _

</llo_original>
